<compile_context>
chip_gen: v6e
topology: v6e:2x2x1
jax: 0.10.0
libtpu: 0.0.40
codegen_flags: <defaults>
</compile_context>

<pallas_src>
import math

import jax
import jax.numpy as jnp
import numpy as np
from jax.experimental import pallas as pl
from jax.experimental.pallas import tpu as pltpu


def make_attention_block_kernel(C, T, S, num_heads, groups):
    ch = C // num_heads
    cpg = C // groups
    eps = 1e-5
    scale = 1.0 / math.sqrt(math.sqrt(ch))   # matches QKVAttentionLegacy

    def kernel(x_ref, k_ref, vT_ref, gmat_ref, g_ref, b_ref,
               wq_ref, bq_ref, wp_ref, bp_ref, out_ref):
        x2 = x_ref[0]                                           # (T, C) f32

        # ---- GroupNorm32 (two-pass; group reduce via (C,C) same-group matmul)
        gmat = gmat_ref[...]
        cnt = float(cpg * T)
        mean = jnp.dot(jnp.sum(x2, axis=0, keepdims=True), gmat,
                       preferred_element_type=jnp.float32) / cnt
        d = x2 - mean
        var = jnp.dot(jnp.sum(d * d, axis=0, keepdims=True), gmat,
                      preferred_element_type=jnp.float32) / cnt
        xn = d * jax.lax.rsqrt(var + eps) * g_ref[...] + b_ref[...]

        # ---- q projection: only q rows of the 1x1 qkv conv, fused over heads.
        # (k/v rows of that conv are discarded by the module when external
        #  key/value are supplied, so they are never computed.)
        q_all = (jnp.dot(xn, wq_ref[...],
                         preferred_element_type=jnp.float32) + bq_ref[...]) * scale
        k_all = k_ref[0] * scale                                # (heads, ch, S)

        # ---- per-head attention, accumulating proj_out directly into (T, C)
        hacc = jnp.zeros((T, C), jnp.float32)
        for h in range(num_heads):                              # 4 heads, unrolled
            qh = q_all[:, h * ch:(h + 1) * ch]                  # (T, ch)
            sc = jnp.dot(qh, k_all[h],
                         preferred_element_type=jnp.float32)    # (T, S) lane-dense
            m = jnp.max(sc, axis=-1, keepdims=True)
            e = jnp.exp(sc - m)
            p = e / jnp.sum(e, axis=-1, keepdims=True)          # softmax in f32
            ah = jnp.dot(p, vT_ref[0, h],
                         preferred_element_type=jnp.float32)    # (T, ch)
            hacc = hacc + jnp.dot(ah, wp_ref[h],
                                  preferred_element_type=jnp.float32)

        # ---- proj_out bias + residual
        out_ref[0] = x2 + hacc + bp_ref[...]

    return kernel


def attention_block_pallas(x_nchw, k, v, params, num_heads=4, groups=32):
    """x: (B, C, H, W); k, v: (B*num_heads, ch, S).  Returns (out, k, v)."""
    B, C, Hs, Ws = x_nchw.shape
    T = Hs * Ws
    ch = C // num_heads
    S = k.shape[-1]

    # channel-last activations: (B, T, C)
    x_tc = jnp.transpose(x_nchw.reshape(B, C, T), (0, 2, 1)).astype(jnp.float32)

    # same-group indicator matrix for the GroupNorm reduction
    cpg = C // groups
    cidx = np.arange(C)
    gmat = jnp.asarray((cidx[:, None] // cpg == cidx[None, :] // cpg),
                       dtype=jnp.float32)

    # q-only slice of the qkv 1x1 conv, reordered head-major:
    # output channel (h*ch + c)  <-  qkv conv row (h*3*ch + c)
    q_rows = (cidx // ch) * (3 * ch) + (cidx % ch)
    wq_t = params["w_qkv"][:, :, 0][q_rows].T                   # (C_in, C) for xn @ wq_t
    bq = params["b_qkv"][q_rows].reshape(1, C)

    # proj_out as right-multiply, split per head along its input channels
    wp_heads = params["w_proj"][:, :, 0].T.reshape(num_heads, ch, C)
    bp = params["b_proj"].reshape(1, C)

    gn_g = params["gn_g"].reshape(1, C)
    gn_b = params["gn_b"].reshape(1, C)

    k_b = k.reshape(B, num_heads, ch, S).astype(jnp.float32)                  # (B,H,ch,S)
    vT_b = jnp.transpose(v.reshape(B, num_heads, ch, S), (0, 1, 3, 2)).astype(jnp.float32)

    kernel = make_attention_block_kernel(C, T, S, num_heads, groups)

    full = lambda shape: pl.BlockSpec(shape, lambda n, _s=shape: (0,) * len(_s))
    out_tc = pl.pallas_call(
        kernel,
        out_shape=jax.ShapeDtypeStruct((B, T, C), jnp.float32),
        grid_spec=pltpu.PrefetchScalarGridSpec(
            num_scalar_prefetch=0,
            grid=(B,),
            in_specs=[
                pl.BlockSpec((1, T, C), lambda n: (n, 0, 0)),                 # x
                pl.BlockSpec((1, num_heads, ch, S), lambda n: (n, 0, 0, 0)),  # k
                pl.BlockSpec((1, num_heads, S, ch), lambda n: (n, 0, 0, 0)),  # v^T
                full((C, C)),                                                 # gmat
                full((1, C)), full((1, C)),                                   # GN gamma/beta
                full((C, C)), full((1, C)),                                   # q-proj w/b
                full((num_heads, ch, C)), full((1, C)),                       # proj_out w/b
            ],
            out_specs=pl.BlockSpec((1, T, C), lambda n: (n, 0, 0)),
        ),
        # batch axis is fully independent -> megacore sharding on v7x
        compiler_params=pltpu.CompilerParams(dimension_semantics=("parallel",)),
    )(x_tc, k_b, vT_b, gmat, gn_g, gn_b, wq_t, bq, wp_heads, bp)

    out = jnp.transpose(out_tc, (0, 2, 1)).reshape(B, C, Hs, Ws)
    # module returns (out, k, v) with k, v passed through unchanged
    return out, k, v


def attention_block_reference(x, k, v, params, num_heads=4, groups=32):
    """Pure-JAX reference of AttentionBlock._forward (for verification)."""
    B, C, Hs, Ws = x.shape
    T = Hs * Ws
    ch = C // num_heads
    eps = 1e-5

    xf = x.reshape(B, C, T).astype(jnp.float32)
    # GroupNorm32
    g = xf.reshape(B, groups, (C // groups) * T)
    mean = g.mean(axis=-1, keepdims=True)
    var = ((g - mean) ** 2).mean(axis=-1, keepdims=True)
    xn = ((g - mean) * jax.lax.rsqrt(var + eps)).reshape(B, C, T)
    xn = xn * params["gn_g"][None, :, None] + params["gn_b"][None, :, None]
    # qkv 1x1 conv
    qkv = (jnp.einsum("oc,bct->bot", params["w_qkv"][:, :, 0], xn)
           + params["b_qkv"][None, :, None])
    # QKVAttentionLegacy with external key/value
    q = qkv.reshape(B * num_heads, 3 * ch, T)[:, :ch, :]
    scale = 1.0 / math.sqrt(math.sqrt(ch))
    w = jnp.einsum("bct,bcs->bts", q * scale, k * scale)
    w = jax.nn.softmax(w.astype(jnp.float32), axis=-1)
    a = jnp.einsum("bts,bcs->bct", w, v).reshape(B, C, T)
    # proj_out 1x1 conv + residual
    h = (jnp.einsum("oc,bct->bot", params["w_proj"][:, :, 0], a)
         + params["b_proj"][None, :, None])
    return (xf + h).reshape(B, C, Hs, Ws)


if __name__ == "__main__":
    # channels must be divisible by 32 (GroupNorm32); heads=4 -> head dim 16
    B, C, Hs, Ws = 2, 64, 16, 16
    num_heads = 4
    ch = C // num_heads
    T = Hs * Ws
    S = T   # external key/value sequence length

    key = jax.random.PRNGKey(0)
    ks = jax.random.split(key, 9)
    x = jax.random.normal(ks[0], (B, C, Hs, Ws), jnp.float32)
    k_in = jax.random.normal(ks[1], (B * num_heads, ch, S), jnp.float32)
    v_in = jax.random.normal(ks[2], (B * num_heads, ch, S), jnp.float32)

    params = {
        "gn_g": 1.0 + 0.1 * jax.random.normal(ks[3], (C,), jnp.float32),
        "gn_b": 0.1 * jax.random.normal(ks[4], (C,), jnp.float32),
        "w_qkv": 0.05 * jax.random.normal(ks[5], (3 * C, C, 1), jnp.float32),
        "b_qkv": 0.1 * jax.random.normal(ks[6], (3 * C,), jnp.float32),
        # Note: the PyTorch module zero-inits proj_out (zero_module); nonzero
        # deterministic weights here so the whole compute path is exercised.
        "w_proj": 0.05 * jax.random.normal(ks[7], (C, C, 1), jnp.float32),
        "b_proj": 0.1 * jax.random.normal(ks[8], (C,), jnp.float32),
    }
    # TODO(synk): gradient checkpointing (CheckpointFunction) is a training-time
    # autograd detail with no forward-pass effect; not modeled.

    out, k_out, v_out = attention_block_pallas(x, k_in, v_in, params,
                                               num_heads=num_heads)
    out = jax.block_until_ready(out)

    out_ref = jax.block_until_ready(
        attention_block_reference(x, k_in, v_in, params, num_heads=num_heads))
    np.testing.assert_allclose(np.asarray(out), np.asarray(out_ref),
                               rtol=2e-3, atol=2e-3)

    print("KERNEL_OK")
</pallas_src>

<mosaic_0001>
module attributes {stable_mosaic.version = 11 : i64} {
  func.func @kernel(%arg0: i32, %arg1: memref<1x256x64xf32, #tpu.memory_space<vmem>>, %arg2: memref<1x4x16x256xf32, #tpu.memory_space<vmem>>, %arg3: memref<1x4x256x16xf32, #tpu.memory_space<vmem>>, %arg4: memref<64x64xf32, #tpu.memory_space<vmem>>, %arg5: memref<1x64xf32, #tpu.memory_space<vmem>>, %arg6: memref<1x64xf32, #tpu.memory_space<vmem>>, %arg7: memref<64x64xf32, #tpu.memory_space<vmem>>, %arg8: memref<1x64xf32, #tpu.memory_space<vmem>>, %arg9: memref<4x16x64xf32, #tpu.memory_space<vmem>>, %arg10: memref<1x64xf32, #tpu.memory_space<vmem>>, %arg11: memref<1x256x64xf32, #tpu.memory_space<vmem>>) attributes {dimension_semantics = [#tpu.dimension_semantics<parallel>], iteration_bounds = array<i64: 2>, scalar_prefetch = 0 : i64, scratch_operands = 0 : i64, tpu.core_type = #tpu.core_type<tc>, window_params = [{transform_indices = @transform_0, window_bounds = array<i64: 1, 256, 64>}, {transform_indices = @transform_1, window_bounds = array<i64: 1, 4, 16, 256>}, {transform_indices = @transform_2, window_bounds = array<i64: 1, 4, 256, 16>}, {pipeline_mode = #tpu.pipeline_mode<synchronous>, transform_indices = @transform_3, window_bounds = array<i64: 64, 64>}, {pipeline_mode = #tpu.pipeline_mode<synchronous>, transform_indices = @transform_4, window_bounds = array<i64: 1, 64>}, {pipeline_mode = #tpu.pipeline_mode<synchronous>, transform_indices = @transform_5, window_bounds = array<i64: 1, 64>}, {pipeline_mode = #tpu.pipeline_mode<synchronous>, transform_indices = @transform_6, window_bounds = array<i64: 64, 64>}, {pipeline_mode = #tpu.pipeline_mode<synchronous>, transform_indices = @transform_7, window_bounds = array<i64: 1, 64>}, {pipeline_mode = #tpu.pipeline_mode<synchronous>, transform_indices = @transform_8, window_bounds = array<i64: 4, 16, 64>}, {pipeline_mode = #tpu.pipeline_mode<synchronous>, transform_indices = @transform_9, window_bounds = array<i64: 1, 64>}, {transform_indices = @transform_10, window_bounds = array<i64: 1, 256, 64>}]} {
    %c0 = arith.constant 0 : index
    %c0_0 = arith.constant 0 : index
    %c0_1 = arith.constant 0 : index
    %0 = vector.load %arg1[%c0, %c0_0, %c0_1] : memref<1x256x64xf32, #tpu.memory_space<vmem>>, vector<1x256x64xf32>
    %1 = vector.shape_cast %0 : vector<1x256x64xf32> to vector<256x64xf32>
    %c0_2 = arith.constant 0 : index
    %c0_3 = arith.constant 0 : index
    %2 = vector.load %arg4[%c0_2, %c0_3] : memref<64x64xf32, #tpu.memory_space<vmem>>, vector<64x64xf32>
    %cst = arith.constant dense<0.000000e+00> : vector<64xf32>
    %3 = vector.multi_reduction <add>, %1, %cst [0] : vector<256x64xf32> to vector<64xf32>
    %4 = vector.shape_cast %3 : vector<64xf32> to vector<1x64xf32>
    %cst_4 = arith.constant dense<0.000000e+00> : vector<1x64xf32>
    %5 = tpu.matmul %4, %2, %cst_4 {dimension_numbers = #tpu.dot_dimension_numbers<[1], [0], [0], [1], [0, 0, 1, 1], [], []>} : vector<1x64xf32>, vector<64x64xf32>, vector<1x64xf32> -> vector<1x64xf32>
    %cst_5 = arith.constant 5.120000e+02 : f32
    %6 = vector.broadcast %cst_5 : f32 to vector<1x64xf32>
    %7 = arith.divf %5, %6 : vector<1x64xf32>
    %8 = vector.broadcast %7 : vector<1x64xf32> to vector<256x64xf32>
    %9 = arith.subf %1, %8 : vector<256x64xf32>
    %10 = arith.mulf %9, %9 : vector<256x64xf32>
    %cst_6 = arith.constant dense<0.000000e+00> : vector<64xf32>
    %11 = vector.multi_reduction <add>, %10, %cst_6 [0] : vector<256x64xf32> to vector<64xf32>
    %12 = vector.shape_cast %11 : vector<64xf32> to vector<1x64xf32>
    %cst_7 = arith.constant dense<0.000000e+00> : vector<1x64xf32>
    %13 = tpu.matmul %12, %2, %cst_7 {dimension_numbers = #tpu.dot_dimension_numbers<[1], [0], [0], [1], [0, 0, 1, 1], [], []>} : vector<1x64xf32>, vector<64x64xf32>, vector<1x64xf32> -> vector<1x64xf32>
    %cst_8 = arith.constant 5.120000e+02 : f32
    %14 = vector.broadcast %cst_8 : f32 to vector<1x64xf32>
    %15 = arith.divf %13, %14 : vector<1x64xf32>
    %cst_9 = arith.constant 9.99999974E-6 : f32
    %16 = vector.broadcast %cst_9 : f32 to vector<1x64xf32>
    %17 = arith.addf %15, %16 : vector<1x64xf32>
    %18 = math.rsqrt %17 : vector<1x64xf32>
    %19 = vector.broadcast %18 : vector<1x64xf32> to vector<256x64xf32>
    %20 = arith.mulf %9, %19 : vector<256x64xf32>
    %c0_10 = arith.constant 0 : index
    %c0_11 = arith.constant 0 : index
    %21 = vector.load %arg5[%c0_10, %c0_11] : memref<1x64xf32, #tpu.memory_space<vmem>>, vector<1x64xf32>
    %22 = vector.broadcast %21 : vector<1x64xf32> to vector<256x64xf32>
    %23 = arith.mulf %20, %22 : vector<256x64xf32>
    %c0_12 = arith.constant 0 : index
    %c0_13 = arith.constant 0 : index
    %24 = vector.load %arg6[%c0_12, %c0_13] : memref<1x64xf32, #tpu.memory_space<vmem>>, vector<1x64xf32>
    %25 = vector.broadcast %24 : vector<1x64xf32> to vector<256x64xf32>
    %26 = arith.addf %23, %25 : vector<256x64xf32>
    %c0_14 = arith.constant 0 : index
    %c0_15 = arith.constant 0 : index
    %27 = vector.load %arg7[%c0_14, %c0_15] : memref<64x64xf32, #tpu.memory_space<vmem>>, vector<64x64xf32>
    %cst_16 = arith.constant dense<0.000000e+00> : vector<256x64xf32>
    %28 = tpu.matmul %26, %27, %cst_16 {dimension_numbers = #tpu.dot_dimension_numbers<[1], [0], [0], [1], [0, 0, 1, 1], [], []>} : vector<256x64xf32>, vector<64x64xf32>, vector<256x64xf32> -> vector<256x64xf32>
    %c0_17 = arith.constant 0 : index
    %c0_18 = arith.constant 0 : index
    %29 = vector.load %arg8[%c0_17, %c0_18] : memref<1x64xf32, #tpu.memory_space<vmem>>, vector<1x64xf32>
    %30 = vector.broadcast %29 : vector<1x64xf32> to vector<256x64xf32>
    %31 = arith.addf %28, %30 : vector<256x64xf32>
    %cst_19 = arith.constant 5.000000e-01 : f32
    %32 = vector.broadcast %cst_19 : f32 to vector<256x64xf32>
    %33 = arith.mulf %31, %32 : vector<256x64xf32>
    %c0_20 = arith.constant 0 : index
    %c0_21 = arith.constant 0 : index
    %c0_22 = arith.constant 0 : index
    %c0_23 = arith.constant 0 : index
    %34 = vector.load %arg2[%c0_20, %c0_21, %c0_22, %c0_23] : memref<1x4x16x256xf32, #tpu.memory_space<vmem>>, vector<1x4x16x256xf32>
    %35 = vector.shape_cast %34 : vector<1x4x16x256xf32> to vector<4x16x256xf32>
    %cst_24 = arith.constant 5.000000e-01 : f32
    %36 = vector.broadcast %cst_24 : f32 to vector<4x16x256xf32>
    %37 = arith.mulf %35, %36 : vector<4x16x256xf32>
    %cst_25 = arith.constant 0.000000e+00 : f32
    %38 = vector.broadcast %cst_25 : f32 to vector<256x64xf32>
    %39 = vector.extract_strided_slice %33 {offsets = [0, 0], sizes = [256, 16], strides = [1, 1]} : vector<256x64xf32> to vector<256x16xf32>
    %40 = vector.extract_strided_slice %37 {offsets = [0, 0, 0], sizes = [1, 16, 256], strides = [1, 1, 1]} : vector<4x16x256xf32> to vector<1x16x256xf32>
    %41 = vector.shape_cast %40 : vector<1x16x256xf32> to vector<16x256xf32>
    %cst_26 = arith.constant dense<0.000000e+00> : vector<256x256xf32>
    %42 = tpu.matmul %39, %41, %cst_26 {dimension_numbers = #tpu.dot_dimension_numbers<[1], [0], [0], [1], [0, 0, 1, 1], [], []>} : vector<256x16xf32>, vector<16x256xf32>, vector<256x256xf32> -> vector<256x256xf32>
    %cst_27 = arith.constant dense<0xFF800000> : vector<256xf32>
    %43 = vector.multi_reduction <maximumf>, %42, %cst_27 [1] : vector<256x256xf32> to vector<256xf32>
    %44 = vector.shape_cast %43 : vector<256xf32> to vector<256x1xf32>
    %45 = vector.broadcast %44 : vector<256x1xf32> to vector<256x256xf32>
    %46 = arith.subf %42, %45 : vector<256x256xf32>
    %47 = math.exp %46 : vector<256x256xf32>
    %cst_28 = arith.constant dense<0.000000e+00> : vector<256xf32>
    %48 = vector.multi_reduction <add>, %47, %cst_28 [1] : vector<256x256xf32> to vector<256xf32>
    %49 = vector.shape_cast %48 : vector<256xf32> to vector<256x1xf32>
    %50 = vector.broadcast %49 : vector<256x1xf32> to vector<256x256xf32>
    %51 = arith.divf %47, %50 : vector<256x256xf32>
    %c0_29 = arith.constant 0 : index
    %c0_30 = arith.constant 0 : index
    %c0_31 = arith.constant 0 : index
    %c0_32 = arith.constant 0 : index
    %52 = vector.load %arg3[%c0_29, %c0_30, %c0_31, %c0_32] : memref<1x4x256x16xf32, #tpu.memory_space<vmem>>, vector<1x1x256x16xf32>
    %53 = vector.shape_cast %52 : vector<1x1x256x16xf32> to vector<256x16xf32>
    %cst_33 = arith.constant dense<0.000000e+00> : vector<256x16xf32>
    %54 = tpu.matmul %51, %53, %cst_33 {dimension_numbers = #tpu.dot_dimension_numbers<[1], [0], [0], [1], [0, 0, 1, 1], [], []>} : vector<256x256xf32>, vector<256x16xf32>, vector<256x16xf32> -> vector<256x16xf32>
    %c0_34 = arith.constant 0 : index
    %c0_35 = arith.constant 0 : index
    %c0_36 = arith.constant 0 : index
    %55 = vector.load %arg9[%c0_34, %c0_35, %c0_36] : memref<4x16x64xf32, #tpu.memory_space<vmem>>, vector<1x16x64xf32>
    %56 = vector.shape_cast %55 : vector<1x16x64xf32> to vector<16x64xf32>
    %cst_37 = arith.constant dense<0.000000e+00> : vector<256x64xf32>
    %57 = tpu.matmul %54, %56, %cst_37 {dimension_numbers = #tpu.dot_dimension_numbers<[1], [0], [0], [1], [0, 0, 1, 1], [], []>} : vector<256x16xf32>, vector<16x64xf32>, vector<256x64xf32> -> vector<256x64xf32>
    %58 = arith.addf %38, %57 : vector<256x64xf32>
    %59 = vector.extract_strided_slice %33 {offsets = [0, 16], sizes = [256, 16], strides = [1, 1]} : vector<256x64xf32> to vector<256x16xf32>
    %60 = vector.extract_strided_slice %37 {offsets = [1, 0, 0], sizes = [1, 16, 256], strides = [1, 1, 1]} : vector<4x16x256xf32> to vector<1x16x256xf32>
    %61 = vector.shape_cast %60 : vector<1x16x256xf32> to vector<16x256xf32>
    %cst_38 = arith.constant dense<0.000000e+00> : vector<256x256xf32>
    %62 = tpu.matmul %59, %61, %cst_38 {dimension_numbers = #tpu.dot_dimension_numbers<[1], [0], [0], [1], [0, 0, 1, 1], [], []>} : vector<256x16xf32>, vector<16x256xf32>, vector<256x256xf32> -> vector<256x256xf32>
    %cst_39 = arith.constant dense<0xFF800000> : vector<256xf32>
    %63 = vector.multi_reduction <maximumf>, %62, %cst_39 [1] : vector<256x256xf32> to vector<256xf32>
    %64 = vector.shape_cast %63 : vector<256xf32> to vector<256x1xf32>
    %65 = vector.broadcast %64 : vector<256x1xf32> to vector<256x256xf32>
    %66 = arith.subf %62, %65 : vector<256x256xf32>
    %67 = math.exp %66 : vector<256x256xf32>
    %cst_40 = arith.constant dense<0.000000e+00> : vector<256xf32>
    %68 = vector.multi_reduction <add>, %67, %cst_40 [1] : vector<256x256xf32> to vector<256xf32>
    %69 = vector.shape_cast %68 : vector<256xf32> to vector<256x1xf32>
    %70 = vector.broadcast %69 : vector<256x1xf32> to vector<256x256xf32>
    %71 = arith.divf %67, %70 : vector<256x256xf32>
    %c0_41 = arith.constant 0 : index
    %c1 = arith.constant 1 : index
    %c0_42 = arith.constant 0 : index
    %c0_43 = arith.constant 0 : index
    %72 = vector.load %arg3[%c0_41, %c1, %c0_42, %c0_43] : memref<1x4x256x16xf32, #tpu.memory_space<vmem>>, vector<1x1x256x16xf32>
    %73 = vector.shape_cast %72 : vector<1x1x256x16xf32> to vector<256x16xf32>
    %cst_44 = arith.constant dense<0.000000e+00> : vector<256x16xf32>
    %74 = tpu.matmul %71, %73, %cst_44 {dimension_numbers = #tpu.dot_dimension_numbers<[1], [0], [0], [1], [0, 0, 1, 1], [], []>} : vector<256x256xf32>, vector<256x16xf32>, vector<256x16xf32> -> vector<256x16xf32>
    %c1_45 = arith.constant 1 : index
    %c0_46 = arith.constant 0 : index
    %c0_47 = arith.constant 0 : index
    %75 = vector.load %arg9[%c1_45, %c0_46, %c0_47] : memref<4x16x64xf32, #tpu.memory_space<vmem>>, vector<1x16x64xf32>
    %76 = vector.shape_cast %75 : vector<1x16x64xf32> to vector<16x64xf32>
    %cst_48 = arith.constant dense<0.000000e+00> : vector<256x64xf32>
    %77 = tpu.matmul %74, %76, %cst_48 {dimension_numbers = #tpu.dot_dimension_numbers<[1], [0], [0], [1], [0, 0, 1, 1], [], []>} : vector<256x16xf32>, vector<16x64xf32>, vector<256x64xf32> -> vector<256x64xf32>
    %78 = arith.addf %58, %77 : vector<256x64xf32>
    %79 = vector.extract_strided_slice %33 {offsets = [0, 32], sizes = [256, 16], strides = [1, 1]} : vector<256x64xf32> to vector<256x16xf32>
    %80 = vector.extract_strided_slice %37 {offsets = [2, 0, 0], sizes = [1, 16, 256], strides = [1, 1, 1]} : vector<4x16x256xf32> to vector<1x16x256xf32>
    %81 = vector.shape_cast %80 : vector<1x16x256xf32> to vector<16x256xf32>
    %cst_49 = arith.constant dense<0.000000e+00> : vector<256x256xf32>
    %82 = tpu.matmul %79, %81, %cst_49 {dimension_numbers = #tpu.dot_dimension_numbers<[1], [0], [0], [1], [0, 0, 1, 1], [], []>} : vector<256x16xf32>, vector<16x256xf32>, vector<256x256xf32> -> vector<256x256xf32>
    %cst_50 = arith.constant dense<0xFF800000> : vector<256xf32>
    %83 = vector.multi_reduction <maximumf>, %82, %cst_50 [1] : vector<256x256xf32> to vector<256xf32>
    %84 = vector.shape_cast %83 : vector<256xf32> to vector<256x1xf32>
    %85 = vector.broadcast %84 : vector<256x1xf32> to vector<256x256xf32>
    %86 = arith.subf %82, %85 : vector<256x256xf32>
    %87 = math.exp %86 : vector<256x256xf32>
    %cst_51 = arith.constant dense<0.000000e+00> : vector<256xf32>
    %88 = vector.multi_reduction <add>, %87, %cst_51 [1] : vector<256x256xf32> to vector<256xf32>
    %89 = vector.shape_cast %88 : vector<256xf32> to vector<256x1xf32>
    %90 = vector.broadcast %89 : vector<256x1xf32> to vector<256x256xf32>
    %91 = arith.divf %87, %90 : vector<256x256xf32>
    %c0_52 = arith.constant 0 : index
    %c2 = arith.constant 2 : index
    %c0_53 = arith.constant 0 : index
    %c0_54 = arith.constant 0 : index
    %92 = vector.load %arg3[%c0_52, %c2, %c0_53, %c0_54] : memref<1x4x256x16xf32, #tpu.memory_space<vmem>>, vector<1x1x256x16xf32>
    %93 = vector.shape_cast %92 : vector<1x1x256x16xf32> to vector<256x16xf32>
    %cst_55 = arith.constant dense<0.000000e+00> : vector<256x16xf32>
    %94 = tpu.matmul %91, %93, %cst_55 {dimension_numbers = #tpu.dot_dimension_numbers<[1], [0], [0], [1], [0, 0, 1, 1], [], []>} : vector<256x256xf32>, vector<256x16xf32>, vector<256x16xf32> -> vector<256x16xf32>
    %c2_56 = arith.constant 2 : index
    %c0_57 = arith.constant 0 : index
    %c0_58 = arith.constant 0 : index
    %95 = vector.load %arg9[%c2_56, %c0_57, %c0_58] : memref<4x16x64xf32, #tpu.memory_space<vmem>>, vector<1x16x64xf32>
    %96 = vector.shape_cast %95 : vector<1x16x64xf32> to vector<16x64xf32>
    %cst_59 = arith.constant dense<0.000000e+00> : vector<256x64xf32>
    %97 = tpu.matmul %94, %96, %cst_59 {dimension_numbers = #tpu.dot_dimension_numbers<[1], [0], [0], [1], [0, 0, 1, 1], [], []>} : vector<256x16xf32>, vector<16x64xf32>, vector<256x64xf32> -> vector<256x64xf32>
    %98 = arith.addf %78, %97 : vector<256x64xf32>
    %99 = vector.extract_strided_slice %33 {offsets = [0, 48], sizes = [256, 16], strides = [1, 1]} : vector<256x64xf32> to vector<256x16xf32>
    %100 = vector.extract_strided_slice %37 {offsets = [3, 0, 0], sizes = [1, 16, 256], strides = [1, 1, 1]} : vector<4x16x256xf32> to vector<1x16x256xf32>
    %101 = vector.shape_cast %100 : vector<1x16x256xf32> to vector<16x256xf32>
    %cst_60 = arith.constant dense<0.000000e+00> : vector<256x256xf32>
    %102 = tpu.matmul %99, %101, %cst_60 {dimension_numbers = #tpu.dot_dimension_numbers<[1], [0], [0], [1], [0, 0, 1, 1], [], []>} : vector<256x16xf32>, vector<16x256xf32>, vector<256x256xf32> -> vector<256x256xf32>
    %cst_61 = arith.constant dense<0xFF800000> : vector<256xf32>
    %103 = vector.multi_reduction <maximumf>, %102, %cst_61 [1] : vector<256x256xf32> to vector<256xf32>
    %104 = vector.shape_cast %103 : vector<256xf32> to vector<256x1xf32>
    %105 = vector.broadcast %104 : vector<256x1xf32> to vector<256x256xf32>
    %106 = arith.subf %102, %105 : vector<256x256xf32>
    %107 = math.exp %106 : vector<256x256xf32>
    %cst_62 = arith.constant dense<0.000000e+00> : vector<256xf32>
    %108 = vector.multi_reduction <add>, %107, %cst_62 [1] : vector<256x256xf32> to vector<256xf32>
    %109 = vector.shape_cast %108 : vector<256xf32> to vector<256x1xf32>
    %110 = vector.broadcast %109 : vector<256x1xf32> to vector<256x256xf32>
    %111 = arith.divf %107, %110 : vector<256x256xf32>
    %c0_63 = arith.constant 0 : index
    %c3 = arith.constant 3 : index
    %c0_64 = arith.constant 0 : index
    %c0_65 = arith.constant 0 : index
    %112 = vector.load %arg3[%c0_63, %c3, %c0_64, %c0_65] : memref<1x4x256x16xf32, #tpu.memory_space<vmem>>, vector<1x1x256x16xf32>
    %113 = vector.shape_cast %112 : vector<1x1x256x16xf32> to vector<256x16xf32>
    %cst_66 = arith.constant dense<0.000000e+00> : vector<256x16xf32>
    %114 = tpu.matmul %111, %113, %cst_66 {dimension_numbers = #tpu.dot_dimension_numbers<[1], [0], [0], [1], [0, 0, 1, 1], [], []>} : vector<256x256xf32>, vector<256x16xf32>, vector<256x16xf32> -> vector<256x16xf32>
    %c3_67 = arith.constant 3 : index
    %c0_68 = arith.constant 0 : index
    %c0_69 = arith.constant 0 : index
    %115 = vector.load %arg9[%c3_67, %c0_68, %c0_69] : memref<4x16x64xf32, #tpu.memory_space<vmem>>, vector<1x16x64xf32>
    %116 = vector.shape_cast %115 : vector<1x16x64xf32> to vector<16x64xf32>
    %cst_70 = arith.constant dense<0.000000e+00> : vector<256x64xf32>
    %117 = tpu.matmul %114, %116, %cst_70 {dimension_numbers = #tpu.dot_dimension_numbers<[1], [0], [0], [1], [0, 0, 1, 1], [], []>} : vector<256x16xf32>, vector<16x64xf32>, vector<256x64xf32> -> vector<256x64xf32>
    %118 = arith.addf %98, %117 : vector<256x64xf32>
    %119 = arith.addf %1, %118 : vector<256x64xf32>
    %c0_71 = arith.constant 0 : index
    %c0_72 = arith.constant 0 : index
    %120 = vector.load %arg10[%c0_71, %c0_72] : memref<1x64xf32, #tpu.memory_space<vmem>>, vector<1x64xf32>
    %121 = vector.broadcast %120 : vector<1x64xf32> to vector<256x64xf32>
    %122 = arith.addf %119, %121 : vector<256x64xf32>
    %c0_73 = arith.constant 0 : index
    %c0_74 = arith.constant 0 : index
    %c0_75 = arith.constant 0 : index
    %123 = vector.load %arg11[%c0_73, %c0_74, %c0_75] : memref<1x256x64xf32, #tpu.memory_space<vmem>>, vector<1x256x64xf32>
    %124 = vector.shape_cast %123 : vector<1x256x64xf32> to vector<256x64xf32>
    %125 = vector.shape_cast %122 : vector<256x64xf32> to vector<1x256x64xf32>
    tpu.vector_store %arg11[%c0_73, %c0_74, %c0_75], %125 {strides = array<i32>} : memref<1x256x64xf32, #tpu.memory_space<vmem>>, vector<1x256x64xf32>,
    return
  }
  func.func @transform_0(%arg0: i32) -> (i32, i32, i32) {
    %c0_i32 = arith.constant 0 : i32
    %c0_i32_0 = arith.constant 0 : i32
    %c0_i32_1 = arith.constant 0 : i32
    return %arg0, %c0_i32, %c0_i32_0 : i32, i32, i32
  }
  func.func @transform_1(%arg0: i32) -> (i32, i32, i32, i32) {
    %c0_i32 = arith.constant 0 : i32
    %c0_i32_0 = arith.constant 0 : i32
    %c0_i32_1 = arith.constant 0 : i32
    %c0_i32_2 = arith.constant 0 : i32
    return %arg0, %c0_i32, %c0_i32_0, %c0_i32_1 : i32, i32, i32, i32
  }
  func.func @transform_2(%arg0: i32) -> (i32, i32, i32, i32) {
    %c0_i32 = arith.constant 0 : i32
    %c0_i32_0 = arith.constant 0 : i32
    %c0_i32_1 = arith.constant 0 : i32
    %c0_i32_2 = arith.constant 0 : i32
    return %arg0, %c0_i32, %c0_i32_0, %c0_i32_1 : i32, i32, i32, i32
  }
  func.func @transform_3(%arg0: i32) -> (i32, i32) {
    %c0_i32 = arith.constant 0 : i32
    %c0_i32_0 = arith.constant 0 : i32
    %c0_i32_1 = arith.constant 0 : i32
    return %c0_i32, %c0_i32_0 : i32, i32
  }
  func.func @transform_4(%arg0: i32) -> (i32, i32) {
    %c0_i32 = arith.constant 0 : i32
    %c0_i32_0 = arith.constant 0 : i32
    %c0_i32_1 = arith.constant 0 : i32
    return %c0_i32, %c0_i32_0 : i32, i32
  }
  func.func @transform_5(%arg0: i32) -> (i32, i32) {
    %c0_i32 = arith.constant 0 : i32
    %c0_i32_0 = arith.constant 0 : i32
    %c0_i32_1 = arith.constant 0 : i32
    return %c0_i32, %c0_i32_0 : i32, i32
  }
  func.func @transform_6(%arg0: i32) -> (i32, i32) {
    %c0_i32 = arith.constant 0 : i32
    %c0_i32_0 = arith.constant 0 : i32
    %c0_i32_1 = arith.constant 0 : i32
    return %c0_i32, %c0_i32_0 : i32, i32
  }
  func.func @transform_7(%arg0: i32) -> (i32, i32) {
    %c0_i32 = arith.constant 0 : i32
    %c0_i32_0 = arith.constant 0 : i32
    %c0_i32_1 = arith.constant 0 : i32
    return %c0_i32, %c0_i32_0 : i32, i32
  }
  func.func @transform_8(%arg0: i32) -> (i32, i32, i32) {
    %c0_i32 = arith.constant 0 : i32
    %c0_i32_0 = arith.constant 0 : i32
    %c0_i32_1 = arith.constant 0 : i32
    %c0_i32_2 = arith.constant 0 : i32
    return %c0_i32, %c0_i32_0, %c0_i32_1 : i32, i32, i32
  }
  func.func @transform_9(%arg0: i32) -> (i32, i32) {
    %c0_i32 = arith.constant 0 : i32
    %c0_i32_0 = arith.constant 0 : i32
    %c0_i32_1 = arith.constant 0 : i32
    return %c0_i32, %c0_i32_0 : i32, i32
  }
  func.func @transform_10(%arg0: i32) -> (i32, i32, i32) {
    %c0_i32 = arith.constant 0 : i32
    %c0_i32_0 = arith.constant 0 : i32
    %c0_i32_1 = arith.constant 0 : i32
    return %arg0, %c0_i32, %c0_i32_0 : i32, i32, i32
  }
}

</mosaic_0001>

<llo_original>
// kernel: tpu_custom_call.1
$region0: #{tpu_custom_call.1}
  #allocation0 [shape = 'u32[]', space=smem, size = 0x4, offset = 0x4, fixed_abs, tag = 'smem constant byte address 0x4 - core index']
  #allocation1 [shape = 'u32[144,128]{1,0:T(1,128)}', space=vmem, size = 0x12000, scoped, tag = 'internal scratch']
  %s0 = inlined_call_operand.vmem [shape: f32[2,256,64], index: 0, kind: input, shape index: {}]
  %s1 = inlined_call_operand.vmem [shape: f32[2,4,16,256], index: 1, kind: input, shape index: {}]
  %s2 = inlined_call_operand.vmem [shape: f32[2,4,256,16], index: 2, kind: input, shape index: {}]
  %s3 = inlined_call_operand.vmem [shape: f32[64,64], index: 3, kind: input, shape index: {}]
  %s4 = inlined_call_operand.vmem [shape: f32[1,64], index: 4, kind: input, shape index: {}]
  %s5 = inlined_call_operand.vmem [shape: f32[1,64], index: 5, kind: input, shape index: {}]
  %s6 = inlined_call_operand.vmem [shape: f32[64,64], index: 6, kind: input, shape index: {}]
  %s7 = inlined_call_operand.vmem [shape: f32[1,64], index: 7, kind: input, shape index: {}]
  %s8 = inlined_call_operand.vmem [shape: f32[4,16,64], index: 8, kind: input, shape index: {}]
  %s9 = inlined_call_operand.vmem [shape: f32[1,64], index: 9, kind: input, shape index: {}]
  %s10 = inlined_call_operand.vmem [shape: f32[2,256,64], index: 10, kind: output, shape index: {}]
  %s11 = sld [smem:[#allocation0]]
  $region73: #{tpu_custom_call.1} parent=0
    _
  %s13 = ssub.s32 1, %s11
  %s14 = scalar_select 0, %s13, %s11
  loop: start=0, step=1, limit=4
  $region2: #{tpu_custom_call.1} parent=0 // loop_pre_header
    _
  $region3: #{tpu_custom_call.1} parent=0 // loop_header
    %s16 = sphi 0, %s20
    %p17 = scmp.ge.s32.totalorder %s16, 4
    %s26 = sphi 0, %s28
    %s29 = sphi 0, %s26
    %s30 = sphi 0, %s29
    %s46 = sphi 0, %s30
    %s52 = sphi 0, %s54
    %s55 = sphi 0, %s52
    %s56 = sphi 0, %s55
    %s72 = sphi 0, %s56
    %s78 = sphi 0, %s80
    %s81 = sphi 0, %s78
    %s82 = sphi 0, %s81
    %s98 = sphi 0, %s82
    %s102 = sphi 0, %s102
    %s104 = sphi 0, %s102
    %s105 = sphi 0, %s104
    %s119 = sphi 0, %s105
    %s123 = sphi 0, %s123
    %s125 = sphi 0, %s123
    %s126 = sphi 0, %s125
    %s140 = sphi 0, %s126
    %s144 = sphi 0, %s144
    %s146 = sphi 0, %s144
    %s147 = sphi 0, %s146
    %s161 = sphi 0, %s147
    %s165 = sphi 0, %s165
    %s167 = sphi 0, %s165
    %s168 = sphi 0, %s167
    %s182 = sphi 0, %s168
    %s186 = sphi 0, %s186
    %s188 = sphi 0, %s186
    %s189 = sphi 0, %s188
    %s203 = sphi 0, %s189
    %s207 = sphi 0, %s207
    %s209 = sphi 0, %s207
    %s210 = sphi 0, %s209
    %s224 = sphi 0, %s210
    %s228 = sphi 0, %s228
    %s230 = sphi 0, %s228
    %s231 = sphi 0, %s230
    %s245 = sphi 0, %s231
    %s251 = sphi 0, %s253
    %s254 = sphi 0, %s251
    %s255 = sphi 0, %s254
    %s271 = sphi 0, %s255
  $region4: #{tpu_custom_call.1} parent=0 // loop_header_branch
    %19 = sbr.rel (%p17) target = $region8
  $region5: #{tpu_custom_call.1} parent=0 // loop_body
    %s21 = ssub.s32 %s16, 1
    %s22 = ssub.s32 %s16, 2
    %s23 = sadd.s32 %s16, 1
    %s24 = ssub.s32 %s16, %s23
    %p25 = scmp.eq.s32.totalorder %s24, 0
    %s27 = sadd.s32 %s26, 1
    %s28 = scalar_select %p25, %s26, %s27
    %p31 = pneg %p25
    %p32 = scmp.eq.s32.totalorder %s16, 1
    %p33 = por %p31, %p32
    %p34 = scmp.ne.s32.totalorder %s26, %s29
    %p35 = scmp.eq.s32.totalorder %s16, 0
    %p36 = por %p34, %p35
    %p37 = scmp.ne.s32.totalorder %s26, %s29
    %p38 = scmp.eq.s32.totalorder %s21, 1
    %p39 = por %p37, %p38
    %p40 = scmp.ne.s32.totalorder %s29, %s30
    %p41 = scmp.eq.s32.totalorder %s21, 0
    %p42 = por %p40, %p41
    %p43 = scmp.ne.s32.totalorder %s29, %s30
    %p44 = scmp.eq.s32.totalorder %s22, 1
    %p45 = por %p43, %p44
    %p47 = scmp.ne.s32.totalorder %s30, %s46
    %p48 = scmp.eq.s32.totalorder %s22, 0
    %p49 = por %p47, %p48
    %s50 = ssub.s32 %s16, %s23
    %p51 = scmp.eq.s32.totalorder %s50, 0
    %s53 = sadd.s32 %s52, 1
    %s54 = scalar_select %p51, %s52, %s53
    %p57 = pneg %p51
    %p58 = scmp.eq.s32.totalorder %s16, 1
    %p59 = por %p57, %p58
    %p60 = scmp.ne.s32.totalorder %s52, %s55
    %p61 = scmp.eq.s32.totalorder %s16, 0
    %p62 = por %p60, %p61
    %p63 = scmp.ne.s32.totalorder %s52, %s55
    %p64 = scmp.eq.s32.totalorder %s21, 1
    %p65 = por %p63, %p64
    %p66 = scmp.ne.s32.totalorder %s55, %s56
    %p67 = scmp.eq.s32.totalorder %s21, 0
    %p68 = por %p66, %p67
    %p69 = scmp.ne.s32.totalorder %s55, %s56
    %p70 = scmp.eq.s32.totalorder %s22, 1
    %p71 = por %p69, %p70
    %p73 = scmp.ne.s32.totalorder %s56, %s72
    %p74 = scmp.eq.s32.totalorder %s22, 0
    %p75 = por %p73, %p74
    %s76 = ssub.s32 %s16, %s23
    %p77 = scmp.eq.s32.totalorder %s76, 0
    %s79 = sadd.s32 %s78, 1
    %s80 = scalar_select %p77, %s78, %s79
    %p83 = pneg %p77
    %p84 = scmp.eq.s32.totalorder %s16, 1
    %p85 = por %p83, %p84
    %p86 = scmp.ne.s32.totalorder %s78, %s81
    %p87 = scmp.eq.s32.totalorder %s16, 0
    %p88 = por %p86, %p87
    %p89 = scmp.ne.s32.totalorder %s78, %s81
    %p90 = scmp.eq.s32.totalorder %s21, 1
    %p91 = por %p89, %p90
    %p92 = scmp.ne.s32.totalorder %s81, %s82
    %p93 = scmp.eq.s32.totalorder %s21, 0
    %p94 = por %p92, %p93
    %p95 = scmp.ne.s32.totalorder %s81, %s82
    %p96 = scmp.eq.s32.totalorder %s22, 1
    %p97 = por %p95, %p96
    %p99 = scmp.ne.s32.totalorder %s82, %s98
    %p100 = scmp.eq.s32.totalorder %s22, 0
    %p101 = por %p99, %p100
    %s103 = sadd.s32 %s102, 1
    %p106 = scmp.eq.s32.totalorder %s16, 1
    %p107 = scmp.ne.s32.totalorder %s102, %s104
    %p108 = scmp.eq.s32.totalorder %s16, 0
    %p109 = por %p107, %p108
    %p110 = scmp.ne.s32.totalorder %s102, %s104
    %p111 = scmp.eq.s32.totalorder %s21, 1
    %p112 = por %p110, %p111
    %p113 = scmp.ne.s32.totalorder %s104, %s105
    %p114 = scmp.eq.s32.totalorder %s21, 0
    %p115 = por %p113, %p114
    %p116 = scmp.ne.s32.totalorder %s104, %s105
    %p117 = scmp.eq.s32.totalorder %s22, 1
    %p118 = por %p116, %p117
    %p120 = scmp.ne.s32.totalorder %s105, %s119
    %p121 = scmp.eq.s32.totalorder %s22, 0
    %p122 = por %p120, %p121
    %s124 = sadd.s32 %s123, 1
    %p127 = scmp.eq.s32.totalorder %s16, 1
    %p128 = scmp.ne.s32.totalorder %s123, %s125
    %p129 = scmp.eq.s32.totalorder %s16, 0
    %p130 = por %p128, %p129
    %p131 = scmp.ne.s32.totalorder %s123, %s125
    %p132 = scmp.eq.s32.totalorder %s21, 1
    %p133 = por %p131, %p132
    %p134 = scmp.ne.s32.totalorder %s125, %s126
    %p135 = scmp.eq.s32.totalorder %s21, 0
    %p136 = por %p134, %p135
    %p137 = scmp.ne.s32.totalorder %s125, %s126
    %p138 = scmp.eq.s32.totalorder %s22, 1
    %p139 = por %p137, %p138
    %p141 = scmp.ne.s32.totalorder %s126, %s140
    %p142 = scmp.eq.s32.totalorder %s22, 0
    %p143 = por %p141, %p142
    %s145 = sadd.s32 %s144, 1
    %p148 = scmp.eq.s32.totalorder %s16, 1
    %p149 = scmp.ne.s32.totalorder %s144, %s146
    %p150 = scmp.eq.s32.totalorder %s16, 0
    %p151 = por %p149, %p150
    %p152 = scmp.ne.s32.totalorder %s144, %s146
    %p153 = scmp.eq.s32.totalorder %s21, 1
    %p154 = por %p152, %p153
    %p155 = scmp.ne.s32.totalorder %s146, %s147
    %p156 = scmp.eq.s32.totalorder %s21, 0
    %p157 = por %p155, %p156
    %p158 = scmp.ne.s32.totalorder %s146, %s147
    %p159 = scmp.eq.s32.totalorder %s22, 1
    %p160 = por %p158, %p159
    %p162 = scmp.ne.s32.totalorder %s147, %s161
    %p163 = scmp.eq.s32.totalorder %s22, 0
    %p164 = por %p162, %p163
    %s166 = sadd.s32 %s165, 1
    %p169 = scmp.eq.s32.totalorder %s16, 1
    %p170 = scmp.ne.s32.totalorder %s165, %s167
    %p171 = scmp.eq.s32.totalorder %s16, 0
    %p172 = por %p170, %p171
    %p173 = scmp.ne.s32.totalorder %s165, %s167
    %p174 = scmp.eq.s32.totalorder %s21, 1
    %p175 = por %p173, %p174
    %p176 = scmp.ne.s32.totalorder %s167, %s168
    %p177 = scmp.eq.s32.totalorder %s21, 0
    %p178 = por %p176, %p177
    %p179 = scmp.ne.s32.totalorder %s167, %s168
    %p180 = scmp.eq.s32.totalorder %s22, 1
    %p181 = por %p179, %p180
    %p183 = scmp.ne.s32.totalorder %s168, %s182
    %p184 = scmp.eq.s32.totalorder %s22, 0
    %p185 = por %p183, %p184
    %s187 = sadd.s32 %s186, 1
    %p190 = scmp.eq.s32.totalorder %s16, 1
    %p191 = scmp.ne.s32.totalorder %s186, %s188
    %p192 = scmp.eq.s32.totalorder %s16, 0
    %p193 = por %p191, %p192
    %p194 = scmp.ne.s32.totalorder %s186, %s188
    %p195 = scmp.eq.s32.totalorder %s21, 1
    %p196 = por %p194, %p195
    %p197 = scmp.ne.s32.totalorder %s188, %s189
    %p198 = scmp.eq.s32.totalorder %s21, 0
    %p199 = por %p197, %p198
    %p200 = scmp.ne.s32.totalorder %s188, %s189
    %p201 = scmp.eq.s32.totalorder %s22, 1
    %p202 = por %p200, %p201
    %p204 = scmp.ne.s32.totalorder %s189, %s203
    %p205 = scmp.eq.s32.totalorder %s22, 0
    %p206 = por %p204, %p205
    %s208 = sadd.s32 %s207, 1
    %p211 = scmp.eq.s32.totalorder %s16, 1
    %p212 = scmp.ne.s32.totalorder %s207, %s209
    %p213 = scmp.eq.s32.totalorder %s16, 0
    %p214 = por %p212, %p213
    %p215 = scmp.ne.s32.totalorder %s207, %s209
    %p216 = scmp.eq.s32.totalorder %s21, 1
    %p217 = por %p215, %p216
    %p218 = scmp.ne.s32.totalorder %s209, %s210
    %p219 = scmp.eq.s32.totalorder %s21, 0
    %p220 = por %p218, %p219
    %p221 = scmp.ne.s32.totalorder %s209, %s210
    %p222 = scmp.eq.s32.totalorder %s22, 1
    %p223 = por %p221, %p222
    %p225 = scmp.ne.s32.totalorder %s210, %s224
    %p226 = scmp.eq.s32.totalorder %s22, 0
    %p227 = por %p225, %p226
    %s229 = sadd.s32 %s228, 1
    %p232 = scmp.eq.s32.totalorder %s16, 1
    %p233 = scmp.ne.s32.totalorder %s228, %s230
    %p234 = scmp.eq.s32.totalorder %s16, 0
    %p235 = por %p233, %p234
    %p236 = scmp.ne.s32.totalorder %s228, %s230
    %p237 = scmp.eq.s32.totalorder %s21, 1
    %p238 = por %p236, %p237
    %p239 = scmp.ne.s32.totalorder %s230, %s231
    %p240 = scmp.eq.s32.totalorder %s21, 0
    %p241 = por %p239, %p240
    %p242 = scmp.ne.s32.totalorder %s230, %s231
    %p243 = scmp.eq.s32.totalorder %s22, 1
    %p244 = por %p242, %p243
    %p246 = scmp.ne.s32.totalorder %s231, %s245
    %p247 = scmp.eq.s32.totalorder %s22, 0
    %p248 = por %p246, %p247
    %s249 = ssub.s32 %s16, %s23
    %p250 = scmp.eq.s32.totalorder %s249, 0
    %s252 = sadd.s32 %s251, 1
    %s253 = scalar_select %p250, %s251, %s252
    %p256 = pneg %p250
    %p257 = scmp.eq.s32.totalorder %s16, 1
    %p258 = por %p256, %p257
    %p259 = scmp.ne.s32.totalorder %s251, %s254
    %p260 = scmp.eq.s32.totalorder %s16, 0
    %p261 = por %p259, %p260
    %p262 = scmp.ne.s32.totalorder %s251, %s254
    %p263 = scmp.eq.s32.totalorder %s21, 1
    %p264 = por %p262, %p263
    %p265 = scmp.ne.s32.totalorder %s254, %s255
    %p266 = scmp.eq.s32.totalorder %s21, 0
    %p267 = por %p265, %p266
    %p268 = scmp.ne.s32.totalorder %s254, %s255
    %p269 = scmp.eq.s32.totalorder %s22, 1
    %p270 = por %p268, %p269
    %p272 = scmp.ne.s32.totalorder %s255, %s271
    %p273 = scmp.eq.s32.totalorder %s22, 0
    %p274 = por %p272, %p273
    %p275 = scmp.le.s32.totalorder 1, %s16
    %p276 = scmp.lt.s32.totalorder %s16, 3
    %p277 = pnand %p275, %p276
    %p278 = pneg %p277
    // Predicated region
    $region9: #{tpu_custom_call.1} parent=5 // pred_check
      _
    $region10: #{tpu_custom_call.1} parent=5 // pred_check_branch
      %280 = sbr.rel (%p277) target = $region12
    $region11: #{tpu_custom_call.1} parent=5 // pred_region
      %s281 = ssub.s32 %s16, 1
      // Predicated region
      $region13: #{tpu_custom_call.1} parent=11 // pred_check
        %p282 = pneg %p115
      $region14: #{tpu_custom_call.1} parent=11 // pred_check_branch
        %284 = sbr.rel (%p282) target = $region16
      $region15: #{tpu_custom_call.1} parent=11 // pred_region
        _
      $region16: #{tpu_custom_call.1} parent=11 // pred_fallthru
        _
      // Predicated region
      $region17: #{tpu_custom_call.1} parent=11 // pred_check
        %p285 = pneg %p136
      $region18: #{tpu_custom_call.1} parent=11 // pred_check_branch
        %287 = sbr.rel (%p285) target = $region20
      $region19: #{tpu_custom_call.1} parent=11 // pred_region
        _
      $region20: #{tpu_custom_call.1} parent=11 // pred_fallthru
        _
      // Predicated region
      $region21: #{tpu_custom_call.1} parent=11 // pred_check
        %p288 = pneg %p157
      $region22: #{tpu_custom_call.1} parent=11 // pred_check_branch
        %290 = sbr.rel (%p288) target = $region24
      $region23: #{tpu_custom_call.1} parent=11 // pred_region
        _
      $region24: #{tpu_custom_call.1} parent=11 // pred_fallthru
        _
      // Predicated region
      $region25: #{tpu_custom_call.1} parent=11 // pred_check
        %p291 = pneg %p178
      $region26: #{tpu_custom_call.1} parent=11 // pred_check_branch
        %293 = sbr.rel (%p291) target = $region28
      $region27: #{tpu_custom_call.1} parent=11 // pred_region
        _
      $region28: #{tpu_custom_call.1} parent=11 // pred_fallthru
        _
      // Predicated region
      $region29: #{tpu_custom_call.1} parent=11 // pred_check
        %p294 = pneg %p199
      $region30: #{tpu_custom_call.1} parent=11 // pred_check_branch
        %296 = sbr.rel (%p294) target = $region32
      $region31: #{tpu_custom_call.1} parent=11 // pred_region
        _
      $region32: #{tpu_custom_call.1} parent=11 // pred_fallthru
        _
      // Predicated region
      $region33: #{tpu_custom_call.1} parent=11 // pred_check
        %p297 = pneg %p220
      $region34: #{tpu_custom_call.1} parent=11 // pred_check_branch
        %299 = sbr.rel (%p297) target = $region36
      $region35: #{tpu_custom_call.1} parent=11 // pred_region
        _
      $region36: #{tpu_custom_call.1} parent=11 // pred_fallthru
        _
      // Predicated region
      $region37: #{tpu_custom_call.1} parent=11 // pred_check
        %p300 = pneg %p241
      $region38: #{tpu_custom_call.1} parent=11 // pred_check_branch
        %302 = sbr.rel (%p300) target = $region40
      $region39: #{tpu_custom_call.1} parent=11 // pred_region
        _
      $region40: #{tpu_custom_call.1} parent=11 // pred_fallthru
        _
    $region12: #{tpu_custom_call.1} parent=5 // pred_fallthru
      _
    %p303 = scmp.lt.s32.totalorder %s16, 2
    // Predicated region
    $region41: #{tpu_custom_call.1} parent=5 // pred_check
      %p304 = pneg %p303
    $region42: #{tpu_custom_call.1} parent=5 // pred_check_branch
      %306 = sbr.rel (%p304) target = $region44
    $region43: #{tpu_custom_call.1} parent=5 // pred_region
      // Predicated region
      $region45: #{tpu_custom_call.1} parent=43 // pred_check
        %p307 = pneg %p36
      $region46: #{tpu_custom_call.1} parent=43 // pred_check_branch
        %309 = sbr.rel (%p307) target = $region48
      $region47: #{tpu_custom_call.1} parent=43 // pred_region
        %p310 = scmp.lt.s32.totalorder %s16, 1
        %s311 = scalar_select %p310, %s16, 1
        %s312 = smul.addr %s311, 32
        %s313 = smul.addr %s312, 8
        %s314 = scalar_lea.vmem %s0, %s313
      $region48: #{tpu_custom_call.1} parent=43 // pred_fallthru
        _
      // Predicated region
      $region49: #{tpu_custom_call.1} parent=43 // pred_check
        %p315 = pneg %p62
      $region50: #{tpu_custom_call.1} parent=43 // pred_check_branch
        %317 = sbr.rel (%p315) target = $region52
      $region51: #{tpu_custom_call.1} parent=43 // pred_region
        %p318 = scmp.lt.s32.totalorder %s16, 1
        %s319 = scalar_select %p318, %s16, 1
        %s320 = smul.addr %s319, 16
        %s321 = smul.addr %s320, 8
        %s322 = scalar_lea.vmem %s1, %s321
      $region52: #{tpu_custom_call.1} parent=43 // pred_fallthru
        _
      // Predicated region
      $region53: #{tpu_custom_call.1} parent=43 // pred_check
        %p323 = pneg %p88
      $region54: #{tpu_custom_call.1} parent=43 // pred_check_branch
        %325 = sbr.rel (%p323) target = $region56
      $region55: #{tpu_custom_call.1} parent=43 // pred_region
        %p326 = scmp.lt.s32.totalorder %s16, 1
        %s327 = scalar_select %p326, %s16, 1
        %s328 = smul.addr %s327, 128
        %s329 = smul.addr %s328, 8
        %s330 = scalar_lea.vmem %s2, %s329
      $region56: #{tpu_custom_call.1} parent=43 // pred_fallthru
        _
    $region44: #{tpu_custom_call.1} parent=5 // pred_fallthru
      _
    %p331 = scmp.le.s32.totalorder 1, %s16
    %p332 = scmp.lt.s32.totalorder %s16, 3
    %p333 = pnand %p331, %p332
    %p334 = pneg %p333
    // Predicated region
    $region57: #{tpu_custom_call.1} parent=5 // pred_check
      _
    $region58: #{tpu_custom_call.1} parent=5 // pred_check_branch
      %336 = sbr.rel (%p333) target = $region60
    $region59: #{tpu_custom_call.1} parent=5 // pred_region
      %s337 = ssub.s32 %s16, 1
      %p338 = scmp.lt.s32.totalorder %s21, 1
      %s339 = scalar_select %p338, %s21, 1
      %s340 = smul.addr %s339, 32
      %s341 = smul.addr %s340, 8
      %s342 = scalar_lea.vmem %s0, %s341
      %p343 = pneg %p42
      %p344 = pneg %p39
      %p345 = scmp.lt.s32.totalorder %s21, 1
      %s346 = scalar_select %p345, %s21, 1
      %s347 = smul.addr %s346, 16
      %s348 = smul.addr %s347, 8
      %s349 = scalar_lea.vmem %s1, %s348
      %p350 = pneg %p68
      %p351 = pneg %p65
      %p352 = scmp.lt.s32.totalorder %s21, 1
      %s353 = scalar_select %p352, %s21, 1
      %s354 = smul.addr %s353, 128
      %s355 = smul.addr %s354, 8
      %s356 = scalar_lea.vmem %s2, %s355
      %p357 = pneg %p94
      %p358 = pneg %p91
      %p359 = pneg %p115
      %p360 = pneg %p112
      %p361 = pneg %p136
      %p362 = pneg %p133
      %p363 = pneg %p157
      %p364 = pneg %p154
      %p365 = pneg %p178
      %p366 = pneg %p175
      %p367 = pneg %p199
      %p368 = pneg %p196
      %p369 = pneg %p220
      %p370 = pneg %p217
      %p371 = pneg %p241
      %p372 = pneg %p238
      %p373 = pneg %p267
      %p374 = pneg %p264
      %p375 = scmp.lt.s32.totalorder %s21, 1
      %s376 = scalar_select %p375, %s21, 1
      %s377 = smul.addr %s376, 32
      %s378 = smul.addr %s377, 8
      %s379 = scalar_lea.vmem %s10, %s378
      %p380 = scmp.lt.s32.totalorder %s21, 1
      %s381 = scalar_select %p380, %s21, 1
      %s382 = smul.addr %s381, 32
      %s383 = smul.addr %s382, 8
      %s384 = scalar_lea.vmem %s0, %s383
      %p385 = scmp.lt.s32.totalorder %s21, 1
      %s386 = scalar_select %p385, %s21, 1
      %s387 = smul.addr %s386, 16
      %s388 = smul.addr %s387, 8
      %s389 = scalar_lea.vmem %s1, %s388
      %p390 = scmp.lt.s32.totalorder %s21, 1
      %s391 = scalar_select %p390, %s21, 1
      %s392 = smul.addr %s391, 128
      %s393 = smul.addr %s392, 8
      %s394 = scalar_lea.vmem %s2, %s393
      %p395 = scmp.lt.s32.totalorder %s21, 1
      %s396 = scalar_select %p395, %s21, 1
      %s397 = smul.addr %s396, 32
      %s398 = smul.addr %s397, 8
      %s399 = scalar_lea.vmem %s10, %s398
      %v400 = vld [vmem:[%s384] sm:$0xff]
      %v401 = vld [vmem:[%s384 + $0x8] sm:$0xff]
      %v402 = vld [vmem:[%s384 + $0x10] sm:$0xff]
      %v403 = vld [vmem:[%s384 + $0x18] sm:$0xff]
      %v404 = vld [vmem:[%s384 + $0x20] sm:$0xff]
      %v405 = vld [vmem:[%s384 + $0x28] sm:$0xff]
      %v406 = vld [vmem:[%s384 + $0x30] sm:$0xff]
      %v407 = vld [vmem:[%s384 + $0x38] sm:$0xff]
      %v408 = vld [vmem:[%s384 + $0x40] sm:$0xff]
      %v409 = vld [vmem:[%s384 + $0x48] sm:$0xff]
      %v410 = vld [vmem:[%s384 + $0x50] sm:$0xff]
      %v411 = vld [vmem:[%s384 + $0x58] sm:$0xff]
      %v412 = vld [vmem:[%s384 + $0x60] sm:$0xff]
      %v413 = vld [vmem:[%s384 + $0x68] sm:$0xff]
      %v414 = vld [vmem:[%s384 + $0x70] sm:$0xff]
      %v415 = vld [vmem:[%s384 + $0x78] sm:$0xff]
      %v416 = vld [vmem:[%s384 + $0x80] sm:$0xff]
      %v417 = vld [vmem:[%s384 + $0x88] sm:$0xff]
      %v418 = vld [vmem:[%s384 + $0x90] sm:$0xff]
      %v419 = vld [vmem:[%s384 + $0x98] sm:$0xff]
      %v420 = vld [vmem:[%s384 + $0xa0] sm:$0xff]
      %v421 = vld [vmem:[%s384 + $0xa8] sm:$0xff]
      %v422 = vld [vmem:[%s384 + $0xb0] sm:$0xff]
      %v423 = vld [vmem:[%s384 + $0xb8] sm:$0xff]
      %v424 = vld [vmem:[%s384 + $0xc0] sm:$0xff]
      %v425 = vld [vmem:[%s384 + $0xc8] sm:$0xff]
      %v426 = vld [vmem:[%s384 + $0xd0] sm:$0xff]
      %v427 = vld [vmem:[%s384 + $0xd8] sm:$0xff]
      %v428 = vld [vmem:[%s384 + $0xe0] sm:$0xff]
      %v429 = vld [vmem:[%s384 + $0xe8] sm:$0xff]
      %v430 = vld [vmem:[%s384 + $0xf0] sm:$0xff]
      %v431 = vld [vmem:[%s384 + $0xf8] sm:$0xff]
      %v432 = vld [vmem:[%s3] sm:$0xff]
      %v433 = vld [vmem:[%s3 + $0x8] sm:$0xff]
      %v434 = vld [vmem:[%s3 + $0x10] sm:$0xff]
      %v435 = vld [vmem:[%s3 + $0x18] sm:$0xff]
      %v436 = vld [vmem:[%s3 + $0x20] sm:$0xff]
      %v437 = vld [vmem:[%s3 + $0x28] sm:$0xff]
      %v438 = vld [vmem:[%s3 + $0x30] sm:$0xff]
      %v439 = vld [vmem:[%s3 + $0x38] sm:$0xff]
      %vm440 = vcmask 523264
      %v441 = vsel %vm440, %v400, 0.0
      %v442 = vsel %vm440, %v401, 0.0
      %v443 = vadd.f32 %v441, %v442
      %v444 = vsel %vm440, %v402, 0.0
      %v445 = vadd.f32 %v443, %v444
      %v446 = vsel %vm440, %v403, 0.0
      %v447 = vadd.f32 %v445, %v446
      %v448 = vsel %vm440, %v404, 0.0
      %v449 = vadd.f32 %v447, %v448
      %v450 = vsel %vm440, %v405, 0.0
      %v451 = vadd.f32 %v449, %v450
      %v452 = vsel %vm440, %v406, 0.0
      %v453 = vadd.f32 %v451, %v452
      %v454 = vsel %vm440, %v407, 0.0
      %v455 = vadd.f32 %v453, %v454
      %v456 = vsel %vm440, %v408, 0.0
      %v457 = vadd.f32 %v455, %v456
      %v458 = vsel %vm440, %v409, 0.0
      %v459 = vadd.f32 %v457, %v458
      %v460 = vsel %vm440, %v410, 0.0
      %v461 = vadd.f32 %v459, %v460
      %v462 = vsel %vm440, %v411, 0.0
      %v463 = vadd.f32 %v461, %v462
      %v464 = vsel %vm440, %v412, 0.0
      %v465 = vadd.f32 %v463, %v464
      %v466 = vsel %vm440, %v413, 0.0
      %v467 = vadd.f32 %v465, %v466
      %v468 = vsel %vm440, %v414, 0.0
      %v469 = vadd.f32 %v467, %v468
      %v470 = vsel %vm440, %v415, 0.0
      %v471 = vadd.f32 %v469, %v470
      %v472 = vsel %vm440, %v416, 0.0
      %v473 = vadd.f32 %v471, %v472
      %v474 = vsel %vm440, %v417, 0.0
      %v475 = vadd.f32 %v473, %v474
      %v476 = vsel %vm440, %v418, 0.0
      %v477 = vadd.f32 %v475, %v476
      %v478 = vsel %vm440, %v419, 0.0
      %v479 = vadd.f32 %v477, %v478
      %v480 = vsel %vm440, %v420, 0.0
      %v481 = vadd.f32 %v479, %v480
      %v482 = vsel %vm440, %v421, 0.0
      %v483 = vadd.f32 %v481, %v482
      %v484 = vsel %vm440, %v422, 0.0
      %v485 = vadd.f32 %v483, %v484
      %v486 = vsel %vm440, %v423, 0.0
      %v487 = vadd.f32 %v485, %v486
      %v488 = vsel %vm440, %v424, 0.0
      %v489 = vadd.f32 %v487, %v488
      %v490 = vsel %vm440, %v425, 0.0
      %v491 = vadd.f32 %v489, %v490
      %v492 = vsel %vm440, %v426, 0.0
      %v493 = vadd.f32 %v491, %v492
      %v494 = vsel %vm440, %v427, 0.0
      %v495 = vadd.f32 %v493, %v494
      %v496 = vsel %vm440, %v428, 0.0
      %v497 = vadd.f32 %v495, %v496
      %v498 = vsel %vm440, %v429, 0.0
      %v499 = vadd.f32 %v497, %v498
      %v500 = vsel %vm440, %v430, 0.0
      %v501 = vadd.f32 %v499, %v500
      %v502 = vsel %vm440, %v431, 0.0
      %v503 = vadd.f32 %v501, %v502
      %v504 = vrot.slane %v503, 4
      %v505 = vadd.f32 %v503, %v504
      %v506 = vrot.slane %v505, 2
      %v507 = vadd.f32 %v505, %v506
      %v508 = vrot.slane %v507, 1
      %v509 = vadd.f32 %v507, %v508
      %v511 = vsel %vm440, %v509, 0
      %513 = vmatprep.subr.mxu0 0.0
      %514 = vmatpush1.msra.mxu0 0.0
      %515 = vmatprep.subr.mxu0 0.0
      %516 = vmatpush1.msra.mxu0 0.0
      %517 = vmatprep.subr.mxu0 0.0
      %518 = vmatpush1.msra.mxu0 0.0
      %519 = vmatprep.subr.mxu0 0.0
      %520 = vmatpush1.msra.mxu0 0.0
      %521 = vmatprep.subr.mxu0 0.0
      %522 = vmatpush1.msra.mxu0 0.0
      %523 = vmatprep.subr.mxu0 0.0
      %524 = vmatpush1.msra.mxu0 0.0
      %525 = vmatprep.subr.mxu0 0.0
      %526 = vmatpush1.msra.mxu0 0.0
      %527 = vmatprep.subr.mxu0 0.0
      %528 = vmatpush1.msra.mxu0 0.0
      %529 = vmatprep.subr.mxu0 0.0
      %530 = vmatpush1.msra.mxu0 %v439
      %531 = vmatprep.subr.mxu0 0.0
      %532 = vmatpush1.msra.mxu0 %v438
      %533 = vmatprep.subr.mxu0 0.0
      %534 = vmatpush1.msra.mxu0 %v437
      %535 = vmatprep.subr.mxu0 0.0
      %536 = vmatpush1.msra.mxu0 %v436
      %537 = vmatprep.subr.mxu0 0.0
      %538 = vmatpush1.msra.mxu0 %v435
      %539 = vmatprep.subr.mxu0 0.0
      %540 = vmatpush1.msra.mxu0 %v434
      %541 = vmatprep.subr.mxu0 0.0
      %542 = vmatpush1.msra.mxu0 %v433
      %543 = vmatprep.subr.mxu0 0.0
      %544 = vmatpush1.msra.mxu0 %v432
      %545 = vmatprep.subr.mxu0 0.0
      %546 = vmatpush2.msra.mxu0 0.0
      %547 = vmatprep.subr.mxu0 0.0
      %548 = vmatpush2.msra.mxu0 0.0
      %549 = vmatprep.subr.mxu0 0.0
      %550 = vmatpush2.msra.mxu0 0.0
      %551 = vmatprep.subr.mxu0 0.0
      %552 = vmatpush2.msra.mxu0 0.0
      %553 = vmatprep.subr.mxu0 0.0
      %554 = vmatpush2.msra.mxu0 0.0
      %555 = vmatprep.subr.mxu0 0.0
      %556 = vmatpush2.msra.mxu0 0.0
      %557 = vmatprep.subr.mxu0 0.0
      %558 = vmatpush2.msra.mxu0 0.0
      %559 = vmatprep.subr.mxu0 0.0
      %560 = vmatpush2.msra.mxu0 0.0
      %561 = vmatprep.subr.mxu0 0.0
      %562 = vmatpush2.msra.mxu0 0.0
      %563 = vmatprep.subr.mxu0 0.0
      %564 = vmatpush2.msra.mxu0 0.0
      %565 = vmatprep.subr.mxu0 0.0
      %566 = vmatpush2.msra.mxu0 0.0
      %567 = vmatprep.subr.mxu0 0.0
      %568 = vmatpush2.msra.mxu0 0.0
      %569 = vmatprep.subr.mxu0 0.0
      %570 = vmatpush2.msra.mxu0 0.0
      %571 = vmatprep.subr.mxu0 0.0
      %572 = vmatpush2.msra.mxu0 0.0
      %573 = vmatprep.subr.mxu0 0.0
      %574 = vmatpush2.msra.mxu0 0.0
      %575 = vmatprep.subr.mxu0 0.0
      %576 = vmatpush2.msra.mxu0 0.0
      %577 = vmatprep.mubr.f32.mxu0 0.0
      %578 = vmatmul.mubr.f32.gmra.mxu0 %v511
      %v579 = vpop.f32.mrf.mxu0
      %v580 = vadd.f32 0.0, %v579
      %v581 = vpop.f32.mrf.mxu0
      %582 = vdwg.mxu0
      %v583 = vrcp.pop 512.0
      %v584 = vmul.f32 %v580, %v583
      %v585 = vlaneseq
      %v586 = vshrl.u32 %v585, 7
      %v587 = vsub.s32 0, %v586
      %v588 = vrot.slane %v584, %v587
      %v589 = vsub.f32 %v400, %v588
      %v590 = vsub.f32 %v401, %v588
      %v591 = vsub.f32 %v402, %v588
      %v592 = vsub.f32 %v403, %v588
      %v593 = vsub.f32 %v404, %v588
      %v594 = vsub.f32 %v405, %v588
      %v595 = vsub.f32 %v406, %v588
      %v596 = vsub.f32 %v407, %v588
      %v597 = vsub.f32 %v408, %v588
      %v598 = vsub.f32 %v409, %v588
      %v599 = vsub.f32 %v410, %v588
      %v600 = vsub.f32 %v411, %v588
      %v601 = vsub.f32 %v412, %v588
      %v602 = vsub.f32 %v413, %v588
      %v603 = vsub.f32 %v414, %v588
      %v604 = vsub.f32 %v415, %v588
      %v605 = vsub.f32 %v416, %v588
      %v606 = vsub.f32 %v417, %v588
      %v607 = vsub.f32 %v418, %v588
      %v608 = vsub.f32 %v419, %v588
      %v609 = vsub.f32 %v420, %v588
      %v610 = vsub.f32 %v421, %v588
      %v611 = vsub.f32 %v422, %v588
      %v612 = vsub.f32 %v423, %v588
      %v613 = vsub.f32 %v424, %v588
      %v614 = vsub.f32 %v425, %v588
      %v615 = vsub.f32 %v426, %v588
      %v616 = vsub.f32 %v427, %v588
      %v617 = vsub.f32 %v428, %v588
      %v618 = vsub.f32 %v429, %v588
      %v619 = vsub.f32 %v430, %v588
      %v620 = vsub.f32 %v431, %v588
      %v621 = vmul.f32 %v589, %v589
      %v622 = vmul.f32 %v590, %v590
      %v623 = vmul.f32 %v591, %v591
      %v624 = vmul.f32 %v592, %v592
      %v625 = vmul.f32 %v593, %v593
      %v626 = vmul.f32 %v594, %v594
      %v627 = vmul.f32 %v595, %v595
      %v628 = vmul.f32 %v596, %v596
      %v629 = vmul.f32 %v597, %v597
      %v630 = vmul.f32 %v598, %v598
      %v631 = vmul.f32 %v599, %v599
      %v632 = vmul.f32 %v600, %v600
      %v633 = vmul.f32 %v601, %v601
      %v634 = vmul.f32 %v602, %v602
      %v635 = vmul.f32 %v603, %v603
      %v636 = vmul.f32 %v604, %v604
      %v637 = vmul.f32 %v605, %v605
      %v638 = vmul.f32 %v606, %v606
      %v639 = vmul.f32 %v607, %v607
      %v640 = vmul.f32 %v608, %v608
      %v641 = vmul.f32 %v609, %v609
      %v642 = vmul.f32 %v610, %v610
      %v643 = vmul.f32 %v611, %v611
      %v644 = vmul.f32 %v612, %v612
      %v645 = vmul.f32 %v613, %v613
      %v646 = vmul.f32 %v614, %v614
      %v647 = vmul.f32 %v615, %v615
      %v648 = vmul.f32 %v616, %v616
      %v649 = vmul.f32 %v617, %v617
      %v650 = vmul.f32 %v618, %v618
      %v651 = vmul.f32 %v619, %v619
      %v652 = vmul.f32 %v620, %v620
      %v653 = vsel %vm440, %v621, 0.0
      %v654 = vsel %vm440, %v622, 0.0
      %v655 = vadd.f32 %v653, %v654
      %v656 = vsel %vm440, %v623, 0.0
      %v657 = vadd.f32 %v655, %v656
      %v658 = vsel %vm440, %v624, 0.0
      %v659 = vadd.f32 %v657, %v658
      %v660 = vsel %vm440, %v625, 0.0
      %v661 = vadd.f32 %v659, %v660
      %v662 = vsel %vm440, %v626, 0.0
      %v663 = vadd.f32 %v661, %v662
      %v664 = vsel %vm440, %v627, 0.0
      %v665 = vadd.f32 %v663, %v664
      %v666 = vsel %vm440, %v628, 0.0
      %v667 = vadd.f32 %v665, %v666
      %v668 = vsel %vm440, %v629, 0.0
      %v669 = vadd.f32 %v667, %v668
      %v670 = vsel %vm440, %v630, 0.0
      %v671 = vadd.f32 %v669, %v670
      %v672 = vsel %vm440, %v631, 0.0
      %v673 = vadd.f32 %v671, %v672
      %v674 = vsel %vm440, %v632, 0.0
      %v675 = vadd.f32 %v673, %v674
      %v676 = vsel %vm440, %v633, 0.0
      %v677 = vadd.f32 %v675, %v676
      %v678 = vsel %vm440, %v634, 0.0
      %v679 = vadd.f32 %v677, %v678
      %v680 = vsel %vm440, %v635, 0.0
      %v681 = vadd.f32 %v679, %v680
      %v682 = vsel %vm440, %v636, 0.0
      %v683 = vadd.f32 %v681, %v682
      %v684 = vsel %vm440, %v637, 0.0
      %v685 = vadd.f32 %v683, %v684
      %v686 = vsel %vm440, %v638, 0.0
      %v687 = vadd.f32 %v685, %v686
      %v688 = vsel %vm440, %v639, 0.0
      %v689 = vadd.f32 %v687, %v688
      %v690 = vsel %vm440, %v640, 0.0
      %v691 = vadd.f32 %v689, %v690
      %v692 = vsel %vm440, %v641, 0.0
      %v693 = vadd.f32 %v691, %v692
      %v694 = vsel %vm440, %v642, 0.0
      %v695 = vadd.f32 %v693, %v694
      %v696 = vsel %vm440, %v643, 0.0
      %v697 = vadd.f32 %v695, %v696
      %v698 = vsel %vm440, %v644, 0.0
      %v699 = vadd.f32 %v697, %v698
      %v700 = vsel %vm440, %v645, 0.0
      %v701 = vadd.f32 %v699, %v700
      %v702 = vsel %vm440, %v646, 0.0
      %v703 = vadd.f32 %v701, %v702
      %v704 = vsel %vm440, %v647, 0.0
      %v705 = vadd.f32 %v703, %v704
      %v706 = vsel %vm440, %v648, 0.0
      %v707 = vadd.f32 %v705, %v706
      %v708 = vsel %vm440, %v649, 0.0
      %v709 = vadd.f32 %v707, %v708
      %v710 = vsel %vm440, %v650, 0.0
      %v711 = vadd.f32 %v709, %v710
      %v712 = vsel %vm440, %v651, 0.0
      %v713 = vadd.f32 %v711, %v712
      %v714 = vsel %vm440, %v652, 0.0
      %v715 = vadd.f32 %v713, %v714
      %v716 = vrot.slane %v715, 4
      %v717 = vadd.f32 %v715, %v716
      %v718 = vrot.slane %v717, 2
      %v719 = vadd.f32 %v717, %v718
      %v720 = vrot.slane %v719, 1
      %v721 = vadd.f32 %v719, %v720
      %v723 = vsel %vm440, %v721, 0
      %725 = vmatprep.subr.mxu0 0.0
      %726 = vmatpush1.msra.mxu0 0.0
      %727 = vmatprep.subr.mxu0 0.0
      %728 = vmatpush1.msra.mxu0 0.0
      %729 = vmatprep.subr.mxu0 0.0
      %730 = vmatpush1.msra.mxu0 0.0
      %731 = vmatprep.subr.mxu0 0.0
      %732 = vmatpush1.msra.mxu0 0.0
      %733 = vmatprep.subr.mxu0 0.0
      %734 = vmatpush1.msra.mxu0 0.0
      %735 = vmatprep.subr.mxu0 0.0
      %736 = vmatpush1.msra.mxu0 0.0
      %737 = vmatprep.subr.mxu0 0.0
      %738 = vmatpush1.msra.mxu0 0.0
      %739 = vmatprep.subr.mxu0 0.0
      %740 = vmatpush1.msra.mxu0 0.0
      %741 = vmatprep.subr.mxu0 0.0
      %742 = vmatpush1.msra.mxu0 %v439
      %743 = vmatprep.subr.mxu0 0.0
      %744 = vmatpush1.msra.mxu0 %v438
      %745 = vmatprep.subr.mxu0 0.0
      %746 = vmatpush1.msra.mxu0 %v437
      %747 = vmatprep.subr.mxu0 0.0
      %748 = vmatpush1.msra.mxu0 %v436
      %749 = vmatprep.subr.mxu0 0.0
      %750 = vmatpush1.msra.mxu0 %v435
      %751 = vmatprep.subr.mxu0 0.0
      %752 = vmatpush1.msra.mxu0 %v434
      %753 = vmatprep.subr.mxu0 0.0
      %754 = vmatpush1.msra.mxu0 %v433
      %755 = vmatprep.subr.mxu0 0.0
      %756 = vmatpush1.msra.mxu0 %v432
      %757 = vmatprep.subr.mxu0 0.0
      %758 = vmatpush2.msra.mxu0 0.0
      %759 = vmatprep.subr.mxu0 0.0
      %760 = vmatpush2.msra.mxu0 0.0
      %761 = vmatprep.subr.mxu0 0.0
      %762 = vmatpush2.msra.mxu0 0.0
      %763 = vmatprep.subr.mxu0 0.0
      %764 = vmatpush2.msra.mxu0 0.0
      %765 = vmatprep.subr.mxu0 0.0
      %766 = vmatpush2.msra.mxu0 0.0
      %767 = vmatprep.subr.mxu0 0.0
      %768 = vmatpush2.msra.mxu0 0.0
      %769 = vmatprep.subr.mxu0 0.0
      %770 = vmatpush2.msra.mxu0 0.0
      %771 = vmatprep.subr.mxu0 0.0
      %772 = vmatpush2.msra.mxu0 0.0
      %773 = vmatprep.subr.mxu0 0.0
      %774 = vmatpush2.msra.mxu0 0.0
      %775 = vmatprep.subr.mxu0 0.0
      %776 = vmatpush2.msra.mxu0 0.0
      %777 = vmatprep.subr.mxu0 0.0
      %778 = vmatpush2.msra.mxu0 0.0
      %779 = vmatprep.subr.mxu0 0.0
      %780 = vmatpush2.msra.mxu0 0.0
      %781 = vmatprep.subr.mxu0 0.0
      %782 = vmatpush2.msra.mxu0 0.0
      %783 = vmatprep.subr.mxu0 0.0
      %784 = vmatpush2.msra.mxu0 0.0
      %785 = vmatprep.subr.mxu0 0.0
      %786 = vmatpush2.msra.mxu0 0.0
      %787 = vmatprep.subr.mxu0 0.0
      %788 = vmatpush2.msra.mxu0 0.0
      %789 = vmatprep.mubr.f32.mxu0 0.0
      %790 = vmatmul.mubr.f32.gmra.mxu0 %v723
      %v791 = vpop.f32.mrf.mxu0
      %v792 = vadd.f32 0.0, %v791
      %v793 = vpop.f32.mrf.mxu0
      %794 = vdwg.mxu0
      %v795 = vmul.f32 %v792, %v583
      %v796 = vadd.f32 %v795, 1e-05
      %v797 = vrsqrt.pop %v796
      %v798 = vlaneseq
      %v799 = vshrl.u32 %v798, 7
      %v800 = vsub.s32 0, %v799
      %v801 = vrot.slane %v797, %v800
      %v802 = vmul.f32 %v589, %v801
      %v803 = vmul.f32 %v590, %v801
      %v804 = vmul.f32 %v591, %v801
      %v805 = vmul.f32 %v592, %v801
      %v806 = vmul.f32 %v593, %v801
      %v807 = vmul.f32 %v594, %v801
      %v808 = vmul.f32 %v595, %v801
      %v809 = vmul.f32 %v596, %v801
      %v810 = vmul.f32 %v597, %v801
      %v811 = vmul.f32 %v598, %v801
      %v812 = vmul.f32 %v599, %v801
      %v813 = vmul.f32 %v600, %v801
      %v814 = vmul.f32 %v601, %v801
      %v815 = vmul.f32 %v602, %v801
      %v816 = vmul.f32 %v603, %v801
      %v817 = vmul.f32 %v604, %v801
      %v818 = vmul.f32 %v605, %v801
      %v819 = vmul.f32 %v606, %v801
      %v820 = vmul.f32 %v607, %v801
      %v821 = vmul.f32 %v608, %v801
      %v822 = vmul.f32 %v609, %v801
      %v823 = vmul.f32 %v610, %v801
      %v824 = vmul.f32 %v611, %v801
      %v825 = vmul.f32 %v612, %v801
      %v826 = vmul.f32 %v613, %v801
      %v827 = vmul.f32 %v614, %v801
      %v828 = vmul.f32 %v615, %v801
      %v829 = vmul.f32 %v616, %v801
      %v830 = vmul.f32 %v617, %v801
      %v831 = vmul.f32 %v618, %v801
      %v832 = vmul.f32 %v619, %v801
      %v833 = vmul.f32 %v620, %v801
      %v834 = vld [vmem:[%s4] sm:$0x1]
      %v836 = vlaneseq
      %v837 = vshrl.u32 %v836, 7
      %v838 = vsub.s32 0, %v837
      %v839 = vrot.slane %v834, %v838
      %v841 = vmul.f32 %v802, %v839
      %v842 = vmul.f32 %v803, %v839
      %v843 = vmul.f32 %v804, %v839
      %v844 = vmul.f32 %v805, %v839
      %v845 = vmul.f32 %v806, %v839
      %v846 = vmul.f32 %v807, %v839
      %v847 = vmul.f32 %v808, %v839
      %v848 = vmul.f32 %v809, %v839
      %v849 = vmul.f32 %v810, %v839
      %v850 = vmul.f32 %v811, %v839
      %v851 = vmul.f32 %v812, %v839
      %v852 = vmul.f32 %v813, %v839
      %v853 = vmul.f32 %v814, %v839
      %v854 = vmul.f32 %v815, %v839
      %v855 = vmul.f32 %v816, %v839
      %v856 = vmul.f32 %v817, %v839
      %v857 = vmul.f32 %v818, %v839
      %v858 = vmul.f32 %v819, %v839
      %v859 = vmul.f32 %v820, %v839
      %v860 = vmul.f32 %v821, %v839
      %v861 = vmul.f32 %v822, %v839
      %v862 = vmul.f32 %v823, %v839
      %v863 = vmul.f32 %v824, %v839
      %v864 = vmul.f32 %v825, %v839
      %v865 = vmul.f32 %v826, %v839
      %v866 = vmul.f32 %v827, %v839
      %v867 = vmul.f32 %v828, %v839
      %v868 = vmul.f32 %v829, %v839
      %v869 = vmul.f32 %v830, %v839
      %v870 = vmul.f32 %v831, %v839
      %v871 = vmul.f32 %v832, %v839
      %v872 = vmul.f32 %v833, %v839
      %v873 = vld [vmem:[%s5] sm:$0x1]
      %v875 = vlaneseq
      %v876 = vshrl.u32 %v875, 7
      %v877 = vsub.s32 0, %v876
      %v878 = vrot.slane %v873, %v877
      %v880 = vadd.f32 %v841, %v878
      %v881 = vadd.f32 %v842, %v878
      %v882 = vadd.f32 %v843, %v878
      %v883 = vadd.f32 %v844, %v878
      %v884 = vadd.f32 %v845, %v878
      %v885 = vadd.f32 %v846, %v878
      %v886 = vadd.f32 %v847, %v878
      %v887 = vadd.f32 %v848, %v878
      %v888 = vadd.f32 %v849, %v878
      %v889 = vadd.f32 %v850, %v878
      %v890 = vadd.f32 %v851, %v878
      %v891 = vadd.f32 %v852, %v878
      %v892 = vadd.f32 %v853, %v878
      %v893 = vadd.f32 %v854, %v878
      %v894 = vadd.f32 %v855, %v878
      %v895 = vadd.f32 %v856, %v878
      %v896 = vadd.f32 %v857, %v878
      %v897 = vadd.f32 %v858, %v878
      %v898 = vadd.f32 %v859, %v878
      %v899 = vadd.f32 %v860, %v878
      %v900 = vadd.f32 %v861, %v878
      %v901 = vadd.f32 %v862, %v878
      %v902 = vadd.f32 %v863, %v878
      %v903 = vadd.f32 %v864, %v878
      %v904 = vadd.f32 %v865, %v878
      %v905 = vadd.f32 %v866, %v878
      %v906 = vadd.f32 %v867, %v878
      %v907 = vadd.f32 %v868, %v878
      %v908 = vadd.f32 %v869, %v878
      %v909 = vadd.f32 %v870, %v878
      %v910 = vadd.f32 %v871, %v878
      %v911 = vadd.f32 %v872, %v878
      %v912 = vld [vmem:[%s6] sm:$0xff]
      %v913 = vld [vmem:[%s6 + $0x8] sm:$0xff]
      %v914 = vld [vmem:[%s6 + $0x10] sm:$0xff]
      %v915 = vld [vmem:[%s6 + $0x18] sm:$0xff]
      %v916 = vld [vmem:[%s6 + $0x20] sm:$0xff]
      %v917 = vld [vmem:[%s6 + $0x28] sm:$0xff]
      %v918 = vld [vmem:[%s6 + $0x30] sm:$0xff]
      %v919 = vld [vmem:[%s6 + $0x38] sm:$0xff]
      %v920 = vld [vmem:[%s7] sm:$0x1]
      %v922 = vlaneseq
      %v923 = vshrl.u32 %v922, 7
      %v924 = vsub.s32 0, %v923
      %v925 = vrot.slane %v920, %v924
      %v928 = vsel %vm440, %v880, 0
      %v931 = vsel %vm440, %v881, 0
      %v934 = vsel %vm440, %v882, 0
      %v937 = vsel %vm440, %v883, 0
      %v940 = vsel %vm440, %v884, 0
      %v943 = vsel %vm440, %v885, 0
      %v946 = vsel %vm440, %v886, 0
      %v949 = vsel %vm440, %v887, 0
      %v952 = vsel %vm440, %v888, 0
      %v955 = vsel %vm440, %v889, 0
      %v958 = vsel %vm440, %v890, 0
      %v961 = vsel %vm440, %v891, 0
      %v964 = vsel %vm440, %v892, 0
      %v967 = vsel %vm440, %v893, 0
      %v970 = vsel %vm440, %v894, 0
      %v973 = vsel %vm440, %v895, 0
      %v976 = vsel %vm440, %v896, 0
      %v979 = vsel %vm440, %v897, 0
      %v982 = vsel %vm440, %v898, 0
      %v985 = vsel %vm440, %v899, 0
      %v988 = vsel %vm440, %v900, 0
      %v991 = vsel %vm440, %v901, 0
      %v994 = vsel %vm440, %v902, 0
      %v997 = vsel %vm440, %v903, 0
      %v1000 = vsel %vm440, %v904, 0
      %v1003 = vsel %vm440, %v905, 0
      %v1006 = vsel %vm440, %v906, 0
      %v1009 = vsel %vm440, %v907, 0
      %v1012 = vsel %vm440, %v908, 0
      %v1015 = vsel %vm440, %v909, 0
      %v1018 = vsel %vm440, %v910, 0
      %v1021 = vsel %vm440, %v911, 0
      %1023 = vmatprep.subr.mxu0 0.0
      %1024 = vmatpush1.msra.mxu0 0.0
      %1025 = vmatprep.subr.mxu0 0.0
      %1026 = vmatpush1.msra.mxu0 0.0
      %1027 = vmatprep.subr.mxu0 0.0
      %1028 = vmatpush1.msra.mxu0 0.0
      %1029 = vmatprep.subr.mxu0 0.0
      %1030 = vmatpush1.msra.mxu0 0.0
      %1031 = vmatprep.subr.mxu0 0.0
      %1032 = vmatpush1.msra.mxu0 0.0
      %1033 = vmatprep.subr.mxu0 0.0
      %1034 = vmatpush1.msra.mxu0 0.0
      %1035 = vmatprep.subr.mxu0 0.0
      %1036 = vmatpush1.msra.mxu0 0.0
      %1037 = vmatprep.subr.mxu0 0.0
      %1038 = vmatpush1.msra.mxu0 0.0
      %1039 = vmatprep.subr.mxu0 0.0
      %1040 = vmatpush1.msra.mxu0 %v919
      %1041 = vmatprep.subr.mxu0 0.0
      %1042 = vmatpush1.msra.mxu0 %v918
      %1043 = vmatprep.subr.mxu0 0.0
      %1044 = vmatpush1.msra.mxu0 %v917
      %1045 = vmatprep.subr.mxu0 0.0
      %1046 = vmatpush1.msra.mxu0 %v916
      %1047 = vmatprep.subr.mxu0 0.0
      %1048 = vmatpush1.msra.mxu0 %v915
      %1049 = vmatprep.subr.mxu0 0.0
      %1050 = vmatpush1.msra.mxu0 %v914
      %1051 = vmatprep.subr.mxu0 0.0
      %1052 = vmatpush1.msra.mxu0 %v913
      %1053 = vmatprep.subr.mxu0 0.0
      %1054 = vmatpush1.msra.mxu0 %v912
      %1055 = vmatprep.subr.mxu0 0.0
      %1056 = vmatpush2.msra.mxu0 0.0
      %1057 = vmatprep.subr.mxu0 0.0
      %1058 = vmatpush2.msra.mxu0 0.0
      %1059 = vmatprep.subr.mxu0 0.0
      %1060 = vmatpush2.msra.mxu0 0.0
      %1061 = vmatprep.subr.mxu0 0.0
      %1062 = vmatpush2.msra.mxu0 0.0
      %1063 = vmatprep.subr.mxu0 0.0
      %1064 = vmatpush2.msra.mxu0 0.0
      %1065 = vmatprep.subr.mxu0 0.0
      %1066 = vmatpush2.msra.mxu0 0.0
      %1067 = vmatprep.subr.mxu0 0.0
      %1068 = vmatpush2.msra.mxu0 0.0
      %1069 = vmatprep.subr.mxu0 0.0
      %1070 = vmatpush2.msra.mxu0 0.0
      %1071 = vmatprep.subr.mxu0 0.0
      %1072 = vmatpush2.msra.mxu0 0.0
      %1073 = vmatprep.subr.mxu0 0.0
      %1074 = vmatpush2.msra.mxu0 0.0
      %1075 = vmatprep.subr.mxu0 0.0
      %1076 = vmatpush2.msra.mxu0 0.0
      %1077 = vmatprep.subr.mxu0 0.0
      %1078 = vmatpush2.msra.mxu0 0.0
      %1079 = vmatprep.subr.mxu0 0.0
      %1080 = vmatpush2.msra.mxu0 0.0
      %1081 = vmatprep.subr.mxu0 0.0
      %1082 = vmatpush2.msra.mxu0 0.0
      %1083 = vmatprep.subr.mxu0 0.0
      %1084 = vmatpush2.msra.mxu0 0.0
      %1085 = vmatprep.subr.mxu0 0.0
      %1086 = vmatpush2.msra.mxu0 0.0
      %1087 = vmatprep.mubr.f32.mxu0 0.0
      %1088 = vmatmul.mubr.f32.gmra.mxu0 %v928
      %v1089 = vpop.f32.mrf.mxu0
      %v1090 = vadd.f32 %v925, %v1089
      %v1091 = vpop.f32.mrf.mxu0
      %1092 = vmatprep.mubr.f32.mxu0 0.0
      %1093 = vmatmul.mubr.f32.gmra.mxu0 %v931
      %v1094 = vpop.f32.mrf.mxu0
      %v1095 = vadd.f32 %v925, %v1094
      %v1096 = vpop.f32.mrf.mxu0
      %1097 = vmatprep.mubr.f32.mxu0 0.0
      %1098 = vmatmul.mubr.f32.gmra.mxu0 %v934
      %v1099 = vpop.f32.mrf.mxu0
      %v1100 = vadd.f32 %v925, %v1099
      %v1101 = vpop.f32.mrf.mxu0
      %1102 = vmatprep.mubr.f32.mxu0 0.0
      %1103 = vmatmul.mubr.f32.gmra.mxu0 %v937
      %v1104 = vpop.f32.mrf.mxu0
      %v1105 = vadd.f32 %v925, %v1104
      %v1106 = vpop.f32.mrf.mxu0
      %1107 = vmatprep.mubr.f32.mxu0 0.0
      %1108 = vmatmul.mubr.f32.gmra.mxu0 %v940
      %v1109 = vpop.f32.mrf.mxu0
      %v1110 = vadd.f32 %v925, %v1109
      %v1111 = vpop.f32.mrf.mxu0
      %1112 = vmatprep.mubr.f32.mxu0 0.0
      %1113 = vmatmul.mubr.f32.gmra.mxu0 %v943
      %v1114 = vpop.f32.mrf.mxu0
      %v1115 = vadd.f32 %v925, %v1114
      %v1116 = vpop.f32.mrf.mxu0
      %1117 = vmatprep.mubr.f32.mxu0 0.0
      %1118 = vmatmul.mubr.f32.gmra.mxu0 %v946
      %v1119 = vpop.f32.mrf.mxu0
      %v1120 = vadd.f32 %v925, %v1119
      %v1121 = vpop.f32.mrf.mxu0
      %1122 = vmatprep.mubr.f32.mxu0 0.0
      %1123 = vmatmul.mubr.f32.gmra.mxu0 %v949
      %v1124 = vpop.f32.mrf.mxu0
      %v1125 = vadd.f32 %v925, %v1124
      %v1126 = vpop.f32.mrf.mxu0
      %1127 = vmatprep.mubr.f32.mxu0 0.0
      %1128 = vmatmul.mubr.f32.gmra.mxu0 %v952
      %v1129 = vpop.f32.mrf.mxu0
      %v1130 = vadd.f32 %v925, %v1129
      %v1131 = vpop.f32.mrf.mxu0
      %1132 = vmatprep.mubr.f32.mxu0 0.0
      %1133 = vmatmul.mubr.f32.gmra.mxu0 %v955
      %v1134 = vpop.f32.mrf.mxu0
      %v1135 = vadd.f32 %v925, %v1134
      %v1136 = vpop.f32.mrf.mxu0
      %1137 = vmatprep.mubr.f32.mxu0 0.0
      %1138 = vmatmul.mubr.f32.gmra.mxu0 %v958
      %v1139 = vpop.f32.mrf.mxu0
      %v1140 = vadd.f32 %v925, %v1139
      %v1141 = vpop.f32.mrf.mxu0
      %1142 = vmatprep.mubr.f32.mxu0 0.0
      %1143 = vmatmul.mubr.f32.gmra.mxu0 %v961
      %v1144 = vpop.f32.mrf.mxu0
      %v1145 = vadd.f32 %v925, %v1144
      %v1146 = vpop.f32.mrf.mxu0
      %1147 = vmatprep.mubr.f32.mxu0 0.0
      %1148 = vmatmul.mubr.f32.gmra.mxu0 %v964
      %v1149 = vpop.f32.mrf.mxu0
      %v1150 = vadd.f32 %v925, %v1149
      %v1151 = vpop.f32.mrf.mxu0
      %1152 = vmatprep.mubr.f32.mxu0 0.0
      %1153 = vmatmul.mubr.f32.gmra.mxu0 %v967
      %v1154 = vpop.f32.mrf.mxu0
      %v1155 = vadd.f32 %v925, %v1154
      %v1156 = vpop.f32.mrf.mxu0
      %1157 = vmatprep.mubr.f32.mxu0 0.0
      %1158 = vmatmul.mubr.f32.gmra.mxu0 %v970
      %v1159 = vpop.f32.mrf.mxu0
      %v1160 = vadd.f32 %v925, %v1159
      %v1161 = vpop.f32.mrf.mxu0
      %1162 = vmatprep.mubr.f32.mxu0 0.0
      %1163 = vmatmul.mubr.f32.gmra.mxu0 %v973
      %v1164 = vpop.f32.mrf.mxu0
      %v1165 = vadd.f32 %v925, %v1164
      %v1166 = vpop.f32.mrf.mxu0
      %1167 = vmatprep.mubr.f32.mxu0 0.0
      %1168 = vmatmul.mubr.f32.gmra.mxu0 %v976
      %v1169 = vpop.f32.mrf.mxu0
      %v1170 = vadd.f32 %v925, %v1169
      %v1171 = vpop.f32.mrf.mxu0
      %1172 = vmatprep.mubr.f32.mxu0 0.0
      %1173 = vmatmul.mubr.f32.gmra.mxu0 %v979
      %v1174 = vpop.f32.mrf.mxu0
      %v1175 = vadd.f32 %v925, %v1174
      %v1176 = vpop.f32.mrf.mxu0
      %1177 = vmatprep.mubr.f32.mxu0 0.0
      %1178 = vmatmul.mubr.f32.gmra.mxu0 %v982
      %v1179 = vpop.f32.mrf.mxu0
      %v1180 = vadd.f32 %v925, %v1179
      %v1181 = vpop.f32.mrf.mxu0
      %1182 = vmatprep.mubr.f32.mxu0 0.0
      %1183 = vmatmul.mubr.f32.gmra.mxu0 %v985
      %v1184 = vpop.f32.mrf.mxu0
      %v1185 = vadd.f32 %v925, %v1184
      %v1186 = vpop.f32.mrf.mxu0
      %1187 = vmatprep.mubr.f32.mxu0 0.0
      %1188 = vmatmul.mubr.f32.gmra.mxu0 %v988
      %v1189 = vpop.f32.mrf.mxu0
      %v1190 = vadd.f32 %v925, %v1189
      %v1191 = vpop.f32.mrf.mxu0
      %1192 = vmatprep.mubr.f32.mxu0 0.0
      %1193 = vmatmul.mubr.f32.gmra.mxu0 %v991
      %v1194 = vpop.f32.mrf.mxu0
      %v1195 = vadd.f32 %v925, %v1194
      %v1196 = vpop.f32.mrf.mxu0
      %1197 = vmatprep.mubr.f32.mxu0 0.0
      %1198 = vmatmul.mubr.f32.gmra.mxu0 %v994
      %v1199 = vpop.f32.mrf.mxu0
      %v1200 = vadd.f32 %v925, %v1199
      %v1201 = vpop.f32.mrf.mxu0
      %1202 = vmatprep.mubr.f32.mxu0 0.0
      %1203 = vmatmul.mubr.f32.gmra.mxu0 %v997
      %v1204 = vpop.f32.mrf.mxu0
      %v1205 = vadd.f32 %v925, %v1204
      %v1206 = vpop.f32.mrf.mxu0
      %1207 = vmatprep.mubr.f32.mxu0 0.0
      %1208 = vmatmul.mubr.f32.gmra.mxu0 %v1000
      %v1209 = vpop.f32.mrf.mxu0
      %v1210 = vadd.f32 %v925, %v1209
      %v1211 = vpop.f32.mrf.mxu0
      %1212 = vmatprep.mubr.f32.mxu0 0.0
      %1213 = vmatmul.mubr.f32.gmra.mxu0 %v1003
      %v1214 = vpop.f32.mrf.mxu0
      %v1215 = vadd.f32 %v925, %v1214
      %v1216 = vpop.f32.mrf.mxu0
      %1217 = vmatprep.mubr.f32.mxu0 0.0
      %1218 = vmatmul.mubr.f32.gmra.mxu0 %v1006
      %v1219 = vpop.f32.mrf.mxu0
      %v1220 = vadd.f32 %v925, %v1219
      %v1221 = vpop.f32.mrf.mxu0
      %1222 = vmatprep.mubr.f32.mxu0 0.0
      %1223 = vmatmul.mubr.f32.gmra.mxu0 %v1009
      %v1224 = vpop.f32.mrf.mxu0
      %v1225 = vadd.f32 %v925, %v1224
      %v1226 = vpop.f32.mrf.mxu0
      %1227 = vmatprep.mubr.f32.mxu0 0.0
      %1228 = vmatmul.mubr.f32.gmra.mxu0 %v1012
      %v1229 = vpop.f32.mrf.mxu0
      %v1230 = vadd.f32 %v925, %v1229
      %v1231 = vpop.f32.mrf.mxu0
      %1232 = vmatprep.mubr.f32.mxu0 0.0
      %1233 = vmatmul.mubr.f32.gmra.mxu0 %v1015
      %v1234 = vpop.f32.mrf.mxu0
      %v1235 = vadd.f32 %v925, %v1234
      %v1236 = vpop.f32.mrf.mxu0
      %1237 = vmatprep.mubr.f32.mxu0 0.0
      %1238 = vmatmul.mubr.f32.gmra.mxu0 %v1018
      %v1239 = vpop.f32.mrf.mxu0
      %v1240 = vadd.f32 %v925, %v1239
      %v1241 = vpop.f32.mrf.mxu0
      %1242 = vmatprep.mubr.f32.mxu0 0.0
      %1243 = vmatmul.mubr.f32.gmra.mxu0 %v1021
      %v1244 = vpop.f32.mrf.mxu0
      %v1245 = vadd.f32 %v925, %v1244
      %v1246 = vpop.f32.mrf.mxu0
      %1247 = vdwg.mxu0
      %v1248 = vmul.f32 %v1090, 0.5
      %v1249 = vmul.f32 %v1095, 0.5
      %v1250 = vmul.f32 %v1100, 0.5
      %v1251 = vmul.f32 %v1105, 0.5
      %v1252 = vmul.f32 %v1110, 0.5
      %v1253 = vmul.f32 %v1115, 0.5
      %v1254 = vmul.f32 %v1120, 0.5
      %v1255 = vmul.f32 %v1125, 0.5
      %v1256 = vmul.f32 %v1130, 0.5
      %v1257 = vmul.f32 %v1135, 0.5
      %v1258 = vmul.f32 %v1140, 0.5
      %v1259 = vmul.f32 %v1145, 0.5
      %v1260 = vmul.f32 %v1150, 0.5
      %v1261 = vmul.f32 %v1155, 0.5
      %v1262 = vmul.f32 %v1160, 0.5
      %v1263 = vmul.f32 %v1165, 0.5
      %v1264 = vmul.f32 %v1170, 0.5
      %v1265 = vmul.f32 %v1175, 0.5
      %v1266 = vmul.f32 %v1180, 0.5
      %v1267 = vmul.f32 %v1185, 0.5
      %v1268 = vmul.f32 %v1190, 0.5
      %v1269 = vmul.f32 %v1195, 0.5
      %v1270 = vmul.f32 %v1200, 0.5
      %v1271 = vmul.f32 %v1205, 0.5
      %v1272 = vmul.f32 %v1210, 0.5
      %v1273 = vmul.f32 %v1215, 0.5
      %v1274 = vmul.f32 %v1220, 0.5
      %v1275 = vmul.f32 %v1225, 0.5
      %v1276 = vmul.f32 %v1230, 0.5
      %v1277 = vmul.f32 %v1235, 0.5
      %v1278 = vmul.f32 %v1240, 0.5
      %v1279 = vmul.f32 %v1245, 0.5
      %v1280 = vld [vmem:[%s389] sm:$0xff]
      %v1281 = vld [vmem:[%s389 + $0x8] sm:$0xff]
      %v1282 = vld [vmem:[%s389 + $0x10] sm:$0xff]
      %v1283 = vld [vmem:[%s389 + $0x18] sm:$0xff]
      %v1284 = vld [vmem:[%s389 + $0x20] sm:$0xff]
      %v1285 = vld [vmem:[%s389 + $0x28] sm:$0xff]
      %v1286 = vld [vmem:[%s389 + $0x30] sm:$0xff]
      %v1287 = vld [vmem:[%s389 + $0x38] sm:$0xff]
      %v1288 = vld [vmem:[%s389 + $0x40] sm:$0xff]
      %v1289 = vld [vmem:[%s389 + $0x48] sm:$0xff]
      %v1290 = vld [vmem:[%s389 + $0x50] sm:$0xff]
      %v1291 = vld [vmem:[%s389 + $0x58] sm:$0xff]
      %v1292 = vld [vmem:[%s389 + $0x60] sm:$0xff]
      %v1293 = vld [vmem:[%s389 + $0x68] sm:$0xff]
      %v1294 = vld [vmem:[%s389 + $0x70] sm:$0xff]
      %v1295 = vld [vmem:[%s389 + $0x78] sm:$0xff]
      %v1296 = vmul.f32 %v1280, 0.5
      %v1297 = vmul.f32 %v1281, 0.5
      %v1298 = vmul.f32 %v1282, 0.5
      %v1299 = vmul.f32 %v1283, 0.5
      %v1300 = vmul.f32 %v1284, 0.5
      %v1301 = vmul.f32 %v1285, 0.5
      %v1302 = vmul.f32 %v1286, 0.5
      %v1303 = vmul.f32 %v1287, 0.5
      %v1304 = vmul.f32 %v1288, 0.5
      %v1305 = vmul.f32 %v1289, 0.5
      %v1306 = vmul.f32 %v1290, 0.5
      %v1307 = vmul.f32 %v1291, 0.5
      %v1308 = vmul.f32 %v1292, 0.5
      %v1309 = vmul.f32 %v1293, 0.5
      %v1310 = vmul.f32 %v1294, 0.5
      %v1311 = vmul.f32 %v1295, 0.5
      %vm1312 = vcmask 130048
      %v1314 = vsel %vm1312, %v1248, 0
      %v1317 = vsel %vm1312, %v1249, 0
      %v1320 = vsel %vm1312, %v1250, 0
      %v1323 = vsel %vm1312, %v1251, 0
      %v1326 = vsel %vm1312, %v1252, 0
      %v1329 = vsel %vm1312, %v1253, 0
      %v1332 = vsel %vm1312, %v1254, 0
      %v1335 = vsel %vm1312, %v1255, 0
      %v1338 = vsel %vm1312, %v1256, 0
      %v1341 = vsel %vm1312, %v1257, 0
      %v1344 = vsel %vm1312, %v1258, 0
      %v1347 = vsel %vm1312, %v1259, 0
      %v1350 = vsel %vm1312, %v1260, 0
      %v1353 = vsel %vm1312, %v1261, 0
      %v1356 = vsel %vm1312, %v1262, 0
      %v1359 = vsel %vm1312, %v1263, 0
      %v1362 = vsel %vm1312, %v1264, 0
      %v1365 = vsel %vm1312, %v1265, 0
      %v1368 = vsel %vm1312, %v1266, 0
      %v1371 = vsel %vm1312, %v1267, 0
      %v1374 = vsel %vm1312, %v1268, 0
      %v1377 = vsel %vm1312, %v1269, 0
      %v1380 = vsel %vm1312, %v1270, 0
      %v1383 = vsel %vm1312, %v1271, 0
      %v1386 = vsel %vm1312, %v1272, 0
      %v1389 = vsel %vm1312, %v1273, 0
      %v1392 = vsel %vm1312, %v1274, 0
      %v1395 = vsel %vm1312, %v1275, 0
      %v1398 = vsel %vm1312, %v1276, 0
      %v1401 = vsel %vm1312, %v1277, 0
      %v1404 = vsel %vm1312, %v1278, 0
      %v1407 = vsel %vm1312, %v1279, 0
      %1409 = vmatprep.subr.mxu0 0.0
      %1410 = vmatpush1.msra.mxu0 0.0
      %1411 = vmatprep.subr.mxu0 0.0
      %1412 = vmatpush1.msra.mxu0 0.0
      %1413 = vmatprep.subr.mxu0 0.0
      %1414 = vmatpush1.msra.mxu0 0.0
      %1415 = vmatprep.subr.mxu0 0.0
      %1416 = vmatpush1.msra.mxu0 0.0
      %1417 = vmatprep.subr.mxu0 0.0
      %1418 = vmatpush1.msra.mxu0 0.0
      %1419 = vmatprep.subr.mxu0 0.0
      %1420 = vmatpush1.msra.mxu0 0.0
      %1421 = vmatprep.subr.mxu0 0.0
      %1422 = vmatpush1.msra.mxu0 0.0
      %1423 = vmatprep.subr.mxu0 0.0
      %1424 = vmatpush1.msra.mxu0 0.0
      %1425 = vmatprep.subr.mxu0 0.0
      %1426 = vmatpush1.msra.mxu0 0.0
      %1427 = vmatprep.subr.mxu0 0.0
      %1428 = vmatpush1.msra.mxu0 0.0
      %1429 = vmatprep.subr.mxu0 0.0
      %1430 = vmatpush1.msra.mxu0 0.0
      %1431 = vmatprep.subr.mxu0 0.0
      %1432 = vmatpush1.msra.mxu0 0.0
      %1433 = vmatprep.subr.mxu0 0.0
      %1434 = vmatpush1.msra.mxu0 0.0
      %1435 = vmatprep.subr.mxu0 0.0
      %1436 = vmatpush1.msra.mxu0 0.0
      %1437 = vmatprep.subr.mxu0 %v1299
      %1438 = vmatpush1.msra.mxu0 %v1298
      %1439 = vmatprep.subr.mxu0 %v1297
      %1440 = vmatpush1.msra.mxu0 %v1296
      %1441 = vmatprep.subr.mxu0 0.0
      %1442 = vmatpush2.msra.mxu0 0.0
      %1443 = vmatprep.subr.mxu0 0.0
      %1444 = vmatpush2.msra.mxu0 0.0
      %1445 = vmatprep.subr.mxu0 0.0
      %1446 = vmatpush2.msra.mxu0 0.0
      %1447 = vmatprep.subr.mxu0 0.0
      %1448 = vmatpush2.msra.mxu0 0.0
      %1449 = vmatprep.subr.mxu0 0.0
      %1450 = vmatpush2.msra.mxu0 0.0
      %1451 = vmatprep.subr.mxu0 0.0
      %1452 = vmatpush2.msra.mxu0 0.0
      %1453 = vmatprep.subr.mxu0 0.0
      %1454 = vmatpush2.msra.mxu0 0.0
      %1455 = vmatprep.subr.mxu0 0.0
      %1456 = vmatpush2.msra.mxu0 0.0
      %1457 = vmatprep.subr.mxu0 0.0
      %1458 = vmatpush2.msra.mxu0 0.0
      %1459 = vmatprep.subr.mxu0 0.0
      %1460 = vmatpush2.msra.mxu0 0.0
      %1461 = vmatprep.subr.mxu0 0.0
      %1462 = vmatpush2.msra.mxu0 0.0
      %1463 = vmatprep.subr.mxu0 0.0
      %1464 = vmatpush2.msra.mxu0 0.0
      %1465 = vmatprep.subr.mxu0 0.0
      %1466 = vmatpush2.msra.mxu0 0.0
      %1467 = vmatprep.subr.mxu0 0.0
      %1468 = vmatpush2.msra.mxu0 0.0
      %1469 = vmatprep.subr.mxu0 0.0
      %1470 = vmatpush2.msra.mxu0 0.0
      %1471 = vmatprep.subr.mxu0 0.0
      %1472 = vmatpush2.msra.mxu0 0.0
      %1473 = vmatprep.mubr.f32.mxu0 0.0
      %1474 = vmatmul.mubr.f32.gmra.mxu0 %v1314
      %v1475 = vpop.f32.mrf.mxu0
      %v1476 = vadd.f32 0.0, %v1475
      %v1477 = vpop.f32.mrf.mxu0
      %v1478 = vadd.f32 0.0, %v1477
      %1479 = vmatprep.mubr.f32.mxu0 0.0
      %1480 = vmatmul.mubr.f32.gmra.mxu0 %v1317
      %v1481 = vpop.f32.mrf.mxu0
      %v1482 = vadd.f32 0.0, %v1481
      %v1483 = vpop.f32.mrf.mxu0
      %v1484 = vadd.f32 0.0, %v1483
      %1485 = vmatprep.mubr.f32.mxu0 0.0
      %1486 = vmatmul.mubr.f32.gmra.mxu0 %v1320
      %v1487 = vpop.f32.mrf.mxu0
      %v1488 = vadd.f32 0.0, %v1487
      %v1489 = vpop.f32.mrf.mxu0
      %v1490 = vadd.f32 0.0, %v1489
      %1491 = vmatprep.mubr.f32.mxu0 0.0
      %1492 = vmatmul.mubr.f32.gmra.mxu0 %v1323
      %v1493 = vpop.f32.mrf.mxu0
      %v1494 = vadd.f32 0.0, %v1493
      %v1495 = vpop.f32.mrf.mxu0
      %v1496 = vadd.f32 0.0, %v1495
      %1497 = vmatprep.mubr.f32.mxu0 0.0
      %1498 = vmatmul.mubr.f32.gmra.mxu0 %v1326
      %v1499 = vpop.f32.mrf.mxu0
      %v1500 = vadd.f32 0.0, %v1499
      %v1501 = vpop.f32.mrf.mxu0
      %v1502 = vadd.f32 0.0, %v1501
      %1503 = vmatprep.mubr.f32.mxu0 0.0
      %1504 = vmatmul.mubr.f32.gmra.mxu0 %v1329
      %v1505 = vpop.f32.mrf.mxu0
      %v1506 = vadd.f32 0.0, %v1505
      %v1507 = vpop.f32.mrf.mxu0
      %v1508 = vadd.f32 0.0, %v1507
      %1509 = vmatprep.mubr.f32.mxu0 0.0
      %1510 = vmatmul.mubr.f32.gmra.mxu0 %v1332
      %v1511 = vpop.f32.mrf.mxu0
      %v1512 = vadd.f32 0.0, %v1511
      %v1513 = vpop.f32.mrf.mxu0
      %v1514 = vadd.f32 0.0, %v1513
      %1515 = vmatprep.mubr.f32.mxu0 0.0
      %1516 = vmatmul.mubr.f32.gmra.mxu0 %v1335
      %v1517 = vpop.f32.mrf.mxu0
      %v1518 = vadd.f32 0.0, %v1517
      %v1519 = vpop.f32.mrf.mxu0
      %v1520 = vadd.f32 0.0, %v1519
      %1521 = vmatprep.mubr.f32.mxu0 0.0
      %1522 = vmatmul.mubr.f32.gmra.mxu0 %v1338
      %v1523 = vpop.f32.mrf.mxu0
      %v1524 = vadd.f32 0.0, %v1523
      %v1525 = vpop.f32.mrf.mxu0
      %v1526 = vadd.f32 0.0, %v1525
      %1527 = vmatprep.mubr.f32.mxu0 0.0
      %1528 = vmatmul.mubr.f32.gmra.mxu0 %v1341
      %v1529 = vpop.f32.mrf.mxu0
      %v1530 = vadd.f32 0.0, %v1529
      %v1531 = vpop.f32.mrf.mxu0
      %v1532 = vadd.f32 0.0, %v1531
      %1533 = vmatprep.mubr.f32.mxu0 0.0
      %1534 = vmatmul.mubr.f32.gmra.mxu0 %v1344
      %v1535 = vpop.f32.mrf.mxu0
      %v1536 = vadd.f32 0.0, %v1535
      %v1537 = vpop.f32.mrf.mxu0
      %v1538 = vadd.f32 0.0, %v1537
      %1539 = vmatprep.mubr.f32.mxu0 0.0
      %1540 = vmatmul.mubr.f32.gmra.mxu0 %v1347
      %v1541 = vpop.f32.mrf.mxu0
      %v1542 = vadd.f32 0.0, %v1541
      %v1543 = vpop.f32.mrf.mxu0
      %v1544 = vadd.f32 0.0, %v1543
      %1545 = vmatprep.mubr.f32.mxu0 0.0
      %1546 = vmatmul.mubr.f32.gmra.mxu0 %v1350
      %v1547 = vpop.f32.mrf.mxu0
      %v1548 = vadd.f32 0.0, %v1547
      %v1549 = vpop.f32.mrf.mxu0
      %v1550 = vadd.f32 0.0, %v1549
      %1551 = vmatprep.mubr.f32.mxu0 0.0
      %1552 = vmatmul.mubr.f32.gmra.mxu0 %v1353
      %v1553 = vpop.f32.mrf.mxu0
      %v1554 = vadd.f32 0.0, %v1553
      %v1555 = vpop.f32.mrf.mxu0
      %v1556 = vadd.f32 0.0, %v1555
      %1557 = vmatprep.mubr.f32.mxu0 0.0
      %1558 = vmatmul.mubr.f32.gmra.mxu0 %v1356
      %v1559 = vpop.f32.mrf.mxu0
      %v1560 = vadd.f32 0.0, %v1559
      %v1561 = vpop.f32.mrf.mxu0
      %v1562 = vadd.f32 0.0, %v1561
      %1563 = vmatprep.mubr.f32.mxu0 0.0
      %1564 = vmatmul.mubr.f32.gmra.mxu0 %v1359
      %v1565 = vpop.f32.mrf.mxu0
      %v1566 = vadd.f32 0.0, %v1565
      %v1567 = vpop.f32.mrf.mxu0
      %v1568 = vadd.f32 0.0, %v1567
      %1569 = vmatprep.mubr.f32.mxu0 0.0
      %1570 = vmatmul.mubr.f32.gmra.mxu0 %v1362
      %v1571 = vpop.f32.mrf.mxu0
      %v1572 = vadd.f32 0.0, %v1571
      %v1573 = vpop.f32.mrf.mxu0
      %v1574 = vadd.f32 0.0, %v1573
      %1575 = vmatprep.mubr.f32.mxu0 0.0
      %1576 = vmatmul.mubr.f32.gmra.mxu0 %v1365
      %v1577 = vpop.f32.mrf.mxu0
      %v1578 = vadd.f32 0.0, %v1577
      %v1579 = vpop.f32.mrf.mxu0
      %v1580 = vadd.f32 0.0, %v1579
      %1581 = vmatprep.mubr.f32.mxu0 0.0
      %1582 = vmatmul.mubr.f32.gmra.mxu0 %v1368
      %v1583 = vpop.f32.mrf.mxu0
      %v1584 = vadd.f32 0.0, %v1583
      %v1585 = vpop.f32.mrf.mxu0
      %v1586 = vadd.f32 0.0, %v1585
      %1587 = vmatprep.mubr.f32.mxu0 0.0
      %1588 = vmatmul.mubr.f32.gmra.mxu0 %v1371
      %v1589 = vpop.f32.mrf.mxu0
      %v1590 = vadd.f32 0.0, %v1589
      %v1591 = vpop.f32.mrf.mxu0
      %v1592 = vadd.f32 0.0, %v1591
      %1593 = vmatprep.mubr.f32.mxu0 0.0
      %1594 = vmatmul.mubr.f32.gmra.mxu0 %v1374
      %v1595 = vpop.f32.mrf.mxu0
      %v1596 = vadd.f32 0.0, %v1595
      %v1597 = vpop.f32.mrf.mxu0
      %v1598 = vadd.f32 0.0, %v1597
      %1599 = vmatprep.mubr.f32.mxu0 0.0
      %1600 = vmatmul.mubr.f32.gmra.mxu0 %v1377
      %v1601 = vpop.f32.mrf.mxu0
      %v1602 = vadd.f32 0.0, %v1601
      %v1603 = vpop.f32.mrf.mxu0
      %v1604 = vadd.f32 0.0, %v1603
      %1605 = vmatprep.mubr.f32.mxu0 0.0
      %1606 = vmatmul.mubr.f32.gmra.mxu0 %v1380
      %v1607 = vpop.f32.mrf.mxu0
      %v1608 = vadd.f32 0.0, %v1607
      %v1609 = vpop.f32.mrf.mxu0
      %v1610 = vadd.f32 0.0, %v1609
      %1611 = vmatprep.mubr.f32.mxu0 0.0
      %1612 = vmatmul.mubr.f32.gmra.mxu0 %v1383
      %v1613 = vpop.f32.mrf.mxu0
      %v1614 = vadd.f32 0.0, %v1613
      %v1615 = vpop.f32.mrf.mxu0
      %v1616 = vadd.f32 0.0, %v1615
      %1617 = vmatprep.mubr.f32.mxu0 0.0
      %1618 = vmatmul.mubr.f32.gmra.mxu0 %v1386
      %v1619 = vpop.f32.mrf.mxu0
      %v1620 = vadd.f32 0.0, %v1619
      %v1621 = vpop.f32.mrf.mxu0
      %v1622 = vadd.f32 0.0, %v1621
      %1623 = vmatprep.mubr.f32.mxu0 0.0
      %1624 = vmatmul.mubr.f32.gmra.mxu0 %v1389
      %v1625 = vpop.f32.mrf.mxu0
      %v1626 = vadd.f32 0.0, %v1625
      %v1627 = vpop.f32.mrf.mxu0
      %v1628 = vadd.f32 0.0, %v1627
      %1629 = vmatprep.mubr.f32.mxu0 0.0
      %1630 = vmatmul.mubr.f32.gmra.mxu0 %v1392
      %v1631 = vpop.f32.mrf.mxu0
      %v1632 = vadd.f32 0.0, %v1631
      %v1633 = vpop.f32.mrf.mxu0
      %v1634 = vadd.f32 0.0, %v1633
      %1635 = vmatprep.mubr.f32.mxu0 0.0
      %1636 = vmatmul.mubr.f32.gmra.mxu0 %v1395
      %v1637 = vpop.f32.mrf.mxu0
      %v1638 = vadd.f32 0.0, %v1637
      %v1639 = vpop.f32.mrf.mxu0
      %v1640 = vadd.f32 0.0, %v1639
      %1641 = vmatprep.mubr.f32.mxu0 0.0
      %1642 = vmatmul.mubr.f32.gmra.mxu0 %v1398
      %v1643 = vpop.f32.mrf.mxu0
      %v1644 = vadd.f32 0.0, %v1643
      %v1645 = vpop.f32.mrf.mxu0
      %v1646 = vadd.f32 0.0, %v1645
      %1647 = vmatprep.mubr.f32.mxu0 0.0
      %1648 = vmatmul.mubr.f32.gmra.mxu0 %v1401
      %v1649 = vpop.f32.mrf.mxu0
      %v1650 = vadd.f32 0.0, %v1649
      %v1651 = vpop.f32.mrf.mxu0
      %v1652 = vadd.f32 0.0, %v1651
      %1653 = vmatprep.mubr.f32.mxu0 0.0
      %1654 = vmatmul.mubr.f32.gmra.mxu0 %v1404
      %v1655 = vpop.f32.mrf.mxu0
      %v1656 = vadd.f32 0.0, %v1655
      %v1657 = vpop.f32.mrf.mxu0
      %v1658 = vadd.f32 0.0, %v1657
      %1659 = vmatprep.mubr.f32.mxu0 0.0
      %1660 = vmatmul.mubr.f32.gmra.mxu0 %v1407
      %v1661 = vpop.f32.mrf.mxu0
      %v1662 = vadd.f32 0.0, %v1661
      %v1663 = vpop.f32.mrf.mxu0
      %v1664 = vadd.f32 0.0, %v1663
      %1665 = vdwg.mxu0
      %v1666 = vmax.f32 %v1476, %v1478
      %1667 = vmax.xlane.f32.xlu0 %v1666
      %v1668 = vpop.xlane.xlu0 %1667
      %v1669 = vmax.f32 %v1482, %v1484
      %1670 = vmax.xlane.f32.xlu0 %v1669
      %v1671 = vpop.xlane.xlu0 %1670
      %v1672 = vmax.f32 %v1488, %v1490
      %1673 = vmax.xlane.f32.xlu0 %v1672
      %v1674 = vpop.xlane.xlu0 %1673
      %v1675 = vmax.f32 %v1494, %v1496
      %1676 = vmax.xlane.f32.xlu0 %v1675
      %v1677 = vpop.xlane.xlu0 %1676
      %v1678 = vmax.f32 %v1500, %v1502
      %1679 = vmax.xlane.f32.xlu0 %v1678
      %v1680 = vpop.xlane.xlu0 %1679
      %v1681 = vmax.f32 %v1506, %v1508
      %1682 = vmax.xlane.f32.xlu0 %v1681
      %v1683 = vpop.xlane.xlu0 %1682
      %v1684 = vmax.f32 %v1512, %v1514
      %1685 = vmax.xlane.f32.xlu0 %v1684
      %v1686 = vpop.xlane.xlu0 %1685
      %v1687 = vmax.f32 %v1518, %v1520
      %1688 = vmax.xlane.f32.xlu0 %v1687
      %v1689 = vpop.xlane.xlu0 %1688
      %v1690 = vmax.f32 %v1524, %v1526
      %1691 = vmax.xlane.f32.xlu0 %v1690
      %v1692 = vpop.xlane.xlu0 %1691
      %v1693 = vmax.f32 %v1530, %v1532
      %1694 = vmax.xlane.f32.xlu0 %v1693
      %v1695 = vpop.xlane.xlu0 %1694
      %v1696 = vmax.f32 %v1536, %v1538
      %1697 = vmax.xlane.f32.xlu0 %v1696
      %v1698 = vpop.xlane.xlu0 %1697
      %v1699 = vmax.f32 %v1542, %v1544
      %1700 = vmax.xlane.f32.xlu0 %v1699
      %v1701 = vpop.xlane.xlu0 %1700
      %v1702 = vmax.f32 %v1548, %v1550
      %1703 = vmax.xlane.f32.xlu0 %v1702
      %v1704 = vpop.xlane.xlu0 %1703
      %v1705 = vmax.f32 %v1554, %v1556
      %1706 = vmax.xlane.f32.xlu0 %v1705
      %v1707 = vpop.xlane.xlu0 %1706
      %v1708 = vmax.f32 %v1560, %v1562
      %1709 = vmax.xlane.f32.xlu0 %v1708
      %v1710 = vpop.xlane.xlu0 %1709
      %v1711 = vmax.f32 %v1566, %v1568
      %1712 = vmax.xlane.f32.xlu0 %v1711
      %v1713 = vpop.xlane.xlu0 %1712
      %v1714 = vmax.f32 %v1572, %v1574
      %1715 = vmax.xlane.f32.xlu0 %v1714
      %v1716 = vpop.xlane.xlu0 %1715
      %v1717 = vmax.f32 %v1578, %v1580
      %1718 = vmax.xlane.f32.xlu0 %v1717
      %v1719 = vpop.xlane.xlu0 %1718
      %v1720 = vmax.f32 %v1584, %v1586
      %1721 = vmax.xlane.f32.xlu0 %v1720
      %v1722 = vpop.xlane.xlu0 %1721
      %v1723 = vmax.f32 %v1590, %v1592
      %1724 = vmax.xlane.f32.xlu0 %v1723
      %v1725 = vpop.xlane.xlu0 %1724
      %v1726 = vmax.f32 %v1596, %v1598
      %1727 = vmax.xlane.f32.xlu0 %v1726
      %v1728 = vpop.xlane.xlu0 %1727
      %v1729 = vmax.f32 %v1602, %v1604
      %1730 = vmax.xlane.f32.xlu0 %v1729
      %v1731 = vpop.xlane.xlu0 %1730
      %v1732 = vmax.f32 %v1608, %v1610
      %1733 = vmax.xlane.f32.xlu0 %v1732
      %v1734 = vpop.xlane.xlu0 %1733
      %v1735 = vmax.f32 %v1614, %v1616
      %1736 = vmax.xlane.f32.xlu0 %v1735
      %v1737 = vpop.xlane.xlu0 %1736
      %v1738 = vmax.f32 %v1620, %v1622
      %1739 = vmax.xlane.f32.xlu0 %v1738
      %v1740 = vpop.xlane.xlu0 %1739
      %v1741 = vmax.f32 %v1626, %v1628
      %1742 = vmax.xlane.f32.xlu0 %v1741
      %v1743 = vpop.xlane.xlu0 %1742
      %v1744 = vmax.f32 %v1632, %v1634
      %1745 = vmax.xlane.f32.xlu0 %v1744
      %v1746 = vpop.xlane.xlu0 %1745
      %v1747 = vmax.f32 %v1638, %v1640
      %1748 = vmax.xlane.f32.xlu0 %v1747
      %v1749 = vpop.xlane.xlu0 %1748
      %v1750 = vmax.f32 %v1644, %v1646
      %1751 = vmax.xlane.f32.xlu0 %v1750
      %v1752 = vpop.xlane.xlu0 %1751
      %v1753 = vmax.f32 %v1650, %v1652
      %1754 = vmax.xlane.f32.xlu0 %v1753
      %v1755 = vpop.xlane.xlu0 %1754
      %v1756 = vmax.f32 %v1656, %v1658
      %1757 = vmax.xlane.f32.xlu0 %v1756
      %v1758 = vpop.xlane.xlu0 %1757
      %v1759 = vmax.f32 %v1662, %v1664
      %1760 = vmax.xlane.f32.xlu0 %v1759
      %v1761 = vpop.xlane.xlu0 %1760
      %v1762 = vsub.f32 %v1476, %v1668
      %v1763 = vsub.f32 %v1478, %v1668
      %v1764 = vsub.f32 %v1482, %v1671
      %v1765 = vsub.f32 %v1484, %v1671
      %v1766 = vsub.f32 %v1488, %v1674
      %v1767 = vsub.f32 %v1490, %v1674
      %v1768 = vsub.f32 %v1494, %v1677
      %v1769 = vsub.f32 %v1496, %v1677
      %v1770 = vsub.f32 %v1500, %v1680
      %v1771 = vsub.f32 %v1502, %v1680
      %v1772 = vsub.f32 %v1506, %v1683
      %v1773 = vsub.f32 %v1508, %v1683
      %v1774 = vsub.f32 %v1512, %v1686
      %v1775 = vsub.f32 %v1514, %v1686
      %v1776 = vsub.f32 %v1518, %v1689
      %v1777 = vsub.f32 %v1520, %v1689
      %v1778 = vsub.f32 %v1524, %v1692
      %v1779 = vsub.f32 %v1526, %v1692
      %v1780 = vsub.f32 %v1530, %v1695
      %v1781 = vsub.f32 %v1532, %v1695
      %v1782 = vsub.f32 %v1536, %v1698
      %v1783 = vsub.f32 %v1538, %v1698
      %v1784 = vsub.f32 %v1542, %v1701
      %v1785 = vsub.f32 %v1544, %v1701
      %v1786 = vsub.f32 %v1548, %v1704
      %v1787 = vsub.f32 %v1550, %v1704
      %v1788 = vsub.f32 %v1554, %v1707
      %v1789 = vsub.f32 %v1556, %v1707
      %v1790 = vsub.f32 %v1560, %v1710
      %v1791 = vsub.f32 %v1562, %v1710
      %v1792 = vsub.f32 %v1566, %v1713
      %v1793 = vsub.f32 %v1568, %v1713
      %v1794 = vsub.f32 %v1572, %v1716
      %v1795 = vsub.f32 %v1574, %v1716
      %v1796 = vsub.f32 %v1578, %v1719
      %v1797 = vsub.f32 %v1580, %v1719
      %v1798 = vsub.f32 %v1584, %v1722
      %v1799 = vsub.f32 %v1586, %v1722
      %v1800 = vsub.f32 %v1590, %v1725
      %v1801 = vsub.f32 %v1592, %v1725
      %v1802 = vsub.f32 %v1596, %v1728
      %v1803 = vsub.f32 %v1598, %v1728
      %v1804 = vsub.f32 %v1602, %v1731
      %v1805 = vsub.f32 %v1604, %v1731
      %v1806 = vsub.f32 %v1608, %v1734
      %v1807 = vsub.f32 %v1610, %v1734
      %v1808 = vsub.f32 %v1614, %v1737
      %v1809 = vsub.f32 %v1616, %v1737
      %v1810 = vsub.f32 %v1620, %v1740
      %v1811 = vsub.f32 %v1622, %v1740
      %v1812 = vsub.f32 %v1626, %v1743
      %v1813 = vsub.f32 %v1628, %v1743
      %v1814 = vsub.f32 %v1632, %v1746
      %v1815 = vsub.f32 %v1634, %v1746
      %v1816 = vsub.f32 %v1638, %v1749
      %v1817 = vsub.f32 %v1640, %v1749
      %v1818 = vsub.f32 %v1644, %v1752
      %v1819 = vsub.f32 %v1646, %v1752
      %v1820 = vsub.f32 %v1650, %v1755
      %v1821 = vsub.f32 %v1652, %v1755
      %v1822 = vsub.f32 %v1656, %v1758
      %v1823 = vsub.f32 %v1658, %v1758
      %v1824 = vsub.f32 %v1662, %v1761
      %v1825 = vsub.f32 %v1664, %v1761
      %v1826 = vmul.f32 %v1762, 1.442695
      %v1827 = vpow.pop %v1826
      %v1828 = vmul.f32 %v1763, 1.442695
      %v1829 = vpow.pop %v1828
      %v1830 = vmul.f32 %v1764, 1.442695
      %v1831 = vpow.pop %v1830
      %v1832 = vmul.f32 %v1765, 1.442695
      %v1833 = vpow.pop %v1832
      %v1834 = vmul.f32 %v1766, 1.442695
      %v1835 = vpow.pop %v1834
      %v1836 = vmul.f32 %v1767, 1.442695
      %v1837 = vpow.pop %v1836
      %v1838 = vmul.f32 %v1768, 1.442695
      %v1839 = vpow.pop %v1838
      %v1840 = vmul.f32 %v1769, 1.442695
      %v1841 = vpow.pop %v1840
      %v1842 = vmul.f32 %v1770, 1.442695
      %v1843 = vpow.pop %v1842
      %v1844 = vmul.f32 %v1771, 1.442695
      %v1845 = vpow.pop %v1844
      %v1846 = vmul.f32 %v1772, 1.442695
      %v1847 = vpow.pop %v1846
      %v1848 = vmul.f32 %v1773, 1.442695
      %v1849 = vpow.pop %v1848
      %v1850 = vmul.f32 %v1774, 1.442695
      %v1851 = vpow.pop %v1850
      %v1852 = vmul.f32 %v1775, 1.442695
      %v1853 = vpow.pop %v1852
      %v1854 = vmul.f32 %v1776, 1.442695
      %v1855 = vpow.pop %v1854
      %v1856 = vmul.f32 %v1777, 1.442695
      %v1857 = vpow.pop %v1856
      %v1858 = vmul.f32 %v1778, 1.442695
      %v1859 = vpow.pop %v1858
      %v1860 = vmul.f32 %v1779, 1.442695
      %v1861 = vpow.pop %v1860
      %v1862 = vmul.f32 %v1780, 1.442695
      %v1863 = vpow.pop %v1862
      %v1864 = vmul.f32 %v1781, 1.442695
      %v1865 = vpow.pop %v1864
      %v1866 = vmul.f32 %v1782, 1.442695
      %v1867 = vpow.pop %v1866
      %v1868 = vmul.f32 %v1783, 1.442695
      %v1869 = vpow.pop %v1868
      %v1870 = vmul.f32 %v1784, 1.442695
      %v1871 = vpow.pop %v1870
      %v1872 = vmul.f32 %v1785, 1.442695
      %v1873 = vpow.pop %v1872
      %v1874 = vmul.f32 %v1786, 1.442695
      %v1875 = vpow.pop %v1874
      %v1876 = vmul.f32 %v1787, 1.442695
      %v1877 = vpow.pop %v1876
      %v1878 = vmul.f32 %v1788, 1.442695
      %v1879 = vpow.pop %v1878
      %v1880 = vmul.f32 %v1789, 1.442695
      %v1881 = vpow.pop %v1880
      %v1882 = vmul.f32 %v1790, 1.442695
      %v1883 = vpow.pop %v1882
      %v1884 = vmul.f32 %v1791, 1.442695
      %v1885 = vpow.pop %v1884
      %v1886 = vmul.f32 %v1792, 1.442695
      %v1887 = vpow.pop %v1886
      %v1888 = vmul.f32 %v1793, 1.442695
      %v1889 = vpow.pop %v1888
      %v1890 = vmul.f32 %v1794, 1.442695
      %v1891 = vpow.pop %v1890
      %v1892 = vmul.f32 %v1795, 1.442695
      %v1893 = vpow.pop %v1892
      %v1894 = vmul.f32 %v1796, 1.442695
      %v1895 = vpow.pop %v1894
      %v1896 = vmul.f32 %v1797, 1.442695
      %v1897 = vpow.pop %v1896
      %v1898 = vmul.f32 %v1798, 1.442695
      %v1899 = vpow.pop %v1898
      %v1900 = vmul.f32 %v1799, 1.442695
      %v1901 = vpow.pop %v1900
      %v1902 = vmul.f32 %v1800, 1.442695
      %v1903 = vpow.pop %v1902
      %v1904 = vmul.f32 %v1801, 1.442695
      %v1905 = vpow.pop %v1904
      %v1906 = vmul.f32 %v1802, 1.442695
      %v1907 = vpow.pop %v1906
      %v1908 = vmul.f32 %v1803, 1.442695
      %v1909 = vpow.pop %v1908
      %v1910 = vmul.f32 %v1804, 1.442695
      %v1911 = vpow.pop %v1910
      %v1912 = vmul.f32 %v1805, 1.442695
      %v1913 = vpow.pop %v1912
      %v1914 = vmul.f32 %v1806, 1.442695
      %v1915 = vpow.pop %v1914
      %v1916 = vmul.f32 %v1807, 1.442695
      %v1917 = vpow.pop %v1916
      %v1918 = vmul.f32 %v1808, 1.442695
      %v1919 = vpow.pop %v1918
      %v1920 = vmul.f32 %v1809, 1.442695
      %v1921 = vpow.pop %v1920
      %v1922 = vmul.f32 %v1810, 1.442695
      %v1923 = vpow.pop %v1922
      %v1924 = vmul.f32 %v1811, 1.442695
      %v1925 = vpow.pop %v1924
      %v1926 = vmul.f32 %v1812, 1.442695
      %v1927 = vpow.pop %v1926
      %v1928 = vmul.f32 %v1813, 1.442695
      %v1929 = vpow.pop %v1928
      %v1930 = vmul.f32 %v1814, 1.442695
      %v1931 = vpow.pop %v1930
      %v1932 = vmul.f32 %v1815, 1.442695
      %v1933 = vpow.pop %v1932
      %v1934 = vmul.f32 %v1816, 1.442695
      %v1935 = vpow.pop %v1934
      %v1936 = vmul.f32 %v1817, 1.442695
      %v1937 = vpow.pop %v1936
      %v1938 = vmul.f32 %v1818, 1.442695
      %v1939 = vpow.pop %v1938
      %v1940 = vmul.f32 %v1819, 1.442695
      %v1941 = vpow.pop %v1940
      %v1942 = vmul.f32 %v1820, 1.442695
      %v1943 = vpow.pop %v1942
      %v1944 = vmul.f32 %v1821, 1.442695
      %v1945 = vpow.pop %v1944
      %v1946 = vmul.f32 %v1822, 1.442695
      %v1947 = vpow.pop %v1946
      %v1948 = vmul.f32 %v1823, 1.442695
      %v1949 = vpow.pop %v1948
      %v1950 = vmul.f32 %v1824, 1.442695
      %v1951 = vpow.pop %v1950
      %v1952 = vmul.f32 %v1825, 1.442695
      %v1953 = vpow.pop %v1952
      %v1954 = vadd.f32 %v1827, %v1829
      %1955 = vadd.xlane.f32.xlu0 %v1954
      %v1956 = vpop.xlane.xlu0 %1955
      %v1957 = vadd.f32 %v1831, %v1833
      %1958 = vadd.xlane.f32.xlu0 %v1957
      %v1959 = vpop.xlane.xlu0 %1958
      %v1960 = vadd.f32 %v1835, %v1837
      %1961 = vadd.xlane.f32.xlu0 %v1960
      %v1962 = vpop.xlane.xlu0 %1961
      %v1963 = vadd.f32 %v1839, %v1841
      %1964 = vadd.xlane.f32.xlu0 %v1963
      %v1965 = vpop.xlane.xlu0 %1964
      %v1966 = vadd.f32 %v1843, %v1845
      %1967 = vadd.xlane.f32.xlu0 %v1966
      %v1968 = vpop.xlane.xlu0 %1967
      %v1969 = vadd.f32 %v1847, %v1849
      %1970 = vadd.xlane.f32.xlu0 %v1969
      %v1971 = vpop.xlane.xlu0 %1970
      %v1972 = vadd.f32 %v1851, %v1853
      %1973 = vadd.xlane.f32.xlu0 %v1972
      %v1974 = vpop.xlane.xlu0 %1973
      %v1975 = vadd.f32 %v1855, %v1857
      %1976 = vadd.xlane.f32.xlu0 %v1975
      %v1977 = vpop.xlane.xlu0 %1976
      %v1978 = vadd.f32 %v1859, %v1861
      %1979 = vadd.xlane.f32.xlu0 %v1978
      %v1980 = vpop.xlane.xlu0 %1979
      %v1981 = vadd.f32 %v1863, %v1865
      %1982 = vadd.xlane.f32.xlu0 %v1981
      %v1983 = vpop.xlane.xlu0 %1982
      %v1984 = vadd.f32 %v1867, %v1869
      %1985 = vadd.xlane.f32.xlu0 %v1984
      %v1986 = vpop.xlane.xlu0 %1985
      %v1987 = vadd.f32 %v1871, %v1873
      %1988 = vadd.xlane.f32.xlu0 %v1987
      %v1989 = vpop.xlane.xlu0 %1988
      %v1990 = vadd.f32 %v1875, %v1877
      %1991 = vadd.xlane.f32.xlu0 %v1990
      %v1992 = vpop.xlane.xlu0 %1991
      %v1993 = vadd.f32 %v1879, %v1881
      %1994 = vadd.xlane.f32.xlu0 %v1993
      %v1995 = vpop.xlane.xlu0 %1994
      %v1996 = vadd.f32 %v1883, %v1885
      %1997 = vadd.xlane.f32.xlu0 %v1996
      %v1998 = vpop.xlane.xlu0 %1997
      %v1999 = vadd.f32 %v1887, %v1889
      %2000 = vadd.xlane.f32.xlu0 %v1999
      %v2001 = vpop.xlane.xlu0 %2000
      %v2002 = vadd.f32 %v1891, %v1893
      %2003 = vadd.xlane.f32.xlu0 %v2002
      %v2004 = vpop.xlane.xlu0 %2003
      %v2005 = vadd.f32 %v1895, %v1897
      %2006 = vadd.xlane.f32.xlu0 %v2005
      %v2007 = vpop.xlane.xlu0 %2006
      %v2008 = vadd.f32 %v1899, %v1901
      %2009 = vadd.xlane.f32.xlu0 %v2008
      %v2010 = vpop.xlane.xlu0 %2009
      %v2011 = vadd.f32 %v1903, %v1905
      %2012 = vadd.xlane.f32.xlu0 %v2011
      %v2013 = vpop.xlane.xlu0 %2012
      %v2014 = vadd.f32 %v1907, %v1909
      %2015 = vadd.xlane.f32.xlu0 %v2014
      %v2016 = vpop.xlane.xlu0 %2015
      %v2017 = vadd.f32 %v1911, %v1913
      %2018 = vadd.xlane.f32.xlu0 %v2017
      %v2019 = vpop.xlane.xlu0 %2018
      %v2020 = vadd.f32 %v1915, %v1917
      %2021 = vadd.xlane.f32.xlu0 %v2020
      %v2022 = vpop.xlane.xlu0 %2021
      %v2023 = vadd.f32 %v1919, %v1921
      %2024 = vadd.xlane.f32.xlu0 %v2023
      %v2025 = vpop.xlane.xlu0 %2024
      %v2026 = vadd.f32 %v1923, %v1925
      %2027 = vadd.xlane.f32.xlu0 %v2026
      %v2028 = vpop.xlane.xlu0 %2027
      %v2029 = vadd.f32 %v1927, %v1929
      %2030 = vadd.xlane.f32.xlu0 %v2029
      %v2031 = vpop.xlane.xlu0 %2030
      %v2032 = vadd.f32 %v1931, %v1933
      %2033 = vadd.xlane.f32.xlu0 %v2032
      %v2034 = vpop.xlane.xlu0 %2033
      %v2035 = vadd.f32 %v1935, %v1937
      %2036 = vadd.xlane.f32.xlu0 %v2035
      %v2037 = vpop.xlane.xlu0 %2036
      %v2038 = vadd.f32 %v1939, %v1941
      %2039 = vadd.xlane.f32.xlu0 %v2038
      %v2040 = vpop.xlane.xlu0 %2039
      %v2041 = vadd.f32 %v1943, %v1945
      %2042 = vadd.xlane.f32.xlu0 %v2041
      %v2043 = vpop.xlane.xlu0 %2042
      %v2044 = vadd.f32 %v1947, %v1949
      %2045 = vadd.xlane.f32.xlu0 %v2044
      %v2046 = vpop.xlane.xlu0 %2045
      %v2047 = vadd.f32 %v1951, %v1953
      %2048 = vadd.xlane.f32.xlu0 %v2047
      %v2049 = vpop.xlane.xlu0 %2048
      %v2050 = vrcp.pop %v1956
      %v2051 = vmul.f32 %v1827, %v2050
      %v2052 = vmul.f32 %v1829, %v2050
      %v2053 = vrcp.pop %v1959
      %v2054 = vmul.f32 %v1831, %v2053
      %v2055 = vmul.f32 %v1833, %v2053
      %v2056 = vrcp.pop %v1962
      %v2057 = vmul.f32 %v1835, %v2056
      %v2058 = vmul.f32 %v1837, %v2056
      %v2059 = vrcp.pop %v1965
      %v2060 = vmul.f32 %v1839, %v2059
      %v2061 = vmul.f32 %v1841, %v2059
      %v2062 = vrcp.pop %v1968
      %v2063 = vmul.f32 %v1843, %v2062
      %v2064 = vmul.f32 %v1845, %v2062
      %v2065 = vrcp.pop %v1971
      %v2066 = vmul.f32 %v1847, %v2065
      %v2067 = vmul.f32 %v1849, %v2065
      %v2068 = vrcp.pop %v1974
      %v2069 = vmul.f32 %v1851, %v2068
      %v2070 = vmul.f32 %v1853, %v2068
      %v2071 = vrcp.pop %v1977
      %v2072 = vmul.f32 %v1855, %v2071
      %v2073 = vmul.f32 %v1857, %v2071
      %v2074 = vrcp.pop %v1980
      %v2075 = vmul.f32 %v1859, %v2074
      %v2076 = vmul.f32 %v1861, %v2074
      %v2077 = vrcp.pop %v1983
      %v2078 = vmul.f32 %v1863, %v2077
      %v2079 = vmul.f32 %v1865, %v2077
      %v2080 = vrcp.pop %v1986
      %v2081 = vmul.f32 %v1867, %v2080
      %v2082 = vmul.f32 %v1869, %v2080
      %v2083 = vrcp.pop %v1989
      %v2084 = vmul.f32 %v1871, %v2083
      %v2085 = vmul.f32 %v1873, %v2083
      %v2086 = vrcp.pop %v1992
      %v2087 = vmul.f32 %v1875, %v2086
      %v2088 = vmul.f32 %v1877, %v2086
      %v2089 = vrcp.pop %v1995
      %v2090 = vmul.f32 %v1879, %v2089
      %v2091 = vmul.f32 %v1881, %v2089
      %v2092 = vrcp.pop %v1998
      %v2093 = vmul.f32 %v1883, %v2092
      %v2094 = vmul.f32 %v1885, %v2092
      %v2095 = vrcp.pop %v2001
      %v2096 = vmul.f32 %v1887, %v2095
      %v2097 = vmul.f32 %v1889, %v2095
      %v2098 = vrcp.pop %v2004
      %v2099 = vmul.f32 %v1891, %v2098
      %v2100 = vmul.f32 %v1893, %v2098
      %v2101 = vrcp.pop %v2007
      %v2102 = vmul.f32 %v1895, %v2101
      %v2103 = vmul.f32 %v1897, %v2101
      %v2104 = vrcp.pop %v2010
      %v2105 = vmul.f32 %v1899, %v2104
      %v2106 = vmul.f32 %v1901, %v2104
      %v2107 = vrcp.pop %v2013
      %v2108 = vmul.f32 %v1903, %v2107
      %v2109 = vmul.f32 %v1905, %v2107
      %v2110 = vrcp.pop %v2016
      %v2111 = vmul.f32 %v1907, %v2110
      %v2112 = vmul.f32 %v1909, %v2110
      %v2113 = vrcp.pop %v2019
      %v2114 = vmul.f32 %v1911, %v2113
      %v2115 = vmul.f32 %v1913, %v2113
      %v2116 = vrcp.pop %v2022
      %v2117 = vmul.f32 %v1915, %v2116
      %v2118 = vmul.f32 %v1917, %v2116
      %v2119 = vrcp.pop %v2025
      %v2120 = vmul.f32 %v1919, %v2119
      %v2121 = vmul.f32 %v1921, %v2119
      %v2122 = vrcp.pop %v2028
      %v2123 = vmul.f32 %v1923, %v2122
      %v2124 = vmul.f32 %v1925, %v2122
      %v2125 = vrcp.pop %v2031
      %v2126 = vmul.f32 %v1927, %v2125
      %v2127 = vmul.f32 %v1929, %v2125
      %v2128 = vrcp.pop %v2034
      %v2129 = vmul.f32 %v1931, %v2128
      %v2130 = vmul.f32 %v1933, %v2128
      %v2131 = vrcp.pop %v2037
      %v2132 = vmul.f32 %v1935, %v2131
      %v2133 = vmul.f32 %v1937, %v2131
      %v2134 = vrcp.pop %v2040
      %v2135 = vmul.f32 %v1939, %v2134
      %v2136 = vmul.f32 %v1941, %v2134
      %v2137 = vrcp.pop %v2043
      %v2138 = vmul.f32 %v1943, %v2137
      %v2139 = vmul.f32 %v1945, %v2137
      %v2140 = vrcp.pop %v2046
      %v2141 = vmul.f32 %v1947, %v2140
      %v2142 = vmul.f32 %v1949, %v2140
      %v2143 = vrcp.pop %v2049
      %v2144 = vmul.f32 %v1951, %v2143
      %v2145 = vmul.f32 %v1953, %v2143
      %v2146 = vld [vmem:[%s394] sm:$0xff]
      %v2147 = vld [vmem:[%s394 + $0x8] sm:$0xff]
      %v2148 = vld [vmem:[%s394 + $0x10] sm:$0xff]
      %v2149 = vld [vmem:[%s394 + $0x18] sm:$0xff]
      %v2150 = vld [vmem:[%s394 + $0x20] sm:$0xff]
      %v2151 = vld [vmem:[%s394 + $0x28] sm:$0xff]
      %v2152 = vld [vmem:[%s394 + $0x30] sm:$0xff]
      %v2153 = vld [vmem:[%s394 + $0x38] sm:$0xff]
      %v2154 = vld [vmem:[%s394 + $0x40] sm:$0xff]
      %v2155 = vld [vmem:[%s394 + $0x48] sm:$0xff]
      %v2156 = vld [vmem:[%s394 + $0x50] sm:$0xff]
      %v2157 = vld [vmem:[%s394 + $0x58] sm:$0xff]
      %v2158 = vld [vmem:[%s394 + $0x60] sm:$0xff]
      %v2159 = vld [vmem:[%s394 + $0x68] sm:$0xff]
      %v2160 = vld [vmem:[%s394 + $0x70] sm:$0xff]
      %v2161 = vld [vmem:[%s394 + $0x78] sm:$0xff]
      %v2162 = vld [vmem:[%s394 + $0x80] sm:$0xff]
      %v2163 = vld [vmem:[%s394 + $0x88] sm:$0xff]
      %v2164 = vld [vmem:[%s394 + $0x90] sm:$0xff]
      %v2165 = vld [vmem:[%s394 + $0x98] sm:$0xff]
      %v2166 = vld [vmem:[%s394 + $0xa0] sm:$0xff]
      %v2167 = vld [vmem:[%s394 + $0xa8] sm:$0xff]
      %v2168 = vld [vmem:[%s394 + $0xb0] sm:$0xff]
      %v2169 = vld [vmem:[%s394 + $0xb8] sm:$0xff]
      %v2170 = vld [vmem:[%s394 + $0xc0] sm:$0xff]
      %v2171 = vld [vmem:[%s394 + $0xc8] sm:$0xff]
      %v2172 = vld [vmem:[%s394 + $0xd0] sm:$0xff]
      %v2173 = vld [vmem:[%s394 + $0xd8] sm:$0xff]
      %v2174 = vld [vmem:[%s394 + $0xe0] sm:$0xff]
      %v2175 = vld [vmem:[%s394 + $0xe8] sm:$0xff]
      %v2176 = vld [vmem:[%s394 + $0xf0] sm:$0xff]
      %v2177 = vld [vmem:[%s394 + $0xf8] sm:$0xff]
      %2178 = vmatprep.subr.mxu0 0.0
      %2179 = vmatpush1.msra.mxu0 %v2161
      %2180 = vmatprep.subr.mxu0 0.0
      %2181 = vmatpush1.msra.mxu0 %v2160
      %2182 = vmatprep.subr.mxu0 0.0
      %2183 = vmatpush1.msra.mxu0 %v2159
      %2184 = vmatprep.subr.mxu0 0.0
      %2185 = vmatpush1.msra.mxu0 %v2158
      %2186 = vmatprep.subr.mxu0 0.0
      %2187 = vmatpush1.msra.mxu0 %v2157
      %2188 = vmatprep.subr.mxu0 0.0
      %2189 = vmatpush1.msra.mxu0 %v2156
      %2190 = vmatprep.subr.mxu0 0.0
      %2191 = vmatpush1.msra.mxu0 %v2155
      %2192 = vmatprep.subr.mxu0 0.0
      %2193 = vmatpush1.msra.mxu0 %v2154
      %2194 = vmatprep.subr.mxu0 0.0
      %2195 = vmatpush1.msra.mxu0 %v2153
      %2196 = vmatprep.subr.mxu0 0.0
      %2197 = vmatpush1.msra.mxu0 %v2152
      %2198 = vmatprep.subr.mxu0 0.0
      %2199 = vmatpush1.msra.mxu0 %v2151
      %2200 = vmatprep.subr.mxu0 0.0
      %2201 = vmatpush1.msra.mxu0 %v2150
      %2202 = vmatprep.subr.mxu0 0.0
      %2203 = vmatpush1.msra.mxu0 %v2149
      %2204 = vmatprep.subr.mxu0 0.0
      %2205 = vmatpush1.msra.mxu0 %v2148
      %2206 = vmatprep.subr.mxu0 0.0
      %2207 = vmatpush1.msra.mxu0 %v2147
      %2208 = vmatprep.subr.mxu0 0.0
      %2209 = vmatpush1.msra.mxu0 %v2146
      %2210 = vmatprep.subr.mxu0 0.0
      %2211 = vmatpush2.msra.mxu0 %v2177
      %2212 = vmatprep.subr.mxu0 0.0
      %2213 = vmatpush2.msra.mxu0 %v2176
      %2214 = vmatprep.subr.mxu0 0.0
      %2215 = vmatpush2.msra.mxu0 %v2175
      %2216 = vmatprep.subr.mxu0 0.0
      %2217 = vmatpush2.msra.mxu0 %v2174
      %2218 = vmatprep.subr.mxu0 0.0
      %2219 = vmatpush2.msra.mxu0 %v2173
      %2220 = vmatprep.subr.mxu0 0.0
      %2221 = vmatpush2.msra.mxu0 %v2172
      %2222 = vmatprep.subr.mxu0 0.0
      %2223 = vmatpush2.msra.mxu0 %v2171
      %2224 = vmatprep.subr.mxu0 0.0
      %2225 = vmatpush2.msra.mxu0 %v2170
      %2226 = vmatprep.subr.mxu0 0.0
      %2227 = vmatpush2.msra.mxu0 %v2169
      %2228 = vmatprep.subr.mxu0 0.0
      %2229 = vmatpush2.msra.mxu0 %v2168
      %2230 = vmatprep.subr.mxu0 0.0
      %2231 = vmatpush2.msra.mxu0 %v2167
      %2232 = vmatprep.subr.mxu0 0.0
      %2233 = vmatpush2.msra.mxu0 %v2166
      %2234 = vmatprep.subr.mxu0 0.0
      %2235 = vmatpush2.msra.mxu0 %v2165
      %2236 = vmatprep.subr.mxu0 0.0
      %2237 = vmatpush2.msra.mxu0 %v2164
      %2238 = vmatprep.subr.mxu0 0.0
      %2239 = vmatpush2.msra.mxu0 %v2163
      %2240 = vmatprep.subr.mxu0 0.0
      %2241 = vmatpush2.msra.mxu0 %v2162
      %2242 = vmatprep.mubr.f32.mxu0 %v2052
      %2243 = vmatmul.mubr.f32.gmra.mxu0 %v2051
      %v2244 = vpop.f32.mrf.mxu0
      %v2245 = vadd.f32 0.0, %v2244
      %v2246 = vpop.f32.mrf.mxu0
      %2247 = vmatprep.mubr.f32.mxu0 %v2055
      %2248 = vmatmul.mubr.f32.gmra.mxu0 %v2054
      %v2249 = vpop.f32.mrf.mxu0
      %v2250 = vadd.f32 0.0, %v2249
      %v2251 = vpop.f32.mrf.mxu0
      %2252 = vmatprep.mubr.f32.mxu0 %v2058
      %2253 = vmatmul.mubr.f32.gmra.mxu0 %v2057
      %v2254 = vpop.f32.mrf.mxu0
      %v2255 = vadd.f32 0.0, %v2254
      %v2256 = vpop.f32.mrf.mxu0
      %2257 = vmatprep.mubr.f32.mxu0 %v2061
      %2258 = vmatmul.mubr.f32.gmra.mxu0 %v2060
      %v2259 = vpop.f32.mrf.mxu0
      %v2260 = vadd.f32 0.0, %v2259
      %v2261 = vpop.f32.mrf.mxu0
      %2262 = vmatprep.mubr.f32.mxu0 %v2064
      %2263 = vmatmul.mubr.f32.gmra.mxu0 %v2063
      %v2264 = vpop.f32.mrf.mxu0
      %v2265 = vadd.f32 0.0, %v2264
      %v2266 = vpop.f32.mrf.mxu0
      %2267 = vmatprep.mubr.f32.mxu0 %v2067
      %2268 = vmatmul.mubr.f32.gmra.mxu0 %v2066
      %v2269 = vpop.f32.mrf.mxu0
      %v2270 = vadd.f32 0.0, %v2269
      %v2271 = vpop.f32.mrf.mxu0
      %2272 = vmatprep.mubr.f32.mxu0 %v2070
      %2273 = vmatmul.mubr.f32.gmra.mxu0 %v2069
      %v2274 = vpop.f32.mrf.mxu0
      %v2275 = vadd.f32 0.0, %v2274
      %v2276 = vpop.f32.mrf.mxu0
      %2277 = vmatprep.mubr.f32.mxu0 %v2073
      %2278 = vmatmul.mubr.f32.gmra.mxu0 %v2072
      %v2279 = vpop.f32.mrf.mxu0
      %v2280 = vadd.f32 0.0, %v2279
      %v2281 = vpop.f32.mrf.mxu0
      %2282 = vmatprep.mubr.f32.mxu0 %v2076
      %2283 = vmatmul.mubr.f32.gmra.mxu0 %v2075
      %v2284 = vpop.f32.mrf.mxu0
      %v2285 = vadd.f32 0.0, %v2284
      %v2286 = vpop.f32.mrf.mxu0
      %2287 = vmatprep.mubr.f32.mxu0 %v2079
      %2288 = vmatmul.mubr.f32.gmra.mxu0 %v2078
      %v2289 = vpop.f32.mrf.mxu0
      %v2290 = vadd.f32 0.0, %v2289
      %v2291 = vpop.f32.mrf.mxu0
      %2292 = vmatprep.mubr.f32.mxu0 %v2082
      %2293 = vmatmul.mubr.f32.gmra.mxu0 %v2081
      %v2294 = vpop.f32.mrf.mxu0
      %v2295 = vadd.f32 0.0, %v2294
      %v2296 = vpop.f32.mrf.mxu0
      %2297 = vmatprep.mubr.f32.mxu0 %v2085
      %2298 = vmatmul.mubr.f32.gmra.mxu0 %v2084
      %v2299 = vpop.f32.mrf.mxu0
      %v2300 = vadd.f32 0.0, %v2299
      %v2301 = vpop.f32.mrf.mxu0
      %2302 = vmatprep.mubr.f32.mxu0 %v2088
      %2303 = vmatmul.mubr.f32.gmra.mxu0 %v2087
      %v2304 = vpop.f32.mrf.mxu0
      %v2305 = vadd.f32 0.0, %v2304
      %v2306 = vpop.f32.mrf.mxu0
      %2307 = vmatprep.mubr.f32.mxu0 %v2091
      %2308 = vmatmul.mubr.f32.gmra.mxu0 %v2090
      %v2309 = vpop.f32.mrf.mxu0
      %v2310 = vadd.f32 0.0, %v2309
      %v2311 = vpop.f32.mrf.mxu0
      %2312 = vmatprep.mubr.f32.mxu0 %v2094
      %2313 = vmatmul.mubr.f32.gmra.mxu0 %v2093
      %v2314 = vpop.f32.mrf.mxu0
      %v2315 = vadd.f32 0.0, %v2314
      %v2316 = vpop.f32.mrf.mxu0
      %2317 = vmatprep.mubr.f32.mxu0 %v2097
      %2318 = vmatmul.mubr.f32.gmra.mxu0 %v2096
      %v2319 = vpop.f32.mrf.mxu0
      %v2320 = vadd.f32 0.0, %v2319
      %v2321 = vpop.f32.mrf.mxu0
      %2322 = vmatprep.mubr.f32.mxu0 %v2100
      %2323 = vmatmul.mubr.f32.gmra.mxu0 %v2099
      %v2324 = vpop.f32.mrf.mxu0
      %v2325 = vadd.f32 0.0, %v2324
      %v2326 = vpop.f32.mrf.mxu0
      %2327 = vmatprep.mubr.f32.mxu0 %v2103
      %2328 = vmatmul.mubr.f32.gmra.mxu0 %v2102
      %v2329 = vpop.f32.mrf.mxu0
      %v2330 = vadd.f32 0.0, %v2329
      %v2331 = vpop.f32.mrf.mxu0
      %2332 = vmatprep.mubr.f32.mxu0 %v2106
      %2333 = vmatmul.mubr.f32.gmra.mxu0 %v2105
      %v2334 = vpop.f32.mrf.mxu0
      %v2335 = vadd.f32 0.0, %v2334
      %v2336 = vpop.f32.mrf.mxu0
      %2337 = vmatprep.mubr.f32.mxu0 %v2109
      %2338 = vmatmul.mubr.f32.gmra.mxu0 %v2108
      %v2339 = vpop.f32.mrf.mxu0
      %v2340 = vadd.f32 0.0, %v2339
      %v2341 = vpop.f32.mrf.mxu0
      %2342 = vmatprep.mubr.f32.mxu0 %v2112
      %2343 = vmatmul.mubr.f32.gmra.mxu0 %v2111
      %v2344 = vpop.f32.mrf.mxu0
      %v2345 = vadd.f32 0.0, %v2344
      %v2346 = vpop.f32.mrf.mxu0
      %2347 = vmatprep.mubr.f32.mxu0 %v2115
      %2348 = vmatmul.mubr.f32.gmra.mxu0 %v2114
      %v2349 = vpop.f32.mrf.mxu0
      %v2350 = vadd.f32 0.0, %v2349
      %v2351 = vpop.f32.mrf.mxu0
      %2352 = vmatprep.mubr.f32.mxu0 %v2118
      %2353 = vmatmul.mubr.f32.gmra.mxu0 %v2117
      %v2354 = vpop.f32.mrf.mxu0
      %v2355 = vadd.f32 0.0, %v2354
      %v2356 = vpop.f32.mrf.mxu0
      %2357 = vmatprep.mubr.f32.mxu0 %v2121
      %2358 = vmatmul.mubr.f32.gmra.mxu0 %v2120
      %v2359 = vpop.f32.mrf.mxu0
      %v2360 = vadd.f32 0.0, %v2359
      %v2361 = vpop.f32.mrf.mxu0
      %2362 = vmatprep.mubr.f32.mxu0 %v2124
      %2363 = vmatmul.mubr.f32.gmra.mxu0 %v2123
      %v2364 = vpop.f32.mrf.mxu0
      %v2365 = vadd.f32 0.0, %v2364
      %v2366 = vpop.f32.mrf.mxu0
      %2367 = vmatprep.mubr.f32.mxu0 %v2127
      %2368 = vmatmul.mubr.f32.gmra.mxu0 %v2126
      %v2369 = vpop.f32.mrf.mxu0
      %v2370 = vadd.f32 0.0, %v2369
      %v2371 = vpop.f32.mrf.mxu0
      %2372 = vmatprep.mubr.f32.mxu0 %v2130
      %2373 = vmatmul.mubr.f32.gmra.mxu0 %v2129
      %v2374 = vpop.f32.mrf.mxu0
      %v2375 = vadd.f32 0.0, %v2374
      %v2376 = vpop.f32.mrf.mxu0
      %2377 = vmatprep.mubr.f32.mxu0 %v2133
      %2378 = vmatmul.mubr.f32.gmra.mxu0 %v2132
      %v2379 = vpop.f32.mrf.mxu0
      %v2380 = vadd.f32 0.0, %v2379
      %v2381 = vpop.f32.mrf.mxu0
      %2382 = vmatprep.mubr.f32.mxu0 %v2136
      %2383 = vmatmul.mubr.f32.gmra.mxu0 %v2135
      %v2384 = vpop.f32.mrf.mxu0
      %v2385 = vadd.f32 0.0, %v2384
      %v2386 = vpop.f32.mrf.mxu0
      %2387 = vmatprep.mubr.f32.mxu0 %v2139
      %2388 = vmatmul.mubr.f32.gmra.mxu0 %v2138
      %v2389 = vpop.f32.mrf.mxu0
      %v2390 = vadd.f32 0.0, %v2389
      %v2391 = vpop.f32.mrf.mxu0
      %2392 = vmatprep.mubr.f32.mxu0 %v2142
      %2393 = vmatmul.mubr.f32.gmra.mxu0 %v2141
      %v2394 = vpop.f32.mrf.mxu0
      %v2395 = vadd.f32 0.0, %v2394
      %v2396 = vpop.f32.mrf.mxu0
      %2397 = vmatprep.mubr.f32.mxu0 %v2145
      %2398 = vmatmul.mubr.f32.gmra.mxu0 %v2144
      %v2399 = vpop.f32.mrf.mxu0
      %v2400 = vadd.f32 0.0, %v2399
      %v2401 = vpop.f32.mrf.mxu0
      %2402 = vdwg.mxu0
      %v2403 = vld [vmem:[%s8] sm:$0xff]
      %v2404 = vld [vmem:[%s8 + $0x8] sm:$0xff]
      %2405 = vrot.lane.b32.xlu0 %v1248, 112
      %v2406 = vpop.permute.xlu0 %2405
      %2407 = vrot.lane.b32.xlu0 %v1249, 112
      %v2408 = vpop.permute.xlu0 %2407
      %2409 = vrot.lane.b32.xlu0 %v1250, 112
      %v2410 = vpop.permute.xlu0 %2409
      %2411 = vrot.lane.b32.xlu0 %v1251, 112
      %v2412 = vpop.permute.xlu0 %2411
      %2413 = vrot.lane.b32.xlu0 %v1252, 112
      %v2414 = vpop.permute.xlu0 %2413
      %2415 = vrot.lane.b32.xlu0 %v1253, 112
      %v2416 = vpop.permute.xlu0 %2415
      %2417 = vrot.lane.b32.xlu0 %v1254, 112
      %v2418 = vpop.permute.xlu0 %2417
      %2419 = vrot.lane.b32.xlu0 %v1255, 112
      %v2420 = vpop.permute.xlu0 %2419
      %2421 = vrot.lane.b32.xlu0 %v1256, 112
      %v2422 = vpop.permute.xlu0 %2421
      %2423 = vrot.lane.b32.xlu0 %v1257, 112
      %v2424 = vpop.permute.xlu0 %2423
      %2425 = vrot.lane.b32.xlu0 %v1258, 112
      %v2426 = vpop.permute.xlu0 %2425
      %2427 = vrot.lane.b32.xlu0 %v1259, 112
      %v2428 = vpop.permute.xlu0 %2427
      %2429 = vrot.lane.b32.xlu0 %v1260, 112
      %v2430 = vpop.permute.xlu0 %2429
      %2431 = vrot.lane.b32.xlu0 %v1261, 112
      %v2432 = vpop.permute.xlu0 %2431
      %2433 = vrot.lane.b32.xlu0 %v1262, 112
      %v2434 = vpop.permute.xlu0 %2433
      %2435 = vrot.lane.b32.xlu0 %v1263, 112
      %v2436 = vpop.permute.xlu0 %2435
      %2437 = vrot.lane.b32.xlu0 %v1264, 112
      %v2438 = vpop.permute.xlu0 %2437
      %2439 = vrot.lane.b32.xlu0 %v1265, 112
      %v2440 = vpop.permute.xlu0 %2439
      %2441 = vrot.lane.b32.xlu0 %v1266, 112
      %v2442 = vpop.permute.xlu0 %2441
      %2443 = vrot.lane.b32.xlu0 %v1267, 112
      %v2444 = vpop.permute.xlu0 %2443
      %2445 = vrot.lane.b32.xlu0 %v1268, 112
      %v2446 = vpop.permute.xlu0 %2445
      %2447 = vrot.lane.b32.xlu0 %v1269, 112
      %v2448 = vpop.permute.xlu0 %2447
      %2449 = vrot.lane.b32.xlu0 %v1270, 112
      %v2450 = vpop.permute.xlu0 %2449
      %2451 = vrot.lane.b32.xlu0 %v1271, 112
      %v2452 = vpop.permute.xlu0 %2451
      %2453 = vrot.lane.b32.xlu0 %v1272, 112
      %v2454 = vpop.permute.xlu0 %2453
      %2455 = vrot.lane.b32.xlu0 %v1273, 112
      %v2456 = vpop.permute.xlu0 %2455
      %2457 = vrot.lane.b32.xlu0 %v1274, 112
      %v2458 = vpop.permute.xlu0 %2457
      %2459 = vrot.lane.b32.xlu0 %v1275, 112
      %v2460 = vpop.permute.xlu0 %2459
      %2461 = vrot.lane.b32.xlu0 %v1276, 112
      %v2462 = vpop.permute.xlu0 %2461
      %2463 = vrot.lane.b32.xlu0 %v1277, 112
      %v2464 = vpop.permute.xlu0 %2463
      %2465 = vrot.lane.b32.xlu0 %v1278, 112
      %v2466 = vpop.permute.xlu0 %2465
      %2467 = vrot.lane.b32.xlu0 %v1279, 112
      %v2468 = vpop.permute.xlu0 %2467
      %v2469 = vsel %vm1312, %v2406, 0
      %v2471 = vsel %vm1312, %v2408, 0
      %v2473 = vsel %vm1312, %v2410, 0
      %v2475 = vsel %vm1312, %v2412, 0
      %v2477 = vsel %vm1312, %v2414, 0
      %v2479 = vsel %vm1312, %v2416, 0
      %v2481 = vsel %vm1312, %v2418, 0
      %v2483 = vsel %vm1312, %v2420, 0
      %v2485 = vsel %vm1312, %v2422, 0
      %v2487 = vsel %vm1312, %v2424, 0
      %v2489 = vsel %vm1312, %v2426, 0
      %v2491 = vsel %vm1312, %v2428, 0
      %v2493 = vsel %vm1312, %v2430, 0
      %v2495 = vsel %vm1312, %v2432, 0
      %v2497 = vsel %vm1312, %v2434, 0
      %v2499 = vsel %vm1312, %v2436, 0
      %v2501 = vsel %vm1312, %v2438, 0
      %v2503 = vsel %vm1312, %v2440, 0
      %v2505 = vsel %vm1312, %v2442, 0
      %v2507 = vsel %vm1312, %v2444, 0
      %v2509 = vsel %vm1312, %v2446, 0
      %v2511 = vsel %vm1312, %v2448, 0
      %v2513 = vsel %vm1312, %v2450, 0
      %v2515 = vsel %vm1312, %v2452, 0
      %v2517 = vsel %vm1312, %v2454, 0
      %v2519 = vsel %vm1312, %v2456, 0
      %v2521 = vsel %vm1312, %v2458, 0
      %v2523 = vsel %vm1312, %v2460, 0
      %v2525 = vsel %vm1312, %v2462, 0
      %v2527 = vsel %vm1312, %v2464, 0
      %v2529 = vsel %vm1312, %v2466, 0
      %v2531 = vsel %vm1312, %v2468, 0
      %2533 = vmatprep.subr.mxu0 0.0
      %2534 = vmatpush1.msra.mxu0 0.0
      %2535 = vmatprep.subr.mxu0 0.0
      %2536 = vmatpush1.msra.mxu0 0.0
      %2537 = vmatprep.subr.mxu0 0.0
      %2538 = vmatpush1.msra.mxu0 0.0
      %2539 = vmatprep.subr.mxu0 0.0
      %2540 = vmatpush1.msra.mxu0 0.0
      %2541 = vmatprep.subr.mxu0 0.0
      %2542 = vmatpush1.msra.mxu0 0.0
      %2543 = vmatprep.subr.mxu0 0.0
      %2544 = vmatpush1.msra.mxu0 0.0
      %2545 = vmatprep.subr.mxu0 0.0
      %2546 = vmatpush1.msra.mxu0 0.0
      %2547 = vmatprep.subr.mxu0 0.0
      %2548 = vmatpush1.msra.mxu0 0.0
      %2549 = vmatprep.subr.mxu0 0.0
      %2550 = vmatpush1.msra.mxu0 0.0
      %2551 = vmatprep.subr.mxu0 0.0
      %2552 = vmatpush1.msra.mxu0 0.0
      %2553 = vmatprep.subr.mxu0 0.0
      %2554 = vmatpush1.msra.mxu0 0.0
      %2555 = vmatprep.subr.mxu0 0.0
      %2556 = vmatpush1.msra.mxu0 0.0
      %2557 = vmatprep.subr.mxu0 0.0
      %2558 = vmatpush1.msra.mxu0 0.0
      %2559 = vmatprep.subr.mxu0 0.0
      %2560 = vmatpush1.msra.mxu0 0.0
      %2561 = vmatprep.subr.mxu0 %v1303
      %2562 = vmatpush1.msra.mxu0 %v1302
      %2563 = vmatprep.subr.mxu0 %v1301
      %2564 = vmatpush1.msra.mxu0 %v1300
      %2565 = vmatprep.subr.mxu0 0.0
      %2566 = vmatpush2.msra.mxu0 0.0
      %2567 = vmatprep.subr.mxu0 0.0
      %2568 = vmatpush2.msra.mxu0 0.0
      %2569 = vmatprep.subr.mxu0 0.0
      %2570 = vmatpush2.msra.mxu0 0.0
      %2571 = vmatprep.subr.mxu0 0.0
      %2572 = vmatpush2.msra.mxu0 0.0
      %2573 = vmatprep.subr.mxu0 0.0
      %2574 = vmatpush2.msra.mxu0 0.0
      %2575 = vmatprep.subr.mxu0 0.0
      %2576 = vmatpush2.msra.mxu0 0.0
      %2577 = vmatprep.subr.mxu0 0.0
      %2578 = vmatpush2.msra.mxu0 0.0
      %2579 = vmatprep.subr.mxu0 0.0
      %2580 = vmatpush2.msra.mxu0 0.0
      %2581 = vmatprep.subr.mxu0 0.0
      %2582 = vmatpush2.msra.mxu0 0.0
      %2583 = vmatprep.subr.mxu0 0.0
      %2584 = vmatpush2.msra.mxu0 0.0
      %2585 = vmatprep.subr.mxu0 0.0
      %2586 = vmatpush2.msra.mxu0 0.0
      %2587 = vmatprep.subr.mxu0 0.0
      %2588 = vmatpush2.msra.mxu0 0.0
      %2589 = vmatprep.subr.mxu0 0.0
      %2590 = vmatpush2.msra.mxu0 0.0
      %2591 = vmatprep.subr.mxu0 0.0
      %2592 = vmatpush2.msra.mxu0 0.0
      %2593 = vmatprep.subr.mxu0 0.0
      %2594 = vmatpush2.msra.mxu0 0.0
      %2595 = vmatprep.subr.mxu0 0.0
      %2596 = vmatpush2.msra.mxu0 0.0
      %2597 = vmatprep.mubr.f32.mxu0 0.0
      %2598 = vmatmul.mubr.f32.gmra.mxu0 %v2469
      %v2599 = vpop.f32.mrf.mxu0
      %v2600 = vadd.f32 0.0, %v2599
      %v2601 = vpop.f32.mrf.mxu0
      %v2602 = vadd.f32 0.0, %v2601
      %2603 = vmatprep.mubr.f32.mxu0 0.0
      %2604 = vmatmul.mubr.f32.gmra.mxu0 %v2471
      %v2605 = vpop.f32.mrf.mxu0
      %v2606 = vadd.f32 0.0, %v2605
      %v2607 = vpop.f32.mrf.mxu0
      %v2608 = vadd.f32 0.0, %v2607
      %2609 = vmatprep.mubr.f32.mxu0 0.0
      %2610 = vmatmul.mubr.f32.gmra.mxu0 %v2473
      %v2611 = vpop.f32.mrf.mxu0
      %v2612 = vadd.f32 0.0, %v2611
      %v2613 = vpop.f32.mrf.mxu0
      %v2614 = vadd.f32 0.0, %v2613
      %2615 = vmatprep.mubr.f32.mxu0 0.0
      %2616 = vmatmul.mubr.f32.gmra.mxu0 %v2475
      %v2617 = vpop.f32.mrf.mxu0
      %v2618 = vadd.f32 0.0, %v2617
      %v2619 = vpop.f32.mrf.mxu0
      %v2620 = vadd.f32 0.0, %v2619
      %2621 = vmatprep.mubr.f32.mxu0 0.0
      %2622 = vmatmul.mubr.f32.gmra.mxu0 %v2477
      %v2623 = vpop.f32.mrf.mxu0
      %v2624 = vadd.f32 0.0, %v2623
      %v2625 = vpop.f32.mrf.mxu0
      %v2626 = vadd.f32 0.0, %v2625
      %2627 = vmatprep.mubr.f32.mxu0 0.0
      %2628 = vmatmul.mubr.f32.gmra.mxu0 %v2479
      %v2629 = vpop.f32.mrf.mxu0
      %v2630 = vadd.f32 0.0, %v2629
      %v2631 = vpop.f32.mrf.mxu0
      %v2632 = vadd.f32 0.0, %v2631
      %2633 = vmatprep.mubr.f32.mxu0 0.0
      %2634 = vmatmul.mubr.f32.gmra.mxu0 %v2481
      %v2635 = vpop.f32.mrf.mxu0
      %v2636 = vadd.f32 0.0, %v2635
      %v2637 = vpop.f32.mrf.mxu0
      %v2638 = vadd.f32 0.0, %v2637
      %2639 = vmatprep.mubr.f32.mxu0 0.0
      %2640 = vmatmul.mubr.f32.gmra.mxu0 %v2483
      %v2641 = vpop.f32.mrf.mxu0
      %v2642 = vadd.f32 0.0, %v2641
      %v2643 = vpop.f32.mrf.mxu0
      %v2644 = vadd.f32 0.0, %v2643
      %2645 = vmatprep.mubr.f32.mxu0 0.0
      %2646 = vmatmul.mubr.f32.gmra.mxu0 %v2485
      %v2647 = vpop.f32.mrf.mxu0
      %v2648 = vadd.f32 0.0, %v2647
      %v2649 = vpop.f32.mrf.mxu0
      %v2650 = vadd.f32 0.0, %v2649
      %2651 = vmatprep.mubr.f32.mxu0 0.0
      %2652 = vmatmul.mubr.f32.gmra.mxu0 %v2487
      %v2653 = vpop.f32.mrf.mxu0
      %v2654 = vadd.f32 0.0, %v2653
      %v2655 = vpop.f32.mrf.mxu0
      %v2656 = vadd.f32 0.0, %v2655
      %2657 = vmatprep.mubr.f32.mxu0 0.0
      %2658 = vmatmul.mubr.f32.gmra.mxu0 %v2489
      %v2659 = vpop.f32.mrf.mxu0
      %v2660 = vadd.f32 0.0, %v2659
      %v2661 = vpop.f32.mrf.mxu0
      %v2662 = vadd.f32 0.0, %v2661
      %2663 = vmatprep.mubr.f32.mxu0 0.0
      %2664 = vmatmul.mubr.f32.gmra.mxu0 %v2491
      %v2665 = vpop.f32.mrf.mxu0
      %v2666 = vadd.f32 0.0, %v2665
      %v2667 = vpop.f32.mrf.mxu0
      %v2668 = vadd.f32 0.0, %v2667
      %2669 = vmatprep.mubr.f32.mxu0 0.0
      %2670 = vmatmul.mubr.f32.gmra.mxu0 %v2493
      %v2671 = vpop.f32.mrf.mxu0
      %v2672 = vadd.f32 0.0, %v2671
      %v2673 = vpop.f32.mrf.mxu0
      %v2674 = vadd.f32 0.0, %v2673
      %2675 = vmatprep.mubr.f32.mxu0 0.0
      %2676 = vmatmul.mubr.f32.gmra.mxu0 %v2495
      %v2677 = vpop.f32.mrf.mxu0
      %v2678 = vadd.f32 0.0, %v2677
      %v2679 = vpop.f32.mrf.mxu0
      %v2680 = vadd.f32 0.0, %v2679
      %2681 = vmatprep.mubr.f32.mxu0 0.0
      %2682 = vmatmul.mubr.f32.gmra.mxu0 %v2497
      %v2683 = vpop.f32.mrf.mxu0
      %v2684 = vadd.f32 0.0, %v2683
      %v2685 = vpop.f32.mrf.mxu0
      %v2686 = vadd.f32 0.0, %v2685
      %2687 = vmatprep.mubr.f32.mxu0 0.0
      %2688 = vmatmul.mubr.f32.gmra.mxu0 %v2499
      %v2689 = vpop.f32.mrf.mxu0
      %v2690 = vadd.f32 0.0, %v2689
      %v2691 = vpop.f32.mrf.mxu0
      %v2692 = vadd.f32 0.0, %v2691
      %2693 = vmatprep.mubr.f32.mxu0 0.0
      %2694 = vmatmul.mubr.f32.gmra.mxu0 %v2501
      %v2695 = vpop.f32.mrf.mxu0
      %v2696 = vadd.f32 0.0, %v2695
      %v2697 = vpop.f32.mrf.mxu0
      %v2698 = vadd.f32 0.0, %v2697
      %2699 = vmatprep.mubr.f32.mxu0 0.0
      %2700 = vmatmul.mubr.f32.gmra.mxu0 %v2503
      %v2701 = vpop.f32.mrf.mxu0
      %v2702 = vadd.f32 0.0, %v2701
      %v2703 = vpop.f32.mrf.mxu0
      %v2704 = vadd.f32 0.0, %v2703
      %2705 = vmatprep.mubr.f32.mxu0 0.0
      %2706 = vmatmul.mubr.f32.gmra.mxu0 %v2505
      %v2707 = vpop.f32.mrf.mxu0
      %v2708 = vadd.f32 0.0, %v2707
      %v2709 = vpop.f32.mrf.mxu0
      %v2710 = vadd.f32 0.0, %v2709
      %2711 = vmatprep.mubr.f32.mxu0 0.0
      %2712 = vmatmul.mubr.f32.gmra.mxu0 %v2507
      %v2713 = vpop.f32.mrf.mxu0
      %v2714 = vadd.f32 0.0, %v2713
      %v2715 = vpop.f32.mrf.mxu0
      %v2716 = vadd.f32 0.0, %v2715
      %2717 = vmatprep.mubr.f32.mxu0 0.0
      %2718 = vmatmul.mubr.f32.gmra.mxu0 %v2509
      %v2719 = vpop.f32.mrf.mxu0
      %v2720 = vadd.f32 0.0, %v2719
      %v2721 = vpop.f32.mrf.mxu0
      %v2722 = vadd.f32 0.0, %v2721
      %2723 = vmatprep.mubr.f32.mxu0 0.0
      %2724 = vmatmul.mubr.f32.gmra.mxu0 %v2511
      %v2725 = vpop.f32.mrf.mxu0
      %v2726 = vadd.f32 0.0, %v2725
      %v2727 = vpop.f32.mrf.mxu0
      %v2728 = vadd.f32 0.0, %v2727
      %2729 = vmatprep.mubr.f32.mxu0 0.0
      %2730 = vmatmul.mubr.f32.gmra.mxu0 %v2513
      %v2731 = vpop.f32.mrf.mxu0
      %v2732 = vadd.f32 0.0, %v2731
      %v2733 = vpop.f32.mrf.mxu0
      %v2734 = vadd.f32 0.0, %v2733
      %2735 = vmatprep.mubr.f32.mxu0 0.0
      %2736 = vmatmul.mubr.f32.gmra.mxu0 %v2515
      %v2737 = vpop.f32.mrf.mxu0
      %v2738 = vadd.f32 0.0, %v2737
      %v2739 = vpop.f32.mrf.mxu0
      %v2740 = vadd.f32 0.0, %v2739
      %2741 = vmatprep.mubr.f32.mxu0 0.0
      %2742 = vmatmul.mubr.f32.gmra.mxu0 %v2517
      %v2743 = vpop.f32.mrf.mxu0
      %v2744 = vadd.f32 0.0, %v2743
      %v2745 = vpop.f32.mrf.mxu0
      %v2746 = vadd.f32 0.0, %v2745
      %2747 = vmatprep.mubr.f32.mxu0 0.0
      %2748 = vmatmul.mubr.f32.gmra.mxu0 %v2519
      %v2749 = vpop.f32.mrf.mxu0
      %v2750 = vadd.f32 0.0, %v2749
      %v2751 = vpop.f32.mrf.mxu0
      %v2752 = vadd.f32 0.0, %v2751
      %2753 = vmatprep.mubr.f32.mxu0 0.0
      %2754 = vmatmul.mubr.f32.gmra.mxu0 %v2521
      %v2755 = vpop.f32.mrf.mxu0
      %v2756 = vadd.f32 0.0, %v2755
      %v2757 = vpop.f32.mrf.mxu0
      %v2758 = vadd.f32 0.0, %v2757
      %2759 = vmatprep.mubr.f32.mxu0 0.0
      %2760 = vmatmul.mubr.f32.gmra.mxu0 %v2523
      %v2761 = vpop.f32.mrf.mxu0
      %v2762 = vadd.f32 0.0, %v2761
      %v2763 = vpop.f32.mrf.mxu0
      %v2764 = vadd.f32 0.0, %v2763
      %2765 = vmatprep.mubr.f32.mxu0 0.0
      %2766 = vmatmul.mubr.f32.gmra.mxu0 %v2525
      %v2767 = vpop.f32.mrf.mxu0
      %v2768 = vadd.f32 0.0, %v2767
      %v2769 = vpop.f32.mrf.mxu0
      %v2770 = vadd.f32 0.0, %v2769
      %2771 = vmatprep.mubr.f32.mxu0 0.0
      %2772 = vmatmul.mubr.f32.gmra.mxu0 %v2527
      %v2773 = vpop.f32.mrf.mxu0
      %v2774 = vadd.f32 0.0, %v2773
      %v2775 = vpop.f32.mrf.mxu0
      %v2776 = vadd.f32 0.0, %v2775
      %2777 = vmatprep.mubr.f32.mxu0 0.0
      %2778 = vmatmul.mubr.f32.gmra.mxu0 %v2529
      %v2779 = vpop.f32.mrf.mxu0
      %v2780 = vadd.f32 0.0, %v2779
      %v2781 = vpop.f32.mrf.mxu0
      %v2782 = vadd.f32 0.0, %v2781
      %2783 = vmatprep.mubr.f32.mxu0 0.0
      %2784 = vmatmul.mubr.f32.gmra.mxu0 %v2531
      %v2785 = vpop.f32.mrf.mxu0
      %v2786 = vadd.f32 0.0, %v2785
      %v2787 = vpop.f32.mrf.mxu0
      %v2788 = vadd.f32 0.0, %v2787
      %2789 = vdwg.mxu0
      %v2790 = vmax.f32 %v2600, %v2602
      %2791 = vmax.xlane.f32.xlu0 %v2790
      %v2792 = vpop.xlane.xlu0 %2791
      %v2793 = vmax.f32 %v2606, %v2608
      %2794 = vmax.xlane.f32.xlu0 %v2793
      %v2795 = vpop.xlane.xlu0 %2794
      %v2796 = vmax.f32 %v2612, %v2614
      %2797 = vmax.xlane.f32.xlu0 %v2796
      %v2798 = vpop.xlane.xlu0 %2797
      %v2799 = vmax.f32 %v2618, %v2620
      %2800 = vmax.xlane.f32.xlu0 %v2799
      %v2801 = vpop.xlane.xlu0 %2800
      %v2802 = vmax.f32 %v2624, %v2626
      %2803 = vmax.xlane.f32.xlu0 %v2802
      %v2804 = vpop.xlane.xlu0 %2803
      %v2805 = vmax.f32 %v2630, %v2632
      %2806 = vmax.xlane.f32.xlu0 %v2805
      %v2807 = vpop.xlane.xlu0 %2806
      %v2808 = vmax.f32 %v2636, %v2638
      %2809 = vmax.xlane.f32.xlu0 %v2808
      %v2810 = vpop.xlane.xlu0 %2809
      %v2811 = vmax.f32 %v2642, %v2644
      %2812 = vmax.xlane.f32.xlu0 %v2811
      %v2813 = vpop.xlane.xlu0 %2812
      %v2814 = vmax.f32 %v2648, %v2650
      %2815 = vmax.xlane.f32.xlu0 %v2814
      %v2816 = vpop.xlane.xlu0 %2815
      %v2817 = vmax.f32 %v2654, %v2656
      %2818 = vmax.xlane.f32.xlu0 %v2817
      %v2819 = vpop.xlane.xlu0 %2818
      %v2820 = vmax.f32 %v2660, %v2662
      %2821 = vmax.xlane.f32.xlu0 %v2820
      %v2822 = vpop.xlane.xlu0 %2821
      %v2823 = vmax.f32 %v2666, %v2668
      %2824 = vmax.xlane.f32.xlu0 %v2823
      %v2825 = vpop.xlane.xlu0 %2824
      %v2826 = vmax.f32 %v2672, %v2674
      %2827 = vmax.xlane.f32.xlu0 %v2826
      %v2828 = vpop.xlane.xlu0 %2827
      %v2829 = vmax.f32 %v2678, %v2680
      %2830 = vmax.xlane.f32.xlu0 %v2829
      %v2831 = vpop.xlane.xlu0 %2830
      %v2832 = vmax.f32 %v2684, %v2686
      %2833 = vmax.xlane.f32.xlu0 %v2832
      %v2834 = vpop.xlane.xlu0 %2833
      %v2835 = vmax.f32 %v2690, %v2692
      %2836 = vmax.xlane.f32.xlu0 %v2835
      %v2837 = vpop.xlane.xlu0 %2836
      %v2838 = vmax.f32 %v2696, %v2698
      %2839 = vmax.xlane.f32.xlu0 %v2838
      %v2840 = vpop.xlane.xlu0 %2839
      %v2841 = vmax.f32 %v2702, %v2704
      %2842 = vmax.xlane.f32.xlu0 %v2841
      %v2843 = vpop.xlane.xlu0 %2842
      %v2844 = vmax.f32 %v2708, %v2710
      %2845 = vmax.xlane.f32.xlu0 %v2844
      %v2846 = vpop.xlane.xlu0 %2845
      %v2847 = vmax.f32 %v2714, %v2716
      %2848 = vmax.xlane.f32.xlu0 %v2847
      %v2849 = vpop.xlane.xlu0 %2848
      %v2850 = vmax.f32 %v2720, %v2722
      %2851 = vmax.xlane.f32.xlu0 %v2850
      %v2852 = vpop.xlane.xlu0 %2851
      %v2853 = vmax.f32 %v2726, %v2728
      %2854 = vmax.xlane.f32.xlu0 %v2853
      %v2855 = vpop.xlane.xlu0 %2854
      %v2856 = vmax.f32 %v2732, %v2734
      %2857 = vmax.xlane.f32.xlu0 %v2856
      %v2858 = vpop.xlane.xlu0 %2857
      %v2859 = vmax.f32 %v2738, %v2740
      %2860 = vmax.xlane.f32.xlu0 %v2859
      %v2861 = vpop.xlane.xlu0 %2860
      %v2862 = vmax.f32 %v2744, %v2746
      %2863 = vmax.xlane.f32.xlu0 %v2862
      %v2864 = vpop.xlane.xlu0 %2863
      %v2865 = vmax.f32 %v2750, %v2752
      %2866 = vmax.xlane.f32.xlu0 %v2865
      %v2867 = vpop.xlane.xlu0 %2866
      %v2868 = vmax.f32 %v2756, %v2758
      %2869 = vmax.xlane.f32.xlu0 %v2868
      %v2870 = vpop.xlane.xlu0 %2869
      %v2871 = vmax.f32 %v2762, %v2764
      %2872 = vmax.xlane.f32.xlu0 %v2871
      %v2873 = vpop.xlane.xlu0 %2872
      %v2874 = vmax.f32 %v2768, %v2770
      %2875 = vmax.xlane.f32.xlu0 %v2874
      %v2876 = vpop.xlane.xlu0 %2875
      %v2877 = vmax.f32 %v2774, %v2776
      %2878 = vmax.xlane.f32.xlu0 %v2877
      %v2879 = vpop.xlane.xlu0 %2878
      %v2880 = vmax.f32 %v2780, %v2782
      %2881 = vmax.xlane.f32.xlu0 %v2880
      %v2882 = vpop.xlane.xlu0 %2881
      %v2883 = vmax.f32 %v2786, %v2788
      %2884 = vmax.xlane.f32.xlu0 %v2883
      %v2885 = vpop.xlane.xlu0 %2884
      %v2886 = vsub.f32 %v2600, %v2792
      %v2887 = vsub.f32 %v2602, %v2792
      %v2888 = vsub.f32 %v2606, %v2795
      %v2889 = vsub.f32 %v2608, %v2795
      %v2890 = vsub.f32 %v2612, %v2798
      %v2891 = vsub.f32 %v2614, %v2798
      %v2892 = vsub.f32 %v2618, %v2801
      %v2893 = vsub.f32 %v2620, %v2801
      %v2894 = vsub.f32 %v2624, %v2804
      %v2895 = vsub.f32 %v2626, %v2804
      %v2896 = vsub.f32 %v2630, %v2807
      %v2897 = vsub.f32 %v2632, %v2807
      %v2898 = vsub.f32 %v2636, %v2810
      %v2899 = vsub.f32 %v2638, %v2810
      %v2900 = vsub.f32 %v2642, %v2813
      %v2901 = vsub.f32 %v2644, %v2813
      %v2902 = vsub.f32 %v2648, %v2816
      %v2903 = vsub.f32 %v2650, %v2816
      %v2904 = vsub.f32 %v2654, %v2819
      %v2905 = vsub.f32 %v2656, %v2819
      %v2906 = vsub.f32 %v2660, %v2822
      %v2907 = vsub.f32 %v2662, %v2822
      %v2908 = vsub.f32 %v2666, %v2825
      %v2909 = vsub.f32 %v2668, %v2825
      %v2910 = vsub.f32 %v2672, %v2828
      %v2911 = vsub.f32 %v2674, %v2828
      %v2912 = vsub.f32 %v2678, %v2831
      %v2913 = vsub.f32 %v2680, %v2831
      %v2914 = vsub.f32 %v2684, %v2834
      %v2915 = vsub.f32 %v2686, %v2834
      %v2916 = vsub.f32 %v2690, %v2837
      %v2917 = vsub.f32 %v2692, %v2837
      %v2918 = vsub.f32 %v2696, %v2840
      %v2919 = vsub.f32 %v2698, %v2840
      %v2920 = vsub.f32 %v2702, %v2843
      %v2921 = vsub.f32 %v2704, %v2843
      %v2922 = vsub.f32 %v2708, %v2846
      %v2923 = vsub.f32 %v2710, %v2846
      %v2924 = vsub.f32 %v2714, %v2849
      %v2925 = vsub.f32 %v2716, %v2849
      %v2926 = vsub.f32 %v2720, %v2852
      %v2927 = vsub.f32 %v2722, %v2852
      %v2928 = vsub.f32 %v2726, %v2855
      %v2929 = vsub.f32 %v2728, %v2855
      %v2930 = vsub.f32 %v2732, %v2858
      %v2931 = vsub.f32 %v2734, %v2858
      %v2932 = vsub.f32 %v2738, %v2861
      %v2933 = vsub.f32 %v2740, %v2861
      %v2934 = vsub.f32 %v2744, %v2864
      %v2935 = vsub.f32 %v2746, %v2864
      %v2936 = vsub.f32 %v2750, %v2867
      %v2937 = vsub.f32 %v2752, %v2867
      %v2938 = vsub.f32 %v2756, %v2870
      %v2939 = vsub.f32 %v2758, %v2870
      %v2940 = vsub.f32 %v2762, %v2873
      %v2941 = vsub.f32 %v2764, %v2873
      %v2942 = vsub.f32 %v2768, %v2876
      %v2943 = vsub.f32 %v2770, %v2876
      %v2944 = vsub.f32 %v2774, %v2879
      %v2945 = vsub.f32 %v2776, %v2879
      %v2946 = vsub.f32 %v2780, %v2882
      %v2947 = vsub.f32 %v2782, %v2882
      %v2948 = vsub.f32 %v2786, %v2885
      %v2949 = vsub.f32 %v2788, %v2885
      %v2950 = vmul.f32 %v2886, 1.442695
      %v2951 = vpow.pop %v2950
      %v2952 = vmul.f32 %v2887, 1.442695
      %v2953 = vpow.pop %v2952
      %v2954 = vmul.f32 %v2888, 1.442695
      %v2955 = vpow.pop %v2954
      %v2956 = vmul.f32 %v2889, 1.442695
      %v2957 = vpow.pop %v2956
      %v2958 = vmul.f32 %v2890, 1.442695
      %v2959 = vpow.pop %v2958
      %v2960 = vmul.f32 %v2891, 1.442695
      %v2961 = vpow.pop %v2960
      %v2962 = vmul.f32 %v2892, 1.442695
      %v2963 = vpow.pop %v2962
      %v2964 = vmul.f32 %v2893, 1.442695
      %v2965 = vpow.pop %v2964
      %v2966 = vmul.f32 %v2894, 1.442695
      %v2967 = vpow.pop %v2966
      %v2968 = vmul.f32 %v2895, 1.442695
      %v2969 = vpow.pop %v2968
      %v2970 = vmul.f32 %v2896, 1.442695
      %v2971 = vpow.pop %v2970
      %v2972 = vmul.f32 %v2897, 1.442695
      %v2973 = vpow.pop %v2972
      %v2974 = vmul.f32 %v2898, 1.442695
      %v2975 = vpow.pop %v2974
      %v2976 = vmul.f32 %v2899, 1.442695
      %v2977 = vpow.pop %v2976
      %v2978 = vmul.f32 %v2900, 1.442695
      %v2979 = vpow.pop %v2978
      %v2980 = vmul.f32 %v2901, 1.442695
      %v2981 = vpow.pop %v2980
      %v2982 = vmul.f32 %v2902, 1.442695
      %v2983 = vpow.pop %v2982
      %v2984 = vmul.f32 %v2903, 1.442695
      %v2985 = vpow.pop %v2984
      %v2986 = vmul.f32 %v2904, 1.442695
      %v2987 = vpow.pop %v2986
      %v2988 = vmul.f32 %v2905, 1.442695
      %v2989 = vpow.pop %v2988
      %v2990 = vmul.f32 %v2906, 1.442695
      %v2991 = vpow.pop %v2990
      %v2992 = vmul.f32 %v2907, 1.442695
      %v2993 = vpow.pop %v2992
      %v2994 = vmul.f32 %v2908, 1.442695
      %v2995 = vpow.pop %v2994
      %v2996 = vmul.f32 %v2909, 1.442695
      %v2997 = vpow.pop %v2996
      %v2998 = vmul.f32 %v2910, 1.442695
      %v2999 = vpow.pop %v2998
      %v3000 = vmul.f32 %v2911, 1.442695
      %v3001 = vpow.pop %v3000
      %v3002 = vmul.f32 %v2912, 1.442695
      %v3003 = vpow.pop %v3002
      %v3004 = vmul.f32 %v2913, 1.442695
      %v3005 = vpow.pop %v3004
      %v3006 = vmul.f32 %v2914, 1.442695
      %v3007 = vpow.pop %v3006
      %v3008 = vmul.f32 %v2915, 1.442695
      %v3009 = vpow.pop %v3008
      %v3010 = vmul.f32 %v2916, 1.442695
      %v3011 = vpow.pop %v3010
      %v3012 = vmul.f32 %v2917, 1.442695
      %v3013 = vpow.pop %v3012
      %v3014 = vmul.f32 %v2918, 1.442695
      %v3015 = vpow.pop %v3014
      %v3016 = vmul.f32 %v2919, 1.442695
      %v3017 = vpow.pop %v3016
      %v3018 = vmul.f32 %v2920, 1.442695
      %v3019 = vpow.pop %v3018
      %v3020 = vmul.f32 %v2921, 1.442695
      %v3021 = vpow.pop %v3020
      %v3022 = vmul.f32 %v2922, 1.442695
      %v3023 = vpow.pop %v3022
      %v3024 = vmul.f32 %v2923, 1.442695
      %v3025 = vpow.pop %v3024
      %v3026 = vmul.f32 %v2924, 1.442695
      %v3027 = vpow.pop %v3026
      %v3028 = vmul.f32 %v2925, 1.442695
      %v3029 = vpow.pop %v3028
      %v3030 = vmul.f32 %v2926, 1.442695
      %v3031 = vpow.pop %v3030
      %v3032 = vmul.f32 %v2927, 1.442695
      %v3033 = vpow.pop %v3032
      %v3034 = vmul.f32 %v2928, 1.442695
      %v3035 = vpow.pop %v3034
      %v3036 = vmul.f32 %v2929, 1.442695
      %v3037 = vpow.pop %v3036
      %v3038 = vmul.f32 %v2930, 1.442695
      %v3039 = vpow.pop %v3038
      %v3040 = vmul.f32 %v2931, 1.442695
      %v3041 = vpow.pop %v3040
      %v3042 = vmul.f32 %v2932, 1.442695
      %v3043 = vpow.pop %v3042
      %v3044 = vmul.f32 %v2933, 1.442695
      %v3045 = vpow.pop %v3044
      %v3046 = vmul.f32 %v2934, 1.442695
      %v3047 = vpow.pop %v3046
      %v3048 = vmul.f32 %v2935, 1.442695
      %v3049 = vpow.pop %v3048
      %v3050 = vmul.f32 %v2936, 1.442695
      %v3051 = vpow.pop %v3050
      %v3052 = vmul.f32 %v2937, 1.442695
      %v3053 = vpow.pop %v3052
      %v3054 = vmul.f32 %v2938, 1.442695
      %v3055 = vpow.pop %v3054
      %v3056 = vmul.f32 %v2939, 1.442695
      %v3057 = vpow.pop %v3056
      %v3058 = vmul.f32 %v2940, 1.442695
      %v3059 = vpow.pop %v3058
      %v3060 = vmul.f32 %v2941, 1.442695
      %v3061 = vpow.pop %v3060
      %v3062 = vmul.f32 %v2942, 1.442695
      %v3063 = vpow.pop %v3062
      %v3064 = vmul.f32 %v2943, 1.442695
      %v3065 = vpow.pop %v3064
      %v3066 = vmul.f32 %v2944, 1.442695
      %v3067 = vpow.pop %v3066
      %v3068 = vmul.f32 %v2945, 1.442695
      %v3069 = vpow.pop %v3068
      %v3070 = vmul.f32 %v2946, 1.442695
      %v3071 = vpow.pop %v3070
      %v3072 = vmul.f32 %v2947, 1.442695
      %v3073 = vpow.pop %v3072
      %v3074 = vmul.f32 %v2948, 1.442695
      %v3075 = vpow.pop %v3074
      %v3076 = vmul.f32 %v2949, 1.442695
      %v3077 = vpow.pop %v3076
      %v3078 = vadd.f32 %v2951, %v2953
      %3079 = vadd.xlane.f32.xlu0 %v3078
      %v3080 = vpop.xlane.xlu0 %3079
      %v3081 = vadd.f32 %v2955, %v2957
      %3082 = vadd.xlane.f32.xlu0 %v3081
      %v3083 = vpop.xlane.xlu0 %3082
      %v3084 = vadd.f32 %v2959, %v2961
      %3085 = vadd.xlane.f32.xlu0 %v3084
      %v3086 = vpop.xlane.xlu0 %3085
      %v3087 = vadd.f32 %v2963, %v2965
      %3088 = vadd.xlane.f32.xlu0 %v3087
      %v3089 = vpop.xlane.xlu0 %3088
      %v3090 = vadd.f32 %v2967, %v2969
      %3091 = vadd.xlane.f32.xlu0 %v3090
      %v3092 = vpop.xlane.xlu0 %3091
      %v3093 = vadd.f32 %v2971, %v2973
      %3094 = vadd.xlane.f32.xlu0 %v3093
      %v3095 = vpop.xlane.xlu0 %3094
      %v3096 = vadd.f32 %v2975, %v2977
      %3097 = vadd.xlane.f32.xlu0 %v3096
      %v3098 = vpop.xlane.xlu0 %3097
      %v3099 = vadd.f32 %v2979, %v2981
      %3100 = vadd.xlane.f32.xlu0 %v3099
      %v3101 = vpop.xlane.xlu0 %3100
      %v3102 = vadd.f32 %v2983, %v2985
      %3103 = vadd.xlane.f32.xlu0 %v3102
      %v3104 = vpop.xlane.xlu0 %3103
      %v3105 = vadd.f32 %v2987, %v2989
      %3106 = vadd.xlane.f32.xlu0 %v3105
      %v3107 = vpop.xlane.xlu0 %3106
      %v3108 = vadd.f32 %v2991, %v2993
      %3109 = vadd.xlane.f32.xlu0 %v3108
      %v3110 = vpop.xlane.xlu0 %3109
      %v3111 = vadd.f32 %v2995, %v2997
      %3112 = vadd.xlane.f32.xlu0 %v3111
      %v3113 = vpop.xlane.xlu0 %3112
      %v3114 = vadd.f32 %v2999, %v3001
      %3115 = vadd.xlane.f32.xlu0 %v3114
      %v3116 = vpop.xlane.xlu0 %3115
      %v3117 = vadd.f32 %v3003, %v3005
      %3118 = vadd.xlane.f32.xlu0 %v3117
      %v3119 = vpop.xlane.xlu0 %3118
      %v3120 = vadd.f32 %v3007, %v3009
      %3121 = vadd.xlane.f32.xlu0 %v3120
      %v3122 = vpop.xlane.xlu0 %3121
      %v3123 = vadd.f32 %v3011, %v3013
      %3124 = vadd.xlane.f32.xlu0 %v3123
      %v3125 = vpop.xlane.xlu0 %3124
      %v3126 = vadd.f32 %v3015, %v3017
      %3127 = vadd.xlane.f32.xlu0 %v3126
      %v3128 = vpop.xlane.xlu0 %3127
      %v3129 = vadd.f32 %v3019, %v3021
      %3130 = vadd.xlane.f32.xlu0 %v3129
      %v3131 = vpop.xlane.xlu0 %3130
      %v3132 = vadd.f32 %v3023, %v3025
      %3133 = vadd.xlane.f32.xlu0 %v3132
      %v3134 = vpop.xlane.xlu0 %3133
      %v3135 = vadd.f32 %v3027, %v3029
      %3136 = vadd.xlane.f32.xlu0 %v3135
      %v3137 = vpop.xlane.xlu0 %3136
      %v3138 = vadd.f32 %v3031, %v3033
      %3139 = vadd.xlane.f32.xlu0 %v3138
      %v3140 = vpop.xlane.xlu0 %3139
      %v3141 = vadd.f32 %v3035, %v3037
      %3142 = vadd.xlane.f32.xlu0 %v3141
      %v3143 = vpop.xlane.xlu0 %3142
      %v3144 = vadd.f32 %v3039, %v3041
      %3145 = vadd.xlane.f32.xlu0 %v3144
      %v3146 = vpop.xlane.xlu0 %3145
      %v3147 = vadd.f32 %v3043, %v3045
      %3148 = vadd.xlane.f32.xlu0 %v3147
      %v3149 = vpop.xlane.xlu0 %3148
      %v3150 = vadd.f32 %v3047, %v3049
      %3151 = vadd.xlane.f32.xlu0 %v3150
      %v3152 = vpop.xlane.xlu0 %3151
      %v3153 = vadd.f32 %v3051, %v3053
      %3154 = vadd.xlane.f32.xlu0 %v3153
      %v3155 = vpop.xlane.xlu0 %3154
      %v3156 = vadd.f32 %v3055, %v3057
      %3157 = vadd.xlane.f32.xlu0 %v3156
      %v3158 = vpop.xlane.xlu0 %3157
      %v3159 = vadd.f32 %v3059, %v3061
      %3160 = vadd.xlane.f32.xlu0 %v3159
      %v3161 = vpop.xlane.xlu0 %3160
      %v3162 = vadd.f32 %v3063, %v3065
      %3163 = vadd.xlane.f32.xlu0 %v3162
      %v3164 = vpop.xlane.xlu0 %3163
      %v3165 = vadd.f32 %v3067, %v3069
      %3166 = vadd.xlane.f32.xlu0 %v3165
      %v3167 = vpop.xlane.xlu0 %3166
      %v3168 = vadd.f32 %v3071, %v3073
      %3169 = vadd.xlane.f32.xlu0 %v3168
      %v3170 = vpop.xlane.xlu0 %3169
      %v3171 = vadd.f32 %v3075, %v3077
      %3172 = vadd.xlane.f32.xlu0 %v3171
      %v3173 = vpop.xlane.xlu0 %3172
      %v3174 = vrcp.pop %v3080
      %v3175 = vmul.f32 %v2951, %v3174
      %v3176 = vmul.f32 %v2953, %v3174
      %v3177 = vrcp.pop %v3083
      %v3178 = vmul.f32 %v2955, %v3177
      %v3179 = vmul.f32 %v2957, %v3177
      %v3180 = vrcp.pop %v3086
      %v3181 = vmul.f32 %v2959, %v3180
      %v3182 = vmul.f32 %v2961, %v3180
      %v3183 = vrcp.pop %v3089
      %v3184 = vmul.f32 %v2963, %v3183
      %v3185 = vmul.f32 %v2965, %v3183
      %v3186 = vrcp.pop %v3092
      %v3187 = vmul.f32 %v2967, %v3186
      %v3188 = vmul.f32 %v2969, %v3186
      %v3189 = vrcp.pop %v3095
      %v3190 = vmul.f32 %v2971, %v3189
      %v3191 = vmul.f32 %v2973, %v3189
      %v3192 = vrcp.pop %v3098
      %v3193 = vmul.f32 %v2975, %v3192
      %v3194 = vmul.f32 %v2977, %v3192
      %v3195 = vrcp.pop %v3101
      %v3196 = vmul.f32 %v2979, %v3195
      %v3197 = vmul.f32 %v2981, %v3195
      %v3198 = vrcp.pop %v3104
      %v3199 = vmul.f32 %v2983, %v3198
      %v3200 = vmul.f32 %v2985, %v3198
      %v3201 = vrcp.pop %v3107
      %v3202 = vmul.f32 %v2987, %v3201
      %v3203 = vmul.f32 %v2989, %v3201
      %v3204 = vrcp.pop %v3110
      %v3205 = vmul.f32 %v2991, %v3204
      %v3206 = vmul.f32 %v2993, %v3204
      %v3207 = vrcp.pop %v3113
      %v3208 = vmul.f32 %v2995, %v3207
      %v3209 = vmul.f32 %v2997, %v3207
      %v3210 = vrcp.pop %v3116
      %v3211 = vmul.f32 %v2999, %v3210
      %v3212 = vmul.f32 %v3001, %v3210
      %v3213 = vrcp.pop %v3119
      %v3214 = vmul.f32 %v3003, %v3213
      %v3215 = vmul.f32 %v3005, %v3213
      %v3216 = vrcp.pop %v3122
      %v3217 = vmul.f32 %v3007, %v3216
      %v3218 = vmul.f32 %v3009, %v3216
      %v3219 = vrcp.pop %v3125
      %v3220 = vmul.f32 %v3011, %v3219
      %v3221 = vmul.f32 %v3013, %v3219
      %v3222 = vrcp.pop %v3128
      %v3223 = vmul.f32 %v3015, %v3222
      %v3224 = vmul.f32 %v3017, %v3222
      %v3225 = vrcp.pop %v3131
      %v3226 = vmul.f32 %v3019, %v3225
      %v3227 = vmul.f32 %v3021, %v3225
      %v3228 = vrcp.pop %v3134
      %v3229 = vmul.f32 %v3023, %v3228
      %v3230 = vmul.f32 %v3025, %v3228
      %v3231 = vrcp.pop %v3137
      %v3232 = vmul.f32 %v3027, %v3231
      %v3233 = vmul.f32 %v3029, %v3231
      %v3234 = vrcp.pop %v3140
      %v3235 = vmul.f32 %v3031, %v3234
      %v3236 = vmul.f32 %v3033, %v3234
      %v3237 = vrcp.pop %v3143
      %v3238 = vmul.f32 %v3035, %v3237
      %v3239 = vmul.f32 %v3037, %v3237
      %v3240 = vrcp.pop %v3146
      %v3241 = vmul.f32 %v3039, %v3240
      %v3242 = vmul.f32 %v3041, %v3240
      %v3243 = vrcp.pop %v3149
      %v3244 = vmul.f32 %v3043, %v3243
      %v3245 = vmul.f32 %v3045, %v3243
      %v3246 = vrcp.pop %v3152
      %v3247 = vmul.f32 %v3047, %v3246
      %v3248 = vmul.f32 %v3049, %v3246
      %v3249 = vrcp.pop %v3155
      %v3250 = vmul.f32 %v3051, %v3249
      %v3251 = vmul.f32 %v3053, %v3249
      %v3252 = vrcp.pop %v3158
      %v3253 = vmul.f32 %v3055, %v3252
      %v3254 = vmul.f32 %v3057, %v3252
      %v3255 = vrcp.pop %v3161
      %v3256 = vmul.f32 %v3059, %v3255
      %v3257 = vmul.f32 %v3061, %v3255
      %v3258 = vrcp.pop %v3164
      %v3259 = vmul.f32 %v3063, %v3258
      %v3260 = vmul.f32 %v3065, %v3258
      %v3261 = vrcp.pop %v3167
      %v3262 = vmul.f32 %v3067, %v3261
      %v3263 = vmul.f32 %v3069, %v3261
      %v3264 = vrcp.pop %v3170
      %v3265 = vmul.f32 %v3071, %v3264
      %v3266 = vmul.f32 %v3073, %v3264
      %v3267 = vrcp.pop %v3173
      %v3268 = vmul.f32 %v3075, %v3267
      %v3269 = vmul.f32 %v3077, %v3267
      %s3270 = scalar_lea.vmem %s394, 256
      %v3271 = vld [vmem:[%s3270] sm:$0xff]
      %v3272 = vld [vmem:[%s3270 + $0x8] sm:$0xff]
      %v3273 = vld [vmem:[%s3270 + $0x10] sm:$0xff]
      %v3274 = vld [vmem:[%s3270 + $0x18] sm:$0xff]
      %v3275 = vld [vmem:[%s3270 + $0x20] sm:$0xff]
      %v3276 = vld [vmem:[%s3270 + $0x28] sm:$0xff]
      %v3277 = vld [vmem:[%s3270 + $0x30] sm:$0xff]
      %v3278 = vld [vmem:[%s3270 + $0x38] sm:$0xff]
      %v3279 = vld [vmem:[%s3270 + $0x40] sm:$0xff]
      %v3280 = vld [vmem:[%s3270 + $0x48] sm:$0xff]
      %v3281 = vld [vmem:[%s3270 + $0x50] sm:$0xff]
      %v3282 = vld [vmem:[%s3270 + $0x58] sm:$0xff]
      %v3283 = vld [vmem:[%s3270 + $0x60] sm:$0xff]
      %v3284 = vld [vmem:[%s3270 + $0x68] sm:$0xff]
      %v3285 = vld [vmem:[%s3270 + $0x70] sm:$0xff]
      %v3286 = vld [vmem:[%s3270 + $0x78] sm:$0xff]
      %v3287 = vld [vmem:[%s3270 + $0x80] sm:$0xff]
      %v3288 = vld [vmem:[%s3270 + $0x88] sm:$0xff]
      %v3289 = vld [vmem:[%s3270 + $0x90] sm:$0xff]
      %v3290 = vld [vmem:[%s3270 + $0x98] sm:$0xff]
      %v3291 = vld [vmem:[%s3270 + $0xa0] sm:$0xff]
      %v3292 = vld [vmem:[%s3270 + $0xa8] sm:$0xff]
      %v3293 = vld [vmem:[%s3270 + $0xb0] sm:$0xff]
      %v3294 = vld [vmem:[%s3270 + $0xb8] sm:$0xff]
      %v3295 = vld [vmem:[%s3270 + $0xc0] sm:$0xff]
      %v3296 = vld [vmem:[%s3270 + $0xc8] sm:$0xff]
      %v3297 = vld [vmem:[%s3270 + $0xd0] sm:$0xff]
      %v3298 = vld [vmem:[%s3270 + $0xd8] sm:$0xff]
      %v3299 = vld [vmem:[%s3270 + $0xe0] sm:$0xff]
      %v3300 = vld [vmem:[%s3270 + $0xe8] sm:$0xff]
      %v3301 = vld [vmem:[%s3270 + $0xf0] sm:$0xff]
      %v3302 = vld [vmem:[%s3270 + $0xf8] sm:$0xff]
      %3303 = vmatprep.subr.mxu0 0.0
      %3304 = vmatpush1.msra.mxu0 %v3286
      %3305 = vmatprep.subr.mxu0 0.0
      %3306 = vmatpush1.msra.mxu0 %v3285
      %3307 = vmatprep.subr.mxu0 0.0
      %3308 = vmatpush1.msra.mxu0 %v3284
      %3309 = vmatprep.subr.mxu0 0.0
      %3310 = vmatpush1.msra.mxu0 %v3283
      %3311 = vmatprep.subr.mxu0 0.0
      %3312 = vmatpush1.msra.mxu0 %v3282
      %3313 = vmatprep.subr.mxu0 0.0
      %3314 = vmatpush1.msra.mxu0 %v3281
      %3315 = vmatprep.subr.mxu0 0.0
      %3316 = vmatpush1.msra.mxu0 %v3280
      %3317 = vmatprep.subr.mxu0 0.0
      %3318 = vmatpush1.msra.mxu0 %v3279
      %3319 = vmatprep.subr.mxu0 0.0
      %3320 = vmatpush1.msra.mxu0 %v3278
      %3321 = vmatprep.subr.mxu0 0.0
      %3322 = vmatpush1.msra.mxu0 %v3277
      %3323 = vmatprep.subr.mxu0 0.0
      %3324 = vmatpush1.msra.mxu0 %v3276
      %3325 = vmatprep.subr.mxu0 0.0
      %3326 = vmatpush1.msra.mxu0 %v3275
      %3327 = vmatprep.subr.mxu0 0.0
      %3328 = vmatpush1.msra.mxu0 %v3274
      %3329 = vmatprep.subr.mxu0 0.0
      %3330 = vmatpush1.msra.mxu0 %v3273
      %3331 = vmatprep.subr.mxu0 0.0
      %3332 = vmatpush1.msra.mxu0 %v3272
      %3333 = vmatprep.subr.mxu0 0.0
      %3334 = vmatpush1.msra.mxu0 %v3271
      %3335 = vmatprep.subr.mxu0 0.0
      %3336 = vmatpush2.msra.mxu0 %v3302
      %3337 = vmatprep.subr.mxu0 0.0
      %3338 = vmatpush2.msra.mxu0 %v3301
      %3339 = vmatprep.subr.mxu0 0.0
      %3340 = vmatpush2.msra.mxu0 %v3300
      %3341 = vmatprep.subr.mxu0 0.0
      %3342 = vmatpush2.msra.mxu0 %v3299
      %3343 = vmatprep.subr.mxu0 0.0
      %3344 = vmatpush2.msra.mxu0 %v3298
      %3345 = vmatprep.subr.mxu0 0.0
      %3346 = vmatpush2.msra.mxu0 %v3297
      %3347 = vmatprep.subr.mxu0 0.0
      %3348 = vmatpush2.msra.mxu0 %v3296
      %3349 = vmatprep.subr.mxu0 0.0
      %3350 = vmatpush2.msra.mxu0 %v3295
      %3351 = vmatprep.subr.mxu0 0.0
      %3352 = vmatpush2.msra.mxu0 %v3294
      %3353 = vmatprep.subr.mxu0 0.0
      %3354 = vmatpush2.msra.mxu0 %v3293
      %3355 = vmatprep.subr.mxu0 0.0
      %3356 = vmatpush2.msra.mxu0 %v3292
      %3357 = vmatprep.subr.mxu0 0.0
      %3358 = vmatpush2.msra.mxu0 %v3291
      %3359 = vmatprep.subr.mxu0 0.0
      %3360 = vmatpush2.msra.mxu0 %v3290
      %3361 = vmatprep.subr.mxu0 0.0
      %3362 = vmatpush2.msra.mxu0 %v3289
      %3363 = vmatprep.subr.mxu0 0.0
      %3364 = vmatpush2.msra.mxu0 %v3288
      %3365 = vmatprep.subr.mxu0 0.0
      %3366 = vmatpush2.msra.mxu0 %v3287
      %3367 = vmatprep.mubr.f32.mxu0 %v3176
      %3368 = vmatmul.mubr.f32.gmra.mxu0 %v3175
      %v3369 = vpop.f32.mrf.mxu0
      %v3370 = vadd.f32 0.0, %v3369
      %v3371 = vpop.f32.mrf.mxu0
      %3372 = vmatprep.mubr.f32.mxu0 %v3179
      %3373 = vmatmul.mubr.f32.gmra.mxu0 %v3178
      %v3374 = vpop.f32.mrf.mxu0
      %v3375 = vadd.f32 0.0, %v3374
      %v3376 = vpop.f32.mrf.mxu0
      %3377 = vmatprep.mubr.f32.mxu0 %v3182
      %3378 = vmatmul.mubr.f32.gmra.mxu0 %v3181
      %v3379 = vpop.f32.mrf.mxu0
      %v3380 = vadd.f32 0.0, %v3379
      %v3381 = vpop.f32.mrf.mxu0
      %3382 = vmatprep.mubr.f32.mxu0 %v3185
      %3383 = vmatmul.mubr.f32.gmra.mxu0 %v3184
      %v3384 = vpop.f32.mrf.mxu0
      %v3385 = vadd.f32 0.0, %v3384
      %v3386 = vpop.f32.mrf.mxu0
      %3387 = vmatprep.mubr.f32.mxu0 %v3188
      %3388 = vmatmul.mubr.f32.gmra.mxu0 %v3187
      %v3389 = vpop.f32.mrf.mxu0
      %v3390 = vadd.f32 0.0, %v3389
      %v3391 = vpop.f32.mrf.mxu0
      %3392 = vmatprep.mubr.f32.mxu0 %v3191
      %3393 = vmatmul.mubr.f32.gmra.mxu0 %v3190
      %v3394 = vpop.f32.mrf.mxu0
      %v3395 = vadd.f32 0.0, %v3394
      %v3396 = vpop.f32.mrf.mxu0
      %3397 = vmatprep.mubr.f32.mxu0 %v3194
      %3398 = vmatmul.mubr.f32.gmra.mxu0 %v3193
      %v3399 = vpop.f32.mrf.mxu0
      %v3400 = vadd.f32 0.0, %v3399
      %v3401 = vpop.f32.mrf.mxu0
      %3402 = vmatprep.mubr.f32.mxu0 %v3197
      %3403 = vmatmul.mubr.f32.gmra.mxu0 %v3196
      %v3404 = vpop.f32.mrf.mxu0
      %v3405 = vadd.f32 0.0, %v3404
      %v3406 = vpop.f32.mrf.mxu0
      %3407 = vmatprep.mubr.f32.mxu0 %v3200
      %3408 = vmatmul.mubr.f32.gmra.mxu0 %v3199
      %v3409 = vpop.f32.mrf.mxu0
      %v3410 = vadd.f32 0.0, %v3409
      %v3411 = vpop.f32.mrf.mxu0
      %3412 = vmatprep.mubr.f32.mxu0 %v3203
      %3413 = vmatmul.mubr.f32.gmra.mxu0 %v3202
      %v3414 = vpop.f32.mrf.mxu0
      %v3415 = vadd.f32 0.0, %v3414
      %v3416 = vpop.f32.mrf.mxu0
      %3417 = vmatprep.mubr.f32.mxu0 %v3206
      %3418 = vmatmul.mubr.f32.gmra.mxu0 %v3205
      %v3419 = vpop.f32.mrf.mxu0
      %v3420 = vadd.f32 0.0, %v3419
      %v3421 = vpop.f32.mrf.mxu0
      %3422 = vmatprep.mubr.f32.mxu0 %v3209
      %3423 = vmatmul.mubr.f32.gmra.mxu0 %v3208
      %v3424 = vpop.f32.mrf.mxu0
      %v3425 = vadd.f32 0.0, %v3424
      %v3426 = vpop.f32.mrf.mxu0
      %3427 = vmatprep.mubr.f32.mxu0 %v3212
      %3428 = vmatmul.mubr.f32.gmra.mxu0 %v3211
      %v3429 = vpop.f32.mrf.mxu0
      %v3430 = vadd.f32 0.0, %v3429
      %v3431 = vpop.f32.mrf.mxu0
      %3432 = vmatprep.mubr.f32.mxu0 %v3215
      %3433 = vmatmul.mubr.f32.gmra.mxu0 %v3214
      %v3434 = vpop.f32.mrf.mxu0
      %v3435 = vadd.f32 0.0, %v3434
      %v3436 = vpop.f32.mrf.mxu0
      %3437 = vmatprep.mubr.f32.mxu0 %v3218
      %3438 = vmatmul.mubr.f32.gmra.mxu0 %v3217
      %v3439 = vpop.f32.mrf.mxu0
      %v3440 = vadd.f32 0.0, %v3439
      %v3441 = vpop.f32.mrf.mxu0
      %3442 = vmatprep.mubr.f32.mxu0 %v3221
      %3443 = vmatmul.mubr.f32.gmra.mxu0 %v3220
      %v3444 = vpop.f32.mrf.mxu0
      %v3445 = vadd.f32 0.0, %v3444
      %v3446 = vpop.f32.mrf.mxu0
      %3447 = vmatprep.mubr.f32.mxu0 %v3224
      %3448 = vmatmul.mubr.f32.gmra.mxu0 %v3223
      %v3449 = vpop.f32.mrf.mxu0
      %v3450 = vadd.f32 0.0, %v3449
      %v3451 = vpop.f32.mrf.mxu0
      %3452 = vmatprep.mubr.f32.mxu0 %v3227
      %3453 = vmatmul.mubr.f32.gmra.mxu0 %v3226
      %v3454 = vpop.f32.mrf.mxu0
      %v3455 = vadd.f32 0.0, %v3454
      %v3456 = vpop.f32.mrf.mxu0
      %3457 = vmatprep.mubr.f32.mxu0 %v3230
      %3458 = vmatmul.mubr.f32.gmra.mxu0 %v3229
      %v3459 = vpop.f32.mrf.mxu0
      %v3460 = vadd.f32 0.0, %v3459
      %v3461 = vpop.f32.mrf.mxu0
      %3462 = vmatprep.mubr.f32.mxu0 %v3233
      %3463 = vmatmul.mubr.f32.gmra.mxu0 %v3232
      %v3464 = vpop.f32.mrf.mxu0
      %v3465 = vadd.f32 0.0, %v3464
      %v3466 = vpop.f32.mrf.mxu0
      %3467 = vmatprep.mubr.f32.mxu0 %v3236
      %3468 = vmatmul.mubr.f32.gmra.mxu0 %v3235
      %v3469 = vpop.f32.mrf.mxu0
      %v3470 = vadd.f32 0.0, %v3469
      %v3471 = vpop.f32.mrf.mxu0
      %3472 = vmatprep.mubr.f32.mxu0 %v3239
      %3473 = vmatmul.mubr.f32.gmra.mxu0 %v3238
      %v3474 = vpop.f32.mrf.mxu0
      %v3475 = vadd.f32 0.0, %v3474
      %v3476 = vpop.f32.mrf.mxu0
      %3477 = vmatprep.mubr.f32.mxu0 %v3242
      %3478 = vmatmul.mubr.f32.gmra.mxu0 %v3241
      %v3479 = vpop.f32.mrf.mxu0
      %v3480 = vadd.f32 0.0, %v3479
      %v3481 = vpop.f32.mrf.mxu0
      %3482 = vmatprep.mubr.f32.mxu0 %v3245
      %3483 = vmatmul.mubr.f32.gmra.mxu0 %v3244
      %v3484 = vpop.f32.mrf.mxu0
      %v3485 = vadd.f32 0.0, %v3484
      %v3486 = vpop.f32.mrf.mxu0
      %3487 = vmatprep.mubr.f32.mxu0 %v3248
      %3488 = vmatmul.mubr.f32.gmra.mxu0 %v3247
      %v3489 = vpop.f32.mrf.mxu0
      %v3490 = vadd.f32 0.0, %v3489
      %v3491 = vpop.f32.mrf.mxu0
      %3492 = vmatprep.mubr.f32.mxu0 %v3251
      %3493 = vmatmul.mubr.f32.gmra.mxu0 %v3250
      %v3494 = vpop.f32.mrf.mxu0
      %v3495 = vadd.f32 0.0, %v3494
      %v3496 = vpop.f32.mrf.mxu0
      %3497 = vmatprep.mubr.f32.mxu0 %v3254
      %3498 = vmatmul.mubr.f32.gmra.mxu0 %v3253
      %v3499 = vpop.f32.mrf.mxu0
      %v3500 = vadd.f32 0.0, %v3499
      %v3501 = vpop.f32.mrf.mxu0
      %3502 = vmatprep.mubr.f32.mxu0 %v3257
      %3503 = vmatmul.mubr.f32.gmra.mxu0 %v3256
      %v3504 = vpop.f32.mrf.mxu0
      %v3505 = vadd.f32 0.0, %v3504
      %v3506 = vpop.f32.mrf.mxu0
      %3507 = vmatprep.mubr.f32.mxu0 %v3260
      %3508 = vmatmul.mubr.f32.gmra.mxu0 %v3259
      %v3509 = vpop.f32.mrf.mxu0
      %v3510 = vadd.f32 0.0, %v3509
      %v3511 = vpop.f32.mrf.mxu0
      %3512 = vmatprep.mubr.f32.mxu0 %v3263
      %3513 = vmatmul.mubr.f32.gmra.mxu0 %v3262
      %v3514 = vpop.f32.mrf.mxu0
      %v3515 = vadd.f32 0.0, %v3514
      %v3516 = vpop.f32.mrf.mxu0
      %3517 = vmatprep.mubr.f32.mxu0 %v3266
      %3518 = vmatmul.mubr.f32.gmra.mxu0 %v3265
      %v3519 = vpop.f32.mrf.mxu0
      %v3520 = vadd.f32 0.0, %v3519
      %v3521 = vpop.f32.mrf.mxu0
      %3522 = vmatprep.mubr.f32.mxu0 %v3269
      %3523 = vmatmul.mubr.f32.gmra.mxu0 %v3268
      %v3524 = vpop.f32.mrf.mxu0
      %v3525 = vadd.f32 0.0, %v3524
      %v3526 = vpop.f32.mrf.mxu0
      %3527 = vdwg.mxu0
      %s3528 = scalar_lea.vmem %s8, 16
      %v3529 = vld [vmem:[%s3528] sm:$0xff]
      %v3530 = vld [vmem:[%s3528 + $0x8] sm:$0xff]
      %v3532 = vsel %vm1312, %v3370, 0
      %v3535 = vsel %vm1312, %v3375, 0
      %v3538 = vsel %vm1312, %v3380, 0
      %v3541 = vsel %vm1312, %v3385, 0
      %v3544 = vsel %vm1312, %v3390, 0
      %v3547 = vsel %vm1312, %v3395, 0
      %v3550 = vsel %vm1312, %v3400, 0
      %v3553 = vsel %vm1312, %v3405, 0
      %v3556 = vsel %vm1312, %v3410, 0
      %v3559 = vsel %vm1312, %v3415, 0
      %v3562 = vsel %vm1312, %v3420, 0
      %v3565 = vsel %vm1312, %v3425, 0
      %v3568 = vsel %vm1312, %v3430, 0
      %v3571 = vsel %vm1312, %v3435, 0
      %v3574 = vsel %vm1312, %v3440, 0
      %v3577 = vsel %vm1312, %v3445, 0
      %v3580 = vsel %vm1312, %v3450, 0
      %v3583 = vsel %vm1312, %v3455, 0
      %v3586 = vsel %vm1312, %v3460, 0
      %v3589 = vsel %vm1312, %v3465, 0
      %v3592 = vsel %vm1312, %v3470, 0
      %v3595 = vsel %vm1312, %v3475, 0
      %v3598 = vsel %vm1312, %v3480, 0
      %v3601 = vsel %vm1312, %v3485, 0
      %v3604 = vsel %vm1312, %v3490, 0
      %v3607 = vsel %vm1312, %v3495, 0
      %v3610 = vsel %vm1312, %v3500, 0
      %v3613 = vsel %vm1312, %v3505, 0
      %v3616 = vsel %vm1312, %v3510, 0
      %v3619 = vsel %vm1312, %v3515, 0
      %v3622 = vsel %vm1312, %v3520, 0
      %v3625 = vsel %vm1312, %v3525, 0
      %3627 = vmatprep.subr.mxu0 0.0
      %3628 = vmatpush1.msra.mxu0 0.0
      %3629 = vmatprep.subr.mxu0 0.0
      %3630 = vmatpush1.msra.mxu0 0.0
      %3631 = vmatprep.subr.mxu0 0.0
      %3632 = vmatpush1.msra.mxu0 0.0
      %3633 = vmatprep.subr.mxu0 0.0
      %3634 = vmatpush1.msra.mxu0 0.0
      %3635 = vmatprep.subr.mxu0 0.0
      %3636 = vmatpush1.msra.mxu0 0.0
      %3637 = vmatprep.subr.mxu0 0.0
      %3638 = vmatpush1.msra.mxu0 0.0
      %3639 = vmatprep.subr.mxu0 0.0
      %3640 = vmatpush1.msra.mxu0 0.0
      %3641 = vmatprep.subr.mxu0 0.0
      %3642 = vmatpush1.msra.mxu0 0.0
      %3643 = vmatprep.subr.mxu0 0.0
      %3644 = vmatpush1.msra.mxu0 0.0
      %3645 = vmatprep.subr.mxu0 0.0
      %3646 = vmatpush1.msra.mxu0 0.0
      %3647 = vmatprep.subr.mxu0 0.0
      %3648 = vmatpush1.msra.mxu0 0.0
      %3649 = vmatprep.subr.mxu0 0.0
      %3650 = vmatpush1.msra.mxu0 0.0
      %3651 = vmatprep.subr.mxu0 0.0
      %3652 = vmatpush1.msra.mxu0 0.0
      %3653 = vmatprep.subr.mxu0 0.0
      %3654 = vmatpush1.msra.mxu0 0.0
      %3655 = vmatprep.subr.mxu0 0.0
      %3656 = vmatpush1.msra.mxu0 %v3530
      %3657 = vmatprep.subr.mxu0 0.0
      %3658 = vmatpush1.msra.mxu0 %v3529
      %3659 = vmatprep.subr.mxu0 0.0
      %3660 = vmatpush2.msra.mxu0 0.0
      %3661 = vmatprep.subr.mxu0 0.0
      %3662 = vmatpush2.msra.mxu0 0.0
      %3663 = vmatprep.subr.mxu0 0.0
      %3664 = vmatpush2.msra.mxu0 0.0
      %3665 = vmatprep.subr.mxu0 0.0
      %3666 = vmatpush2.msra.mxu0 0.0
      %3667 = vmatprep.subr.mxu0 0.0
      %3668 = vmatpush2.msra.mxu0 0.0
      %3669 = vmatprep.subr.mxu0 0.0
      %3670 = vmatpush2.msra.mxu0 0.0
      %3671 = vmatprep.subr.mxu0 0.0
      %3672 = vmatpush2.msra.mxu0 0.0
      %3673 = vmatprep.subr.mxu0 0.0
      %3674 = vmatpush2.msra.mxu0 0.0
      %3675 = vmatprep.subr.mxu0 0.0
      %3676 = vmatpush2.msra.mxu0 0.0
      %3677 = vmatprep.subr.mxu0 0.0
      %3678 = vmatpush2.msra.mxu0 0.0
      %3679 = vmatprep.subr.mxu0 0.0
      %3680 = vmatpush2.msra.mxu0 0.0
      %3681 = vmatprep.subr.mxu0 0.0
      %3682 = vmatpush2.msra.mxu0 0.0
      %3683 = vmatprep.subr.mxu0 0.0
      %3684 = vmatpush2.msra.mxu0 0.0
      %3685 = vmatprep.subr.mxu0 0.0
      %3686 = vmatpush2.msra.mxu0 0.0
      %3687 = vmatprep.subr.mxu0 0.0
      %3688 = vmatpush2.msra.mxu0 0.0
      %3689 = vmatprep.subr.mxu0 0.0
      %3690 = vmatpush2.msra.mxu0 0.0
      %3691 = vmatprep.mubr.f32.mxu0 0.0
      %3692 = vmatmul.mubr.f32.gmra.mxu0 %v3532
      %v3693 = vpop.f32.mrf.mxu0
      %v3694 = vadd.f32 0.0, %v3693
      %v3695 = vpop.f32.mrf.mxu0
      %3696 = vmatprep.mubr.f32.mxu0 0.0
      %3697 = vmatmul.mubr.f32.gmra.mxu0 %v3535
      %v3698 = vpop.f32.mrf.mxu0
      %v3699 = vadd.f32 0.0, %v3698
      %v3700 = vpop.f32.mrf.mxu0
      %3701 = vmatprep.mubr.f32.mxu0 0.0
      %3702 = vmatmul.mubr.f32.gmra.mxu0 %v3538
      %v3703 = vpop.f32.mrf.mxu0
      %v3704 = vadd.f32 0.0, %v3703
      %v3705 = vpop.f32.mrf.mxu0
      %3706 = vmatprep.mubr.f32.mxu0 0.0
      %3707 = vmatmul.mubr.f32.gmra.mxu0 %v3541
      %v3708 = vpop.f32.mrf.mxu0
      %v3709 = vadd.f32 0.0, %v3708
      %v3710 = vpop.f32.mrf.mxu0
      %3711 = vmatprep.mubr.f32.mxu0 0.0
      %3712 = vmatmul.mubr.f32.gmra.mxu0 %v3544
      %v3713 = vpop.f32.mrf.mxu0
      %v3714 = vadd.f32 0.0, %v3713
      %v3715 = vpop.f32.mrf.mxu0
      %3716 = vmatprep.mubr.f32.mxu0 0.0
      %3717 = vmatmul.mubr.f32.gmra.mxu0 %v3547
      %v3718 = vpop.f32.mrf.mxu0
      %v3719 = vadd.f32 0.0, %v3718
      %v3720 = vpop.f32.mrf.mxu0
      %3721 = vmatprep.mubr.f32.mxu0 0.0
      %3722 = vmatmul.mubr.f32.gmra.mxu0 %v3550
      %v3723 = vpop.f32.mrf.mxu0
      %v3724 = vadd.f32 0.0, %v3723
      %v3725 = vpop.f32.mrf.mxu0
      %3726 = vmatprep.mubr.f32.mxu0 0.0
      %3727 = vmatmul.mubr.f32.gmra.mxu0 %v3553
      %v3728 = vpop.f32.mrf.mxu0
      %v3729 = vadd.f32 0.0, %v3728
      %v3730 = vpop.f32.mrf.mxu0
      %3731 = vmatprep.mubr.f32.mxu0 0.0
      %3732 = vmatmul.mubr.f32.gmra.mxu0 %v3556
      %v3733 = vpop.f32.mrf.mxu0
      %v3734 = vadd.f32 0.0, %v3733
      %v3735 = vpop.f32.mrf.mxu0
      %3736 = vmatprep.mubr.f32.mxu0 0.0
      %3737 = vmatmul.mubr.f32.gmra.mxu0 %v3559
      %v3738 = vpop.f32.mrf.mxu0
      %v3739 = vadd.f32 0.0, %v3738
      %v3740 = vpop.f32.mrf.mxu0
      %3741 = vmatprep.mubr.f32.mxu0 0.0
      %3742 = vmatmul.mubr.f32.gmra.mxu0 %v3562
      %v3743 = vpop.f32.mrf.mxu0
      %v3744 = vadd.f32 0.0, %v3743
      %v3745 = vpop.f32.mrf.mxu0
      %3746 = vmatprep.mubr.f32.mxu0 0.0
      %3747 = vmatmul.mubr.f32.gmra.mxu0 %v3565
      %v3748 = vpop.f32.mrf.mxu0
      %v3749 = vadd.f32 0.0, %v3748
      %v3750 = vpop.f32.mrf.mxu0
      %3751 = vmatprep.mubr.f32.mxu0 0.0
      %3752 = vmatmul.mubr.f32.gmra.mxu0 %v3568
      %v3753 = vpop.f32.mrf.mxu0
      %v3754 = vadd.f32 0.0, %v3753
      %v3755 = vpop.f32.mrf.mxu0
      %3756 = vmatprep.mubr.f32.mxu0 0.0
      %3757 = vmatmul.mubr.f32.gmra.mxu0 %v3571
      %v3758 = vpop.f32.mrf.mxu0
      %v3759 = vadd.f32 0.0, %v3758
      %v3760 = vpop.f32.mrf.mxu0
      %3761 = vmatprep.mubr.f32.mxu0 0.0
      %3762 = vmatmul.mubr.f32.gmra.mxu0 %v3574
      %v3763 = vpop.f32.mrf.mxu0
      %v3764 = vadd.f32 0.0, %v3763
      %v3765 = vpop.f32.mrf.mxu0
      %3766 = vmatprep.mubr.f32.mxu0 0.0
      %3767 = vmatmul.mubr.f32.gmra.mxu0 %v3577
      %v3768 = vpop.f32.mrf.mxu0
      %v3769 = vadd.f32 0.0, %v3768
      %v3770 = vpop.f32.mrf.mxu0
      %3771 = vmatprep.mubr.f32.mxu0 0.0
      %3772 = vmatmul.mubr.f32.gmra.mxu0 %v3580
      %v3773 = vpop.f32.mrf.mxu0
      %v3774 = vadd.f32 0.0, %v3773
      %v3775 = vpop.f32.mrf.mxu0
      %3776 = vmatprep.mubr.f32.mxu0 0.0
      %3777 = vmatmul.mubr.f32.gmra.mxu0 %v3583
      %v3778 = vpop.f32.mrf.mxu0
      %v3779 = vadd.f32 0.0, %v3778
      %v3780 = vpop.f32.mrf.mxu0
      %3781 = vmatprep.mubr.f32.mxu0 0.0
      %3782 = vmatmul.mubr.f32.gmra.mxu0 %v3586
      %v3783 = vpop.f32.mrf.mxu0
      %v3784 = vadd.f32 0.0, %v3783
      %v3785 = vpop.f32.mrf.mxu0
      %3786 = vmatprep.mubr.f32.mxu0 0.0
      %3787 = vmatmul.mubr.f32.gmra.mxu0 %v3589
      %v3788 = vpop.f32.mrf.mxu0
      %v3789 = vadd.f32 0.0, %v3788
      %v3790 = vpop.f32.mrf.mxu0
      %3791 = vmatprep.mubr.f32.mxu0 0.0
      %3792 = vmatmul.mubr.f32.gmra.mxu0 %v3592
      %v3793 = vpop.f32.mrf.mxu0
      %v3794 = vadd.f32 0.0, %v3793
      %v3795 = vpop.f32.mrf.mxu0
      %3796 = vmatprep.mubr.f32.mxu0 0.0
      %3797 = vmatmul.mubr.f32.gmra.mxu0 %v3595
      %v3798 = vpop.f32.mrf.mxu0
      %v3799 = vadd.f32 0.0, %v3798
      %v3800 = vpop.f32.mrf.mxu0
      %3801 = vmatprep.mubr.f32.mxu0 0.0
      %3802 = vmatmul.mubr.f32.gmra.mxu0 %v3598
      %v3803 = vpop.f32.mrf.mxu0
      %v3804 = vadd.f32 0.0, %v3803
      %v3805 = vpop.f32.mrf.mxu0
      %3806 = vmatprep.mubr.f32.mxu0 0.0
      %3807 = vmatmul.mubr.f32.gmra.mxu0 %v3601
      %v3808 = vpop.f32.mrf.mxu0
      %v3809 = vadd.f32 0.0, %v3808
      %v3810 = vpop.f32.mrf.mxu0
      %3811 = vmatprep.mubr.f32.mxu0 0.0
      %3812 = vmatmul.mubr.f32.gmra.mxu0 %v3604
      %v3813 = vpop.f32.mrf.mxu0
      %v3814 = vadd.f32 0.0, %v3813
      %v3815 = vpop.f32.mrf.mxu0
      %3816 = vmatprep.mubr.f32.mxu0 0.0
      %3817 = vmatmul.mubr.f32.gmra.mxu0 %v3607
      %v3818 = vpop.f32.mrf.mxu0
      %v3819 = vadd.f32 0.0, %v3818
      %v3820 = vpop.f32.mrf.mxu0
      %3821 = vmatprep.mubr.f32.mxu0 0.0
      %3822 = vmatmul.mubr.f32.gmra.mxu0 %v3610
      %v3823 = vpop.f32.mrf.mxu0
      %v3824 = vadd.f32 0.0, %v3823
      %v3825 = vpop.f32.mrf.mxu0
      %3826 = vmatprep.mubr.f32.mxu0 0.0
      %3827 = vmatmul.mubr.f32.gmra.mxu0 %v3613
      %v3828 = vpop.f32.mrf.mxu0
      %v3829 = vadd.f32 0.0, %v3828
      %v3830 = vpop.f32.mrf.mxu0
      %3831 = vmatprep.mubr.f32.mxu0 0.0
      %3832 = vmatmul.mubr.f32.gmra.mxu0 %v3616
      %v3833 = vpop.f32.mrf.mxu0
      %v3834 = vadd.f32 0.0, %v3833
      %v3835 = vpop.f32.mrf.mxu0
      %3836 = vmatprep.mubr.f32.mxu0 0.0
      %3837 = vmatmul.mubr.f32.gmra.mxu0 %v3619
      %v3838 = vpop.f32.mrf.mxu0
      %v3839 = vadd.f32 0.0, %v3838
      %v3840 = vpop.f32.mrf.mxu0
      %3841 = vmatprep.mubr.f32.mxu0 0.0
      %3842 = vmatmul.mubr.f32.gmra.mxu0 %v3622
      %v3843 = vpop.f32.mrf.mxu0
      %v3844 = vadd.f32 0.0, %v3843
      %v3845 = vpop.f32.mrf.mxu0
      %3846 = vmatprep.mubr.f32.mxu0 0.0
      %3847 = vmatmul.mubr.f32.gmra.mxu0 %v3625
      %v3848 = vpop.f32.mrf.mxu0
      %v3849 = vadd.f32 0.0, %v3848
      %v3850 = vpop.f32.mrf.mxu0
      %3851 = vdwg.mxu0
      %v3853 = vsel %vm1312, %v2245, 0
      %v3856 = vsel %vm1312, %v2250, 0
      %v3859 = vsel %vm1312, %v2255, 0
      %v3862 = vsel %vm1312, %v2260, 0
      %v3865 = vsel %vm1312, %v2265, 0
      %v3868 = vsel %vm1312, %v2270, 0
      %v3871 = vsel %vm1312, %v2275, 0
      %v3874 = vsel %vm1312, %v2280, 0
      %v3877 = vsel %vm1312, %v2285, 0
      %v3880 = vsel %vm1312, %v2290, 0
      %v3883 = vsel %vm1312, %v2295, 0
      %v3886 = vsel %vm1312, %v2300, 0
      %v3889 = vsel %vm1312, %v2305, 0
      %v3892 = vsel %vm1312, %v2310, 0
      %v3895 = vsel %vm1312, %v2315, 0
      %v3898 = vsel %vm1312, %v2320, 0
      %v3901 = vsel %vm1312, %v2325, 0
      %v3904 = vsel %vm1312, %v2330, 0
      %v3907 = vsel %vm1312, %v2335, 0
      %v3910 = vsel %vm1312, %v2340, 0
      %v3913 = vsel %vm1312, %v2345, 0
      %v3916 = vsel %vm1312, %v2350, 0
      %v3919 = vsel %vm1312, %v2355, 0
      %v3922 = vsel %vm1312, %v2360, 0
      %v3925 = vsel %vm1312, %v2365, 0
      %v3928 = vsel %vm1312, %v2370, 0
      %v3931 = vsel %vm1312, %v2375, 0
      %v3934 = vsel %vm1312, %v2380, 0
      %v3937 = vsel %vm1312, %v2385, 0
      %v3940 = vsel %vm1312, %v2390, 0
      %v3943 = vsel %vm1312, %v2395, 0
      %v3946 = vsel %vm1312, %v2400, 0
      %3948 = vmatprep.subr.mxu0 0.0
      %3949 = vmatpush1.msra.mxu0 0.0
      %3950 = vmatprep.subr.mxu0 0.0
      %3951 = vmatpush1.msra.mxu0 0.0
      %3952 = vmatprep.subr.mxu0 0.0
      %3953 = vmatpush1.msra.mxu0 0.0
      %3954 = vmatprep.subr.mxu0 0.0
      %3955 = vmatpush1.msra.mxu0 0.0
      %3956 = vmatprep.subr.mxu0 0.0
      %3957 = vmatpush1.msra.mxu0 0.0
      %3958 = vmatprep.subr.mxu0 0.0
      %3959 = vmatpush1.msra.mxu0 0.0
      %3960 = vmatprep.subr.mxu0 0.0
      %3961 = vmatpush1.msra.mxu0 0.0
      %3962 = vmatprep.subr.mxu0 0.0
      %3963 = vmatpush1.msra.mxu0 0.0
      %3964 = vmatprep.subr.mxu0 0.0
      %3965 = vmatpush1.msra.mxu0 0.0
      %3966 = vmatprep.subr.mxu0 0.0
      %3967 = vmatpush1.msra.mxu0 0.0
      %3968 = vmatprep.subr.mxu0 0.0
      %3969 = vmatpush1.msra.mxu0 0.0
      %3970 = vmatprep.subr.mxu0 0.0
      %3971 = vmatpush1.msra.mxu0 0.0
      %3972 = vmatprep.subr.mxu0 0.0
      %3973 = vmatpush1.msra.mxu0 0.0
      %3974 = vmatprep.subr.mxu0 0.0
      %3975 = vmatpush1.msra.mxu0 0.0
      %3976 = vmatprep.subr.mxu0 0.0
      %3977 = vmatpush1.msra.mxu0 %v2404
      %3978 = vmatprep.subr.mxu0 0.0
      %3979 = vmatpush1.msra.mxu0 %v2403
      %3980 = vmatprep.subr.mxu0 0.0
      %3981 = vmatpush2.msra.mxu0 0.0
      %3982 = vmatprep.subr.mxu0 0.0
      %3983 = vmatpush2.msra.mxu0 0.0
      %3984 = vmatprep.subr.mxu0 0.0
      %3985 = vmatpush2.msra.mxu0 0.0
      %3986 = vmatprep.subr.mxu0 0.0
      %3987 = vmatpush2.msra.mxu0 0.0
      %3988 = vmatprep.subr.mxu0 0.0
      %3989 = vmatpush2.msra.mxu0 0.0
      %3990 = vmatprep.subr.mxu0 0.0
      %3991 = vmatpush2.msra.mxu0 0.0
      %3992 = vmatprep.subr.mxu0 0.0
      %3993 = vmatpush2.msra.mxu0 0.0
      %3994 = vmatprep.subr.mxu0 0.0
      %3995 = vmatpush2.msra.mxu0 0.0
      %3996 = vmatprep.subr.mxu0 0.0
      %3997 = vmatpush2.msra.mxu0 0.0
      %3998 = vmatprep.subr.mxu0 0.0
      %3999 = vmatpush2.msra.mxu0 0.0
      %4000 = vmatprep.subr.mxu0 0.0
      %4001 = vmatpush2.msra.mxu0 0.0
      %4002 = vmatprep.subr.mxu0 0.0
      %4003 = vmatpush2.msra.mxu0 0.0
      %4004 = vmatprep.subr.mxu0 0.0
      %4005 = vmatpush2.msra.mxu0 0.0
      %4006 = vmatprep.subr.mxu0 0.0
      %4007 = vmatpush2.msra.mxu0 0.0
      %4008 = vmatprep.subr.mxu0 0.0
      %4009 = vmatpush2.msra.mxu0 0.0
      %4010 = vmatprep.subr.mxu0 0.0
      %4011 = vmatpush2.msra.mxu0 0.0
      %4012 = vmatprep.mubr.f32.mxu0 0.0
      %4013 = vmatmul.mubr.f32.gmra.mxu0 %v3853
      %v4014 = vpop.f32.mrf.mxu0
      %v4015 = vadd.f32 %v3694, %v4014
      %v4016 = vpop.f32.mrf.mxu0
      %4017 = vmatprep.mubr.f32.mxu0 0.0
      %4018 = vmatmul.mubr.f32.gmra.mxu0 %v3856
      %v4019 = vpop.f32.mrf.mxu0
      %v4020 = vadd.f32 %v3699, %v4019
      %v4021 = vpop.f32.mrf.mxu0
      %4022 = vmatprep.mubr.f32.mxu0 0.0
      %4023 = vmatmul.mubr.f32.gmra.mxu0 %v3859
      %v4024 = vpop.f32.mrf.mxu0
      %v4025 = vadd.f32 %v3704, %v4024
      %v4026 = vpop.f32.mrf.mxu0
      %4027 = vmatprep.mubr.f32.mxu0 0.0
      %4028 = vmatmul.mubr.f32.gmra.mxu0 %v3862
      %v4029 = vpop.f32.mrf.mxu0
      %v4030 = vadd.f32 %v3709, %v4029
      %v4031 = vpop.f32.mrf.mxu0
      %4032 = vmatprep.mubr.f32.mxu0 0.0
      %4033 = vmatmul.mubr.f32.gmra.mxu0 %v3865
      %v4034 = vpop.f32.mrf.mxu0
      %v4035 = vadd.f32 %v3714, %v4034
      %v4036 = vpop.f32.mrf.mxu0
      %4037 = vmatprep.mubr.f32.mxu0 0.0
      %4038 = vmatmul.mubr.f32.gmra.mxu0 %v3868
      %v4039 = vpop.f32.mrf.mxu0
      %v4040 = vadd.f32 %v3719, %v4039
      %v4041 = vpop.f32.mrf.mxu0
      %4042 = vmatprep.mubr.f32.mxu0 0.0
      %4043 = vmatmul.mubr.f32.gmra.mxu0 %v3871
      %v4044 = vpop.f32.mrf.mxu0
      %v4045 = vadd.f32 %v3724, %v4044
      %v4046 = vpop.f32.mrf.mxu0
      %4047 = vmatprep.mubr.f32.mxu0 0.0
      %4048 = vmatmul.mubr.f32.gmra.mxu0 %v3874
      %v4049 = vpop.f32.mrf.mxu0
      %v4050 = vadd.f32 %v3729, %v4049
      %v4051 = vpop.f32.mrf.mxu0
      %4052 = vmatprep.mubr.f32.mxu0 0.0
      %4053 = vmatmul.mubr.f32.gmra.mxu0 %v3877
      %v4054 = vpop.f32.mrf.mxu0
      %v4055 = vadd.f32 %v3734, %v4054
      %v4056 = vpop.f32.mrf.mxu0
      %4057 = vmatprep.mubr.f32.mxu0 0.0
      %4058 = vmatmul.mubr.f32.gmra.mxu0 %v3880
      %v4059 = vpop.f32.mrf.mxu0
      %v4060 = vadd.f32 %v3739, %v4059
      %v4061 = vpop.f32.mrf.mxu0
      %4062 = vmatprep.mubr.f32.mxu0 0.0
      %4063 = vmatmul.mubr.f32.gmra.mxu0 %v3883
      %v4064 = vpop.f32.mrf.mxu0
      %v4065 = vadd.f32 %v3744, %v4064
      %v4066 = vpop.f32.mrf.mxu0
      %4067 = vmatprep.mubr.f32.mxu0 0.0
      %4068 = vmatmul.mubr.f32.gmra.mxu0 %v3886
      %v4069 = vpop.f32.mrf.mxu0
      %v4070 = vadd.f32 %v3749, %v4069
      %v4071 = vpop.f32.mrf.mxu0
      %4072 = vmatprep.mubr.f32.mxu0 0.0
      %4073 = vmatmul.mubr.f32.gmra.mxu0 %v3889
      %v4074 = vpop.f32.mrf.mxu0
      %v4075 = vadd.f32 %v3754, %v4074
      %v4076 = vpop.f32.mrf.mxu0
      %4077 = vmatprep.mubr.f32.mxu0 0.0
      %4078 = vmatmul.mubr.f32.gmra.mxu0 %v3892
      %v4079 = vpop.f32.mrf.mxu0
      %v4080 = vadd.f32 %v3759, %v4079
      %v4081 = vpop.f32.mrf.mxu0
      %4082 = vmatprep.mubr.f32.mxu0 0.0
      %4083 = vmatmul.mubr.f32.gmra.mxu0 %v3895
      %v4084 = vpop.f32.mrf.mxu0
      %v4085 = vadd.f32 %v3764, %v4084
      %v4086 = vpop.f32.mrf.mxu0
      %4087 = vmatprep.mubr.f32.mxu0 0.0
      %4088 = vmatmul.mubr.f32.gmra.mxu0 %v3898
      %v4089 = vpop.f32.mrf.mxu0
      %v4090 = vadd.f32 %v3769, %v4089
      %v4091 = vpop.f32.mrf.mxu0
      %4092 = vmatprep.mubr.f32.mxu0 0.0
      %4093 = vmatmul.mubr.f32.gmra.mxu0 %v3901
      %v4094 = vpop.f32.mrf.mxu0
      %v4095 = vadd.f32 %v3774, %v4094
      %v4096 = vpop.f32.mrf.mxu0
      %4097 = vmatprep.mubr.f32.mxu0 0.0
      %4098 = vmatmul.mubr.f32.gmra.mxu0 %v3904
      %v4099 = vpop.f32.mrf.mxu0
      %v4100 = vadd.f32 %v3779, %v4099
      %v4101 = vpop.f32.mrf.mxu0
      %4102 = vmatprep.mubr.f32.mxu0 0.0
      %4103 = vmatmul.mubr.f32.gmra.mxu0 %v3907
      %v4104 = vpop.f32.mrf.mxu0
      %v4105 = vadd.f32 %v3784, %v4104
      %v4106 = vpop.f32.mrf.mxu0
      %4107 = vmatprep.mubr.f32.mxu0 0.0
      %4108 = vmatmul.mubr.f32.gmra.mxu0 %v3910
      %v4109 = vpop.f32.mrf.mxu0
      %v4110 = vadd.f32 %v3789, %v4109
      %v4111 = vpop.f32.mrf.mxu0
      %4112 = vmatprep.mubr.f32.mxu0 0.0
      %4113 = vmatmul.mubr.f32.gmra.mxu0 %v3913
      %v4114 = vpop.f32.mrf.mxu0
      %v4115 = vadd.f32 %v3794, %v4114
      %v4116 = vpop.f32.mrf.mxu0
      %4117 = vmatprep.mubr.f32.mxu0 0.0
      %4118 = vmatmul.mubr.f32.gmra.mxu0 %v3916
      %v4119 = vpop.f32.mrf.mxu0
      %v4120 = vadd.f32 %v3799, %v4119
      %v4121 = vpop.f32.mrf.mxu0
      %4122 = vmatprep.mubr.f32.mxu0 0.0
      %4123 = vmatmul.mubr.f32.gmra.mxu0 %v3919
      %v4124 = vpop.f32.mrf.mxu0
      %v4125 = vadd.f32 %v3804, %v4124
      %v4126 = vpop.f32.mrf.mxu0
      %4127 = vmatprep.mubr.f32.mxu0 0.0
      %4128 = vmatmul.mubr.f32.gmra.mxu0 %v3922
      %v4129 = vpop.f32.mrf.mxu0
      %v4130 = vadd.f32 %v3809, %v4129
      %v4131 = vpop.f32.mrf.mxu0
      %4132 = vmatprep.mubr.f32.mxu0 0.0
      %4133 = vmatmul.mubr.f32.gmra.mxu0 %v3925
      %v4134 = vpop.f32.mrf.mxu0
      %v4135 = vadd.f32 %v3814, %v4134
      %v4136 = vpop.f32.mrf.mxu0
      %4137 = vmatprep.mubr.f32.mxu0 0.0
      %4138 = vmatmul.mubr.f32.gmra.mxu0 %v3928
      %v4139 = vpop.f32.mrf.mxu0
      %v4140 = vadd.f32 %v3819, %v4139
      %v4141 = vpop.f32.mrf.mxu0
      %4142 = vmatprep.mubr.f32.mxu0 0.0
      %4143 = vmatmul.mubr.f32.gmra.mxu0 %v3931
      %v4144 = vpop.f32.mrf.mxu0
      %v4145 = vadd.f32 %v3824, %v4144
      %v4146 = vpop.f32.mrf.mxu0
      %4147 = vmatprep.mubr.f32.mxu0 0.0
      %4148 = vmatmul.mubr.f32.gmra.mxu0 %v3934
      %v4149 = vpop.f32.mrf.mxu0
      %v4150 = vadd.f32 %v3829, %v4149
      %v4151 = vpop.f32.mrf.mxu0
      %4152 = vmatprep.mubr.f32.mxu0 0.0
      %4153 = vmatmul.mubr.f32.gmra.mxu0 %v3937
      %v4154 = vpop.f32.mrf.mxu0
      %v4155 = vadd.f32 %v3834, %v4154
      %v4156 = vpop.f32.mrf.mxu0
      %4157 = vmatprep.mubr.f32.mxu0 0.0
      %4158 = vmatmul.mubr.f32.gmra.mxu0 %v3940
      %v4159 = vpop.f32.mrf.mxu0
      %v4160 = vadd.f32 %v3839, %v4159
      %v4161 = vpop.f32.mrf.mxu0
      %4162 = vmatprep.mubr.f32.mxu0 0.0
      %4163 = vmatmul.mubr.f32.gmra.mxu0 %v3943
      %v4164 = vpop.f32.mrf.mxu0
      %v4165 = vadd.f32 %v3844, %v4164
      %v4166 = vpop.f32.mrf.mxu0
      %4167 = vmatprep.mubr.f32.mxu0 0.0
      %4168 = vmatmul.mubr.f32.gmra.mxu0 %v3946
      %v4169 = vpop.f32.mrf.mxu0
      %v4170 = vadd.f32 %v3849, %v4169
      %v4171 = vpop.f32.mrf.mxu0
      %4172 = vdwg.mxu0
      %4173 = vrot.lane.b32.xlu0 %v1248, 96
      %v4174 = vpop.permute.xlu0 %4173
      %4175 = vrot.lane.b32.xlu0 %v1249, 96
      %v4176 = vpop.permute.xlu0 %4175
      %4177 = vrot.lane.b32.xlu0 %v1250, 96
      %v4178 = vpop.permute.xlu0 %4177
      %4179 = vrot.lane.b32.xlu0 %v1251, 96
      %v4180 = vpop.permute.xlu0 %4179
      %4181 = vrot.lane.b32.xlu0 %v1252, 96
      %v4182 = vpop.permute.xlu0 %4181
      %4183 = vrot.lane.b32.xlu0 %v1253, 96
      %v4184 = vpop.permute.xlu0 %4183
      %4185 = vrot.lane.b32.xlu0 %v1254, 96
      %v4186 = vpop.permute.xlu0 %4185
      %4187 = vrot.lane.b32.xlu0 %v1255, 96
      %v4188 = vpop.permute.xlu0 %4187
      %4189 = vrot.lane.b32.xlu0 %v1256, 96
      %v4190 = vpop.permute.xlu0 %4189
      %4191 = vrot.lane.b32.xlu0 %v1257, 96
      %v4192 = vpop.permute.xlu0 %4191
      %4193 = vrot.lane.b32.xlu0 %v1258, 96
      %v4194 = vpop.permute.xlu0 %4193
      %4195 = vrot.lane.b32.xlu0 %v1259, 96
      %v4196 = vpop.permute.xlu0 %4195
      %4197 = vrot.lane.b32.xlu0 %v1260, 96
      %v4198 = vpop.permute.xlu0 %4197
      %4199 = vrot.lane.b32.xlu0 %v1261, 96
      %v4200 = vpop.permute.xlu0 %4199
      %4201 = vrot.lane.b32.xlu0 %v1262, 96
      %v4202 = vpop.permute.xlu0 %4201
      %4203 = vrot.lane.b32.xlu0 %v1263, 96
      %v4204 = vpop.permute.xlu0 %4203
      %4205 = vrot.lane.b32.xlu0 %v1264, 96
      %v4206 = vpop.permute.xlu0 %4205
      %4207 = vrot.lane.b32.xlu0 %v1265, 96
      %v4208 = vpop.permute.xlu0 %4207
      %4209 = vrot.lane.b32.xlu0 %v1266, 96
      %v4210 = vpop.permute.xlu0 %4209
      %4211 = vrot.lane.b32.xlu0 %v1267, 96
      %v4212 = vpop.permute.xlu0 %4211
      %4213 = vrot.lane.b32.xlu0 %v1268, 96
      %v4214 = vpop.permute.xlu0 %4213
      %4215 = vrot.lane.b32.xlu0 %v1269, 96
      %v4216 = vpop.permute.xlu0 %4215
      %4217 = vrot.lane.b32.xlu0 %v1270, 96
      %v4218 = vpop.permute.xlu0 %4217
      %4219 = vrot.lane.b32.xlu0 %v1271, 96
      %v4220 = vpop.permute.xlu0 %4219
      %4221 = vrot.lane.b32.xlu0 %v1272, 96
      %v4222 = vpop.permute.xlu0 %4221
      %4223 = vrot.lane.b32.xlu0 %v1273, 96
      %v4224 = vpop.permute.xlu0 %4223
      %4225 = vrot.lane.b32.xlu0 %v1274, 96
      %v4226 = vpop.permute.xlu0 %4225
      %4227 = vrot.lane.b32.xlu0 %v1275, 96
      %v4228 = vpop.permute.xlu0 %4227
      %4229 = vrot.lane.b32.xlu0 %v1276, 96
      %v4230 = vpop.permute.xlu0 %4229
      %4231 = vrot.lane.b32.xlu0 %v1277, 96
      %v4232 = vpop.permute.xlu0 %4231
      %4233 = vrot.lane.b32.xlu0 %v1278, 96
      %v4234 = vpop.permute.xlu0 %4233
      %4235 = vrot.lane.b32.xlu0 %v1279, 96
      %v4236 = vpop.permute.xlu0 %4235
      %v4237 = vsel %vm1312, %v4174, 0
      %v4239 = vsel %vm1312, %v4176, 0
      %v4241 = vsel %vm1312, %v4178, 0
      %v4243 = vsel %vm1312, %v4180, 0
      %v4245 = vsel %vm1312, %v4182, 0
      %v4247 = vsel %vm1312, %v4184, 0
      %v4249 = vsel %vm1312, %v4186, 0
      %v4251 = vsel %vm1312, %v4188, 0
      %v4253 = vsel %vm1312, %v4190, 0
      %v4255 = vsel %vm1312, %v4192, 0
      %v4257 = vsel %vm1312, %v4194, 0
      %v4259 = vsel %vm1312, %v4196, 0
      %v4261 = vsel %vm1312, %v4198, 0
      %v4263 = vsel %vm1312, %v4200, 0
      %v4265 = vsel %vm1312, %v4202, 0
      %v4267 = vsel %vm1312, %v4204, 0
      %v4269 = vsel %vm1312, %v4206, 0
      %v4271 = vsel %vm1312, %v4208, 0
      %v4273 = vsel %vm1312, %v4210, 0
      %v4275 = vsel %vm1312, %v4212, 0
      %v4277 = vsel %vm1312, %v4214, 0
      %v4279 = vsel %vm1312, %v4216, 0
      %v4281 = vsel %vm1312, %v4218, 0
      %v4283 = vsel %vm1312, %v4220, 0
      %v4285 = vsel %vm1312, %v4222, 0
      %v4287 = vsel %vm1312, %v4224, 0
      %v4289 = vsel %vm1312, %v4226, 0
      %v4291 = vsel %vm1312, %v4228, 0
      %v4293 = vsel %vm1312, %v4230, 0
      %v4295 = vsel %vm1312, %v4232, 0
      %v4297 = vsel %vm1312, %v4234, 0
      %v4299 = vsel %vm1312, %v4236, 0
      %4301 = vmatprep.subr.mxu0 0.0
      %4302 = vmatpush1.msra.mxu0 0.0
      %4303 = vmatprep.subr.mxu0 0.0
      %4304 = vmatpush1.msra.mxu0 0.0
      %4305 = vmatprep.subr.mxu0 0.0
      %4306 = vmatpush1.msra.mxu0 0.0
      %4307 = vmatprep.subr.mxu0 0.0
      %4308 = vmatpush1.msra.mxu0 0.0
      %4309 = vmatprep.subr.mxu0 0.0
      %4310 = vmatpush1.msra.mxu0 0.0
      %4311 = vmatprep.subr.mxu0 0.0
      %4312 = vmatpush1.msra.mxu0 0.0
      %4313 = vmatprep.subr.mxu0 0.0
      %4314 = vmatpush1.msra.mxu0 0.0
      %4315 = vmatprep.subr.mxu0 0.0
      %4316 = vmatpush1.msra.mxu0 0.0
      %4317 = vmatprep.subr.mxu0 0.0
      %4318 = vmatpush1.msra.mxu0 0.0
      %4319 = vmatprep.subr.mxu0 0.0
      %4320 = vmatpush1.msra.mxu0 0.0
      %4321 = vmatprep.subr.mxu0 0.0
      %4322 = vmatpush1.msra.mxu0 0.0
      %4323 = vmatprep.subr.mxu0 0.0
      %4324 = vmatpush1.msra.mxu0 0.0
      %4325 = vmatprep.subr.mxu0 0.0
      %4326 = vmatpush1.msra.mxu0 0.0
      %4327 = vmatprep.subr.mxu0 0.0
      %4328 = vmatpush1.msra.mxu0 0.0
      %4329 = vmatprep.subr.mxu0 %v1307
      %4330 = vmatpush1.msra.mxu0 %v1306
      %4331 = vmatprep.subr.mxu0 %v1305
      %4332 = vmatpush1.msra.mxu0 %v1304
      %4333 = vmatprep.subr.mxu0 0.0
      %4334 = vmatpush2.msra.mxu0 0.0
      %4335 = vmatprep.subr.mxu0 0.0
      %4336 = vmatpush2.msra.mxu0 0.0
      %4337 = vmatprep.subr.mxu0 0.0
      %4338 = vmatpush2.msra.mxu0 0.0
      %4339 = vmatprep.subr.mxu0 0.0
      %4340 = vmatpush2.msra.mxu0 0.0
      %4341 = vmatprep.subr.mxu0 0.0
      %4342 = vmatpush2.msra.mxu0 0.0
      %4343 = vmatprep.subr.mxu0 0.0
      %4344 = vmatpush2.msra.mxu0 0.0
      %4345 = vmatprep.subr.mxu0 0.0
      %4346 = vmatpush2.msra.mxu0 0.0
      %4347 = vmatprep.subr.mxu0 0.0
      %4348 = vmatpush2.msra.mxu0 0.0
      %4349 = vmatprep.subr.mxu0 0.0
      %4350 = vmatpush2.msra.mxu0 0.0
      %4351 = vmatprep.subr.mxu0 0.0
      %4352 = vmatpush2.msra.mxu0 0.0
      %4353 = vmatprep.subr.mxu0 0.0
      %4354 = vmatpush2.msra.mxu0 0.0
      %4355 = vmatprep.subr.mxu0 0.0
      %4356 = vmatpush2.msra.mxu0 0.0
      %4357 = vmatprep.subr.mxu0 0.0
      %4358 = vmatpush2.msra.mxu0 0.0
      %4359 = vmatprep.subr.mxu0 0.0
      %4360 = vmatpush2.msra.mxu0 0.0
      %4361 = vmatprep.subr.mxu0 0.0
      %4362 = vmatpush2.msra.mxu0 0.0
      %4363 = vmatprep.subr.mxu0 0.0
      %4364 = vmatpush2.msra.mxu0 0.0
      %4365 = vmatprep.mubr.f32.mxu0 0.0
      %4366 = vmatmul.mubr.f32.gmra.mxu0 %v4237
      %v4367 = vpop.f32.mrf.mxu0
      %v4368 = vadd.f32 0.0, %v4367
      %v4369 = vpop.f32.mrf.mxu0
      %v4370 = vadd.f32 0.0, %v4369
      %4371 = vmatprep.mubr.f32.mxu0 0.0
      %4372 = vmatmul.mubr.f32.gmra.mxu0 %v4239
      %v4373 = vpop.f32.mrf.mxu0
      %v4374 = vadd.f32 0.0, %v4373
      %v4375 = vpop.f32.mrf.mxu0
      %v4376 = vadd.f32 0.0, %v4375
      %4377 = vmatprep.mubr.f32.mxu0 0.0
      %4378 = vmatmul.mubr.f32.gmra.mxu0 %v4241
      %v4379 = vpop.f32.mrf.mxu0
      %v4380 = vadd.f32 0.0, %v4379
      %v4381 = vpop.f32.mrf.mxu0
      %v4382 = vadd.f32 0.0, %v4381
      %4383 = vmatprep.mubr.f32.mxu0 0.0
      %4384 = vmatmul.mubr.f32.gmra.mxu0 %v4243
      %v4385 = vpop.f32.mrf.mxu0
      %v4386 = vadd.f32 0.0, %v4385
      %v4387 = vpop.f32.mrf.mxu0
      %v4388 = vadd.f32 0.0, %v4387
      %4389 = vmatprep.mubr.f32.mxu0 0.0
      %4390 = vmatmul.mubr.f32.gmra.mxu0 %v4245
      %v4391 = vpop.f32.mrf.mxu0
      %v4392 = vadd.f32 0.0, %v4391
      %v4393 = vpop.f32.mrf.mxu0
      %v4394 = vadd.f32 0.0, %v4393
      %4395 = vmatprep.mubr.f32.mxu0 0.0
      %4396 = vmatmul.mubr.f32.gmra.mxu0 %v4247
      %v4397 = vpop.f32.mrf.mxu0
      %v4398 = vadd.f32 0.0, %v4397
      %v4399 = vpop.f32.mrf.mxu0
      %v4400 = vadd.f32 0.0, %v4399
      %4401 = vmatprep.mubr.f32.mxu0 0.0
      %4402 = vmatmul.mubr.f32.gmra.mxu0 %v4249
      %v4403 = vpop.f32.mrf.mxu0
      %v4404 = vadd.f32 0.0, %v4403
      %v4405 = vpop.f32.mrf.mxu0
      %v4406 = vadd.f32 0.0, %v4405
      %4407 = vmatprep.mubr.f32.mxu0 0.0
      %4408 = vmatmul.mubr.f32.gmra.mxu0 %v4251
      %v4409 = vpop.f32.mrf.mxu0
      %v4410 = vadd.f32 0.0, %v4409
      %v4411 = vpop.f32.mrf.mxu0
      %v4412 = vadd.f32 0.0, %v4411
      %4413 = vmatprep.mubr.f32.mxu0 0.0
      %4414 = vmatmul.mubr.f32.gmra.mxu0 %v4253
      %v4415 = vpop.f32.mrf.mxu0
      %v4416 = vadd.f32 0.0, %v4415
      %v4417 = vpop.f32.mrf.mxu0
      %v4418 = vadd.f32 0.0, %v4417
      %4419 = vmatprep.mubr.f32.mxu0 0.0
      %4420 = vmatmul.mubr.f32.gmra.mxu0 %v4255
      %v4421 = vpop.f32.mrf.mxu0
      %v4422 = vadd.f32 0.0, %v4421
      %v4423 = vpop.f32.mrf.mxu0
      %v4424 = vadd.f32 0.0, %v4423
      %4425 = vmatprep.mubr.f32.mxu0 0.0
      %4426 = vmatmul.mubr.f32.gmra.mxu0 %v4257
      %v4427 = vpop.f32.mrf.mxu0
      %v4428 = vadd.f32 0.0, %v4427
      %v4429 = vpop.f32.mrf.mxu0
      %v4430 = vadd.f32 0.0, %v4429
      %4431 = vmatprep.mubr.f32.mxu0 0.0
      %4432 = vmatmul.mubr.f32.gmra.mxu0 %v4259
      %v4433 = vpop.f32.mrf.mxu0
      %v4434 = vadd.f32 0.0, %v4433
      %v4435 = vpop.f32.mrf.mxu0
      %v4436 = vadd.f32 0.0, %v4435
      %4437 = vmatprep.mubr.f32.mxu0 0.0
      %4438 = vmatmul.mubr.f32.gmra.mxu0 %v4261
      %v4439 = vpop.f32.mrf.mxu0
      %v4440 = vadd.f32 0.0, %v4439
      %v4441 = vpop.f32.mrf.mxu0
      %v4442 = vadd.f32 0.0, %v4441
      %4443 = vmatprep.mubr.f32.mxu0 0.0
      %4444 = vmatmul.mubr.f32.gmra.mxu0 %v4263
      %v4445 = vpop.f32.mrf.mxu0
      %v4446 = vadd.f32 0.0, %v4445
      %v4447 = vpop.f32.mrf.mxu0
      %v4448 = vadd.f32 0.0, %v4447
      %4449 = vmatprep.mubr.f32.mxu0 0.0
      %4450 = vmatmul.mubr.f32.gmra.mxu0 %v4265
      %v4451 = vpop.f32.mrf.mxu0
      %v4452 = vadd.f32 0.0, %v4451
      %v4453 = vpop.f32.mrf.mxu0
      %v4454 = vadd.f32 0.0, %v4453
      %4455 = vmatprep.mubr.f32.mxu0 0.0
      %4456 = vmatmul.mubr.f32.gmra.mxu0 %v4267
      %v4457 = vpop.f32.mrf.mxu0
      %v4458 = vadd.f32 0.0, %v4457
      %v4459 = vpop.f32.mrf.mxu0
      %v4460 = vadd.f32 0.0, %v4459
      %4461 = vmatprep.mubr.f32.mxu0 0.0
      %4462 = vmatmul.mubr.f32.gmra.mxu0 %v4269
      %v4463 = vpop.f32.mrf.mxu0
      %v4464 = vadd.f32 0.0, %v4463
      %v4465 = vpop.f32.mrf.mxu0
      %v4466 = vadd.f32 0.0, %v4465
      %4467 = vmatprep.mubr.f32.mxu0 0.0
      %4468 = vmatmul.mubr.f32.gmra.mxu0 %v4271
      %v4469 = vpop.f32.mrf.mxu0
      %v4470 = vadd.f32 0.0, %v4469
      %v4471 = vpop.f32.mrf.mxu0
      %v4472 = vadd.f32 0.0, %v4471
      %4473 = vmatprep.mubr.f32.mxu0 0.0
      %4474 = vmatmul.mubr.f32.gmra.mxu0 %v4273
      %v4475 = vpop.f32.mrf.mxu0
      %v4476 = vadd.f32 0.0, %v4475
      %v4477 = vpop.f32.mrf.mxu0
      %v4478 = vadd.f32 0.0, %v4477
      %4479 = vmatprep.mubr.f32.mxu0 0.0
      %4480 = vmatmul.mubr.f32.gmra.mxu0 %v4275
      %v4481 = vpop.f32.mrf.mxu0
      %v4482 = vadd.f32 0.0, %v4481
      %v4483 = vpop.f32.mrf.mxu0
      %v4484 = vadd.f32 0.0, %v4483
      %4485 = vmatprep.mubr.f32.mxu0 0.0
      %4486 = vmatmul.mubr.f32.gmra.mxu0 %v4277
      %v4487 = vpop.f32.mrf.mxu0
      %v4488 = vadd.f32 0.0, %v4487
      %v4489 = vpop.f32.mrf.mxu0
      %v4490 = vadd.f32 0.0, %v4489
      %4491 = vmatprep.mubr.f32.mxu0 0.0
      %4492 = vmatmul.mubr.f32.gmra.mxu0 %v4279
      %v4493 = vpop.f32.mrf.mxu0
      %v4494 = vadd.f32 0.0, %v4493
      %v4495 = vpop.f32.mrf.mxu0
      %v4496 = vadd.f32 0.0, %v4495
      %4497 = vmatprep.mubr.f32.mxu0 0.0
      %4498 = vmatmul.mubr.f32.gmra.mxu0 %v4281
      %v4499 = vpop.f32.mrf.mxu0
      %v4500 = vadd.f32 0.0, %v4499
      %v4501 = vpop.f32.mrf.mxu0
      %v4502 = vadd.f32 0.0, %v4501
      %4503 = vmatprep.mubr.f32.mxu0 0.0
      %4504 = vmatmul.mubr.f32.gmra.mxu0 %v4283
      %v4505 = vpop.f32.mrf.mxu0
      %v4506 = vadd.f32 0.0, %v4505
      %v4507 = vpop.f32.mrf.mxu0
      %v4508 = vadd.f32 0.0, %v4507
      %4509 = vmatprep.mubr.f32.mxu0 0.0
      %4510 = vmatmul.mubr.f32.gmra.mxu0 %v4285
      %v4511 = vpop.f32.mrf.mxu0
      %v4512 = vadd.f32 0.0, %v4511
      %v4513 = vpop.f32.mrf.mxu0
      %v4514 = vadd.f32 0.0, %v4513
      %4515 = vmatprep.mubr.f32.mxu0 0.0
      %4516 = vmatmul.mubr.f32.gmra.mxu0 %v4287
      %v4517 = vpop.f32.mrf.mxu0
      %v4518 = vadd.f32 0.0, %v4517
      %v4519 = vpop.f32.mrf.mxu0
      %v4520 = vadd.f32 0.0, %v4519
      %4521 = vmatprep.mubr.f32.mxu0 0.0
      %4522 = vmatmul.mubr.f32.gmra.mxu0 %v4289
      %v4523 = vpop.f32.mrf.mxu0
      %v4524 = vadd.f32 0.0, %v4523
      %v4525 = vpop.f32.mrf.mxu0
      %v4526 = vadd.f32 0.0, %v4525
      %4527 = vmatprep.mubr.f32.mxu0 0.0
      %4528 = vmatmul.mubr.f32.gmra.mxu0 %v4291
      %v4529 = vpop.f32.mrf.mxu0
      %v4530 = vadd.f32 0.0, %v4529
      %v4531 = vpop.f32.mrf.mxu0
      %v4532 = vadd.f32 0.0, %v4531
      %4533 = vmatprep.mubr.f32.mxu0 0.0
      %4534 = vmatmul.mubr.f32.gmra.mxu0 %v4293
      %v4535 = vpop.f32.mrf.mxu0
      %v4536 = vadd.f32 0.0, %v4535
      %v4537 = vpop.f32.mrf.mxu0
      %v4538 = vadd.f32 0.0, %v4537
      %4539 = vmatprep.mubr.f32.mxu0 0.0
      %4540 = vmatmul.mubr.f32.gmra.mxu0 %v4295
      %v4541 = vpop.f32.mrf.mxu0
      %v4542 = vadd.f32 0.0, %v4541
      %v4543 = vpop.f32.mrf.mxu0
      %v4544 = vadd.f32 0.0, %v4543
      %4545 = vmatprep.mubr.f32.mxu0 0.0
      %4546 = vmatmul.mubr.f32.gmra.mxu0 %v4297
      %v4547 = vpop.f32.mrf.mxu0
      %v4548 = vadd.f32 0.0, %v4547
      %v4549 = vpop.f32.mrf.mxu0
      %v4550 = vadd.f32 0.0, %v4549
      %4551 = vmatprep.mubr.f32.mxu0 0.0
      %4552 = vmatmul.mubr.f32.gmra.mxu0 %v4299
      %v4553 = vpop.f32.mrf.mxu0
      %v4554 = vadd.f32 0.0, %v4553
      %v4555 = vpop.f32.mrf.mxu0
      %v4556 = vadd.f32 0.0, %v4555
      %4557 = vdwg.mxu0
      %v4558 = vmax.f32 %v4368, %v4370
      %4559 = vmax.xlane.f32.xlu0 %v4558
      %v4560 = vpop.xlane.xlu0 %4559
      %v4561 = vmax.f32 %v4374, %v4376
      %4562 = vmax.xlane.f32.xlu0 %v4561
      %v4563 = vpop.xlane.xlu0 %4562
      %v4564 = vmax.f32 %v4380, %v4382
      %4565 = vmax.xlane.f32.xlu0 %v4564
      %v4566 = vpop.xlane.xlu0 %4565
      %v4567 = vmax.f32 %v4386, %v4388
      %4568 = vmax.xlane.f32.xlu0 %v4567
      %v4569 = vpop.xlane.xlu0 %4568
      %v4570 = vmax.f32 %v4392, %v4394
      %4571 = vmax.xlane.f32.xlu0 %v4570
      %v4572 = vpop.xlane.xlu0 %4571
      %v4573 = vmax.f32 %v4398, %v4400
      %4574 = vmax.xlane.f32.xlu0 %v4573
      %v4575 = vpop.xlane.xlu0 %4574
      %v4576 = vmax.f32 %v4404, %v4406
      %4577 = vmax.xlane.f32.xlu0 %v4576
      %v4578 = vpop.xlane.xlu0 %4577
      %v4579 = vmax.f32 %v4410, %v4412
      %4580 = vmax.xlane.f32.xlu0 %v4579
      %v4581 = vpop.xlane.xlu0 %4580
      %v4582 = vmax.f32 %v4416, %v4418
      %4583 = vmax.xlane.f32.xlu0 %v4582
      %v4584 = vpop.xlane.xlu0 %4583
      %v4585 = vmax.f32 %v4422, %v4424
      %4586 = vmax.xlane.f32.xlu0 %v4585
      %v4587 = vpop.xlane.xlu0 %4586
      %v4588 = vmax.f32 %v4428, %v4430
      %4589 = vmax.xlane.f32.xlu0 %v4588
      %v4590 = vpop.xlane.xlu0 %4589
      %v4591 = vmax.f32 %v4434, %v4436
      %4592 = vmax.xlane.f32.xlu0 %v4591
      %v4593 = vpop.xlane.xlu0 %4592
      %v4594 = vmax.f32 %v4440, %v4442
      %4595 = vmax.xlane.f32.xlu0 %v4594
      %v4596 = vpop.xlane.xlu0 %4595
      %v4597 = vmax.f32 %v4446, %v4448
      %4598 = vmax.xlane.f32.xlu0 %v4597
      %v4599 = vpop.xlane.xlu0 %4598
      %v4600 = vmax.f32 %v4452, %v4454
      %4601 = vmax.xlane.f32.xlu0 %v4600
      %v4602 = vpop.xlane.xlu0 %4601
      %v4603 = vmax.f32 %v4458, %v4460
      %4604 = vmax.xlane.f32.xlu0 %v4603
      %v4605 = vpop.xlane.xlu0 %4604
      %v4606 = vmax.f32 %v4464, %v4466
      %4607 = vmax.xlane.f32.xlu0 %v4606
      %v4608 = vpop.xlane.xlu0 %4607
      %v4609 = vmax.f32 %v4470, %v4472
      %4610 = vmax.xlane.f32.xlu0 %v4609
      %v4611 = vpop.xlane.xlu0 %4610
      %v4612 = vmax.f32 %v4476, %v4478
      %4613 = vmax.xlane.f32.xlu0 %v4612
      %v4614 = vpop.xlane.xlu0 %4613
      %v4615 = vmax.f32 %v4482, %v4484
      %4616 = vmax.xlane.f32.xlu0 %v4615
      %v4617 = vpop.xlane.xlu0 %4616
      %v4618 = vmax.f32 %v4488, %v4490
      %4619 = vmax.xlane.f32.xlu0 %v4618
      %v4620 = vpop.xlane.xlu0 %4619
      %v4621 = vmax.f32 %v4494, %v4496
      %4622 = vmax.xlane.f32.xlu0 %v4621
      %v4623 = vpop.xlane.xlu0 %4622
      %v4624 = vmax.f32 %v4500, %v4502
      %4625 = vmax.xlane.f32.xlu0 %v4624
      %v4626 = vpop.xlane.xlu0 %4625
      %v4627 = vmax.f32 %v4506, %v4508
      %4628 = vmax.xlane.f32.xlu0 %v4627
      %v4629 = vpop.xlane.xlu0 %4628
      %v4630 = vmax.f32 %v4512, %v4514
      %4631 = vmax.xlane.f32.xlu0 %v4630
      %v4632 = vpop.xlane.xlu0 %4631
      %v4633 = vmax.f32 %v4518, %v4520
      %4634 = vmax.xlane.f32.xlu0 %v4633
      %v4635 = vpop.xlane.xlu0 %4634
      %v4636 = vmax.f32 %v4524, %v4526
      %4637 = vmax.xlane.f32.xlu0 %v4636
      %v4638 = vpop.xlane.xlu0 %4637
      %v4639 = vmax.f32 %v4530, %v4532
      %4640 = vmax.xlane.f32.xlu0 %v4639
      %v4641 = vpop.xlane.xlu0 %4640
      %v4642 = vmax.f32 %v4536, %v4538
      %4643 = vmax.xlane.f32.xlu0 %v4642
      %v4644 = vpop.xlane.xlu0 %4643
      %v4645 = vmax.f32 %v4542, %v4544
      %4646 = vmax.xlane.f32.xlu0 %v4645
      %v4647 = vpop.xlane.xlu0 %4646
      %v4648 = vmax.f32 %v4548, %v4550
      %4649 = vmax.xlane.f32.xlu0 %v4648
      %v4650 = vpop.xlane.xlu0 %4649
      %v4651 = vmax.f32 %v4554, %v4556
      %4652 = vmax.xlane.f32.xlu0 %v4651
      %v4653 = vpop.xlane.xlu0 %4652
      %v4654 = vsub.f32 %v4368, %v4560
      %v4655 = vsub.f32 %v4370, %v4560
      %v4656 = vsub.f32 %v4374, %v4563
      %v4657 = vsub.f32 %v4376, %v4563
      %v4658 = vsub.f32 %v4380, %v4566
      %v4659 = vsub.f32 %v4382, %v4566
      %v4660 = vsub.f32 %v4386, %v4569
      %v4661 = vsub.f32 %v4388, %v4569
      %v4662 = vsub.f32 %v4392, %v4572
      %v4663 = vsub.f32 %v4394, %v4572
      %v4664 = vsub.f32 %v4398, %v4575
      %v4665 = vsub.f32 %v4400, %v4575
      %v4666 = vsub.f32 %v4404, %v4578
      %v4667 = vsub.f32 %v4406, %v4578
      %v4668 = vsub.f32 %v4410, %v4581
      %v4669 = vsub.f32 %v4412, %v4581
      %v4670 = vsub.f32 %v4416, %v4584
      %v4671 = vsub.f32 %v4418, %v4584
      %v4672 = vsub.f32 %v4422, %v4587
      %v4673 = vsub.f32 %v4424, %v4587
      %v4674 = vsub.f32 %v4428, %v4590
      %v4675 = vsub.f32 %v4430, %v4590
      %v4676 = vsub.f32 %v4434, %v4593
      %v4677 = vsub.f32 %v4436, %v4593
      %v4678 = vsub.f32 %v4440, %v4596
      %v4679 = vsub.f32 %v4442, %v4596
      %v4680 = vsub.f32 %v4446, %v4599
      %v4681 = vsub.f32 %v4448, %v4599
      %v4682 = vsub.f32 %v4452, %v4602
      %v4683 = vsub.f32 %v4454, %v4602
      %v4684 = vsub.f32 %v4458, %v4605
      %v4685 = vsub.f32 %v4460, %v4605
      %v4686 = vsub.f32 %v4464, %v4608
      %v4687 = vsub.f32 %v4466, %v4608
      %v4688 = vsub.f32 %v4470, %v4611
      %v4689 = vsub.f32 %v4472, %v4611
      %v4690 = vsub.f32 %v4476, %v4614
      %v4691 = vsub.f32 %v4478, %v4614
      %v4692 = vsub.f32 %v4482, %v4617
      %v4693 = vsub.f32 %v4484, %v4617
      %v4694 = vsub.f32 %v4488, %v4620
      %v4695 = vsub.f32 %v4490, %v4620
      %v4696 = vsub.f32 %v4494, %v4623
      %v4697 = vsub.f32 %v4496, %v4623
      %v4698 = vsub.f32 %v4500, %v4626
      %v4699 = vsub.f32 %v4502, %v4626
      %v4700 = vsub.f32 %v4506, %v4629
      %v4701 = vsub.f32 %v4508, %v4629
      %v4702 = vsub.f32 %v4512, %v4632
      %v4703 = vsub.f32 %v4514, %v4632
      %v4704 = vsub.f32 %v4518, %v4635
      %v4705 = vsub.f32 %v4520, %v4635
      %v4706 = vsub.f32 %v4524, %v4638
      %v4707 = vsub.f32 %v4526, %v4638
      %v4708 = vsub.f32 %v4530, %v4641
      %v4709 = vsub.f32 %v4532, %v4641
      %v4710 = vsub.f32 %v4536, %v4644
      %v4711 = vsub.f32 %v4538, %v4644
      %v4712 = vsub.f32 %v4542, %v4647
      %v4713 = vsub.f32 %v4544, %v4647
      %v4714 = vsub.f32 %v4548, %v4650
      %v4715 = vsub.f32 %v4550, %v4650
      %v4716 = vsub.f32 %v4554, %v4653
      %v4717 = vsub.f32 %v4556, %v4653
      %v4718 = vmul.f32 %v4654, 1.442695
      %v4719 = vpow.pop %v4718
      %v4720 = vmul.f32 %v4655, 1.442695
      %v4721 = vpow.pop %v4720
      %v4722 = vmul.f32 %v4656, 1.442695
      %v4723 = vpow.pop %v4722
      %v4724 = vmul.f32 %v4657, 1.442695
      %v4725 = vpow.pop %v4724
      %v4726 = vmul.f32 %v4658, 1.442695
      %v4727 = vpow.pop %v4726
      %v4728 = vmul.f32 %v4659, 1.442695
      %v4729 = vpow.pop %v4728
      %v4730 = vmul.f32 %v4660, 1.442695
      %v4731 = vpow.pop %v4730
      %v4732 = vmul.f32 %v4661, 1.442695
      %v4733 = vpow.pop %v4732
      %v4734 = vmul.f32 %v4662, 1.442695
      %v4735 = vpow.pop %v4734
      %v4736 = vmul.f32 %v4663, 1.442695
      %v4737 = vpow.pop %v4736
      %v4738 = vmul.f32 %v4664, 1.442695
      %v4739 = vpow.pop %v4738
      %v4740 = vmul.f32 %v4665, 1.442695
      %v4741 = vpow.pop %v4740
      %v4742 = vmul.f32 %v4666, 1.442695
      %v4743 = vpow.pop %v4742
      %v4744 = vmul.f32 %v4667, 1.442695
      %v4745 = vpow.pop %v4744
      %v4746 = vmul.f32 %v4668, 1.442695
      %v4747 = vpow.pop %v4746
      %v4748 = vmul.f32 %v4669, 1.442695
      %v4749 = vpow.pop %v4748
      %v4750 = vmul.f32 %v4670, 1.442695
      %v4751 = vpow.pop %v4750
      %v4752 = vmul.f32 %v4671, 1.442695
      %v4753 = vpow.pop %v4752
      %v4754 = vmul.f32 %v4672, 1.442695
      %v4755 = vpow.pop %v4754
      %v4756 = vmul.f32 %v4673, 1.442695
      %v4757 = vpow.pop %v4756
      %v4758 = vmul.f32 %v4674, 1.442695
      %v4759 = vpow.pop %v4758
      %v4760 = vmul.f32 %v4675, 1.442695
      %v4761 = vpow.pop %v4760
      %v4762 = vmul.f32 %v4676, 1.442695
      %v4763 = vpow.pop %v4762
      %v4764 = vmul.f32 %v4677, 1.442695
      %v4765 = vpow.pop %v4764
      %v4766 = vmul.f32 %v4678, 1.442695
      %v4767 = vpow.pop %v4766
      %v4768 = vmul.f32 %v4679, 1.442695
      %v4769 = vpow.pop %v4768
      %v4770 = vmul.f32 %v4680, 1.442695
      %v4771 = vpow.pop %v4770
      %v4772 = vmul.f32 %v4681, 1.442695
      %v4773 = vpow.pop %v4772
      %v4774 = vmul.f32 %v4682, 1.442695
      %v4775 = vpow.pop %v4774
      %v4776 = vmul.f32 %v4683, 1.442695
      %v4777 = vpow.pop %v4776
      %v4778 = vmul.f32 %v4684, 1.442695
      %v4779 = vpow.pop %v4778
      %v4780 = vmul.f32 %v4685, 1.442695
      %v4781 = vpow.pop %v4780
      %v4782 = vmul.f32 %v4686, 1.442695
      %v4783 = vpow.pop %v4782
      %v4784 = vmul.f32 %v4687, 1.442695
      %v4785 = vpow.pop %v4784
      %v4786 = vmul.f32 %v4688, 1.442695
      %v4787 = vpow.pop %v4786
      %v4788 = vmul.f32 %v4689, 1.442695
      %v4789 = vpow.pop %v4788
      %v4790 = vmul.f32 %v4690, 1.442695
      %v4791 = vpow.pop %v4790
      %v4792 = vmul.f32 %v4691, 1.442695
      %v4793 = vpow.pop %v4792
      %v4794 = vmul.f32 %v4692, 1.442695
      %v4795 = vpow.pop %v4794
      %v4796 = vmul.f32 %v4693, 1.442695
      %v4797 = vpow.pop %v4796
      %v4798 = vmul.f32 %v4694, 1.442695
      %v4799 = vpow.pop %v4798
      %v4800 = vmul.f32 %v4695, 1.442695
      %v4801 = vpow.pop %v4800
      %v4802 = vmul.f32 %v4696, 1.442695
      %v4803 = vpow.pop %v4802
      %v4804 = vmul.f32 %v4697, 1.442695
      %v4805 = vpow.pop %v4804
      %v4806 = vmul.f32 %v4698, 1.442695
      %v4807 = vpow.pop %v4806
      %v4808 = vmul.f32 %v4699, 1.442695
      %v4809 = vpow.pop %v4808
      %v4810 = vmul.f32 %v4700, 1.442695
      %v4811 = vpow.pop %v4810
      %v4812 = vmul.f32 %v4701, 1.442695
      %v4813 = vpow.pop %v4812
      %v4814 = vmul.f32 %v4702, 1.442695
      %v4815 = vpow.pop %v4814
      %v4816 = vmul.f32 %v4703, 1.442695
      %v4817 = vpow.pop %v4816
      %v4818 = vmul.f32 %v4704, 1.442695
      %v4819 = vpow.pop %v4818
      %v4820 = vmul.f32 %v4705, 1.442695
      %v4821 = vpow.pop %v4820
      %v4822 = vmul.f32 %v4706, 1.442695
      %v4823 = vpow.pop %v4822
      %v4824 = vmul.f32 %v4707, 1.442695
      %v4825 = vpow.pop %v4824
      %v4826 = vmul.f32 %v4708, 1.442695
      %v4827 = vpow.pop %v4826
      %v4828 = vmul.f32 %v4709, 1.442695
      %v4829 = vpow.pop %v4828
      %v4830 = vmul.f32 %v4710, 1.442695
      %v4831 = vpow.pop %v4830
      %v4832 = vmul.f32 %v4711, 1.442695
      %v4833 = vpow.pop %v4832
      %v4834 = vmul.f32 %v4712, 1.442695
      %v4835 = vpow.pop %v4834
      %v4836 = vmul.f32 %v4713, 1.442695
      %v4837 = vpow.pop %v4836
      %v4838 = vmul.f32 %v4714, 1.442695
      %v4839 = vpow.pop %v4838
      %v4840 = vmul.f32 %v4715, 1.442695
      %v4841 = vpow.pop %v4840
      %v4842 = vmul.f32 %v4716, 1.442695
      %v4843 = vpow.pop %v4842
      %v4844 = vmul.f32 %v4717, 1.442695
      %v4845 = vpow.pop %v4844
      %v4846 = vadd.f32 %v4719, %v4721
      %4847 = vadd.xlane.f32.xlu0 %v4846
      %v4848 = vpop.xlane.xlu0 %4847
      %v4849 = vadd.f32 %v4723, %v4725
      %4850 = vadd.xlane.f32.xlu0 %v4849
      %v4851 = vpop.xlane.xlu0 %4850
      %v4852 = vadd.f32 %v4727, %v4729
      %4853 = vadd.xlane.f32.xlu0 %v4852
      %v4854 = vpop.xlane.xlu0 %4853
      %v4855 = vadd.f32 %v4731, %v4733
      %4856 = vadd.xlane.f32.xlu0 %v4855
      %v4857 = vpop.xlane.xlu0 %4856
      %v4858 = vadd.f32 %v4735, %v4737
      %4859 = vadd.xlane.f32.xlu0 %v4858
      %v4860 = vpop.xlane.xlu0 %4859
      %v4861 = vadd.f32 %v4739, %v4741
      %4862 = vadd.xlane.f32.xlu0 %v4861
      %v4863 = vpop.xlane.xlu0 %4862
      %v4864 = vadd.f32 %v4743, %v4745
      %4865 = vadd.xlane.f32.xlu0 %v4864
      %v4866 = vpop.xlane.xlu0 %4865
      %v4867 = vadd.f32 %v4747, %v4749
      %4868 = vadd.xlane.f32.xlu0 %v4867
      %v4869 = vpop.xlane.xlu0 %4868
      %v4870 = vadd.f32 %v4751, %v4753
      %4871 = vadd.xlane.f32.xlu0 %v4870
      %v4872 = vpop.xlane.xlu0 %4871
      %v4873 = vadd.f32 %v4755, %v4757
      %4874 = vadd.xlane.f32.xlu0 %v4873
      %v4875 = vpop.xlane.xlu0 %4874
      %v4876 = vadd.f32 %v4759, %v4761
      %4877 = vadd.xlane.f32.xlu0 %v4876
      %v4878 = vpop.xlane.xlu0 %4877
      %v4879 = vadd.f32 %v4763, %v4765
      %4880 = vadd.xlane.f32.xlu0 %v4879
      %v4881 = vpop.xlane.xlu0 %4880
      %v4882 = vadd.f32 %v4767, %v4769
      %4883 = vadd.xlane.f32.xlu0 %v4882
      %v4884 = vpop.xlane.xlu0 %4883
      %v4885 = vadd.f32 %v4771, %v4773
      %4886 = vadd.xlane.f32.xlu0 %v4885
      %v4887 = vpop.xlane.xlu0 %4886
      %v4888 = vadd.f32 %v4775, %v4777
      %4889 = vadd.xlane.f32.xlu0 %v4888
      %v4890 = vpop.xlane.xlu0 %4889
      %v4891 = vadd.f32 %v4779, %v4781
      %4892 = vadd.xlane.f32.xlu0 %v4891
      %v4893 = vpop.xlane.xlu0 %4892
      %v4894 = vadd.f32 %v4783, %v4785
      %4895 = vadd.xlane.f32.xlu0 %v4894
      %v4896 = vpop.xlane.xlu0 %4895
      %v4897 = vadd.f32 %v4787, %v4789
      %4898 = vadd.xlane.f32.xlu0 %v4897
      %v4899 = vpop.xlane.xlu0 %4898
      %v4900 = vadd.f32 %v4791, %v4793
      %4901 = vadd.xlane.f32.xlu0 %v4900
      %v4902 = vpop.xlane.xlu0 %4901
      %v4903 = vadd.f32 %v4795, %v4797
      %4904 = vadd.xlane.f32.xlu0 %v4903
      %v4905 = vpop.xlane.xlu0 %4904
      %v4906 = vadd.f32 %v4799, %v4801
      %4907 = vadd.xlane.f32.xlu0 %v4906
      %v4908 = vpop.xlane.xlu0 %4907
      %v4909 = vadd.f32 %v4803, %v4805
      %4910 = vadd.xlane.f32.xlu0 %v4909
      %v4911 = vpop.xlane.xlu0 %4910
      %v4912 = vadd.f32 %v4807, %v4809
      %4913 = vadd.xlane.f32.xlu0 %v4912
      %v4914 = vpop.xlane.xlu0 %4913
      %v4915 = vadd.f32 %v4811, %v4813
      %4916 = vadd.xlane.f32.xlu0 %v4915
      %v4917 = vpop.xlane.xlu0 %4916
      %v4918 = vadd.f32 %v4815, %v4817
      %4919 = vadd.xlane.f32.xlu0 %v4918
      %v4920 = vpop.xlane.xlu0 %4919
      %v4921 = vadd.f32 %v4819, %v4821
      %4922 = vadd.xlane.f32.xlu0 %v4921
      %v4923 = vpop.xlane.xlu0 %4922
      %v4924 = vadd.f32 %v4823, %v4825
      %4925 = vadd.xlane.f32.xlu0 %v4924
      %v4926 = vpop.xlane.xlu0 %4925
      %v4927 = vadd.f32 %v4827, %v4829
      %4928 = vadd.xlane.f32.xlu0 %v4927
      %v4929 = vpop.xlane.xlu0 %4928
      %v4930 = vadd.f32 %v4831, %v4833
      %4931 = vadd.xlane.f32.xlu0 %v4930
      %v4932 = vpop.xlane.xlu0 %4931
      %v4933 = vadd.f32 %v4835, %v4837
      %4934 = vadd.xlane.f32.xlu0 %v4933
      %v4935 = vpop.xlane.xlu0 %4934
      %v4936 = vadd.f32 %v4839, %v4841
      %4937 = vadd.xlane.f32.xlu0 %v4936
      %v4938 = vpop.xlane.xlu0 %4937
      %v4939 = vadd.f32 %v4843, %v4845
      %4940 = vadd.xlane.f32.xlu0 %v4939
      %v4941 = vpop.xlane.xlu0 %4940
      %v4942 = vrcp.pop %v4848
      %v4943 = vmul.f32 %v4719, %v4942
      %v4944 = vmul.f32 %v4721, %v4942
      %v4945 = vrcp.pop %v4851
      %v4946 = vmul.f32 %v4723, %v4945
      %v4947 = vmul.f32 %v4725, %v4945
      %v4948 = vrcp.pop %v4854
      %v4949 = vmul.f32 %v4727, %v4948
      %v4950 = vmul.f32 %v4729, %v4948
      %v4951 = vrcp.pop %v4857
      %v4952 = vmul.f32 %v4731, %v4951
      %v4953 = vmul.f32 %v4733, %v4951
      %v4954 = vrcp.pop %v4860
      %v4955 = vmul.f32 %v4735, %v4954
      %v4956 = vmul.f32 %v4737, %v4954
      %v4957 = vrcp.pop %v4863
      %v4958 = vmul.f32 %v4739, %v4957
      %v4959 = vmul.f32 %v4741, %v4957
      %v4960 = vrcp.pop %v4866
      %v4961 = vmul.f32 %v4743, %v4960
      %v4962 = vmul.f32 %v4745, %v4960
      %v4963 = vrcp.pop %v4869
      %v4964 = vmul.f32 %v4747, %v4963
      %v4965 = vmul.f32 %v4749, %v4963
      %v4966 = vrcp.pop %v4872
      %v4967 = vmul.f32 %v4751, %v4966
      %v4968 = vmul.f32 %v4753, %v4966
      %v4969 = vrcp.pop %v4875
      %v4970 = vmul.f32 %v4755, %v4969
      %v4971 = vmul.f32 %v4757, %v4969
      %v4972 = vrcp.pop %v4878
      %v4973 = vmul.f32 %v4759, %v4972
      %v4974 = vmul.f32 %v4761, %v4972
      %v4975 = vrcp.pop %v4881
      %v4976 = vmul.f32 %v4763, %v4975
      %v4977 = vmul.f32 %v4765, %v4975
      %v4978 = vrcp.pop %v4884
      %v4979 = vmul.f32 %v4767, %v4978
      %v4980 = vmul.f32 %v4769, %v4978
      %v4981 = vrcp.pop %v4887
      %v4982 = vmul.f32 %v4771, %v4981
      %v4983 = vmul.f32 %v4773, %v4981
      %v4984 = vrcp.pop %v4890
      %v4985 = vmul.f32 %v4775, %v4984
      %v4986 = vmul.f32 %v4777, %v4984
      %v4987 = vrcp.pop %v4893
      %v4988 = vmul.f32 %v4779, %v4987
      %v4989 = vmul.f32 %v4781, %v4987
      %v4990 = vrcp.pop %v4896
      %v4991 = vmul.f32 %v4783, %v4990
      %v4992 = vmul.f32 %v4785, %v4990
      %v4993 = vrcp.pop %v4899
      %v4994 = vmul.f32 %v4787, %v4993
      %v4995 = vmul.f32 %v4789, %v4993
      %v4996 = vrcp.pop %v4902
      %v4997 = vmul.f32 %v4791, %v4996
      %v4998 = vmul.f32 %v4793, %v4996
      %v4999 = vrcp.pop %v4905
      %v5000 = vmul.f32 %v4795, %v4999
      %v5001 = vmul.f32 %v4797, %v4999
      %v5002 = vrcp.pop %v4908
      %v5003 = vmul.f32 %v4799, %v5002
      %v5004 = vmul.f32 %v4801, %v5002
      %v5005 = vrcp.pop %v4911
      %v5006 = vmul.f32 %v4803, %v5005
      %v5007 = vmul.f32 %v4805, %v5005
      %v5008 = vrcp.pop %v4914
      %v5009 = vmul.f32 %v4807, %v5008
      %v5010 = vmul.f32 %v4809, %v5008
      %v5011 = vrcp.pop %v4917
      %v5012 = vmul.f32 %v4811, %v5011
      %v5013 = vmul.f32 %v4813, %v5011
      %v5014 = vrcp.pop %v4920
      %v5015 = vmul.f32 %v4815, %v5014
      %v5016 = vmul.f32 %v4817, %v5014
      %v5017 = vrcp.pop %v4923
      %v5018 = vmul.f32 %v4819, %v5017
      %v5019 = vmul.f32 %v4821, %v5017
      %v5020 = vrcp.pop %v4926
      %v5021 = vmul.f32 %v4823, %v5020
      %v5022 = vmul.f32 %v4825, %v5020
      %v5023 = vrcp.pop %v4929
      %v5024 = vmul.f32 %v4827, %v5023
      %v5025 = vmul.f32 %v4829, %v5023
      %v5026 = vrcp.pop %v4932
      %v5027 = vmul.f32 %v4831, %v5026
      %v5028 = vmul.f32 %v4833, %v5026
      %v5029 = vrcp.pop %v4935
      %v5030 = vmul.f32 %v4835, %v5029
      %v5031 = vmul.f32 %v4837, %v5029
      %v5032 = vrcp.pop %v4938
      %v5033 = vmul.f32 %v4839, %v5032
      %v5034 = vmul.f32 %v4841, %v5032
      %v5035 = vrcp.pop %v4941
      %v5036 = vmul.f32 %v4843, %v5035
      %v5037 = vmul.f32 %v4845, %v5035
      %s5038 = scalar_lea.vmem %s394, 512
      %v5039 = vld [vmem:[%s5038] sm:$0xff]
      %v5040 = vld [vmem:[%s5038 + $0x8] sm:$0xff]
      %v5041 = vld [vmem:[%s5038 + $0x10] sm:$0xff]
      %v5042 = vld [vmem:[%s5038 + $0x18] sm:$0xff]
      %v5043 = vld [vmem:[%s5038 + $0x20] sm:$0xff]
      %v5044 = vld [vmem:[%s5038 + $0x28] sm:$0xff]
      %v5045 = vld [vmem:[%s5038 + $0x30] sm:$0xff]
      %v5046 = vld [vmem:[%s5038 + $0x38] sm:$0xff]
      %v5047 = vld [vmem:[%s5038 + $0x40] sm:$0xff]
      %v5048 = vld [vmem:[%s5038 + $0x48] sm:$0xff]
      %v5049 = vld [vmem:[%s5038 + $0x50] sm:$0xff]
      %v5050 = vld [vmem:[%s5038 + $0x58] sm:$0xff]
      %v5051 = vld [vmem:[%s5038 + $0x60] sm:$0xff]
      %v5052 = vld [vmem:[%s5038 + $0x68] sm:$0xff]
      %v5053 = vld [vmem:[%s5038 + $0x70] sm:$0xff]
      %v5054 = vld [vmem:[%s5038 + $0x78] sm:$0xff]
      %v5055 = vld [vmem:[%s5038 + $0x80] sm:$0xff]
      %v5056 = vld [vmem:[%s5038 + $0x88] sm:$0xff]
      %v5057 = vld [vmem:[%s5038 + $0x90] sm:$0xff]
      %v5058 = vld [vmem:[%s5038 + $0x98] sm:$0xff]
      %v5059 = vld [vmem:[%s5038 + $0xa0] sm:$0xff]
      %v5060 = vld [vmem:[%s5038 + $0xa8] sm:$0xff]
      %v5061 = vld [vmem:[%s5038 + $0xb0] sm:$0xff]
      %v5062 = vld [vmem:[%s5038 + $0xb8] sm:$0xff]
      %v5063 = vld [vmem:[%s5038 + $0xc0] sm:$0xff]
      %v5064 = vld [vmem:[%s5038 + $0xc8] sm:$0xff]
      %v5065 = vld [vmem:[%s5038 + $0xd0] sm:$0xff]
      %v5066 = vld [vmem:[%s5038 + $0xd8] sm:$0xff]
      %v5067 = vld [vmem:[%s5038 + $0xe0] sm:$0xff]
      %v5068 = vld [vmem:[%s5038 + $0xe8] sm:$0xff]
      %v5069 = vld [vmem:[%s5038 + $0xf0] sm:$0xff]
      %v5070 = vld [vmem:[%s5038 + $0xf8] sm:$0xff]
      %5071 = vmatprep.subr.mxu0 0.0
      %5072 = vmatpush1.msra.mxu0 %v5054
      %5073 = vmatprep.subr.mxu0 0.0
      %5074 = vmatpush1.msra.mxu0 %v5053
      %5075 = vmatprep.subr.mxu0 0.0
      %5076 = vmatpush1.msra.mxu0 %v5052
      %5077 = vmatprep.subr.mxu0 0.0
      %5078 = vmatpush1.msra.mxu0 %v5051
      %5079 = vmatprep.subr.mxu0 0.0
      %5080 = vmatpush1.msra.mxu0 %v5050
      %5081 = vmatprep.subr.mxu0 0.0
      %5082 = vmatpush1.msra.mxu0 %v5049
      %5083 = vmatprep.subr.mxu0 0.0
      %5084 = vmatpush1.msra.mxu0 %v5048
      %5085 = vmatprep.subr.mxu0 0.0
      %5086 = vmatpush1.msra.mxu0 %v5047
      %5087 = vmatprep.subr.mxu0 0.0
      %5088 = vmatpush1.msra.mxu0 %v5046
      %5089 = vmatprep.subr.mxu0 0.0
      %5090 = vmatpush1.msra.mxu0 %v5045
      %5091 = vmatprep.subr.mxu0 0.0
      %5092 = vmatpush1.msra.mxu0 %v5044
      %5093 = vmatprep.subr.mxu0 0.0
      %5094 = vmatpush1.msra.mxu0 %v5043
      %5095 = vmatprep.subr.mxu0 0.0
      %5096 = vmatpush1.msra.mxu0 %v5042
      %5097 = vmatprep.subr.mxu0 0.0
      %5098 = vmatpush1.msra.mxu0 %v5041
      %5099 = vmatprep.subr.mxu0 0.0
      %5100 = vmatpush1.msra.mxu0 %v5040
      %5101 = vmatprep.subr.mxu0 0.0
      %5102 = vmatpush1.msra.mxu0 %v5039
      %5103 = vmatprep.subr.mxu0 0.0
      %5104 = vmatpush2.msra.mxu0 %v5070
      %5105 = vmatprep.subr.mxu0 0.0
      %5106 = vmatpush2.msra.mxu0 %v5069
      %5107 = vmatprep.subr.mxu0 0.0
      %5108 = vmatpush2.msra.mxu0 %v5068
      %5109 = vmatprep.subr.mxu0 0.0
      %5110 = vmatpush2.msra.mxu0 %v5067
      %5111 = vmatprep.subr.mxu0 0.0
      %5112 = vmatpush2.msra.mxu0 %v5066
      %5113 = vmatprep.subr.mxu0 0.0
      %5114 = vmatpush2.msra.mxu0 %v5065
      %5115 = vmatprep.subr.mxu0 0.0
      %5116 = vmatpush2.msra.mxu0 %v5064
      %5117 = vmatprep.subr.mxu0 0.0
      %5118 = vmatpush2.msra.mxu0 %v5063
      %5119 = vmatprep.subr.mxu0 0.0
      %5120 = vmatpush2.msra.mxu0 %v5062
      %5121 = vmatprep.subr.mxu0 0.0
      %5122 = vmatpush2.msra.mxu0 %v5061
      %5123 = vmatprep.subr.mxu0 0.0
      %5124 = vmatpush2.msra.mxu0 %v5060
      %5125 = vmatprep.subr.mxu0 0.0
      %5126 = vmatpush2.msra.mxu0 %v5059
      %5127 = vmatprep.subr.mxu0 0.0
      %5128 = vmatpush2.msra.mxu0 %v5058
      %5129 = vmatprep.subr.mxu0 0.0
      %5130 = vmatpush2.msra.mxu0 %v5057
      %5131 = vmatprep.subr.mxu0 0.0
      %5132 = vmatpush2.msra.mxu0 %v5056
      %5133 = vmatprep.subr.mxu0 0.0
      %5134 = vmatpush2.msra.mxu0 %v5055
      %5135 = vmatprep.mubr.f32.mxu0 %v4944
      %5136 = vmatmul.mubr.f32.gmra.mxu0 %v4943
      %v5137 = vpop.f32.mrf.mxu0
      %v5138 = vadd.f32 0.0, %v5137
      %v5139 = vpop.f32.mrf.mxu0
      %5140 = vmatprep.mubr.f32.mxu0 %v4947
      %5141 = vmatmul.mubr.f32.gmra.mxu0 %v4946
      %v5142 = vpop.f32.mrf.mxu0
      %v5143 = vadd.f32 0.0, %v5142
      %v5144 = vpop.f32.mrf.mxu0
      %5145 = vmatprep.mubr.f32.mxu0 %v4950
      %5146 = vmatmul.mubr.f32.gmra.mxu0 %v4949
      %v5147 = vpop.f32.mrf.mxu0
      %v5148 = vadd.f32 0.0, %v5147
      %v5149 = vpop.f32.mrf.mxu0
      %5150 = vmatprep.mubr.f32.mxu0 %v4953
      %5151 = vmatmul.mubr.f32.gmra.mxu0 %v4952
      %v5152 = vpop.f32.mrf.mxu0
      %v5153 = vadd.f32 0.0, %v5152
      %v5154 = vpop.f32.mrf.mxu0
      %5155 = vmatprep.mubr.f32.mxu0 %v4956
      %5156 = vmatmul.mubr.f32.gmra.mxu0 %v4955
      %v5157 = vpop.f32.mrf.mxu0
      %v5158 = vadd.f32 0.0, %v5157
      %v5159 = vpop.f32.mrf.mxu0
      %5160 = vmatprep.mubr.f32.mxu0 %v4959
      %5161 = vmatmul.mubr.f32.gmra.mxu0 %v4958
      %v5162 = vpop.f32.mrf.mxu0
      %v5163 = vadd.f32 0.0, %v5162
      %v5164 = vpop.f32.mrf.mxu0
      %5165 = vmatprep.mubr.f32.mxu0 %v4962
      %5166 = vmatmul.mubr.f32.gmra.mxu0 %v4961
      %v5167 = vpop.f32.mrf.mxu0
      %v5168 = vadd.f32 0.0, %v5167
      %v5169 = vpop.f32.mrf.mxu0
      %5170 = vmatprep.mubr.f32.mxu0 %v4965
      %5171 = vmatmul.mubr.f32.gmra.mxu0 %v4964
      %v5172 = vpop.f32.mrf.mxu0
      %v5173 = vadd.f32 0.0, %v5172
      %v5174 = vpop.f32.mrf.mxu0
      %5175 = vmatprep.mubr.f32.mxu0 %v4968
      %5176 = vmatmul.mubr.f32.gmra.mxu0 %v4967
      %v5177 = vpop.f32.mrf.mxu0
      %v5178 = vadd.f32 0.0, %v5177
      %v5179 = vpop.f32.mrf.mxu0
      %5180 = vmatprep.mubr.f32.mxu0 %v4971
      %5181 = vmatmul.mubr.f32.gmra.mxu0 %v4970
      %v5182 = vpop.f32.mrf.mxu0
      %v5183 = vadd.f32 0.0, %v5182
      %v5184 = vpop.f32.mrf.mxu0
      %5185 = vmatprep.mubr.f32.mxu0 %v4974
      %5186 = vmatmul.mubr.f32.gmra.mxu0 %v4973
      %v5187 = vpop.f32.mrf.mxu0
      %v5188 = vadd.f32 0.0, %v5187
      %v5189 = vpop.f32.mrf.mxu0
      %5190 = vmatprep.mubr.f32.mxu0 %v4977
      %5191 = vmatmul.mubr.f32.gmra.mxu0 %v4976
      %v5192 = vpop.f32.mrf.mxu0
      %v5193 = vadd.f32 0.0, %v5192
      %v5194 = vpop.f32.mrf.mxu0
      %5195 = vmatprep.mubr.f32.mxu0 %v4980
      %5196 = vmatmul.mubr.f32.gmra.mxu0 %v4979
      %v5197 = vpop.f32.mrf.mxu0
      %v5198 = vadd.f32 0.0, %v5197
      %v5199 = vpop.f32.mrf.mxu0
      %5200 = vmatprep.mubr.f32.mxu0 %v4983
      %5201 = vmatmul.mubr.f32.gmra.mxu0 %v4982
      %v5202 = vpop.f32.mrf.mxu0
      %v5203 = vadd.f32 0.0, %v5202
      %v5204 = vpop.f32.mrf.mxu0
      %5205 = vmatprep.mubr.f32.mxu0 %v4986
      %5206 = vmatmul.mubr.f32.gmra.mxu0 %v4985
      %v5207 = vpop.f32.mrf.mxu0
      %v5208 = vadd.f32 0.0, %v5207
      %v5209 = vpop.f32.mrf.mxu0
      %5210 = vmatprep.mubr.f32.mxu0 %v4989
      %5211 = vmatmul.mubr.f32.gmra.mxu0 %v4988
      %v5212 = vpop.f32.mrf.mxu0
      %v5213 = vadd.f32 0.0, %v5212
      %v5214 = vpop.f32.mrf.mxu0
      %5215 = vmatprep.mubr.f32.mxu0 %v4992
      %5216 = vmatmul.mubr.f32.gmra.mxu0 %v4991
      %v5217 = vpop.f32.mrf.mxu0
      %v5218 = vadd.f32 0.0, %v5217
      %v5219 = vpop.f32.mrf.mxu0
      %5220 = vmatprep.mubr.f32.mxu0 %v4995
      %5221 = vmatmul.mubr.f32.gmra.mxu0 %v4994
      %v5222 = vpop.f32.mrf.mxu0
      %v5223 = vadd.f32 0.0, %v5222
      %v5224 = vpop.f32.mrf.mxu0
      %5225 = vmatprep.mubr.f32.mxu0 %v4998
      %5226 = vmatmul.mubr.f32.gmra.mxu0 %v4997
      %v5227 = vpop.f32.mrf.mxu0
      %v5228 = vadd.f32 0.0, %v5227
      %v5229 = vpop.f32.mrf.mxu0
      %5230 = vmatprep.mubr.f32.mxu0 %v5001
      %5231 = vmatmul.mubr.f32.gmra.mxu0 %v5000
      %v5232 = vpop.f32.mrf.mxu0
      %v5233 = vadd.f32 0.0, %v5232
      %v5234 = vpop.f32.mrf.mxu0
      %5235 = vmatprep.mubr.f32.mxu0 %v5004
      %5236 = vmatmul.mubr.f32.gmra.mxu0 %v5003
      %v5237 = vpop.f32.mrf.mxu0
      %v5238 = vadd.f32 0.0, %v5237
      %v5239 = vpop.f32.mrf.mxu0
      %5240 = vmatprep.mubr.f32.mxu0 %v5007
      %5241 = vmatmul.mubr.f32.gmra.mxu0 %v5006
      %v5242 = vpop.f32.mrf.mxu0
      %v5243 = vadd.f32 0.0, %v5242
      %v5244 = vpop.f32.mrf.mxu0
      %5245 = vmatprep.mubr.f32.mxu0 %v5010
      %5246 = vmatmul.mubr.f32.gmra.mxu0 %v5009
      %v5247 = vpop.f32.mrf.mxu0
      %v5248 = vadd.f32 0.0, %v5247
      %v5249 = vpop.f32.mrf.mxu0
      %5250 = vmatprep.mubr.f32.mxu0 %v5013
      %5251 = vmatmul.mubr.f32.gmra.mxu0 %v5012
      %v5252 = vpop.f32.mrf.mxu0
      %v5253 = vadd.f32 0.0, %v5252
      %v5254 = vpop.f32.mrf.mxu0
      %5255 = vmatprep.mubr.f32.mxu0 %v5016
      %5256 = vmatmul.mubr.f32.gmra.mxu0 %v5015
      %v5257 = vpop.f32.mrf.mxu0
      %v5258 = vadd.f32 0.0, %v5257
      %v5259 = vpop.f32.mrf.mxu0
      %5260 = vmatprep.mubr.f32.mxu0 %v5019
      %5261 = vmatmul.mubr.f32.gmra.mxu0 %v5018
      %v5262 = vpop.f32.mrf.mxu0
      %v5263 = vadd.f32 0.0, %v5262
      %v5264 = vpop.f32.mrf.mxu0
      %5265 = vmatprep.mubr.f32.mxu0 %v5022
      %5266 = vmatmul.mubr.f32.gmra.mxu0 %v5021
      %v5267 = vpop.f32.mrf.mxu0
      %v5268 = vadd.f32 0.0, %v5267
      %v5269 = vpop.f32.mrf.mxu0
      %5270 = vmatprep.mubr.f32.mxu0 %v5025
      %5271 = vmatmul.mubr.f32.gmra.mxu0 %v5024
      %v5272 = vpop.f32.mrf.mxu0
      %v5273 = vadd.f32 0.0, %v5272
      %v5274 = vpop.f32.mrf.mxu0
      %5275 = vmatprep.mubr.f32.mxu0 %v5028
      %5276 = vmatmul.mubr.f32.gmra.mxu0 %v5027
      %v5277 = vpop.f32.mrf.mxu0
      %v5278 = vadd.f32 0.0, %v5277
      %v5279 = vpop.f32.mrf.mxu0
      %5280 = vmatprep.mubr.f32.mxu0 %v5031
      %5281 = vmatmul.mubr.f32.gmra.mxu0 %v5030
      %v5282 = vpop.f32.mrf.mxu0
      %v5283 = vadd.f32 0.0, %v5282
      %v5284 = vpop.f32.mrf.mxu0
      %5285 = vmatprep.mubr.f32.mxu0 %v5034
      %5286 = vmatmul.mubr.f32.gmra.mxu0 %v5033
      %v5287 = vpop.f32.mrf.mxu0
      %v5288 = vadd.f32 0.0, %v5287
      %v5289 = vpop.f32.mrf.mxu0
      %5290 = vmatprep.mubr.f32.mxu0 %v5037
      %5291 = vmatmul.mubr.f32.gmra.mxu0 %v5036
      %v5292 = vpop.f32.mrf.mxu0
      %v5293 = vadd.f32 0.0, %v5292
      %v5294 = vpop.f32.mrf.mxu0
      %5295 = vdwg.mxu0
      %s5296 = scalar_lea.vmem %s8, 32
      %v5297 = vld [vmem:[%s5296] sm:$0xff]
      %v5298 = vld [vmem:[%s5296 + $0x8] sm:$0xff]
      %v5300 = vsel %vm1312, %v5138, 0
      %v5303 = vsel %vm1312, %v5143, 0
      %v5306 = vsel %vm1312, %v5148, 0
      %v5309 = vsel %vm1312, %v5153, 0
      %v5312 = vsel %vm1312, %v5158, 0
      %v5315 = vsel %vm1312, %v5163, 0
      %v5318 = vsel %vm1312, %v5168, 0
      %v5321 = vsel %vm1312, %v5173, 0
      %v5324 = vsel %vm1312, %v5178, 0
      %v5327 = vsel %vm1312, %v5183, 0
      %v5330 = vsel %vm1312, %v5188, 0
      %v5333 = vsel %vm1312, %v5193, 0
      %v5336 = vsel %vm1312, %v5198, 0
      %v5339 = vsel %vm1312, %v5203, 0
      %v5342 = vsel %vm1312, %v5208, 0
      %v5345 = vsel %vm1312, %v5213, 0
      %v5348 = vsel %vm1312, %v5218, 0
      %v5351 = vsel %vm1312, %v5223, 0
      %v5354 = vsel %vm1312, %v5228, 0
      %v5357 = vsel %vm1312, %v5233, 0
      %v5360 = vsel %vm1312, %v5238, 0
      %v5363 = vsel %vm1312, %v5243, 0
      %v5366 = vsel %vm1312, %v5248, 0
      %v5369 = vsel %vm1312, %v5253, 0
      %v5372 = vsel %vm1312, %v5258, 0
      %v5375 = vsel %vm1312, %v5263, 0
      %v5378 = vsel %vm1312, %v5268, 0
      %v5381 = vsel %vm1312, %v5273, 0
      %v5384 = vsel %vm1312, %v5278, 0
      %v5387 = vsel %vm1312, %v5283, 0
      %v5390 = vsel %vm1312, %v5288, 0
      %v5393 = vsel %vm1312, %v5293, 0
      %5395 = vmatprep.subr.mxu0 0.0
      %5396 = vmatpush1.msra.mxu0 0.0
      %5397 = vmatprep.subr.mxu0 0.0
      %5398 = vmatpush1.msra.mxu0 0.0
      %5399 = vmatprep.subr.mxu0 0.0
      %5400 = vmatpush1.msra.mxu0 0.0
      %5401 = vmatprep.subr.mxu0 0.0
      %5402 = vmatpush1.msra.mxu0 0.0
      %5403 = vmatprep.subr.mxu0 0.0
      %5404 = vmatpush1.msra.mxu0 0.0
      %5405 = vmatprep.subr.mxu0 0.0
      %5406 = vmatpush1.msra.mxu0 0.0
      %5407 = vmatprep.subr.mxu0 0.0
      %5408 = vmatpush1.msra.mxu0 0.0
      %5409 = vmatprep.subr.mxu0 0.0
      %5410 = vmatpush1.msra.mxu0 0.0
      %5411 = vmatprep.subr.mxu0 0.0
      %5412 = vmatpush1.msra.mxu0 0.0
      %5413 = vmatprep.subr.mxu0 0.0
      %5414 = vmatpush1.msra.mxu0 0.0
      %5415 = vmatprep.subr.mxu0 0.0
      %5416 = vmatpush1.msra.mxu0 0.0
      %5417 = vmatprep.subr.mxu0 0.0
      %5418 = vmatpush1.msra.mxu0 0.0
      %5419 = vmatprep.subr.mxu0 0.0
      %5420 = vmatpush1.msra.mxu0 0.0
      %5421 = vmatprep.subr.mxu0 0.0
      %5422 = vmatpush1.msra.mxu0 0.0
      %5423 = vmatprep.subr.mxu0 0.0
      %5424 = vmatpush1.msra.mxu0 %v5298
      %5425 = vmatprep.subr.mxu0 0.0
      %5426 = vmatpush1.msra.mxu0 %v5297
      %5427 = vmatprep.subr.mxu0 0.0
      %5428 = vmatpush2.msra.mxu0 0.0
      %5429 = vmatprep.subr.mxu0 0.0
      %5430 = vmatpush2.msra.mxu0 0.0
      %5431 = vmatprep.subr.mxu0 0.0
      %5432 = vmatpush2.msra.mxu0 0.0
      %5433 = vmatprep.subr.mxu0 0.0
      %5434 = vmatpush2.msra.mxu0 0.0
      %5435 = vmatprep.subr.mxu0 0.0
      %5436 = vmatpush2.msra.mxu0 0.0
      %5437 = vmatprep.subr.mxu0 0.0
      %5438 = vmatpush2.msra.mxu0 0.0
      %5439 = vmatprep.subr.mxu0 0.0
      %5440 = vmatpush2.msra.mxu0 0.0
      %5441 = vmatprep.subr.mxu0 0.0
      %5442 = vmatpush2.msra.mxu0 0.0
      %5443 = vmatprep.subr.mxu0 0.0
      %5444 = vmatpush2.msra.mxu0 0.0
      %5445 = vmatprep.subr.mxu0 0.0
      %5446 = vmatpush2.msra.mxu0 0.0
      %5447 = vmatprep.subr.mxu0 0.0
      %5448 = vmatpush2.msra.mxu0 0.0
      %5449 = vmatprep.subr.mxu0 0.0
      %5450 = vmatpush2.msra.mxu0 0.0
      %5451 = vmatprep.subr.mxu0 0.0
      %5452 = vmatpush2.msra.mxu0 0.0
      %5453 = vmatprep.subr.mxu0 0.0
      %5454 = vmatpush2.msra.mxu0 0.0
      %5455 = vmatprep.subr.mxu0 0.0
      %5456 = vmatpush2.msra.mxu0 0.0
      %5457 = vmatprep.subr.mxu0 0.0
      %5458 = vmatpush2.msra.mxu0 0.0
      %5459 = vmatprep.mubr.f32.mxu0 0.0
      %5460 = vmatmul.mubr.f32.gmra.mxu0 %v5300
      %v5461 = vpop.f32.mrf.mxu0
      %v5462 = vadd.f32 0.0, %v5461
      %v5463 = vpop.f32.mrf.mxu0
      %5464 = vmatprep.mubr.f32.mxu0 0.0
      %5465 = vmatmul.mubr.f32.gmra.mxu0 %v5303
      %v5466 = vpop.f32.mrf.mxu0
      %v5467 = vadd.f32 0.0, %v5466
      %v5468 = vpop.f32.mrf.mxu0
      %5469 = vmatprep.mubr.f32.mxu0 0.0
      %5470 = vmatmul.mubr.f32.gmra.mxu0 %v5306
      %v5471 = vpop.f32.mrf.mxu0
      %v5472 = vadd.f32 0.0, %v5471
      %v5473 = vpop.f32.mrf.mxu0
      %5474 = vmatprep.mubr.f32.mxu0 0.0
      %5475 = vmatmul.mubr.f32.gmra.mxu0 %v5309
      %v5476 = vpop.f32.mrf.mxu0
      %v5477 = vadd.f32 0.0, %v5476
      %v5478 = vpop.f32.mrf.mxu0
      %5479 = vmatprep.mubr.f32.mxu0 0.0
      %5480 = vmatmul.mubr.f32.gmra.mxu0 %v5312
      %v5481 = vpop.f32.mrf.mxu0
      %v5482 = vadd.f32 0.0, %v5481
      %v5483 = vpop.f32.mrf.mxu0
      %5484 = vmatprep.mubr.f32.mxu0 0.0
      %5485 = vmatmul.mubr.f32.gmra.mxu0 %v5315
      %v5486 = vpop.f32.mrf.mxu0
      %v5487 = vadd.f32 0.0, %v5486
      %v5488 = vpop.f32.mrf.mxu0
      %5489 = vmatprep.mubr.f32.mxu0 0.0
      %5490 = vmatmul.mubr.f32.gmra.mxu0 %v5318
      %v5491 = vpop.f32.mrf.mxu0
      %v5492 = vadd.f32 0.0, %v5491
      %v5493 = vpop.f32.mrf.mxu0
      %5494 = vmatprep.mubr.f32.mxu0 0.0
      %5495 = vmatmul.mubr.f32.gmra.mxu0 %v5321
      %v5496 = vpop.f32.mrf.mxu0
      %v5497 = vadd.f32 0.0, %v5496
      %v5498 = vpop.f32.mrf.mxu0
      %5499 = vmatprep.mubr.f32.mxu0 0.0
      %5500 = vmatmul.mubr.f32.gmra.mxu0 %v5324
      %v5501 = vpop.f32.mrf.mxu0
      %v5502 = vadd.f32 0.0, %v5501
      %v5503 = vpop.f32.mrf.mxu0
      %5504 = vmatprep.mubr.f32.mxu0 0.0
      %5505 = vmatmul.mubr.f32.gmra.mxu0 %v5327
      %v5506 = vpop.f32.mrf.mxu0
      %v5507 = vadd.f32 0.0, %v5506
      %v5508 = vpop.f32.mrf.mxu0
      %5509 = vmatprep.mubr.f32.mxu0 0.0
      %5510 = vmatmul.mubr.f32.gmra.mxu0 %v5330
      %v5511 = vpop.f32.mrf.mxu0
      %v5512 = vadd.f32 0.0, %v5511
      %v5513 = vpop.f32.mrf.mxu0
      %5514 = vmatprep.mubr.f32.mxu0 0.0
      %5515 = vmatmul.mubr.f32.gmra.mxu0 %v5333
      %v5516 = vpop.f32.mrf.mxu0
      %v5517 = vadd.f32 0.0, %v5516
      %v5518 = vpop.f32.mrf.mxu0
      %5519 = vmatprep.mubr.f32.mxu0 0.0
      %5520 = vmatmul.mubr.f32.gmra.mxu0 %v5336
      %v5521 = vpop.f32.mrf.mxu0
      %v5522 = vadd.f32 0.0, %v5521
      %v5523 = vpop.f32.mrf.mxu0
      %5524 = vmatprep.mubr.f32.mxu0 0.0
      %5525 = vmatmul.mubr.f32.gmra.mxu0 %v5339
      %v5526 = vpop.f32.mrf.mxu0
      %v5527 = vadd.f32 0.0, %v5526
      %v5528 = vpop.f32.mrf.mxu0
      %5529 = vmatprep.mubr.f32.mxu0 0.0
      %5530 = vmatmul.mubr.f32.gmra.mxu0 %v5342
      %v5531 = vpop.f32.mrf.mxu0
      %v5532 = vadd.f32 0.0, %v5531
      %v5533 = vpop.f32.mrf.mxu0
      %5534 = vmatprep.mubr.f32.mxu0 0.0
      %5535 = vmatmul.mubr.f32.gmra.mxu0 %v5345
      %v5536 = vpop.f32.mrf.mxu0
      %v5537 = vadd.f32 0.0, %v5536
      %v5538 = vpop.f32.mrf.mxu0
      %5539 = vmatprep.mubr.f32.mxu0 0.0
      %5540 = vmatmul.mubr.f32.gmra.mxu0 %v5348
      %v5541 = vpop.f32.mrf.mxu0
      %v5542 = vadd.f32 0.0, %v5541
      %v5543 = vpop.f32.mrf.mxu0
      %5544 = vmatprep.mubr.f32.mxu0 0.0
      %5545 = vmatmul.mubr.f32.gmra.mxu0 %v5351
      %v5546 = vpop.f32.mrf.mxu0
      %v5547 = vadd.f32 0.0, %v5546
      %v5548 = vpop.f32.mrf.mxu0
      %5549 = vmatprep.mubr.f32.mxu0 0.0
      %5550 = vmatmul.mubr.f32.gmra.mxu0 %v5354
      %v5551 = vpop.f32.mrf.mxu0
      %v5552 = vadd.f32 0.0, %v5551
      %v5553 = vpop.f32.mrf.mxu0
      %5554 = vmatprep.mubr.f32.mxu0 0.0
      %5555 = vmatmul.mubr.f32.gmra.mxu0 %v5357
      %v5556 = vpop.f32.mrf.mxu0
      %v5557 = vadd.f32 0.0, %v5556
      %v5558 = vpop.f32.mrf.mxu0
      %5559 = vmatprep.mubr.f32.mxu0 0.0
      %5560 = vmatmul.mubr.f32.gmra.mxu0 %v5360
      %v5561 = vpop.f32.mrf.mxu0
      %v5562 = vadd.f32 0.0, %v5561
      %v5563 = vpop.f32.mrf.mxu0
      %5564 = vmatprep.mubr.f32.mxu0 0.0
      %5565 = vmatmul.mubr.f32.gmra.mxu0 %v5363
      %v5566 = vpop.f32.mrf.mxu0
      %v5567 = vadd.f32 0.0, %v5566
      %v5568 = vpop.f32.mrf.mxu0
      %5569 = vmatprep.mubr.f32.mxu0 0.0
      %5570 = vmatmul.mubr.f32.gmra.mxu0 %v5366
      %v5571 = vpop.f32.mrf.mxu0
      %v5572 = vadd.f32 0.0, %v5571
      %v5573 = vpop.f32.mrf.mxu0
      %5574 = vmatprep.mubr.f32.mxu0 0.0
      %5575 = vmatmul.mubr.f32.gmra.mxu0 %v5369
      %v5576 = vpop.f32.mrf.mxu0
      %v5577 = vadd.f32 0.0, %v5576
      %v5578 = vpop.f32.mrf.mxu0
      %5579 = vmatprep.mubr.f32.mxu0 0.0
      %5580 = vmatmul.mubr.f32.gmra.mxu0 %v5372
      %v5581 = vpop.f32.mrf.mxu0
      %v5582 = vadd.f32 0.0, %v5581
      %v5583 = vpop.f32.mrf.mxu0
      %5584 = vmatprep.mubr.f32.mxu0 0.0
      %5585 = vmatmul.mubr.f32.gmra.mxu0 %v5375
      %v5586 = vpop.f32.mrf.mxu0
      %v5587 = vadd.f32 0.0, %v5586
      %v5588 = vpop.f32.mrf.mxu0
      %5589 = vmatprep.mubr.f32.mxu0 0.0
      %5590 = vmatmul.mubr.f32.gmra.mxu0 %v5378
      %v5591 = vpop.f32.mrf.mxu0
      %v5592 = vadd.f32 0.0, %v5591
      %v5593 = vpop.f32.mrf.mxu0
      %5594 = vmatprep.mubr.f32.mxu0 0.0
      %5595 = vmatmul.mubr.f32.gmra.mxu0 %v5381
      %v5596 = vpop.f32.mrf.mxu0
      %v5597 = vadd.f32 0.0, %v5596
      %v5598 = vpop.f32.mrf.mxu0
      %5599 = vmatprep.mubr.f32.mxu0 0.0
      %5600 = vmatmul.mubr.f32.gmra.mxu0 %v5384
      %v5601 = vpop.f32.mrf.mxu0
      %v5602 = vadd.f32 0.0, %v5601
      %v5603 = vpop.f32.mrf.mxu0
      %5604 = vmatprep.mubr.f32.mxu0 0.0
      %5605 = vmatmul.mubr.f32.gmra.mxu0 %v5387
      %v5606 = vpop.f32.mrf.mxu0
      %v5607 = vadd.f32 0.0, %v5606
      %v5608 = vpop.f32.mrf.mxu0
      %5609 = vmatprep.mubr.f32.mxu0 0.0
      %5610 = vmatmul.mubr.f32.gmra.mxu0 %v5390
      %v5611 = vpop.f32.mrf.mxu0
      %v5612 = vadd.f32 0.0, %v5611
      %v5613 = vpop.f32.mrf.mxu0
      %5614 = vmatprep.mubr.f32.mxu0 0.0
      %5615 = vmatmul.mubr.f32.gmra.mxu0 %v5393
      %v5616 = vpop.f32.mrf.mxu0
      %v5617 = vadd.f32 0.0, %v5616
      %v5618 = vpop.f32.mrf.mxu0
      %5619 = vdwg.mxu0
      %v5620 = vadd.f32 %v4015, %v5462
      %v5621 = vadd.f32 %v4020, %v5467
      %v5622 = vadd.f32 %v4025, %v5472
      %v5623 = vadd.f32 %v4030, %v5477
      %v5624 = vadd.f32 %v4035, %v5482
      %v5625 = vadd.f32 %v4040, %v5487
      %v5626 = vadd.f32 %v4045, %v5492
      %v5627 = vadd.f32 %v4050, %v5497
      %v5628 = vadd.f32 %v4055, %v5502
      %v5629 = vadd.f32 %v4060, %v5507
      %v5630 = vadd.f32 %v4065, %v5512
      %v5631 = vadd.f32 %v4070, %v5517
      %v5632 = vadd.f32 %v4075, %v5522
      %v5633 = vadd.f32 %v4080, %v5527
      %v5634 = vadd.f32 %v4085, %v5532
      %v5635 = vadd.f32 %v4090, %v5537
      %v5636 = vadd.f32 %v4095, %v5542
      %v5637 = vadd.f32 %v4100, %v5547
      %v5638 = vadd.f32 %v4105, %v5552
      %v5639 = vadd.f32 %v4110, %v5557
      %v5640 = vadd.f32 %v4115, %v5562
      %v5641 = vadd.f32 %v4120, %v5567
      %v5642 = vadd.f32 %v4125, %v5572
      %v5643 = vadd.f32 %v4130, %v5577
      %v5644 = vadd.f32 %v4135, %v5582
      %v5645 = vadd.f32 %v4140, %v5587
      %v5646 = vadd.f32 %v4145, %v5592
      %v5647 = vadd.f32 %v4150, %v5597
      %v5648 = vadd.f32 %v4155, %v5602
      %v5649 = vadd.f32 %v4160, %v5607
      %v5650 = vadd.f32 %v4165, %v5612
      %v5651 = vadd.f32 %v4170, %v5617
      %5652 = vrot.lane.b32.xlu0 %v1248, 80
      %v5653 = vpop.permute.xlu0 %5652
      %5654 = vrot.lane.b32.xlu0 %v1249, 80
      %v5655 = vpop.permute.xlu0 %5654
      %5656 = vrot.lane.b32.xlu0 %v1250, 80
      %v5657 = vpop.permute.xlu0 %5656
      %5658 = vrot.lane.b32.xlu0 %v1251, 80
      %v5659 = vpop.permute.xlu0 %5658
      %5660 = vrot.lane.b32.xlu0 %v1252, 80
      %v5661 = vpop.permute.xlu0 %5660
      %5662 = vrot.lane.b32.xlu0 %v1253, 80
      %v5663 = vpop.permute.xlu0 %5662
      %5664 = vrot.lane.b32.xlu0 %v1254, 80
      %v5665 = vpop.permute.xlu0 %5664
      %5666 = vrot.lane.b32.xlu0 %v1255, 80
      %v5667 = vpop.permute.xlu0 %5666
      %5668 = vrot.lane.b32.xlu0 %v1256, 80
      %v5669 = vpop.permute.xlu0 %5668
      %5670 = vrot.lane.b32.xlu0 %v1257, 80
      %v5671 = vpop.permute.xlu0 %5670
      %5672 = vrot.lane.b32.xlu0 %v1258, 80
      %v5673 = vpop.permute.xlu0 %5672
      %5674 = vrot.lane.b32.xlu0 %v1259, 80
      %v5675 = vpop.permute.xlu0 %5674
      %5676 = vrot.lane.b32.xlu0 %v1260, 80
      %v5677 = vpop.permute.xlu0 %5676
      %5678 = vrot.lane.b32.xlu0 %v1261, 80
      %v5679 = vpop.permute.xlu0 %5678
      %5680 = vrot.lane.b32.xlu0 %v1262, 80
      %v5681 = vpop.permute.xlu0 %5680
      %5682 = vrot.lane.b32.xlu0 %v1263, 80
      %v5683 = vpop.permute.xlu0 %5682
      %5684 = vrot.lane.b32.xlu0 %v1264, 80
      %v5685 = vpop.permute.xlu0 %5684
      %5686 = vrot.lane.b32.xlu0 %v1265, 80
      %v5687 = vpop.permute.xlu0 %5686
      %5688 = vrot.lane.b32.xlu0 %v1266, 80
      %v5689 = vpop.permute.xlu0 %5688
      %5690 = vrot.lane.b32.xlu0 %v1267, 80
      %v5691 = vpop.permute.xlu0 %5690
      %5692 = vrot.lane.b32.xlu0 %v1268, 80
      %v5693 = vpop.permute.xlu0 %5692
      %5694 = vrot.lane.b32.xlu0 %v1269, 80
      %v5695 = vpop.permute.xlu0 %5694
      %5696 = vrot.lane.b32.xlu0 %v1270, 80
      %v5697 = vpop.permute.xlu0 %5696
      %5698 = vrot.lane.b32.xlu0 %v1271, 80
      %v5699 = vpop.permute.xlu0 %5698
      %5700 = vrot.lane.b32.xlu0 %v1272, 80
      %v5701 = vpop.permute.xlu0 %5700
      %5702 = vrot.lane.b32.xlu0 %v1273, 80
      %v5703 = vpop.permute.xlu0 %5702
      %5704 = vrot.lane.b32.xlu0 %v1274, 80
      %v5705 = vpop.permute.xlu0 %5704
      %5706 = vrot.lane.b32.xlu0 %v1275, 80
      %v5707 = vpop.permute.xlu0 %5706
      %5708 = vrot.lane.b32.xlu0 %v1276, 80
      %v5709 = vpop.permute.xlu0 %5708
      %5710 = vrot.lane.b32.xlu0 %v1277, 80
      %v5711 = vpop.permute.xlu0 %5710
      %5712 = vrot.lane.b32.xlu0 %v1278, 80
      %v5713 = vpop.permute.xlu0 %5712
      %5714 = vrot.lane.b32.xlu0 %v1279, 80
      %v5715 = vpop.permute.xlu0 %5714
      %v5716 = vsel %vm1312, %v5653, 0
      %v5718 = vsel %vm1312, %v5655, 0
      %v5720 = vsel %vm1312, %v5657, 0
      %v5722 = vsel %vm1312, %v5659, 0
      %v5724 = vsel %vm1312, %v5661, 0
      %v5726 = vsel %vm1312, %v5663, 0
      %v5728 = vsel %vm1312, %v5665, 0
      %v5730 = vsel %vm1312, %v5667, 0
      %v5732 = vsel %vm1312, %v5669, 0
      %v5734 = vsel %vm1312, %v5671, 0
      %v5736 = vsel %vm1312, %v5673, 0
      %v5738 = vsel %vm1312, %v5675, 0
      %v5740 = vsel %vm1312, %v5677, 0
      %v5742 = vsel %vm1312, %v5679, 0
      %v5744 = vsel %vm1312, %v5681, 0
      %v5746 = vsel %vm1312, %v5683, 0
      %v5748 = vsel %vm1312, %v5685, 0
      %v5750 = vsel %vm1312, %v5687, 0
      %v5752 = vsel %vm1312, %v5689, 0
      %v5754 = vsel %vm1312, %v5691, 0
      %v5756 = vsel %vm1312, %v5693, 0
      %v5758 = vsel %vm1312, %v5695, 0
      %v5760 = vsel %vm1312, %v5697, 0
      %v5762 = vsel %vm1312, %v5699, 0
      %v5764 = vsel %vm1312, %v5701, 0
      %v5766 = vsel %vm1312, %v5703, 0
      %v5768 = vsel %vm1312, %v5705, 0
      %v5770 = vsel %vm1312, %v5707, 0
      %v5772 = vsel %vm1312, %v5709, 0
      %v5774 = vsel %vm1312, %v5711, 0
      %v5776 = vsel %vm1312, %v5713, 0
      %v5778 = vsel %vm1312, %v5715, 0
      %5780 = vmatprep.subr.mxu0 0.0
      %5781 = vmatpush1.msra.mxu0 0.0
      %5782 = vmatprep.subr.mxu0 0.0
      %5783 = vmatpush1.msra.mxu0 0.0
      %5784 = vmatprep.subr.mxu0 0.0
      %5785 = vmatpush1.msra.mxu0 0.0
      %5786 = vmatprep.subr.mxu0 0.0
      %5787 = vmatpush1.msra.mxu0 0.0
      %5788 = vmatprep.subr.mxu0 0.0
      %5789 = vmatpush1.msra.mxu0 0.0
      %5790 = vmatprep.subr.mxu0 0.0
      %5791 = vmatpush1.msra.mxu0 0.0
      %5792 = vmatprep.subr.mxu0 0.0
      %5793 = vmatpush1.msra.mxu0 0.0
      %5794 = vmatprep.subr.mxu0 0.0
      %5795 = vmatpush1.msra.mxu0 0.0
      %5796 = vmatprep.subr.mxu0 0.0
      %5797 = vmatpush1.msra.mxu0 0.0
      %5798 = vmatprep.subr.mxu0 0.0
      %5799 = vmatpush1.msra.mxu0 0.0
      %5800 = vmatprep.subr.mxu0 0.0
      %5801 = vmatpush1.msra.mxu0 0.0
      %5802 = vmatprep.subr.mxu0 0.0
      %5803 = vmatpush1.msra.mxu0 0.0
      %5804 = vmatprep.subr.mxu0 0.0
      %5805 = vmatpush1.msra.mxu0 0.0
      %5806 = vmatprep.subr.mxu0 0.0
      %5807 = vmatpush1.msra.mxu0 0.0
      %5808 = vmatprep.subr.mxu0 %v1311
      %5809 = vmatpush1.msra.mxu0 %v1310
      %5810 = vmatprep.subr.mxu0 %v1309
      %5811 = vmatpush1.msra.mxu0 %v1308
      %5812 = vmatprep.subr.mxu0 0.0
      %5813 = vmatpush2.msra.mxu0 0.0
      %5814 = vmatprep.subr.mxu0 0.0
      %5815 = vmatpush2.msra.mxu0 0.0
      %5816 = vmatprep.subr.mxu0 0.0
      %5817 = vmatpush2.msra.mxu0 0.0
      %5818 = vmatprep.subr.mxu0 0.0
      %5819 = vmatpush2.msra.mxu0 0.0
      %5820 = vmatprep.subr.mxu0 0.0
      %5821 = vmatpush2.msra.mxu0 0.0
      %5822 = vmatprep.subr.mxu0 0.0
      %5823 = vmatpush2.msra.mxu0 0.0
      %5824 = vmatprep.subr.mxu0 0.0
      %5825 = vmatpush2.msra.mxu0 0.0
      %5826 = vmatprep.subr.mxu0 0.0
      %5827 = vmatpush2.msra.mxu0 0.0
      %5828 = vmatprep.subr.mxu0 0.0
      %5829 = vmatpush2.msra.mxu0 0.0
      %5830 = vmatprep.subr.mxu0 0.0
      %5831 = vmatpush2.msra.mxu0 0.0
      %5832 = vmatprep.subr.mxu0 0.0
      %5833 = vmatpush2.msra.mxu0 0.0
      %5834 = vmatprep.subr.mxu0 0.0
      %5835 = vmatpush2.msra.mxu0 0.0
      %5836 = vmatprep.subr.mxu0 0.0
      %5837 = vmatpush2.msra.mxu0 0.0
      %5838 = vmatprep.subr.mxu0 0.0
      %5839 = vmatpush2.msra.mxu0 0.0
      %5840 = vmatprep.subr.mxu0 0.0
      %5841 = vmatpush2.msra.mxu0 0.0
      %5842 = vmatprep.subr.mxu0 0.0
      %5843 = vmatpush2.msra.mxu0 0.0
      %5844 = vmatprep.mubr.f32.mxu0 0.0
      %5845 = vmatmul.mubr.f32.gmra.mxu0 %v5716
      %v5846 = vpop.f32.mrf.mxu0
      %v5847 = vadd.f32 0.0, %v5846
      %v5848 = vpop.f32.mrf.mxu0
      %v5849 = vadd.f32 0.0, %v5848
      %5850 = vmatprep.mubr.f32.mxu0 0.0
      %5851 = vmatmul.mubr.f32.gmra.mxu0 %v5718
      %v5852 = vpop.f32.mrf.mxu0
      %v5853 = vadd.f32 0.0, %v5852
      %v5854 = vpop.f32.mrf.mxu0
      %v5855 = vadd.f32 0.0, %v5854
      %5856 = vmatprep.mubr.f32.mxu0 0.0
      %5857 = vmatmul.mubr.f32.gmra.mxu0 %v5720
      %v5858 = vpop.f32.mrf.mxu0
      %v5859 = vadd.f32 0.0, %v5858
      %v5860 = vpop.f32.mrf.mxu0
      %v5861 = vadd.f32 0.0, %v5860
      %5862 = vmatprep.mubr.f32.mxu0 0.0
      %5863 = vmatmul.mubr.f32.gmra.mxu0 %v5722
      %v5864 = vpop.f32.mrf.mxu0
      %v5865 = vadd.f32 0.0, %v5864
      %v5866 = vpop.f32.mrf.mxu0
      %v5867 = vadd.f32 0.0, %v5866
      %5868 = vmatprep.mubr.f32.mxu0 0.0
      %5869 = vmatmul.mubr.f32.gmra.mxu0 %v5724
      %v5870 = vpop.f32.mrf.mxu0
      %v5871 = vadd.f32 0.0, %v5870
      %v5872 = vpop.f32.mrf.mxu0
      %v5873 = vadd.f32 0.0, %v5872
      %5874 = vmatprep.mubr.f32.mxu0 0.0
      %5875 = vmatmul.mubr.f32.gmra.mxu0 %v5726
      %v5876 = vpop.f32.mrf.mxu0
      %v5877 = vadd.f32 0.0, %v5876
      %v5878 = vpop.f32.mrf.mxu0
      %v5879 = vadd.f32 0.0, %v5878
      %5880 = vmatprep.mubr.f32.mxu0 0.0
      %5881 = vmatmul.mubr.f32.gmra.mxu0 %v5728
      %v5882 = vpop.f32.mrf.mxu0
      %v5883 = vadd.f32 0.0, %v5882
      %v5884 = vpop.f32.mrf.mxu0
      %v5885 = vadd.f32 0.0, %v5884
      %5886 = vmatprep.mubr.f32.mxu0 0.0
      %5887 = vmatmul.mubr.f32.gmra.mxu0 %v5730
      %v5888 = vpop.f32.mrf.mxu0
      %v5889 = vadd.f32 0.0, %v5888
      %v5890 = vpop.f32.mrf.mxu0
      %v5891 = vadd.f32 0.0, %v5890
      %5892 = vmatprep.mubr.f32.mxu0 0.0
      %5893 = vmatmul.mubr.f32.gmra.mxu0 %v5732
      %v5894 = vpop.f32.mrf.mxu0
      %v5895 = vadd.f32 0.0, %v5894
      %v5896 = vpop.f32.mrf.mxu0
      %v5897 = vadd.f32 0.0, %v5896
      %5898 = vmatprep.mubr.f32.mxu0 0.0
      %5899 = vmatmul.mubr.f32.gmra.mxu0 %v5734
      %v5900 = vpop.f32.mrf.mxu0
      %v5901 = vadd.f32 0.0, %v5900
      %v5902 = vpop.f32.mrf.mxu0
      %v5903 = vadd.f32 0.0, %v5902
      %5904 = vmatprep.mubr.f32.mxu0 0.0
      %5905 = vmatmul.mubr.f32.gmra.mxu0 %v5736
      %v5906 = vpop.f32.mrf.mxu0
      %v5907 = vadd.f32 0.0, %v5906
      %v5908 = vpop.f32.mrf.mxu0
      %v5909 = vadd.f32 0.0, %v5908
      %5910 = vmatprep.mubr.f32.mxu0 0.0
      %5911 = vmatmul.mubr.f32.gmra.mxu0 %v5738
      %v5912 = vpop.f32.mrf.mxu0
      %v5913 = vadd.f32 0.0, %v5912
      %v5914 = vpop.f32.mrf.mxu0
      %v5915 = vadd.f32 0.0, %v5914
      %5916 = vmatprep.mubr.f32.mxu0 0.0
      %5917 = vmatmul.mubr.f32.gmra.mxu0 %v5740
      %v5918 = vpop.f32.mrf.mxu0
      %v5919 = vadd.f32 0.0, %v5918
      %v5920 = vpop.f32.mrf.mxu0
      %v5921 = vadd.f32 0.0, %v5920
      %5922 = vmatprep.mubr.f32.mxu0 0.0
      %5923 = vmatmul.mubr.f32.gmra.mxu0 %v5742
      %v5924 = vpop.f32.mrf.mxu0
      %v5925 = vadd.f32 0.0, %v5924
      %v5926 = vpop.f32.mrf.mxu0
      %v5927 = vadd.f32 0.0, %v5926
      %5928 = vmatprep.mubr.f32.mxu0 0.0
      %5929 = vmatmul.mubr.f32.gmra.mxu0 %v5744
      %v5930 = vpop.f32.mrf.mxu0
      %v5931 = vadd.f32 0.0, %v5930
      %v5932 = vpop.f32.mrf.mxu0
      %v5933 = vadd.f32 0.0, %v5932
      %5934 = vmatprep.mubr.f32.mxu0 0.0
      %5935 = vmatmul.mubr.f32.gmra.mxu0 %v5746
      %v5936 = vpop.f32.mrf.mxu0
      %v5937 = vadd.f32 0.0, %v5936
      %v5938 = vpop.f32.mrf.mxu0
      %v5939 = vadd.f32 0.0, %v5938
      %5940 = vmatprep.mubr.f32.mxu0 0.0
      %5941 = vmatmul.mubr.f32.gmra.mxu0 %v5748
      %v5942 = vpop.f32.mrf.mxu0
      %v5943 = vadd.f32 0.0, %v5942
      %v5944 = vpop.f32.mrf.mxu0
      %v5945 = vadd.f32 0.0, %v5944
      %5946 = vmatprep.mubr.f32.mxu0 0.0
      %5947 = vmatmul.mubr.f32.gmra.mxu0 %v5750
      %v5948 = vpop.f32.mrf.mxu0
      %v5949 = vadd.f32 0.0, %v5948
      %v5950 = vpop.f32.mrf.mxu0
      %v5951 = vadd.f32 0.0, %v5950
      %5952 = vmatprep.mubr.f32.mxu0 0.0
      %5953 = vmatmul.mubr.f32.gmra.mxu0 %v5752
      %v5954 = vpop.f32.mrf.mxu0
      %v5955 = vadd.f32 0.0, %v5954
      %v5956 = vpop.f32.mrf.mxu0
      %v5957 = vadd.f32 0.0, %v5956
      %5958 = vmatprep.mubr.f32.mxu0 0.0
      %5959 = vmatmul.mubr.f32.gmra.mxu0 %v5754
      %v5960 = vpop.f32.mrf.mxu0
      %v5961 = vadd.f32 0.0, %v5960
      %v5962 = vpop.f32.mrf.mxu0
      %v5963 = vadd.f32 0.0, %v5962
      %5964 = vmatprep.mubr.f32.mxu0 0.0
      %5965 = vmatmul.mubr.f32.gmra.mxu0 %v5756
      %v5966 = vpop.f32.mrf.mxu0
      %v5967 = vadd.f32 0.0, %v5966
      %v5968 = vpop.f32.mrf.mxu0
      %v5969 = vadd.f32 0.0, %v5968
      %5970 = vmatprep.mubr.f32.mxu0 0.0
      %5971 = vmatmul.mubr.f32.gmra.mxu0 %v5758
      %v5972 = vpop.f32.mrf.mxu0
      %v5973 = vadd.f32 0.0, %v5972
      %v5974 = vpop.f32.mrf.mxu0
      %v5975 = vadd.f32 0.0, %v5974
      %5976 = vmatprep.mubr.f32.mxu0 0.0
      %5977 = vmatmul.mubr.f32.gmra.mxu0 %v5760
      %v5978 = vpop.f32.mrf.mxu0
      %v5979 = vadd.f32 0.0, %v5978
      %v5980 = vpop.f32.mrf.mxu0
      %v5981 = vadd.f32 0.0, %v5980
      %5982 = vmatprep.mubr.f32.mxu0 0.0
      %5983 = vmatmul.mubr.f32.gmra.mxu0 %v5762
      %v5984 = vpop.f32.mrf.mxu0
      %v5985 = vadd.f32 0.0, %v5984
      %v5986 = vpop.f32.mrf.mxu0
      %v5987 = vadd.f32 0.0, %v5986
      %5988 = vmatprep.mubr.f32.mxu0 0.0
      %5989 = vmatmul.mubr.f32.gmra.mxu0 %v5764
      %v5990 = vpop.f32.mrf.mxu0
      %v5991 = vadd.f32 0.0, %v5990
      %v5992 = vpop.f32.mrf.mxu0
      %v5993 = vadd.f32 0.0, %v5992
      %5994 = vmatprep.mubr.f32.mxu0 0.0
      %5995 = vmatmul.mubr.f32.gmra.mxu0 %v5766
      %v5996 = vpop.f32.mrf.mxu0
      %v5997 = vadd.f32 0.0, %v5996
      %v5998 = vpop.f32.mrf.mxu0
      %v5999 = vadd.f32 0.0, %v5998
      %6000 = vmatprep.mubr.f32.mxu0 0.0
      %6001 = vmatmul.mubr.f32.gmra.mxu0 %v5768
      %v6002 = vpop.f32.mrf.mxu0
      %v6003 = vadd.f32 0.0, %v6002
      %v6004 = vpop.f32.mrf.mxu0
      %v6005 = vadd.f32 0.0, %v6004
      %6006 = vmatprep.mubr.f32.mxu0 0.0
      %6007 = vmatmul.mubr.f32.gmra.mxu0 %v5770
      %v6008 = vpop.f32.mrf.mxu0
      %v6009 = vadd.f32 0.0, %v6008
      %v6010 = vpop.f32.mrf.mxu0
      %v6011 = vadd.f32 0.0, %v6010
      %6012 = vmatprep.mubr.f32.mxu0 0.0
      %6013 = vmatmul.mubr.f32.gmra.mxu0 %v5772
      %v6014 = vpop.f32.mrf.mxu0
      %v6015 = vadd.f32 0.0, %v6014
      %v6016 = vpop.f32.mrf.mxu0
      %v6017 = vadd.f32 0.0, %v6016
      %6018 = vmatprep.mubr.f32.mxu0 0.0
      %6019 = vmatmul.mubr.f32.gmra.mxu0 %v5774
      %v6020 = vpop.f32.mrf.mxu0
      %v6021 = vadd.f32 0.0, %v6020
      %v6022 = vpop.f32.mrf.mxu0
      %v6023 = vadd.f32 0.0, %v6022
      %6024 = vmatprep.mubr.f32.mxu0 0.0
      %6025 = vmatmul.mubr.f32.gmra.mxu0 %v5776
      %v6026 = vpop.f32.mrf.mxu0
      %v6027 = vadd.f32 0.0, %v6026
      %v6028 = vpop.f32.mrf.mxu0
      %v6029 = vadd.f32 0.0, %v6028
      %6030 = vmatprep.mubr.f32.mxu0 0.0
      %6031 = vmatmul.mubr.f32.gmra.mxu0 %v5778
      %v6032 = vpop.f32.mrf.mxu0
      %v6033 = vadd.f32 0.0, %v6032
      %v6034 = vpop.f32.mrf.mxu0
      %v6035 = vadd.f32 0.0, %v6034
      %6036 = vdwg.mxu0
      %v6037 = vmax.f32 %v5847, %v5849
      %6038 = vmax.xlane.f32.xlu0 %v6037
      %v6039 = vpop.xlane.xlu0 %6038
      %v6040 = vmax.f32 %v5853, %v5855
      %6041 = vmax.xlane.f32.xlu0 %v6040
      %v6042 = vpop.xlane.xlu0 %6041
      %v6043 = vmax.f32 %v5859, %v5861
      %6044 = vmax.xlane.f32.xlu0 %v6043
      %v6045 = vpop.xlane.xlu0 %6044
      %v6046 = vmax.f32 %v5865, %v5867
      %6047 = vmax.xlane.f32.xlu0 %v6046
      %v6048 = vpop.xlane.xlu0 %6047
      %v6049 = vmax.f32 %v5871, %v5873
      %6050 = vmax.xlane.f32.xlu0 %v6049
      %v6051 = vpop.xlane.xlu0 %6050
      %v6052 = vmax.f32 %v5877, %v5879
      %6053 = vmax.xlane.f32.xlu0 %v6052
      %v6054 = vpop.xlane.xlu0 %6053
      %v6055 = vmax.f32 %v5883, %v5885
      %6056 = vmax.xlane.f32.xlu0 %v6055
      %v6057 = vpop.xlane.xlu0 %6056
      %v6058 = vmax.f32 %v5889, %v5891
      %6059 = vmax.xlane.f32.xlu0 %v6058
      %v6060 = vpop.xlane.xlu0 %6059
      %v6061 = vmax.f32 %v5895, %v5897
      %6062 = vmax.xlane.f32.xlu0 %v6061
      %v6063 = vpop.xlane.xlu0 %6062
      %v6064 = vmax.f32 %v5901, %v5903
      %6065 = vmax.xlane.f32.xlu0 %v6064
      %v6066 = vpop.xlane.xlu0 %6065
      %v6067 = vmax.f32 %v5907, %v5909
      %6068 = vmax.xlane.f32.xlu0 %v6067
      %v6069 = vpop.xlane.xlu0 %6068
      %v6070 = vmax.f32 %v5913, %v5915
      %6071 = vmax.xlane.f32.xlu0 %v6070
      %v6072 = vpop.xlane.xlu0 %6071
      %v6073 = vmax.f32 %v5919, %v5921
      %6074 = vmax.xlane.f32.xlu0 %v6073
      %v6075 = vpop.xlane.xlu0 %6074
      %v6076 = vmax.f32 %v5925, %v5927
      %6077 = vmax.xlane.f32.xlu0 %v6076
      %v6078 = vpop.xlane.xlu0 %6077
      %v6079 = vmax.f32 %v5931, %v5933
      %6080 = vmax.xlane.f32.xlu0 %v6079
      %v6081 = vpop.xlane.xlu0 %6080
      %v6082 = vmax.f32 %v5937, %v5939
      %6083 = vmax.xlane.f32.xlu0 %v6082
      %v6084 = vpop.xlane.xlu0 %6083
      %v6085 = vmax.f32 %v5943, %v5945
      %6086 = vmax.xlane.f32.xlu0 %v6085
      %v6087 = vpop.xlane.xlu0 %6086
      %v6088 = vmax.f32 %v5949, %v5951
      %6089 = vmax.xlane.f32.xlu0 %v6088
      %v6090 = vpop.xlane.xlu0 %6089
      %v6091 = vmax.f32 %v5955, %v5957
      %6092 = vmax.xlane.f32.xlu0 %v6091
      %v6093 = vpop.xlane.xlu0 %6092
      %v6094 = vmax.f32 %v5961, %v5963
      %6095 = vmax.xlane.f32.xlu0 %v6094
      %v6096 = vpop.xlane.xlu0 %6095
      %v6097 = vmax.f32 %v5967, %v5969
      %6098 = vmax.xlane.f32.xlu0 %v6097
      %v6099 = vpop.xlane.xlu0 %6098
      %v6100 = vmax.f32 %v5973, %v5975
      %6101 = vmax.xlane.f32.xlu0 %v6100
      %v6102 = vpop.xlane.xlu0 %6101
      %v6103 = vmax.f32 %v5979, %v5981
      %6104 = vmax.xlane.f32.xlu0 %v6103
      %v6105 = vpop.xlane.xlu0 %6104
      %v6106 = vmax.f32 %v5985, %v5987
      %6107 = vmax.xlane.f32.xlu0 %v6106
      %v6108 = vpop.xlane.xlu0 %6107
      %v6109 = vmax.f32 %v5991, %v5993
      %6110 = vmax.xlane.f32.xlu0 %v6109
      %v6111 = vpop.xlane.xlu0 %6110
      %v6112 = vmax.f32 %v5997, %v5999
      %6113 = vmax.xlane.f32.xlu0 %v6112
      %v6114 = vpop.xlane.xlu0 %6113
      %v6115 = vmax.f32 %v6003, %v6005
      %6116 = vmax.xlane.f32.xlu0 %v6115
      %v6117 = vpop.xlane.xlu0 %6116
      %v6118 = vmax.f32 %v6009, %v6011
      %6119 = vmax.xlane.f32.xlu0 %v6118
      %v6120 = vpop.xlane.xlu0 %6119
      %v6121 = vmax.f32 %v6015, %v6017
      %6122 = vmax.xlane.f32.xlu0 %v6121
      %v6123 = vpop.xlane.xlu0 %6122
      %v6124 = vmax.f32 %v6021, %v6023
      %6125 = vmax.xlane.f32.xlu0 %v6124
      %v6126 = vpop.xlane.xlu0 %6125
      %v6127 = vmax.f32 %v6027, %v6029
      %6128 = vmax.xlane.f32.xlu0 %v6127
      %v6129 = vpop.xlane.xlu0 %6128
      %v6130 = vmax.f32 %v6033, %v6035
      %6131 = vmax.xlane.f32.xlu0 %v6130
      %v6132 = vpop.xlane.xlu0 %6131
      %v6133 = vsub.f32 %v5847, %v6039
      %v6134 = vsub.f32 %v5849, %v6039
      %v6135 = vsub.f32 %v5853, %v6042
      %v6136 = vsub.f32 %v5855, %v6042
      %v6137 = vsub.f32 %v5859, %v6045
      %v6138 = vsub.f32 %v5861, %v6045
      %v6139 = vsub.f32 %v5865, %v6048
      %v6140 = vsub.f32 %v5867, %v6048
      %v6141 = vsub.f32 %v5871, %v6051
      %v6142 = vsub.f32 %v5873, %v6051
      %v6143 = vsub.f32 %v5877, %v6054
      %v6144 = vsub.f32 %v5879, %v6054
      %v6145 = vsub.f32 %v5883, %v6057
      %v6146 = vsub.f32 %v5885, %v6057
      %v6147 = vsub.f32 %v5889, %v6060
      %v6148 = vsub.f32 %v5891, %v6060
      %v6149 = vsub.f32 %v5895, %v6063
      %v6150 = vsub.f32 %v5897, %v6063
      %v6151 = vsub.f32 %v5901, %v6066
      %v6152 = vsub.f32 %v5903, %v6066
      %v6153 = vsub.f32 %v5907, %v6069
      %v6154 = vsub.f32 %v5909, %v6069
      %v6155 = vsub.f32 %v5913, %v6072
      %v6156 = vsub.f32 %v5915, %v6072
      %v6157 = vsub.f32 %v5919, %v6075
      %v6158 = vsub.f32 %v5921, %v6075
      %v6159 = vsub.f32 %v5925, %v6078
      %v6160 = vsub.f32 %v5927, %v6078
      %v6161 = vsub.f32 %v5931, %v6081
      %v6162 = vsub.f32 %v5933, %v6081
      %v6163 = vsub.f32 %v5937, %v6084
      %v6164 = vsub.f32 %v5939, %v6084
      %v6165 = vsub.f32 %v5943, %v6087
      %v6166 = vsub.f32 %v5945, %v6087
      %v6167 = vsub.f32 %v5949, %v6090
      %v6168 = vsub.f32 %v5951, %v6090
      %v6169 = vsub.f32 %v5955, %v6093
      %v6170 = vsub.f32 %v5957, %v6093
      %v6171 = vsub.f32 %v5961, %v6096
      %v6172 = vsub.f32 %v5963, %v6096
      %v6173 = vsub.f32 %v5967, %v6099
      %v6174 = vsub.f32 %v5969, %v6099
      %v6175 = vsub.f32 %v5973, %v6102
      %v6176 = vsub.f32 %v5975, %v6102
      %v6177 = vsub.f32 %v5979, %v6105
      %v6178 = vsub.f32 %v5981, %v6105
      %v6179 = vsub.f32 %v5985, %v6108
      %v6180 = vsub.f32 %v5987, %v6108
      %v6181 = vsub.f32 %v5991, %v6111
      %v6182 = vsub.f32 %v5993, %v6111
      %v6183 = vsub.f32 %v5997, %v6114
      %v6184 = vsub.f32 %v5999, %v6114
      %v6185 = vsub.f32 %v6003, %v6117
      %v6186 = vsub.f32 %v6005, %v6117
      %v6187 = vsub.f32 %v6009, %v6120
      %v6188 = vsub.f32 %v6011, %v6120
      %v6189 = vsub.f32 %v6015, %v6123
      %v6190 = vsub.f32 %v6017, %v6123
      %v6191 = vsub.f32 %v6021, %v6126
      %v6192 = vsub.f32 %v6023, %v6126
      %v6193 = vsub.f32 %v6027, %v6129
      %v6194 = vsub.f32 %v6029, %v6129
      %v6195 = vsub.f32 %v6033, %v6132
      %v6196 = vsub.f32 %v6035, %v6132
      %v6197 = vmul.f32 %v6133, 1.442695
      %v6198 = vpow.pop %v6197
      %v6199 = vmul.f32 %v6134, 1.442695
      %v6200 = vpow.pop %v6199
      %v6201 = vmul.f32 %v6135, 1.442695
      %v6202 = vpow.pop %v6201
      %v6203 = vmul.f32 %v6136, 1.442695
      %v6204 = vpow.pop %v6203
      %v6205 = vmul.f32 %v6137, 1.442695
      %v6206 = vpow.pop %v6205
      %v6207 = vmul.f32 %v6138, 1.442695
      %v6208 = vpow.pop %v6207
      %v6209 = vmul.f32 %v6139, 1.442695
      %v6210 = vpow.pop %v6209
      %v6211 = vmul.f32 %v6140, 1.442695
      %v6212 = vpow.pop %v6211
      %v6213 = vmul.f32 %v6141, 1.442695
      %v6214 = vpow.pop %v6213
      %v6215 = vmul.f32 %v6142, 1.442695
      %v6216 = vpow.pop %v6215
      %v6217 = vmul.f32 %v6143, 1.442695
      %v6218 = vpow.pop %v6217
      %v6219 = vmul.f32 %v6144, 1.442695
      %v6220 = vpow.pop %v6219
      %v6221 = vmul.f32 %v6145, 1.442695
      %v6222 = vpow.pop %v6221
      %v6223 = vmul.f32 %v6146, 1.442695
      %v6224 = vpow.pop %v6223
      %v6225 = vmul.f32 %v6147, 1.442695
      %v6226 = vpow.pop %v6225
      %v6227 = vmul.f32 %v6148, 1.442695
      %v6228 = vpow.pop %v6227
      %v6229 = vmul.f32 %v6149, 1.442695
      %v6230 = vpow.pop %v6229
      %v6231 = vmul.f32 %v6150, 1.442695
      %v6232 = vpow.pop %v6231
      %v6233 = vmul.f32 %v6151, 1.442695
      %v6234 = vpow.pop %v6233
      %v6235 = vmul.f32 %v6152, 1.442695
      %v6236 = vpow.pop %v6235
      %v6237 = vmul.f32 %v6153, 1.442695
      %v6238 = vpow.pop %v6237
      %v6239 = vmul.f32 %v6154, 1.442695
      %v6240 = vpow.pop %v6239
      %v6241 = vmul.f32 %v6155, 1.442695
      %v6242 = vpow.pop %v6241
      %v6243 = vmul.f32 %v6156, 1.442695
      %v6244 = vpow.pop %v6243
      %v6245 = vmul.f32 %v6157, 1.442695
      %v6246 = vpow.pop %v6245
      %v6247 = vmul.f32 %v6158, 1.442695
      %v6248 = vpow.pop %v6247
      %v6249 = vmul.f32 %v6159, 1.442695
      %v6250 = vpow.pop %v6249
      %v6251 = vmul.f32 %v6160, 1.442695
      %v6252 = vpow.pop %v6251
      %v6253 = vmul.f32 %v6161, 1.442695
      %v6254 = vpow.pop %v6253
      %v6255 = vmul.f32 %v6162, 1.442695
      %v6256 = vpow.pop %v6255
      %v6257 = vmul.f32 %v6163, 1.442695
      %v6258 = vpow.pop %v6257
      %v6259 = vmul.f32 %v6164, 1.442695
      %v6260 = vpow.pop %v6259
      %v6261 = vmul.f32 %v6165, 1.442695
      %v6262 = vpow.pop %v6261
      %v6263 = vmul.f32 %v6166, 1.442695
      %v6264 = vpow.pop %v6263
      %v6265 = vmul.f32 %v6167, 1.442695
      %v6266 = vpow.pop %v6265
      %v6267 = vmul.f32 %v6168, 1.442695
      %v6268 = vpow.pop %v6267
      %v6269 = vmul.f32 %v6169, 1.442695
      %v6270 = vpow.pop %v6269
      %v6271 = vmul.f32 %v6170, 1.442695
      %v6272 = vpow.pop %v6271
      %v6273 = vmul.f32 %v6171, 1.442695
      %v6274 = vpow.pop %v6273
      %v6275 = vmul.f32 %v6172, 1.442695
      %v6276 = vpow.pop %v6275
      %v6277 = vmul.f32 %v6173, 1.442695
      %v6278 = vpow.pop %v6277
      %v6279 = vmul.f32 %v6174, 1.442695
      %v6280 = vpow.pop %v6279
      %v6281 = vmul.f32 %v6175, 1.442695
      %v6282 = vpow.pop %v6281
      %v6283 = vmul.f32 %v6176, 1.442695
      %v6284 = vpow.pop %v6283
      %v6285 = vmul.f32 %v6177, 1.442695
      %v6286 = vpow.pop %v6285
      %v6287 = vmul.f32 %v6178, 1.442695
      %v6288 = vpow.pop %v6287
      %v6289 = vmul.f32 %v6179, 1.442695
      %v6290 = vpow.pop %v6289
      %v6291 = vmul.f32 %v6180, 1.442695
      %v6292 = vpow.pop %v6291
      %v6293 = vmul.f32 %v6181, 1.442695
      %v6294 = vpow.pop %v6293
      %v6295 = vmul.f32 %v6182, 1.442695
      %v6296 = vpow.pop %v6295
      %v6297 = vmul.f32 %v6183, 1.442695
      %v6298 = vpow.pop %v6297
      %v6299 = vmul.f32 %v6184, 1.442695
      %v6300 = vpow.pop %v6299
      %v6301 = vmul.f32 %v6185, 1.442695
      %v6302 = vpow.pop %v6301
      %v6303 = vmul.f32 %v6186, 1.442695
      %v6304 = vpow.pop %v6303
      %v6305 = vmul.f32 %v6187, 1.442695
      %v6306 = vpow.pop %v6305
      %v6307 = vmul.f32 %v6188, 1.442695
      %v6308 = vpow.pop %v6307
      %v6309 = vmul.f32 %v6189, 1.442695
      %v6310 = vpow.pop %v6309
      %v6311 = vmul.f32 %v6190, 1.442695
      %v6312 = vpow.pop %v6311
      %v6313 = vmul.f32 %v6191, 1.442695
      %v6314 = vpow.pop %v6313
      %v6315 = vmul.f32 %v6192, 1.442695
      %v6316 = vpow.pop %v6315
      %v6317 = vmul.f32 %v6193, 1.442695
      %v6318 = vpow.pop %v6317
      %v6319 = vmul.f32 %v6194, 1.442695
      %v6320 = vpow.pop %v6319
      %v6321 = vmul.f32 %v6195, 1.442695
      %v6322 = vpow.pop %v6321
      %v6323 = vmul.f32 %v6196, 1.442695
      %v6324 = vpow.pop %v6323
      %v6325 = vadd.f32 %v6198, %v6200
      %6326 = vadd.xlane.f32.xlu0 %v6325
      %v6327 = vpop.xlane.xlu0 %6326
      %v6328 = vadd.f32 %v6202, %v6204
      %6329 = vadd.xlane.f32.xlu0 %v6328
      %v6330 = vpop.xlane.xlu0 %6329
      %v6331 = vadd.f32 %v6206, %v6208
      %6332 = vadd.xlane.f32.xlu0 %v6331
      %v6333 = vpop.xlane.xlu0 %6332
      %v6334 = vadd.f32 %v6210, %v6212
      %6335 = vadd.xlane.f32.xlu0 %v6334
      %v6336 = vpop.xlane.xlu0 %6335
      %v6337 = vadd.f32 %v6214, %v6216
      %6338 = vadd.xlane.f32.xlu0 %v6337
      %v6339 = vpop.xlane.xlu0 %6338
      %v6340 = vadd.f32 %v6218, %v6220
      %6341 = vadd.xlane.f32.xlu0 %v6340
      %v6342 = vpop.xlane.xlu0 %6341
      %v6343 = vadd.f32 %v6222, %v6224
      %6344 = vadd.xlane.f32.xlu0 %v6343
      %v6345 = vpop.xlane.xlu0 %6344
      %v6346 = vadd.f32 %v6226, %v6228
      %6347 = vadd.xlane.f32.xlu0 %v6346
      %v6348 = vpop.xlane.xlu0 %6347
      %v6349 = vadd.f32 %v6230, %v6232
      %6350 = vadd.xlane.f32.xlu0 %v6349
      %v6351 = vpop.xlane.xlu0 %6350
      %v6352 = vadd.f32 %v6234, %v6236
      %6353 = vadd.xlane.f32.xlu0 %v6352
      %v6354 = vpop.xlane.xlu0 %6353
      %v6355 = vadd.f32 %v6238, %v6240
      %6356 = vadd.xlane.f32.xlu0 %v6355
      %v6357 = vpop.xlane.xlu0 %6356
      %v6358 = vadd.f32 %v6242, %v6244
      %6359 = vadd.xlane.f32.xlu0 %v6358
      %v6360 = vpop.xlane.xlu0 %6359
      %v6361 = vadd.f32 %v6246, %v6248
      %6362 = vadd.xlane.f32.xlu0 %v6361
      %v6363 = vpop.xlane.xlu0 %6362
      %v6364 = vadd.f32 %v6250, %v6252
      %6365 = vadd.xlane.f32.xlu0 %v6364
      %v6366 = vpop.xlane.xlu0 %6365
      %v6367 = vadd.f32 %v6254, %v6256
      %6368 = vadd.xlane.f32.xlu0 %v6367
      %v6369 = vpop.xlane.xlu0 %6368
      %v6370 = vadd.f32 %v6258, %v6260
      %6371 = vadd.xlane.f32.xlu0 %v6370
      %v6372 = vpop.xlane.xlu0 %6371
      %v6373 = vadd.f32 %v6262, %v6264
      %6374 = vadd.xlane.f32.xlu0 %v6373
      %v6375 = vpop.xlane.xlu0 %6374
      %v6376 = vadd.f32 %v6266, %v6268
      %6377 = vadd.xlane.f32.xlu0 %v6376
      %v6378 = vpop.xlane.xlu0 %6377
      %v6379 = vadd.f32 %v6270, %v6272
      %6380 = vadd.xlane.f32.xlu0 %v6379
      %v6381 = vpop.xlane.xlu0 %6380
      %v6382 = vadd.f32 %v6274, %v6276
      %6383 = vadd.xlane.f32.xlu0 %v6382
      %v6384 = vpop.xlane.xlu0 %6383
      %v6385 = vadd.f32 %v6278, %v6280
      %6386 = vadd.xlane.f32.xlu0 %v6385
      %v6387 = vpop.xlane.xlu0 %6386
      %v6388 = vadd.f32 %v6282, %v6284
      %6389 = vadd.xlane.f32.xlu0 %v6388
      %v6390 = vpop.xlane.xlu0 %6389
      %v6391 = vadd.f32 %v6286, %v6288
      %6392 = vadd.xlane.f32.xlu0 %v6391
      %v6393 = vpop.xlane.xlu0 %6392
      %v6394 = vadd.f32 %v6290, %v6292
      %6395 = vadd.xlane.f32.xlu0 %v6394
      %v6396 = vpop.xlane.xlu0 %6395
      %v6397 = vadd.f32 %v6294, %v6296
      %6398 = vadd.xlane.f32.xlu0 %v6397
      %v6399 = vpop.xlane.xlu0 %6398
      %v6400 = vadd.f32 %v6298, %v6300
      %6401 = vadd.xlane.f32.xlu0 %v6400
      %v6402 = vpop.xlane.xlu0 %6401
      %v6403 = vadd.f32 %v6302, %v6304
      %6404 = vadd.xlane.f32.xlu0 %v6403
      %v6405 = vpop.xlane.xlu0 %6404
      %v6406 = vadd.f32 %v6306, %v6308
      %6407 = vadd.xlane.f32.xlu0 %v6406
      %v6408 = vpop.xlane.xlu0 %6407
      %v6409 = vadd.f32 %v6310, %v6312
      %6410 = vadd.xlane.f32.xlu0 %v6409
      %v6411 = vpop.xlane.xlu0 %6410
      %v6412 = vadd.f32 %v6314, %v6316
      %6413 = vadd.xlane.f32.xlu0 %v6412
      %v6414 = vpop.xlane.xlu0 %6413
      %v6415 = vadd.f32 %v6318, %v6320
      %6416 = vadd.xlane.f32.xlu0 %v6415
      %v6417 = vpop.xlane.xlu0 %6416
      %v6418 = vadd.f32 %v6322, %v6324
      %6419 = vadd.xlane.f32.xlu0 %v6418
      %v6420 = vpop.xlane.xlu0 %6419
      %v6421 = vrcp.pop %v6327
      %v6422 = vmul.f32 %v6198, %v6421
      %v6423 = vmul.f32 %v6200, %v6421
      %v6424 = vrcp.pop %v6330
      %v6425 = vmul.f32 %v6202, %v6424
      %v6426 = vmul.f32 %v6204, %v6424
      %v6427 = vrcp.pop %v6333
      %v6428 = vmul.f32 %v6206, %v6427
      %v6429 = vmul.f32 %v6208, %v6427
      %v6430 = vrcp.pop %v6336
      %v6431 = vmul.f32 %v6210, %v6430
      %v6432 = vmul.f32 %v6212, %v6430
      %v6433 = vrcp.pop %v6339
      %v6434 = vmul.f32 %v6214, %v6433
      %v6435 = vmul.f32 %v6216, %v6433
      %v6436 = vrcp.pop %v6342
      %v6437 = vmul.f32 %v6218, %v6436
      %v6438 = vmul.f32 %v6220, %v6436
      %v6439 = vrcp.pop %v6345
      %v6440 = vmul.f32 %v6222, %v6439
      %v6441 = vmul.f32 %v6224, %v6439
      %v6442 = vrcp.pop %v6348
      %v6443 = vmul.f32 %v6226, %v6442
      %v6444 = vmul.f32 %v6228, %v6442
      %v6445 = vrcp.pop %v6351
      %v6446 = vmul.f32 %v6230, %v6445
      %v6447 = vmul.f32 %v6232, %v6445
      %v6448 = vrcp.pop %v6354
      %v6449 = vmul.f32 %v6234, %v6448
      %v6450 = vmul.f32 %v6236, %v6448
      %v6451 = vrcp.pop %v6357
      %v6452 = vmul.f32 %v6238, %v6451
      %v6453 = vmul.f32 %v6240, %v6451
      %v6454 = vrcp.pop %v6360
      %v6455 = vmul.f32 %v6242, %v6454
      %v6456 = vmul.f32 %v6244, %v6454
      %v6457 = vrcp.pop %v6363
      %v6458 = vmul.f32 %v6246, %v6457
      %v6459 = vmul.f32 %v6248, %v6457
      %v6460 = vrcp.pop %v6366
      %v6461 = vmul.f32 %v6250, %v6460
      %v6462 = vmul.f32 %v6252, %v6460
      %v6463 = vrcp.pop %v6369
      %v6464 = vmul.f32 %v6254, %v6463
      %v6465 = vmul.f32 %v6256, %v6463
      %v6466 = vrcp.pop %v6372
      %v6467 = vmul.f32 %v6258, %v6466
      %v6468 = vmul.f32 %v6260, %v6466
      %v6469 = vrcp.pop %v6375
      %v6470 = vmul.f32 %v6262, %v6469
      %v6471 = vmul.f32 %v6264, %v6469
      %v6472 = vrcp.pop %v6378
      %v6473 = vmul.f32 %v6266, %v6472
      %v6474 = vmul.f32 %v6268, %v6472
      %v6475 = vrcp.pop %v6381
      %v6476 = vmul.f32 %v6270, %v6475
      %v6477 = vmul.f32 %v6272, %v6475
      %v6478 = vrcp.pop %v6384
      %v6479 = vmul.f32 %v6274, %v6478
      %v6480 = vmul.f32 %v6276, %v6478
      %v6481 = vrcp.pop %v6387
      %v6482 = vmul.f32 %v6278, %v6481
      %v6483 = vmul.f32 %v6280, %v6481
      %v6484 = vrcp.pop %v6390
      %v6485 = vmul.f32 %v6282, %v6484
      %v6486 = vmul.f32 %v6284, %v6484
      %v6487 = vrcp.pop %v6393
      %v6488 = vmul.f32 %v6286, %v6487
      %v6489 = vmul.f32 %v6288, %v6487
      %v6490 = vrcp.pop %v6396
      %v6491 = vmul.f32 %v6290, %v6490
      %v6492 = vmul.f32 %v6292, %v6490
      %v6493 = vrcp.pop %v6399
      %v6494 = vmul.f32 %v6294, %v6493
      %v6495 = vmul.f32 %v6296, %v6493
      %v6496 = vrcp.pop %v6402
      %v6497 = vmul.f32 %v6298, %v6496
      %v6498 = vmul.f32 %v6300, %v6496
      %v6499 = vrcp.pop %v6405
      %v6500 = vmul.f32 %v6302, %v6499
      %v6501 = vmul.f32 %v6304, %v6499
      %v6502 = vrcp.pop %v6408
      %v6503 = vmul.f32 %v6306, %v6502
      %v6504 = vmul.f32 %v6308, %v6502
      %v6505 = vrcp.pop %v6411
      %v6506 = vmul.f32 %v6310, %v6505
      %v6507 = vmul.f32 %v6312, %v6505
      %v6508 = vrcp.pop %v6414
      %v6509 = vmul.f32 %v6314, %v6508
      %v6510 = vmul.f32 %v6316, %v6508
      %v6511 = vrcp.pop %v6417
      %v6512 = vmul.f32 %v6318, %v6511
      %v6513 = vmul.f32 %v6320, %v6511
      %v6514 = vrcp.pop %v6420
      %v6515 = vmul.f32 %v6322, %v6514
      %v6516 = vmul.f32 %v6324, %v6514
      %s6517 = scalar_lea.vmem %s394, 768
      %v6518 = vld [vmem:[%s6517] sm:$0xff]
      %v6519 = vld [vmem:[%s6517 + $0x8] sm:$0xff]
      %v6520 = vld [vmem:[%s6517 + $0x10] sm:$0xff]
      %v6521 = vld [vmem:[%s6517 + $0x18] sm:$0xff]
      %v6522 = vld [vmem:[%s6517 + $0x20] sm:$0xff]
      %v6523 = vld [vmem:[%s6517 + $0x28] sm:$0xff]
      %v6524 = vld [vmem:[%s6517 + $0x30] sm:$0xff]
      %v6525 = vld [vmem:[%s6517 + $0x38] sm:$0xff]
      %v6526 = vld [vmem:[%s6517 + $0x40] sm:$0xff]
      %v6527 = vld [vmem:[%s6517 + $0x48] sm:$0xff]
      %v6528 = vld [vmem:[%s6517 + $0x50] sm:$0xff]
      %v6529 = vld [vmem:[%s6517 + $0x58] sm:$0xff]
      %v6530 = vld [vmem:[%s6517 + $0x60] sm:$0xff]
      %v6531 = vld [vmem:[%s6517 + $0x68] sm:$0xff]
      %v6532 = vld [vmem:[%s6517 + $0x70] sm:$0xff]
      %v6533 = vld [vmem:[%s6517 + $0x78] sm:$0xff]
      %v6534 = vld [vmem:[%s6517 + $0x80] sm:$0xff]
      %v6535 = vld [vmem:[%s6517 + $0x88] sm:$0xff]
      %v6536 = vld [vmem:[%s6517 + $0x90] sm:$0xff]
      %v6537 = vld [vmem:[%s6517 + $0x98] sm:$0xff]
      %v6538 = vld [vmem:[%s6517 + $0xa0] sm:$0xff]
      %v6539 = vld [vmem:[%s6517 + $0xa8] sm:$0xff]
      %v6540 = vld [vmem:[%s6517 + $0xb0] sm:$0xff]
      %v6541 = vld [vmem:[%s6517 + $0xb8] sm:$0xff]
      %v6542 = vld [vmem:[%s6517 + $0xc0] sm:$0xff]
      %v6543 = vld [vmem:[%s6517 + $0xc8] sm:$0xff]
      %v6544 = vld [vmem:[%s6517 + $0xd0] sm:$0xff]
      %v6545 = vld [vmem:[%s6517 + $0xd8] sm:$0xff]
      %v6546 = vld [vmem:[%s6517 + $0xe0] sm:$0xff]
      %v6547 = vld [vmem:[%s6517 + $0xe8] sm:$0xff]
      %v6548 = vld [vmem:[%s6517 + $0xf0] sm:$0xff]
      %v6549 = vld [vmem:[%s6517 + $0xf8] sm:$0xff]
      %6550 = vmatprep.subr.mxu0 0.0
      %6551 = vmatpush1.msra.mxu0 %v6533
      %6552 = vmatprep.subr.mxu0 0.0
      %6553 = vmatpush1.msra.mxu0 %v6532
      %6554 = vmatprep.subr.mxu0 0.0
      %6555 = vmatpush1.msra.mxu0 %v6531
      %6556 = vmatprep.subr.mxu0 0.0
      %6557 = vmatpush1.msra.mxu0 %v6530
      %6558 = vmatprep.subr.mxu0 0.0
      %6559 = vmatpush1.msra.mxu0 %v6529
      %6560 = vmatprep.subr.mxu0 0.0
      %6561 = vmatpush1.msra.mxu0 %v6528
      %6562 = vmatprep.subr.mxu0 0.0
      %6563 = vmatpush1.msra.mxu0 %v6527
      %6564 = vmatprep.subr.mxu0 0.0
      %6565 = vmatpush1.msra.mxu0 %v6526
      %6566 = vmatprep.subr.mxu0 0.0
      %6567 = vmatpush1.msra.mxu0 %v6525
      %6568 = vmatprep.subr.mxu0 0.0
      %6569 = vmatpush1.msra.mxu0 %v6524
      %6570 = vmatprep.subr.mxu0 0.0
      %6571 = vmatpush1.msra.mxu0 %v6523
      %6572 = vmatprep.subr.mxu0 0.0
      %6573 = vmatpush1.msra.mxu0 %v6522
      %6574 = vmatprep.subr.mxu0 0.0
      %6575 = vmatpush1.msra.mxu0 %v6521
      %6576 = vmatprep.subr.mxu0 0.0
      %6577 = vmatpush1.msra.mxu0 %v6520
      %6578 = vmatprep.subr.mxu0 0.0
      %6579 = vmatpush1.msra.mxu0 %v6519
      %6580 = vmatprep.subr.mxu0 0.0
      %6581 = vmatpush1.msra.mxu0 %v6518
      %6582 = vmatprep.subr.mxu0 0.0
      %6583 = vmatpush2.msra.mxu0 %v6549
      %6584 = vmatprep.subr.mxu0 0.0
      %6585 = vmatpush2.msra.mxu0 %v6548
      %6586 = vmatprep.subr.mxu0 0.0
      %6587 = vmatpush2.msra.mxu0 %v6547
      %6588 = vmatprep.subr.mxu0 0.0
      %6589 = vmatpush2.msra.mxu0 %v6546
      %6590 = vmatprep.subr.mxu0 0.0
      %6591 = vmatpush2.msra.mxu0 %v6545
      %6592 = vmatprep.subr.mxu0 0.0
      %6593 = vmatpush2.msra.mxu0 %v6544
      %6594 = vmatprep.subr.mxu0 0.0
      %6595 = vmatpush2.msra.mxu0 %v6543
      %6596 = vmatprep.subr.mxu0 0.0
      %6597 = vmatpush2.msra.mxu0 %v6542
      %6598 = vmatprep.subr.mxu0 0.0
      %6599 = vmatpush2.msra.mxu0 %v6541
      %6600 = vmatprep.subr.mxu0 0.0
      %6601 = vmatpush2.msra.mxu0 %v6540
      %6602 = vmatprep.subr.mxu0 0.0
      %6603 = vmatpush2.msra.mxu0 %v6539
      %6604 = vmatprep.subr.mxu0 0.0
      %6605 = vmatpush2.msra.mxu0 %v6538
      %6606 = vmatprep.subr.mxu0 0.0
      %6607 = vmatpush2.msra.mxu0 %v6537
      %6608 = vmatprep.subr.mxu0 0.0
      %6609 = vmatpush2.msra.mxu0 %v6536
      %6610 = vmatprep.subr.mxu0 0.0
      %6611 = vmatpush2.msra.mxu0 %v6535
      %6612 = vmatprep.subr.mxu0 0.0
      %6613 = vmatpush2.msra.mxu0 %v6534
      %6614 = vmatprep.mubr.f32.mxu0 %v6423
      %6615 = vmatmul.mubr.f32.gmra.mxu0 %v6422
      %v6616 = vpop.f32.mrf.mxu0
      %v6617 = vadd.f32 0.0, %v6616
      %v6618 = vpop.f32.mrf.mxu0
      %6619 = vmatprep.mubr.f32.mxu0 %v6426
      %6620 = vmatmul.mubr.f32.gmra.mxu0 %v6425
      %v6621 = vpop.f32.mrf.mxu0
      %v6622 = vadd.f32 0.0, %v6621
      %v6623 = vpop.f32.mrf.mxu0
      %6624 = vmatprep.mubr.f32.mxu0 %v6429
      %6625 = vmatmul.mubr.f32.gmra.mxu0 %v6428
      %v6626 = vpop.f32.mrf.mxu0
      %v6627 = vadd.f32 0.0, %v6626
      %v6628 = vpop.f32.mrf.mxu0
      %6629 = vmatprep.mubr.f32.mxu0 %v6432
      %6630 = vmatmul.mubr.f32.gmra.mxu0 %v6431
      %v6631 = vpop.f32.mrf.mxu0
      %v6632 = vadd.f32 0.0, %v6631
      %v6633 = vpop.f32.mrf.mxu0
      %6634 = vmatprep.mubr.f32.mxu0 %v6435
      %6635 = vmatmul.mubr.f32.gmra.mxu0 %v6434
      %v6636 = vpop.f32.mrf.mxu0
      %v6637 = vadd.f32 0.0, %v6636
      %v6638 = vpop.f32.mrf.mxu0
      %6639 = vmatprep.mubr.f32.mxu0 %v6438
      %6640 = vmatmul.mubr.f32.gmra.mxu0 %v6437
      %v6641 = vpop.f32.mrf.mxu0
      %v6642 = vadd.f32 0.0, %v6641
      %v6643 = vpop.f32.mrf.mxu0
      %6644 = vmatprep.mubr.f32.mxu0 %v6441
      %6645 = vmatmul.mubr.f32.gmra.mxu0 %v6440
      %v6646 = vpop.f32.mrf.mxu0
      %v6647 = vadd.f32 0.0, %v6646
      %v6648 = vpop.f32.mrf.mxu0
      %6649 = vmatprep.mubr.f32.mxu0 %v6444
      %6650 = vmatmul.mubr.f32.gmra.mxu0 %v6443
      %v6651 = vpop.f32.mrf.mxu0
      %v6652 = vadd.f32 0.0, %v6651
      %v6653 = vpop.f32.mrf.mxu0
      %6654 = vmatprep.mubr.f32.mxu0 %v6447
      %6655 = vmatmul.mubr.f32.gmra.mxu0 %v6446
      %v6656 = vpop.f32.mrf.mxu0
      %v6657 = vadd.f32 0.0, %v6656
      %v6658 = vpop.f32.mrf.mxu0
      %6659 = vmatprep.mubr.f32.mxu0 %v6450
      %6660 = vmatmul.mubr.f32.gmra.mxu0 %v6449
      %v6661 = vpop.f32.mrf.mxu0
      %v6662 = vadd.f32 0.0, %v6661
      %v6663 = vpop.f32.mrf.mxu0
      %6664 = vmatprep.mubr.f32.mxu0 %v6453
      %6665 = vmatmul.mubr.f32.gmra.mxu0 %v6452
      %v6666 = vpop.f32.mrf.mxu0
      %v6667 = vadd.f32 0.0, %v6666
      %v6668 = vpop.f32.mrf.mxu0
      %6669 = vmatprep.mubr.f32.mxu0 %v6456
      %6670 = vmatmul.mubr.f32.gmra.mxu0 %v6455
      %v6671 = vpop.f32.mrf.mxu0
      %v6672 = vadd.f32 0.0, %v6671
      %v6673 = vpop.f32.mrf.mxu0
      %6674 = vmatprep.mubr.f32.mxu0 %v6459
      %6675 = vmatmul.mubr.f32.gmra.mxu0 %v6458
      %v6676 = vpop.f32.mrf.mxu0
      %v6677 = vadd.f32 0.0, %v6676
      %v6678 = vpop.f32.mrf.mxu0
      %6679 = vmatprep.mubr.f32.mxu0 %v6462
      %6680 = vmatmul.mubr.f32.gmra.mxu0 %v6461
      %v6681 = vpop.f32.mrf.mxu0
      %v6682 = vadd.f32 0.0, %v6681
      %v6683 = vpop.f32.mrf.mxu0
      %6684 = vmatprep.mubr.f32.mxu0 %v6465
      %6685 = vmatmul.mubr.f32.gmra.mxu0 %v6464
      %v6686 = vpop.f32.mrf.mxu0
      %v6687 = vadd.f32 0.0, %v6686
      %v6688 = vpop.f32.mrf.mxu0
      %6689 = vmatprep.mubr.f32.mxu0 %v6468
      %6690 = vmatmul.mubr.f32.gmra.mxu0 %v6467
      %v6691 = vpop.f32.mrf.mxu0
      %v6692 = vadd.f32 0.0, %v6691
      %v6693 = vpop.f32.mrf.mxu0
      %6694 = vmatprep.mubr.f32.mxu0 %v6471
      %6695 = vmatmul.mubr.f32.gmra.mxu0 %v6470
      %v6696 = vpop.f32.mrf.mxu0
      %v6697 = vadd.f32 0.0, %v6696
      %v6698 = vpop.f32.mrf.mxu0
      %6699 = vmatprep.mubr.f32.mxu0 %v6474
      %6700 = vmatmul.mubr.f32.gmra.mxu0 %v6473
      %v6701 = vpop.f32.mrf.mxu0
      %v6702 = vadd.f32 0.0, %v6701
      %v6703 = vpop.f32.mrf.mxu0
      %6704 = vmatprep.mubr.f32.mxu0 %v6477
      %6705 = vmatmul.mubr.f32.gmra.mxu0 %v6476
      %v6706 = vpop.f32.mrf.mxu0
      %v6707 = vadd.f32 0.0, %v6706
      %v6708 = vpop.f32.mrf.mxu0
      %6709 = vmatprep.mubr.f32.mxu0 %v6480
      %6710 = vmatmul.mubr.f32.gmra.mxu0 %v6479
      %v6711 = vpop.f32.mrf.mxu0
      %v6712 = vadd.f32 0.0, %v6711
      %v6713 = vpop.f32.mrf.mxu0
      %6714 = vmatprep.mubr.f32.mxu0 %v6483
      %6715 = vmatmul.mubr.f32.gmra.mxu0 %v6482
      %v6716 = vpop.f32.mrf.mxu0
      %v6717 = vadd.f32 0.0, %v6716
      %v6718 = vpop.f32.mrf.mxu0
      %6719 = vmatprep.mubr.f32.mxu0 %v6486
      %6720 = vmatmul.mubr.f32.gmra.mxu0 %v6485
      %v6721 = vpop.f32.mrf.mxu0
      %v6722 = vadd.f32 0.0, %v6721
      %v6723 = vpop.f32.mrf.mxu0
      %6724 = vmatprep.mubr.f32.mxu0 %v6489
      %6725 = vmatmul.mubr.f32.gmra.mxu0 %v6488
      %v6726 = vpop.f32.mrf.mxu0
      %v6727 = vadd.f32 0.0, %v6726
      %v6728 = vpop.f32.mrf.mxu0
      %6729 = vmatprep.mubr.f32.mxu0 %v6492
      %6730 = vmatmul.mubr.f32.gmra.mxu0 %v6491
      %v6731 = vpop.f32.mrf.mxu0
      %v6732 = vadd.f32 0.0, %v6731
      %v6733 = vpop.f32.mrf.mxu0
      %6734 = vmatprep.mubr.f32.mxu0 %v6495
      %6735 = vmatmul.mubr.f32.gmra.mxu0 %v6494
      %v6736 = vpop.f32.mrf.mxu0
      %v6737 = vadd.f32 0.0, %v6736
      %v6738 = vpop.f32.mrf.mxu0
      %6739 = vmatprep.mubr.f32.mxu0 %v6498
      %6740 = vmatmul.mubr.f32.gmra.mxu0 %v6497
      %v6741 = vpop.f32.mrf.mxu0
      %v6742 = vadd.f32 0.0, %v6741
      %v6743 = vpop.f32.mrf.mxu0
      %6744 = vmatprep.mubr.f32.mxu0 %v6501
      %6745 = vmatmul.mubr.f32.gmra.mxu0 %v6500
      %v6746 = vpop.f32.mrf.mxu0
      %v6747 = vadd.f32 0.0, %v6746
      %v6748 = vpop.f32.mrf.mxu0
      %6749 = vmatprep.mubr.f32.mxu0 %v6504
      %6750 = vmatmul.mubr.f32.gmra.mxu0 %v6503
      %v6751 = vpop.f32.mrf.mxu0
      %v6752 = vadd.f32 0.0, %v6751
      %v6753 = vpop.f32.mrf.mxu0
      %6754 = vmatprep.mubr.f32.mxu0 %v6507
      %6755 = vmatmul.mubr.f32.gmra.mxu0 %v6506
      %v6756 = vpop.f32.mrf.mxu0
      %v6757 = vadd.f32 0.0, %v6756
      %v6758 = vpop.f32.mrf.mxu0
      %6759 = vmatprep.mubr.f32.mxu0 %v6510
      %6760 = vmatmul.mubr.f32.gmra.mxu0 %v6509
      %v6761 = vpop.f32.mrf.mxu0
      %v6762 = vadd.f32 0.0, %v6761
      %v6763 = vpop.f32.mrf.mxu0
      %6764 = vmatprep.mubr.f32.mxu0 %v6513
      %6765 = vmatmul.mubr.f32.gmra.mxu0 %v6512
      %v6766 = vpop.f32.mrf.mxu0
      %v6767 = vadd.f32 0.0, %v6766
      %v6768 = vpop.f32.mrf.mxu0
      %6769 = vmatprep.mubr.f32.mxu0 %v6516
      %6770 = vmatmul.mubr.f32.gmra.mxu0 %v6515
      %v6771 = vpop.f32.mrf.mxu0
      %v6772 = vadd.f32 0.0, %v6771
      %v6773 = vpop.f32.mrf.mxu0
      %6774 = vdwg.mxu0
      %s6775 = scalar_lea.vmem %s8, 48
      %v6776 = vld [vmem:[%s6775] sm:$0xff]
      %v6777 = vld [vmem:[%s6775 + $0x8] sm:$0xff]
      %v6779 = vsel %vm1312, %v6617, 0
      %v6782 = vsel %vm1312, %v6622, 0
      %v6785 = vsel %vm1312, %v6627, 0
      %v6788 = vsel %vm1312, %v6632, 0
      %v6791 = vsel %vm1312, %v6637, 0
      %v6794 = vsel %vm1312, %v6642, 0
      %v6797 = vsel %vm1312, %v6647, 0
      %v6800 = vsel %vm1312, %v6652, 0
      %v6803 = vsel %vm1312, %v6657, 0
      %v6806 = vsel %vm1312, %v6662, 0
      %v6809 = vsel %vm1312, %v6667, 0
      %v6812 = vsel %vm1312, %v6672, 0
      %v6815 = vsel %vm1312, %v6677, 0
      %v6818 = vsel %vm1312, %v6682, 0
      %v6821 = vsel %vm1312, %v6687, 0
      %v6824 = vsel %vm1312, %v6692, 0
      %v6827 = vsel %vm1312, %v6697, 0
      %v6830 = vsel %vm1312, %v6702, 0
      %v6833 = vsel %vm1312, %v6707, 0
      %v6836 = vsel %vm1312, %v6712, 0
      %v6839 = vsel %vm1312, %v6717, 0
      %v6842 = vsel %vm1312, %v6722, 0
      %v6845 = vsel %vm1312, %v6727, 0
      %v6848 = vsel %vm1312, %v6732, 0
      %v6851 = vsel %vm1312, %v6737, 0
      %v6854 = vsel %vm1312, %v6742, 0
      %v6857 = vsel %vm1312, %v6747, 0
      %v6860 = vsel %vm1312, %v6752, 0
      %v6863 = vsel %vm1312, %v6757, 0
      %v6866 = vsel %vm1312, %v6762, 0
      %v6869 = vsel %vm1312, %v6767, 0
      %v6872 = vsel %vm1312, %v6772, 0
      %6874 = vmatprep.subr.mxu0 0.0
      %6875 = vmatpush1.msra.mxu0 0.0
      %6876 = vmatprep.subr.mxu0 0.0
      %6877 = vmatpush1.msra.mxu0 0.0
      %6878 = vmatprep.subr.mxu0 0.0
      %6879 = vmatpush1.msra.mxu0 0.0
      %6880 = vmatprep.subr.mxu0 0.0
      %6881 = vmatpush1.msra.mxu0 0.0
      %6882 = vmatprep.subr.mxu0 0.0
      %6883 = vmatpush1.msra.mxu0 0.0
      %6884 = vmatprep.subr.mxu0 0.0
      %6885 = vmatpush1.msra.mxu0 0.0
      %6886 = vmatprep.subr.mxu0 0.0
      %6887 = vmatpush1.msra.mxu0 0.0
      %6888 = vmatprep.subr.mxu0 0.0
      %6889 = vmatpush1.msra.mxu0 0.0
      %6890 = vmatprep.subr.mxu0 0.0
      %6891 = vmatpush1.msra.mxu0 0.0
      %6892 = vmatprep.subr.mxu0 0.0
      %6893 = vmatpush1.msra.mxu0 0.0
      %6894 = vmatprep.subr.mxu0 0.0
      %6895 = vmatpush1.msra.mxu0 0.0
      %6896 = vmatprep.subr.mxu0 0.0
      %6897 = vmatpush1.msra.mxu0 0.0
      %6898 = vmatprep.subr.mxu0 0.0
      %6899 = vmatpush1.msra.mxu0 0.0
      %6900 = vmatprep.subr.mxu0 0.0
      %6901 = vmatpush1.msra.mxu0 0.0
      %6902 = vmatprep.subr.mxu0 0.0
      %6903 = vmatpush1.msra.mxu0 %v6777
      %6904 = vmatprep.subr.mxu0 0.0
      %6905 = vmatpush1.msra.mxu0 %v6776
      %6906 = vmatprep.subr.mxu0 0.0
      %6907 = vmatpush2.msra.mxu0 0.0
      %6908 = vmatprep.subr.mxu0 0.0
      %6909 = vmatpush2.msra.mxu0 0.0
      %6910 = vmatprep.subr.mxu0 0.0
      %6911 = vmatpush2.msra.mxu0 0.0
      %6912 = vmatprep.subr.mxu0 0.0
      %6913 = vmatpush2.msra.mxu0 0.0
      %6914 = vmatprep.subr.mxu0 0.0
      %6915 = vmatpush2.msra.mxu0 0.0
      %6916 = vmatprep.subr.mxu0 0.0
      %6917 = vmatpush2.msra.mxu0 0.0
      %6918 = vmatprep.subr.mxu0 0.0
      %6919 = vmatpush2.msra.mxu0 0.0
      %6920 = vmatprep.subr.mxu0 0.0
      %6921 = vmatpush2.msra.mxu0 0.0
      %6922 = vmatprep.subr.mxu0 0.0
      %6923 = vmatpush2.msra.mxu0 0.0
      %6924 = vmatprep.subr.mxu0 0.0
      %6925 = vmatpush2.msra.mxu0 0.0
      %6926 = vmatprep.subr.mxu0 0.0
      %6927 = vmatpush2.msra.mxu0 0.0
      %6928 = vmatprep.subr.mxu0 0.0
      %6929 = vmatpush2.msra.mxu0 0.0
      %6930 = vmatprep.subr.mxu0 0.0
      %6931 = vmatpush2.msra.mxu0 0.0
      %6932 = vmatprep.subr.mxu0 0.0
      %6933 = vmatpush2.msra.mxu0 0.0
      %6934 = vmatprep.subr.mxu0 0.0
      %6935 = vmatpush2.msra.mxu0 0.0
      %6936 = vmatprep.subr.mxu0 0.0
      %6937 = vmatpush2.msra.mxu0 0.0
      %6938 = vmatprep.mubr.f32.mxu0 0.0
      %6939 = vmatmul.mubr.f32.gmra.mxu0 %v6779
      %v6940 = vpop.f32.mrf.mxu0
      %v6941 = vadd.f32 0.0, %v6940
      %v6942 = vpop.f32.mrf.mxu0
      %6943 = vmatprep.mubr.f32.mxu0 0.0
      %6944 = vmatmul.mubr.f32.gmra.mxu0 %v6782
      %v6945 = vpop.f32.mrf.mxu0
      %v6946 = vadd.f32 0.0, %v6945
      %v6947 = vpop.f32.mrf.mxu0
      %6948 = vmatprep.mubr.f32.mxu0 0.0
      %6949 = vmatmul.mubr.f32.gmra.mxu0 %v6785
      %v6950 = vpop.f32.mrf.mxu0
      %v6951 = vadd.f32 0.0, %v6950
      %v6952 = vpop.f32.mrf.mxu0
      %6953 = vmatprep.mubr.f32.mxu0 0.0
      %6954 = vmatmul.mubr.f32.gmra.mxu0 %v6788
      %v6955 = vpop.f32.mrf.mxu0
      %v6956 = vadd.f32 0.0, %v6955
      %v6957 = vpop.f32.mrf.mxu0
      %6958 = vmatprep.mubr.f32.mxu0 0.0
      %6959 = vmatmul.mubr.f32.gmra.mxu0 %v6791
      %v6960 = vpop.f32.mrf.mxu0
      %v6961 = vadd.f32 0.0, %v6960
      %v6962 = vpop.f32.mrf.mxu0
      %6963 = vmatprep.mubr.f32.mxu0 0.0
      %6964 = vmatmul.mubr.f32.gmra.mxu0 %v6794
      %v6965 = vpop.f32.mrf.mxu0
      %v6966 = vadd.f32 0.0, %v6965
      %v6967 = vpop.f32.mrf.mxu0
      %6968 = vmatprep.mubr.f32.mxu0 0.0
      %6969 = vmatmul.mubr.f32.gmra.mxu0 %v6797
      %v6970 = vpop.f32.mrf.mxu0
      %v6971 = vadd.f32 0.0, %v6970
      %v6972 = vpop.f32.mrf.mxu0
      %6973 = vmatprep.mubr.f32.mxu0 0.0
      %6974 = vmatmul.mubr.f32.gmra.mxu0 %v6800
      %v6975 = vpop.f32.mrf.mxu0
      %v6976 = vadd.f32 0.0, %v6975
      %v6977 = vpop.f32.mrf.mxu0
      %6978 = vmatprep.mubr.f32.mxu0 0.0
      %6979 = vmatmul.mubr.f32.gmra.mxu0 %v6803
      %v6980 = vpop.f32.mrf.mxu0
      %v6981 = vadd.f32 0.0, %v6980
      %v6982 = vpop.f32.mrf.mxu0
      %6983 = vmatprep.mubr.f32.mxu0 0.0
      %6984 = vmatmul.mubr.f32.gmra.mxu0 %v6806
      %v6985 = vpop.f32.mrf.mxu0
      %v6986 = vadd.f32 0.0, %v6985
      %v6987 = vpop.f32.mrf.mxu0
      %6988 = vmatprep.mubr.f32.mxu0 0.0
      %6989 = vmatmul.mubr.f32.gmra.mxu0 %v6809
      %v6990 = vpop.f32.mrf.mxu0
      %v6991 = vadd.f32 0.0, %v6990
      %v6992 = vpop.f32.mrf.mxu0
      %6993 = vmatprep.mubr.f32.mxu0 0.0
      %6994 = vmatmul.mubr.f32.gmra.mxu0 %v6812
      %v6995 = vpop.f32.mrf.mxu0
      %v6996 = vadd.f32 0.0, %v6995
      %v6997 = vpop.f32.mrf.mxu0
      %6998 = vmatprep.mubr.f32.mxu0 0.0
      %6999 = vmatmul.mubr.f32.gmra.mxu0 %v6815
      %v7000 = vpop.f32.mrf.mxu0
      %v7001 = vadd.f32 0.0, %v7000
      %v7002 = vpop.f32.mrf.mxu0
      %7003 = vmatprep.mubr.f32.mxu0 0.0
      %7004 = vmatmul.mubr.f32.gmra.mxu0 %v6818
      %v7005 = vpop.f32.mrf.mxu0
      %v7006 = vadd.f32 0.0, %v7005
      %v7007 = vpop.f32.mrf.mxu0
      %7008 = vmatprep.mubr.f32.mxu0 0.0
      %7009 = vmatmul.mubr.f32.gmra.mxu0 %v6821
      %v7010 = vpop.f32.mrf.mxu0
      %v7011 = vadd.f32 0.0, %v7010
      %v7012 = vpop.f32.mrf.mxu0
      %7013 = vmatprep.mubr.f32.mxu0 0.0
      %7014 = vmatmul.mubr.f32.gmra.mxu0 %v6824
      %v7015 = vpop.f32.mrf.mxu0
      %v7016 = vadd.f32 0.0, %v7015
      %v7017 = vpop.f32.mrf.mxu0
      %7018 = vmatprep.mubr.f32.mxu0 0.0
      %7019 = vmatmul.mubr.f32.gmra.mxu0 %v6827
      %v7020 = vpop.f32.mrf.mxu0
      %v7021 = vadd.f32 0.0, %v7020
      %v7022 = vpop.f32.mrf.mxu0
      %7023 = vmatprep.mubr.f32.mxu0 0.0
      %7024 = vmatmul.mubr.f32.gmra.mxu0 %v6830
      %v7025 = vpop.f32.mrf.mxu0
      %v7026 = vadd.f32 0.0, %v7025
      %v7027 = vpop.f32.mrf.mxu0
      %7028 = vmatprep.mubr.f32.mxu0 0.0
      %7029 = vmatmul.mubr.f32.gmra.mxu0 %v6833
      %v7030 = vpop.f32.mrf.mxu0
      %v7031 = vadd.f32 0.0, %v7030
      %v7032 = vpop.f32.mrf.mxu0
      %7033 = vmatprep.mubr.f32.mxu0 0.0
      %7034 = vmatmul.mubr.f32.gmra.mxu0 %v6836
      %v7035 = vpop.f32.mrf.mxu0
      %v7036 = vadd.f32 0.0, %v7035
      %v7037 = vpop.f32.mrf.mxu0
      %7038 = vmatprep.mubr.f32.mxu0 0.0
      %7039 = vmatmul.mubr.f32.gmra.mxu0 %v6839
      %v7040 = vpop.f32.mrf.mxu0
      %v7041 = vadd.f32 0.0, %v7040
      %v7042 = vpop.f32.mrf.mxu0
      %7043 = vmatprep.mubr.f32.mxu0 0.0
      %7044 = vmatmul.mubr.f32.gmra.mxu0 %v6842
      %v7045 = vpop.f32.mrf.mxu0
      %v7046 = vadd.f32 0.0, %v7045
      %v7047 = vpop.f32.mrf.mxu0
      %7048 = vmatprep.mubr.f32.mxu0 0.0
      %7049 = vmatmul.mubr.f32.gmra.mxu0 %v6845
      %v7050 = vpop.f32.mrf.mxu0
      %v7051 = vadd.f32 0.0, %v7050
      %v7052 = vpop.f32.mrf.mxu0
      %7053 = vmatprep.mubr.f32.mxu0 0.0
      %7054 = vmatmul.mubr.f32.gmra.mxu0 %v6848
      %v7055 = vpop.f32.mrf.mxu0
      %v7056 = vadd.f32 0.0, %v7055
      %v7057 = vpop.f32.mrf.mxu0
      %7058 = vmatprep.mubr.f32.mxu0 0.0
      %7059 = vmatmul.mubr.f32.gmra.mxu0 %v6851
      %v7060 = vpop.f32.mrf.mxu0
      %v7061 = vadd.f32 0.0, %v7060
      %v7062 = vpop.f32.mrf.mxu0
      %7063 = vmatprep.mubr.f32.mxu0 0.0
      %7064 = vmatmul.mubr.f32.gmra.mxu0 %v6854
      %v7065 = vpop.f32.mrf.mxu0
      %v7066 = vadd.f32 0.0, %v7065
      %v7067 = vpop.f32.mrf.mxu0
      %7068 = vmatprep.mubr.f32.mxu0 0.0
      %7069 = vmatmul.mubr.f32.gmra.mxu0 %v6857
      %v7070 = vpop.f32.mrf.mxu0
      %v7071 = vadd.f32 0.0, %v7070
      %v7072 = vpop.f32.mrf.mxu0
      %7073 = vmatprep.mubr.f32.mxu0 0.0
      %7074 = vmatmul.mubr.f32.gmra.mxu0 %v6860
      %v7075 = vpop.f32.mrf.mxu0
      %v7076 = vadd.f32 0.0, %v7075
      %v7077 = vpop.f32.mrf.mxu0
      %7078 = vmatprep.mubr.f32.mxu0 0.0
      %7079 = vmatmul.mubr.f32.gmra.mxu0 %v6863
      %v7080 = vpop.f32.mrf.mxu0
      %v7081 = vadd.f32 0.0, %v7080
      %v7082 = vpop.f32.mrf.mxu0
      %7083 = vmatprep.mubr.f32.mxu0 0.0
      %7084 = vmatmul.mubr.f32.gmra.mxu0 %v6866
      %v7085 = vpop.f32.mrf.mxu0
      %v7086 = vadd.f32 0.0, %v7085
      %v7087 = vpop.f32.mrf.mxu0
      %7088 = vmatprep.mubr.f32.mxu0 0.0
      %7089 = vmatmul.mubr.f32.gmra.mxu0 %v6869
      %v7090 = vpop.f32.mrf.mxu0
      %v7091 = vadd.f32 0.0, %v7090
      %v7092 = vpop.f32.mrf.mxu0
      %7093 = vmatprep.mubr.f32.mxu0 0.0
      %7094 = vmatmul.mubr.f32.gmra.mxu0 %v6872
      %v7095 = vpop.f32.mrf.mxu0
      %v7096 = vadd.f32 0.0, %v7095
      %v7097 = vpop.f32.mrf.mxu0
      %7098 = vdwg.mxu0
      %v7099 = vadd.f32 %v5620, %v6941
      %v7100 = vadd.f32 %v5621, %v6946
      %v7101 = vadd.f32 %v5622, %v6951
      %v7102 = vadd.f32 %v5623, %v6956
      %v7103 = vadd.f32 %v5624, %v6961
      %v7104 = vadd.f32 %v5625, %v6966
      %v7105 = vadd.f32 %v5626, %v6971
      %v7106 = vadd.f32 %v5627, %v6976
      %v7107 = vadd.f32 %v5628, %v6981
      %v7108 = vadd.f32 %v5629, %v6986
      %v7109 = vadd.f32 %v5630, %v6991
      %v7110 = vadd.f32 %v5631, %v6996
      %v7111 = vadd.f32 %v5632, %v7001
      %v7112 = vadd.f32 %v5633, %v7006
      %v7113 = vadd.f32 %v5634, %v7011
      %v7114 = vadd.f32 %v5635, %v7016
      %v7115 = vadd.f32 %v5636, %v7021
      %v7116 = vadd.f32 %v5637, %v7026
      %v7117 = vadd.f32 %v5638, %v7031
      %v7118 = vadd.f32 %v5639, %v7036
      %v7119 = vadd.f32 %v5640, %v7041
      %v7120 = vadd.f32 %v5641, %v7046
      %v7121 = vadd.f32 %v5642, %v7051
      %v7122 = vadd.f32 %v5643, %v7056
      %v7123 = vadd.f32 %v5644, %v7061
      %v7124 = vadd.f32 %v5645, %v7066
      %v7125 = vadd.f32 %v5646, %v7071
      %v7126 = vadd.f32 %v5647, %v7076
      %v7127 = vadd.f32 %v5648, %v7081
      %v7128 = vadd.f32 %v5649, %v7086
      %v7129 = vadd.f32 %v5650, %v7091
      %v7130 = vadd.f32 %v5651, %v7096
      %v7131 = vadd.f32 %v400, %v7099
      %v7132 = vadd.f32 %v401, %v7100
      %v7133 = vadd.f32 %v402, %v7101
      %v7134 = vadd.f32 %v403, %v7102
      %v7135 = vadd.f32 %v404, %v7103
      %v7136 = vadd.f32 %v405, %v7104
      %v7137 = vadd.f32 %v406, %v7105
      %v7138 = vadd.f32 %v407, %v7106
      %v7139 = vadd.f32 %v408, %v7107
      %v7140 = vadd.f32 %v409, %v7108
      %v7141 = vadd.f32 %v410, %v7109
      %v7142 = vadd.f32 %v411, %v7110
      %v7143 = vadd.f32 %v412, %v7111
      %v7144 = vadd.f32 %v413, %v7112
      %v7145 = vadd.f32 %v414, %v7113
      %v7146 = vadd.f32 %v415, %v7114
      %v7147 = vadd.f32 %v416, %v7115
      %v7148 = vadd.f32 %v417, %v7116
      %v7149 = vadd.f32 %v418, %v7117
      %v7150 = vadd.f32 %v419, %v7118
      %v7151 = vadd.f32 %v420, %v7119
      %v7152 = vadd.f32 %v421, %v7120
      %v7153 = vadd.f32 %v422, %v7121
      %v7154 = vadd.f32 %v423, %v7122
      %v7155 = vadd.f32 %v424, %v7123
      %v7156 = vadd.f32 %v425, %v7124
      %v7157 = vadd.f32 %v426, %v7125
      %v7158 = vadd.f32 %v427, %v7126
      %v7159 = vadd.f32 %v428, %v7127
      %v7160 = vadd.f32 %v429, %v7128
      %v7161 = vadd.f32 %v430, %v7129
      %v7162 = vadd.f32 %v431, %v7130
      %v7163 = vld [vmem:[%s9] sm:$0x1]
      %v7165 = vlaneseq
      %v7166 = vshrl.u32 %v7165, 7
      %v7167 = vsub.s32 0, %v7166
      %v7168 = vrot.slane %v7163, %v7167
      %v7170 = vadd.f32 %v7131, %v7168
      %v7171 = vadd.f32 %v7132, %v7168
      %v7172 = vadd.f32 %v7133, %v7168
      %v7173 = vadd.f32 %v7134, %v7168
      %v7174 = vadd.f32 %v7135, %v7168
      %v7175 = vadd.f32 %v7136, %v7168
      %v7176 = vadd.f32 %v7137, %v7168
      %v7177 = vadd.f32 %v7138, %v7168
      %v7178 = vadd.f32 %v7139, %v7168
      %v7179 = vadd.f32 %v7140, %v7168
      %v7180 = vadd.f32 %v7141, %v7168
      %v7181 = vadd.f32 %v7142, %v7168
      %v7182 = vadd.f32 %v7143, %v7168
      %v7183 = vadd.f32 %v7144, %v7168
      %v7184 = vadd.f32 %v7145, %v7168
      %v7185 = vadd.f32 %v7146, %v7168
      %v7186 = vadd.f32 %v7147, %v7168
      %v7187 = vadd.f32 %v7148, %v7168
      %v7188 = vadd.f32 %v7149, %v7168
      %v7189 = vadd.f32 %v7150, %v7168
      %v7190 = vadd.f32 %v7151, %v7168
      %v7191 = vadd.f32 %v7152, %v7168
      %v7192 = vadd.f32 %v7153, %v7168
      %v7193 = vadd.f32 %v7154, %v7168
      %v7194 = vadd.f32 %v7155, %v7168
      %v7195 = vadd.f32 %v7156, %v7168
      %v7196 = vadd.f32 %v7157, %v7168
      %v7197 = vadd.f32 %v7158, %v7168
      %v7198 = vadd.f32 %v7159, %v7168
      %v7199 = vadd.f32 %v7160, %v7168
      %v7200 = vadd.f32 %v7161, %v7168
      %v7201 = vadd.f32 %v7162, %v7168
      %7202 = vst.msk [vmem:[%s399] sm:$0xff] %vm440, %v7170
      %7203 = vst.msk [vmem:[%s399 + $0x8] sm:$0xff] %vm440, %v7171
      %7204 = vst.msk [vmem:[%s399 + $0x10] sm:$0xff] %vm440, %v7172
      %7205 = vst.msk [vmem:[%s399 + $0x18] sm:$0xff] %vm440, %v7173
      %7206 = vst.msk [vmem:[%s399 + $0x20] sm:$0xff] %vm440, %v7174
      %7207 = vst.msk [vmem:[%s399 + $0x28] sm:$0xff] %vm440, %v7175
      %7208 = vst.msk [vmem:[%s399 + $0x30] sm:$0xff] %vm440, %v7176
      %7209 = vst.msk [vmem:[%s399 + $0x38] sm:$0xff] %vm440, %v7177
      %7210 = vst.msk [vmem:[%s399 + $0x40] sm:$0xff] %vm440, %v7178
      %7211 = vst.msk [vmem:[%s399 + $0x48] sm:$0xff] %vm440, %v7179
      %7212 = vst.msk [vmem:[%s399 + $0x50] sm:$0xff] %vm440, %v7180
      %7213 = vst.msk [vmem:[%s399 + $0x58] sm:$0xff] %vm440, %v7181
      %7214 = vst.msk [vmem:[%s399 + $0x60] sm:$0xff] %vm440, %v7182
      %7215 = vst.msk [vmem:[%s399 + $0x68] sm:$0xff] %vm440, %v7183
      %7216 = vst.msk [vmem:[%s399 + $0x70] sm:$0xff] %vm440, %v7184
      %7217 = vst.msk [vmem:[%s399 + $0x78] sm:$0xff] %vm440, %v7185
      %7218 = vst.msk [vmem:[%s399 + $0x80] sm:$0xff] %vm440, %v7186
      %7219 = vst.msk [vmem:[%s399 + $0x88] sm:$0xff] %vm440, %v7187
      %7220 = vst.msk [vmem:[%s399 + $0x90] sm:$0xff] %vm440, %v7188
      %7221 = vst.msk [vmem:[%s399 + $0x98] sm:$0xff] %vm440, %v7189
      %7222 = vst.msk [vmem:[%s399 + $0xa0] sm:$0xff] %vm440, %v7190
      %7223 = vst.msk [vmem:[%s399 + $0xa8] sm:$0xff] %vm440, %v7191
      %7224 = vst.msk [vmem:[%s399 + $0xb0] sm:$0xff] %vm440, %v7192
      %7225 = vst.msk [vmem:[%s399 + $0xb8] sm:$0xff] %vm440, %v7193
      %7226 = vst.msk [vmem:[%s399 + $0xc0] sm:$0xff] %vm440, %v7194
      %7227 = vst.msk [vmem:[%s399 + $0xc8] sm:$0xff] %vm440, %v7195
      %7228 = vst.msk [vmem:[%s399 + $0xd0] sm:$0xff] %vm440, %v7196
      %7229 = vst.msk [vmem:[%s399 + $0xd8] sm:$0xff] %vm440, %v7197
      %7230 = vst.msk [vmem:[%s399 + $0xe0] sm:$0xff] %vm440, %v7198
      %7231 = vst.msk [vmem:[%s399 + $0xe8] sm:$0xff] %vm440, %v7199
      %7232 = vst.msk [vmem:[%s399 + $0xf0] sm:$0xff] %vm440, %v7200
      %7233 = vst.msk [vmem:[%s399 + $0xf8] sm:$0xff] %vm440, %v7201
      %p7234 = scmp.lt.s32.totalorder %s21, 1
      %s7235 = scalar_select %p7234, %s21, 1
      %s7236 = smul.addr %s7235, 32
      %s7237 = smul.addr %s7236, 8
      %s7238 = scalar_lea.vmem %s10, %s7237
      // Predicated region
      $region61: #{tpu_custom_call.1} parent=59 // pred_check
        %p7239 = pneg %p264
      $region62: #{tpu_custom_call.1} parent=59 // pred_check_branch
        %7241 = sbr.rel (%p7239) target = $region64
      $region63: #{tpu_custom_call.1} parent=59 // pred_region
        _
      $region64: #{tpu_custom_call.1} parent=59 // pred_fallthru
        _
    $region60: #{tpu_custom_call.1} parent=5 // pred_fallthru
      _
    %p7242 = scmp.le.s32.totalorder 2, %s16
    // Predicated region
    $region65: #{tpu_custom_call.1} parent=5 // pred_check
      %p7243 = pneg %p7242
    $region66: #{tpu_custom_call.1} parent=5 // pred_check_branch
      %7245 = sbr.rel (%p7243) target = $region68
    $region67: #{tpu_custom_call.1} parent=5 // pred_region
      %s7246 = ssub.s32 %s16, 2
      // Predicated region
      $region69: #{tpu_custom_call.1} parent=67 // pred_check
        %p7247 = pneg %p270
      $region70: #{tpu_custom_call.1} parent=67 // pred_check_branch
        %7249 = sbr.rel (%p7247) target = $region72
      $region71: #{tpu_custom_call.1} parent=67 // pred_region
        %p7250 = scmp.lt.s32.totalorder %s22, 1
        %s7251 = scalar_select %p7250, %s22, 1
        %s7252 = smul.addr %s7251, 32
        %s7253 = smul.addr %s7252, 8
        %s7254 = scalar_lea.vmem %s10, %s7253
      $region72: #{tpu_custom_call.1} parent=67 // pred_fallthru
        _
    $region68: #{tpu_custom_call.1} parent=5 // pred_fallthru
      _
  $region6: #{tpu_custom_call.1} parent=0 // loop_footer
    %s20 = sadd.s32 1, %s16
  $region7: #{tpu_custom_call.1} parent=0 // loop_footer_branch
    %15 = sbr.rel target = $region3
  $region8: #{tpu_custom_call.1} parent=0 // loop_exit
    _

</llo_original>
